<compile_context>
chip_gen: v7x
topology: tpu7x:2x2x1
jax: 0.10.0
libtpu: 0.0.40
codegen_flags: <defaults>
</compile_context>

<pallas_src>
import functools
import math

import jax
import jax.numpy as jnp
from jax.experimental import pallas as pl
from jax.experimental.pallas import tpu as pltpu


# ----------------------------- Pallas kernels -----------------------------

def _matmul_bias_kernel(x_ref, w_ref, b_ref, o_ref, *, relu):
    """bf16 x bf16 -> f32 MXU matmul with fused bias (+ optional ReLU)."""
    acc = jnp.dot(x_ref[...], w_ref[...], preferred_element_type=jnp.float32)
    acc = acc + b_ref[...]
    if relu:
        acc = jnp.maximum(acc, 0.0)
    o_ref[...] = acc.astype(o_ref.dtype)


def _matmul_bias_relu_l2norm_kernel(x_ref, w_ref, b_ref, g_ref, o_ref, s_ref):
    """Conv (matmul) + bias + ReLU with the L2Norm source tap fused into the
    epilogue (second output).  Channel reduction -> XLU slot, reciprocal ->
    EUP slot; both are idle during the matmul epilogue, so ~free."""
    acc = jnp.dot(x_ref[...], w_ref[...], preferred_element_type=jnp.float32)
    acc = jnp.maximum(acc + b_ref[...], 0.0)
    o_ref[...] = acc.astype(o_ref.dtype)
    norm = jnp.sqrt(jnp.sum(acc * acc, axis=-1, keepdims=True)) + 1e-10
    s_ref[...] = (g_ref[...] * (acc * pl.reciprocal(norm, approx=True))
                  ).astype(s_ref.dtype)


# ------------------------------ helpers / glue ------------------------------

def _round_up(x, m):
    return (x + m - 1) // m * m


def _pick_tm(m, max_tm):
    """Largest M tile <= max_tm (multiple of 8); return (tm, padded M)."""
    tm = min(max_tm, _round_up(m, 8))
    return tm, _round_up(m, tm)


def _pool2x2(x):
    """2x2 stride-2 max pool (NHWC).  Pure XLA; fused by the compiler into the
    following conv's im2col gather, so no extra HBM pass or pallas launch."""
    n, h, w, c = x.shape
    return jnp.max(x.reshape(n, h // 2, 2, w // 2, 2, c), axis=(2, 4))


def _im2col(x, kh, kw, stride, pad):
    """x: NHWC -> patches (N*Ho*Wo, kh*kw*Cin) ordered (dy, dx, cin)."""
    n, h, w, c = x.shape
    xp = jnp.pad(x, ((0, 0), (pad, pad), (pad, pad), (0, 0)))
    ho = (h + 2 * pad - kh) // stride + 1
    wo = (w + 2 * pad - kw) // stride + 1
    cols = []
    for dy in range(kh):
        for dx in range(kw):
            cols.append(xp[:, dy:dy + stride * ho:stride,
                           dx:dx + stride * wo:stride, :])
    patches = jnp.stack(cols, axis=3)            # (N, Ho, Wo, kh*kw, C)
    return patches.reshape(n * ho * wo, kh * kw * c), (n, ho, wo)


# --------------------------- Pallas matmul wrapper ---------------------------

def _matmul(patches, wm, bvec, *, relu, max_tm=512, gamma=None):
    """(M,K)@(K,Cout)+b with bf16 operands / f32 accumulation.
    If `gamma` is given, also returns the fused L2Norm of the (ReLU'd) output."""
    m, k = patches.shape
    cout = wm.shape[1]
    tm, m_pad = _pick_tm(m, max_tm)

    patches = patches.astype(jnp.bfloat16)
    if m_pad != m:
        patches = jnp.pad(patches, ((0, m_pad - m), (0, 0)))
    wm = wm.astype(jnp.bfloat16)
    bm = bvec.reshape(1, cout).astype(jnp.float32)

    grid = (m_pad // tm,)
    x_spec = pl.BlockSpec((tm, k), lambda i: (i, 0))
    w_spec = pl.BlockSpec((k, cout), lambda i: (0, 0))
    b_spec = pl.BlockSpec((1, cout), lambda i: (0, 0))   # resident bias row
    o_spec = pl.BlockSpec((tm, cout), lambda i: (i, 0))
    cparams = pltpu.CompilerParams(dimension_semantics=("parallel",))
    flops = 2 * m_pad * k * cout
    in_bytes = patches.size * 2 + wm.size * 2 + bm.size * 4

    if gamma is None:
        cost = pl.CostEstimate(flops=flops, transcendentals=0,
                               bytes_accessed=in_bytes + m_pad * cout * 4)
        out = pl.pallas_call(
            functools.partial(_matmul_bias_kernel, relu=relu),
            out_shape=jax.ShapeDtypeStruct((m_pad, cout), jnp.float32),
            grid=grid,
            in_specs=[x_spec, w_spec, b_spec],
            out_specs=o_spec,
            compiler_params=cparams,
            cost_estimate=cost,
        )(patches, wm, bm)
        return out[:m]

    # fused conv + ReLU + L2Norm tap (two outputs)
    gm = gamma.reshape(1, cout).astype(jnp.float32)
    cost = pl.CostEstimate(flops=flops, transcendentals=m_pad,
                           bytes_accessed=in_bytes + 2 * m_pad * cout * 4)
    out, src = pl.pallas_call(
        _matmul_bias_relu_l2norm_kernel,
        out_shape=(jax.ShapeDtypeStruct((m_pad, cout), jnp.float32),
                   jax.ShapeDtypeStruct((m_pad, cout), jnp.float32)),
        grid=grid,
        in_specs=[x_spec, w_spec, b_spec, b_spec],
        out_specs=(o_spec, o_spec),
        compiler_params=cparams,
        cost_estimate=cost,
    )(patches, wm, bm, gm)
    return out[:m], src[:m]


def conv2d(x, w, b, *, stride=1, pad=1, relu=False, pool_input=False,
           max_tm=512, gamma=None):
    """Conv2d (NHWC). w: (kh, kw, Cin, Cout), b: (Cout,).
    pool_input=True applies the 2x2 max-pool to x as part of the im2col
    construction (fused with the gather by XLA).  gamma!=None additionally
    returns the L2Norm'd output (fused epilogue, requires relu=True)."""
    if pool_input:
        x = _pool2x2(x)
    kh, kw, cin, cout = w.shape
    patches, (n, ho, wo) = _im2col(x, kh, kw, stride, pad)
    wm = w.reshape(kh * kw * cin, cout)
    if gamma is None:
        out = _matmul(patches, wm, b, relu=relu, max_tm=max_tm)
        return out.reshape(n, ho, wo, cout)
    assert relu, "fused L2Norm epilogue assumes conv+ReLU (as in SSD vgg[22])"
    out, src = _matmul(patches, wm, b, relu=True, max_tm=max_tm, gamma=gamma)
    return out.reshape(n, ho, wo, cout), src.reshape(n, ho, wo, cout)


def fused_head_conv(x, per_source_heads, head_names):
    """Run ALL 24 multibox head convs on one source as a single lane-dense
    Pallas matmul: the im2col patches are shared, so the 24 (K, cout_h) weight
    matrices are concatenated along cout (padded to a multiple of 128) and the
    result columns are split afterwards.  Returns {name: (n, ho, wo, cout_h)}."""
    kh = kw = 3
    patches, (n, ho, wo) = _im2col(x, kh, kw, 1, 1)
    ws = [per_source_heads[nm][0] for nm in head_names]
    bs = [per_source_heads[nm][1] for nm in head_names]
    couts = [w.shape[-1] for w in ws]
    total = sum(couts)
    w_cat = jnp.concatenate(
        [w.reshape(kh * kw * w.shape[2], w.shape[3]) for w in ws], axis=1)
    b_cat = jnp.concatenate(bs)

    # pad fused cout up to a lane-dense multiple of 128 -> full-width stores
    cout_pad = _round_up(total, 128)
    if cout_pad != total:
        w_cat = jnp.pad(w_cat, ((0, 0), (0, cout_pad - total)))
        b_cat = jnp.pad(b_cat, (0, cout_pad - total))

    # tm=64 keeps >=2 grid blocks on the largest source (v7x dual-TC sharding)
    out = _matmul(patches, w_cat, b_cat, relu=False, max_tm=64)

    outs = {}
    off = 0
    for nm, c in zip(head_names, couts):
        outs[nm] = out[:, off:off + c].reshape(n, ho, wo, c)
        off += c
    return outs


# ----------------------------- model definition -----------------------------

NUM_CLASSES = 5
MBOX = [4, 6, 4]          # default boxes per cell, one per source (mini SSD)

HEAD_NAMES = (
    [f"loc_mu_{i}" for i in (1, 2, 3, 4)]
    + [f"loc_var_{i}" for i in (1, 2, 3, 4)]
    + [f"loc_pi_{i}" for i in (1, 2, 3, 4)]
    + [f"conf_mu_{i}" for i in (1, 2, 3, 4)]
    + [f"conf_var_{i}" for i in (1, 2, 3, 4)]
    + [f"conf_pi_{i}" for i in (1, 2, 3, 4)]
)


def _head_out_channels(name, mbox_k):
    if name.startswith("loc_"):
        return mbox_k * 4
    if name.startswith("conf_pi"):
        return mbox_k * 1
    return mbox_k * NUM_CLASSES   # conf_mu / conf_var


def _init_conv(key, kh, kw, cin, cout):
    w = jax.random.normal(key, (kh, kw, cin, cout), jnp.float32)
    w = w * (1.0 / math.sqrt(kh * kw * cin))
    b = jnp.zeros((cout,), jnp.float32)
    return w, b


def make_params():
    key = jax.random.PRNGKey(0)
    keys = iter(jax.random.split(key, 512))
    nxt = lambda: next(keys)

    p = {}
    # mini "VGG" backbone
    p["conv1"] = _init_conv(nxt(), 3, 3, 3, 16)
    p["conv2"] = _init_conv(nxt(), 3, 3, 16, 32)
    p["conv3"] = _init_conv(nxt(), 3, 3, 32, 32)    # L2Norm tap (analogue conv4_3)
    p["conv4"] = _init_conv(nxt(), 3, 3, 32, 64)    # analogue conv7 source
    p["l2norm_gamma"] = jnp.full((32,), 20.0, jnp.float32)   # L2Norm(512, 20) analogue
    # extras: 1x1 then 3x3 stride-2 ('S'), ReLU after each, tap at odd index
    p["extra0"] = _init_conv(nxt(), 1, 1, 64, 32)
    p["extra1"] = _init_conv(nxt(), 3, 3, 32, 64)
    # multibox heads: 24 families x 3 sources
    src_channels = [32, 64, 64]
    heads = {}
    for name in HEAD_NAMES:
        heads[name] = []
        for k, cin in enumerate(src_channels):
            cout = _head_out_channels(name, MBOX[k])
            heads[name].append(_init_conv(nxt(), 3, 3, cin, cout))
    p["head"] = heads
    return p


def make_priors(source_shapes):
    # TODO(synk): PriorBox geometry (aspect ratios / scales) is an external
    # module not provided; generate deterministic priors of the correct shape.
    num_priors = sum(MBOX[k] * h * w for k, (h, w) in enumerate(source_shapes))
    return jax.random.uniform(jax.random.PRNGKey(42), (num_priors, 4),
                              dtype=jnp.float32)


def ssd_gmm_forward(x_nchw, params, priors):
    """Mini SSD_GMM forward, phase='train'.  Input is NCHW (as in PyTorch)."""
    n = x_nchw.shape[0]
    x = jnp.transpose(x_nchw, (0, 2, 3, 1))        # NCHW -> NHWC

    sources = []
    # backbone up to the L2Norm tap; 2x2 pools are folded into the next conv
    x = conv2d(x, *params["conv1"], relu=True)
    x = conv2d(x, *params["conv2"], relu=True, pool_input=True)
    x, s1 = conv2d(x, *params["conv3"], relu=True, pool_input=True,
                   gamma=params["l2norm_gamma"])   # fused conv+ReLU+L2Norm
    sources.append(s1)
    # rest of backbone (continues from the UN-normalized conv3 output)
    x = conv2d(x, *params["conv4"], relu=True, pool_input=True)
    sources.append(x)
    # extras (ReLU applied to every extra layer; tap at odd index)
    x = conv2d(x, *params["extra0"], pad=0, relu=True)
    x = conv2d(x, *params["extra1"], stride=2, pad=1, relu=True)
    sources.append(x)

    # multibox heads: one fused lane-dense matmul per source (24 heads each),
    # then (permute(0,2,3,1) == identity in NHWC) -> flatten -> concat.
    outs = {name: [] for name in HEAD_NAMES}
    for k, s in enumerate(sources):
        per_src = {name: params["head"][name][k] for name in HEAD_NAMES}
        ys = fused_head_conv(s, per_src, HEAD_NAMES)
        for name in HEAD_NAMES:
            outs[name].append(ys[name].reshape(n, -1))
    cat = {name: jnp.concatenate(parts, axis=1) for name, parts in outs.items()}

    # phase == 'train' output tuple, matching the reference ordering exactly
    output = (priors,)
    for i in (1, 2, 3, 4):
        output += (
            cat[f"loc_mu_{i}"].reshape(n, -1, 4),
            cat[f"loc_var_{i}"].reshape(n, -1, 4),
            cat[f"loc_pi_{i}"].reshape(n, -1, 4),
        )
    for i in (1, 2, 3, 4):
        output += (
            cat[f"conf_mu_{i}"].reshape(n, -1, NUM_CLASSES),
            cat[f"conf_var_{i}"].reshape(n, -1, NUM_CLASSES),
            cat[f"conf_pi_{i}"].reshape(n, -1, 1),
        )
    return output


# --------------------------------- driver ---------------------------------

if __name__ == "__main__":
    params = make_params()

    # deterministic small input, NCHW like the PyTorch module
    x = jax.random.normal(jax.random.PRNGKey(0), (2, 3, 32, 32), jnp.float32)

    # source spatial shapes for this config: 8x8, 4x4, 2x2
    priors = make_priors([(8, 8), (4, 4), (2, 2)])

    fwd = jax.jit(functools.partial(ssd_gmm_forward, params=params,
                                    priors=priors))
    out = fwd(x)
    jax.block_until_ready(out)

    # light sanity checks on shapes (P = 4*64 + 6*16 + 4*4 = 368 priors)
    P = 368
    assert out[0].shape == (P, 4)
    assert out[1].shape == (2, P, 4)              # loc_mu_1
    assert out[13].shape == (2, P, NUM_CLASSES)   # conf_mu_1
    assert out[15].shape == (2, P, 1)             # conf_pi_1
    assert len(out) == 25
    assert all(bool(jnp.all(jnp.isfinite(o))) for o in out)

    print("KERNEL_OK")
</pallas_src>

<mosaic_0001>
module attributes {stable_mosaic.version = 11 : i64} {
  func.func @_matmul_bias_kernel(%arg0: i32, %arg1: memref<512x27xbf16, #tpu.memory_space<vmem>>, %arg2: memref<27x16xbf16, #tpu.memory_space<vmem>>, %arg3: memref<1x16xf32, #tpu.memory_space<vmem>>, %arg4: memref<512x16xf32, #tpu.memory_space<vmem>>) attributes {dimension_semantics = [#tpu.dimension_semantics<parallel>], iteration_bounds = array<i64: 4>, scalar_prefetch = 0 : i64, scratch_operands = 0 : i64, tpu.core_type = #tpu.core_type<tc>, window_params = [{transform_indices = @transform_0, window_bounds = array<i64: 512, 27>}, {pipeline_mode = #tpu.pipeline_mode<synchronous>, transform_indices = @transform_1, window_bounds = array<i64: 27, 16>}, {pipeline_mode = #tpu.pipeline_mode<synchronous>, transform_indices = @transform_2, window_bounds = array<i64: 1, 16>}, {transform_indices = @transform_3, window_bounds = array<i64: 512, 16>}]} {
    %c0 = arith.constant 0 : index
    %c0_0 = arith.constant 0 : index
    %0 = vector.load %arg1[%c0, %c0_0] : memref<512x27xbf16, #tpu.memory_space<vmem>>, vector<512x27xbf16>
    %c0_1 = arith.constant 0 : index
    %c0_2 = arith.constant 0 : index
    %1 = vector.load %arg2[%c0_1, %c0_2] : memref<27x16xbf16, #tpu.memory_space<vmem>>, vector<27x16xbf16>
    %cst = arith.constant dense<0.000000e+00> : vector<512x16xf32>
    %2 = tpu.matmul %0, %1, %cst {dimension_numbers = #tpu.dot_dimension_numbers<[1], [0], [0], [1], [0, 0, 1, 1], [], []>} : vector<512x27xbf16>, vector<27x16xbf16>, vector<512x16xf32> -> vector<512x16xf32>
    %c0_3 = arith.constant 0 : index
    %c0_4 = arith.constant 0 : index
    %3 = vector.load %arg3[%c0_3, %c0_4] : memref<1x16xf32, #tpu.memory_space<vmem>>, vector<1x16xf32>
    %4 = vector.broadcast %3 : vector<1x16xf32> to vector<512x16xf32>
    %5 = arith.addf %2, %4 : vector<512x16xf32>
    %cst_5 = arith.constant 0.000000e+00 : f32
    %6 = vector.broadcast %cst_5 : f32 to vector<512x16xf32>
    %7 = arith.maximumf %5, %6 : vector<512x16xf32>
    %c0_6 = arith.constant 0 : index
    %c0_7 = arith.constant 0 : index
    %8 = vector.load %arg4[%c0_6, %c0_7] : memref<512x16xf32, #tpu.memory_space<vmem>>, vector<512x16xf32>
    tpu.vector_store %arg4[%c0_6, %c0_7], %7 {strides = array<i32>} : memref<512x16xf32, #tpu.memory_space<vmem>>, vector<512x16xf32>,
    return
  }
  func.func @transform_0(%arg0: i32) -> (i32, i32) {
    %c0_i32 = arith.constant 0 : i32
    %c0_i32_0 = arith.constant 0 : i32
    return %arg0, %c0_i32 : i32, i32
  }
  func.func @transform_1(%arg0: i32) -> (i32, i32) {
    %c0_i32 = arith.constant 0 : i32
    %c0_i32_0 = arith.constant 0 : i32
    %c0_i32_1 = arith.constant 0 : i32
    return %c0_i32, %c0_i32_0 : i32, i32
  }
  func.func @transform_2(%arg0: i32) -> (i32, i32) {
    %c0_i32 = arith.constant 0 : i32
    %c0_i32_0 = arith.constant 0 : i32
    %c0_i32_1 = arith.constant 0 : i32
    return %c0_i32, %c0_i32_0 : i32, i32
  }
  func.func @transform_3(%arg0: i32) -> (i32, i32) {
    %c0_i32 = arith.constant 0 : i32
    %c0_i32_0 = arith.constant 0 : i32
    return %arg0, %c0_i32 : i32, i32
  }
}

module attributes {stable_mosaic.version = 11 : i64} {
  func.func @_matmul_bias_kernel(%arg0: i32, %arg1: memref<512x144xbf16, #tpu.memory_space<vmem>>, %arg2: memref<144x32xbf16, #tpu.memory_space<vmem>>, %arg3: memref<1x32xf32, #tpu.memory_space<vmem>>, %arg4: memref<512x32xf32, #tpu.memory_space<vmem>>) attributes {dimension_semantics = [#tpu.dimension_semantics<parallel>], iteration_bounds = array<i64: 1>, scalar_prefetch = 0 : i64, scratch_operands = 0 : i64, tpu.core_type = #tpu.core_type<tc>, window_params = [{transform_indices = @transform_0, window_bounds = array<i64: 512, 144>}, {pipeline_mode = #tpu.pipeline_mode<synchronous>, transform_indices = @transform_1, window_bounds = array<i64: 144, 32>}, {pipeline_mode = #tpu.pipeline_mode<synchronous>, transform_indices = @transform_2, window_bounds = array<i64: 1, 32>}, {transform_indices = @transform_3, window_bounds = array<i64: 512, 32>}]} {
    %c0 = arith.constant 0 : index
    %c0_0 = arith.constant 0 : index
    %0 = vector.load %arg1[%c0, %c0_0] : memref<512x144xbf16, #tpu.memory_space<vmem>>, vector<512x144xbf16>
    %c0_1 = arith.constant 0 : index
    %c0_2 = arith.constant 0 : index
    %1 = vector.load %arg2[%c0_1, %c0_2] : memref<144x32xbf16, #tpu.memory_space<vmem>>, vector<144x32xbf16>
    %cst = arith.constant dense<0.000000e+00> : vector<512x32xf32>
    %2 = tpu.matmul %0, %1, %cst {dimension_numbers = #tpu.dot_dimension_numbers<[1], [0], [0], [1], [0, 0, 1, 1], [], []>} : vector<512x144xbf16>, vector<144x32xbf16>, vector<512x32xf32> -> vector<512x32xf32>
    %c0_3 = arith.constant 0 : index
    %c0_4 = arith.constant 0 : index
    %3 = vector.load %arg3[%c0_3, %c0_4] : memref<1x32xf32, #tpu.memory_space<vmem>>, vector<1x32xf32>
    %4 = vector.broadcast %3 : vector<1x32xf32> to vector<512x32xf32>
    %5 = arith.addf %2, %4 : vector<512x32xf32>
    %cst_5 = arith.constant 0.000000e+00 : f32
    %6 = vector.broadcast %cst_5 : f32 to vector<512x32xf32>
    %7 = arith.maximumf %5, %6 : vector<512x32xf32>
    %c0_6 = arith.constant 0 : index
    %c0_7 = arith.constant 0 : index
    %8 = vector.load %arg4[%c0_6, %c0_7] : memref<512x32xf32, #tpu.memory_space<vmem>>, vector<512x32xf32>
    tpu.vector_store %arg4[%c0_6, %c0_7], %7 {strides = array<i32>} : memref<512x32xf32, #tpu.memory_space<vmem>>, vector<512x32xf32>,
    return
  }
  func.func @transform_0(%arg0: i32) -> (i32, i32) {
    %c0_i32 = arith.constant 0 : i32
    %c0_i32_0 = arith.constant 0 : i32
    return %arg0, %c0_i32 : i32, i32
  }
  func.func @transform_1(%arg0: i32) -> (i32, i32) {
    %c0_i32 = arith.constant 0 : i32
    %c0_i32_0 = arith.constant 0 : i32
    %c0_i32_1 = arith.constant 0 : i32
    return %c0_i32, %c0_i32_0 : i32, i32
  }
  func.func @transform_2(%arg0: i32) -> (i32, i32) {
    %c0_i32 = arith.constant 0 : i32
    %c0_i32_0 = arith.constant 0 : i32
    %c0_i32_1 = arith.constant 0 : i32
    return %c0_i32, %c0_i32_0 : i32, i32
  }
  func.func @transform_3(%arg0: i32) -> (i32, i32) {
    %c0_i32 = arith.constant 0 : i32
    %c0_i32_0 = arith.constant 0 : i32
    return %arg0, %c0_i32 : i32, i32
  }
}

module attributes {stable_mosaic.version = 11 : i64} {
  func.func @_matmul_bias_relu_l2norm_kernel(%arg0: i32, %arg1: memref<128x288xbf16, #tpu.memory_space<vmem>>, %arg2: memref<288x32xbf16, #tpu.memory_space<vmem>>, %arg3: memref<1x32xf32, #tpu.memory_space<vmem>>, %arg4: memref<1x32xf32, #tpu.memory_space<vmem>>, %arg5: memref<128x32xf32, #tpu.memory_space<vmem>>, %arg6: memref<128x32xf32, #tpu.memory_space<vmem>>) attributes {dimension_semantics = [#tpu.dimension_semantics<parallel>], iteration_bounds = array<i64: 1>, scalar_prefetch = 0 : i64, scratch_operands = 0 : i64, tpu.core_type = #tpu.core_type<tc>, window_params = [{transform_indices = @transform_0, window_bounds = array<i64: 128, 288>}, {pipeline_mode = #tpu.pipeline_mode<synchronous>, transform_indices = @transform_1, window_bounds = array<i64: 288, 32>}, {pipeline_mode = #tpu.pipeline_mode<synchronous>, transform_indices = @transform_2, window_bounds = array<i64: 1, 32>}, {pipeline_mode = #tpu.pipeline_mode<synchronous>, transform_indices = @transform_3, window_bounds = array<i64: 1, 32>}, {transform_indices = @transform_4, window_bounds = array<i64: 128, 32>}, {transform_indices = @transform_5, window_bounds = array<i64: 128, 32>}]} {
    %c0 = arith.constant 0 : index
    %c0_0 = arith.constant 0 : index
    %0 = vector.load %arg1[%c0, %c0_0] : memref<128x288xbf16, #tpu.memory_space<vmem>>, vector<128x288xbf16>
    %c0_1 = arith.constant 0 : index
    %c0_2 = arith.constant 0 : index
    %1 = vector.load %arg2[%c0_1, %c0_2] : memref<288x32xbf16, #tpu.memory_space<vmem>>, vector<288x32xbf16>
    %cst = arith.constant dense<0.000000e+00> : vector<128x32xf32>
    %2 = tpu.matmul %0, %1, %cst {dimension_numbers = #tpu.dot_dimension_numbers<[1], [0], [0], [1], [0, 0, 1, 1], [], []>} : vector<128x288xbf16>, vector<288x32xbf16>, vector<128x32xf32> -> vector<128x32xf32>
    %c0_3 = arith.constant 0 : index
    %c0_4 = arith.constant 0 : index
    %3 = vector.load %arg3[%c0_3, %c0_4] : memref<1x32xf32, #tpu.memory_space<vmem>>, vector<1x32xf32>
    %4 = vector.broadcast %3 : vector<1x32xf32> to vector<128x32xf32>
    %5 = arith.addf %2, %4 : vector<128x32xf32>
    %cst_5 = arith.constant 0.000000e+00 : f32
    %6 = vector.broadcast %cst_5 : f32 to vector<128x32xf32>
    %7 = arith.maximumf %5, %6 : vector<128x32xf32>
    %c0_6 = arith.constant 0 : index
    %c0_7 = arith.constant 0 : index
    %8 = vector.load %arg5[%c0_6, %c0_7] : memref<128x32xf32, #tpu.memory_space<vmem>>, vector<128x32xf32>
    tpu.vector_store %arg5[%c0_6, %c0_7], %7 {strides = array<i32>} : memref<128x32xf32, #tpu.memory_space<vmem>>, vector<128x32xf32>,
    %9 = arith.mulf %7, %7 : vector<128x32xf32>
    %cst_8 = arith.constant dense<0.000000e+00> : vector<128xf32>
    %10 = vector.multi_reduction <add>, %9, %cst_8 [1] : vector<128x32xf32> to vector<128xf32>
    %11 = vector.shape_cast %10 : vector<128xf32> to vector<128x1xf32>
    %12 = math.sqrt %11 : vector<128x1xf32>
    %cst_9 = arith.constant 1.000000e-10 : f32
    %13 = vector.broadcast %cst_9 : f32 to vector<128x1xf32>
    %14 = arith.addf %12, %13 : vector<128x1xf32>
    %c0_10 = arith.constant 0 : index
    %c0_11 = arith.constant 0 : index
    %15 = vector.load %arg4[%c0_10, %c0_11] : memref<1x32xf32, #tpu.memory_space<vmem>>, vector<1x32xf32>
    %16 = tpu.reciprocal %14 {approx = true} : vector<128x1xf32> -> vector<128x1xf32>
    %17 = vector.broadcast %16 : vector<128x1xf32> to vector<128x32xf32>
    %18 = arith.mulf %7, %17 : vector<128x32xf32>
    %19 = vector.broadcast %15 : vector<1x32xf32> to vector<128x32xf32>
    %20 = arith.mulf %19, %18 : vector<128x32xf32>
    %c0_12 = arith.constant 0 : index
    %c0_13 = arith.constant 0 : index
    %21 = vector.load %arg6[%c0_12, %c0_13] : memref<128x32xf32, #tpu.memory_space<vmem>>, vector<128x32xf32>
    tpu.vector_store %arg6[%c0_12, %c0_13], %20 {strides = array<i32>} : memref<128x32xf32, #tpu.memory_space<vmem>>, vector<128x32xf32>,
    return
  }
  func.func @transform_0(%arg0: i32) -> (i32, i32) {
    %c0_i32 = arith.constant 0 : i32
    %c0_i32_0 = arith.constant 0 : i32
    return %arg0, %c0_i32 : i32, i32
  }
  func.func @transform_1(%arg0: i32) -> (i32, i32) {
    %c0_i32 = arith.constant 0 : i32
    %c0_i32_0 = arith.constant 0 : i32
    %c0_i32_1 = arith.constant 0 : i32
    return %c0_i32, %c0_i32_0 : i32, i32
  }
  func.func @transform_2(%arg0: i32) -> (i32, i32) {
    %c0_i32 = arith.constant 0 : i32
    %c0_i32_0 = arith.constant 0 : i32
    %c0_i32_1 = arith.constant 0 : i32
    return %c0_i32, %c0_i32_0 : i32, i32
  }
  func.func @transform_3(%arg0: i32) -> (i32, i32) {
    %c0_i32 = arith.constant 0 : i32
    %c0_i32_0 = arith.constant 0 : i32
    %c0_i32_1 = arith.constant 0 : i32
    return %c0_i32, %c0_i32_0 : i32, i32
  }
  func.func @transform_4(%arg0: i32) -> (i32, i32) {
    %c0_i32 = arith.constant 0 : i32
    %c0_i32_0 = arith.constant 0 : i32
    return %arg0, %c0_i32 : i32, i32
  }
  func.func @transform_5(%arg0: i32) -> (i32, i32) {
    %c0_i32 = arith.constant 0 : i32
    %c0_i32_0 = arith.constant 0 : i32
    return %arg0, %c0_i32 : i32, i32
  }
}

module attributes {stable_mosaic.version = 11 : i64} {
  func.func @_matmul_bias_kernel(%arg0: i32, %arg1: memref<64x288xbf16, #tpu.memory_space<vmem>>, %arg2: memref<288x384xbf16, #tpu.memory_space<vmem>>, %arg3: memref<1x384xf32, #tpu.memory_space<vmem>>, %arg4: memref<64x384xf32, #tpu.memory_space<vmem>>) attributes {dimension_semantics = [#tpu.dimension_semantics<parallel>], iteration_bounds = array<i64: 2>, scalar_prefetch = 0 : i64, scratch_operands = 0 : i64, tpu.core_type = #tpu.core_type<tc>, window_params = [{transform_indices = @transform_0, window_bounds = array<i64: 64, 288>}, {pipeline_mode = #tpu.pipeline_mode<synchronous>, transform_indices = @transform_1, window_bounds = array<i64: 288, 384>}, {pipeline_mode = #tpu.pipeline_mode<synchronous>, transform_indices = @transform_2, window_bounds = array<i64: 1, 384>}, {transform_indices = @transform_3, window_bounds = array<i64: 64, 384>}]} {
    %c0 = arith.constant 0 : index
    %c0_0 = arith.constant 0 : index
    %0 = vector.load %arg1[%c0, %c0_0] : memref<64x288xbf16, #tpu.memory_space<vmem>>, vector<64x288xbf16>
    %c0_1 = arith.constant 0 : index
    %c0_2 = arith.constant 0 : index
    %1 = vector.load %arg2[%c0_1, %c0_2] : memref<288x384xbf16, #tpu.memory_space<vmem>>, vector<288x384xbf16>
    %cst = arith.constant dense<0.000000e+00> : vector<64x384xf32>
    %2 = tpu.matmul %0, %1, %cst {dimension_numbers = #tpu.dot_dimension_numbers<[1], [0], [0], [1], [0, 0, 1, 1], [], []>} : vector<64x288xbf16>, vector<288x384xbf16>, vector<64x384xf32> -> vector<64x384xf32>
    %c0_3 = arith.constant 0 : index
    %c0_4 = arith.constant 0 : index
    %3 = vector.load %arg3[%c0_3, %c0_4] : memref<1x384xf32, #tpu.memory_space<vmem>>, vector<1x384xf32>
    %4 = vector.broadcast %3 : vector<1x384xf32> to vector<64x384xf32>
    %5 = arith.addf %2, %4 : vector<64x384xf32>
    %c0_5 = arith.constant 0 : index
    %c0_6 = arith.constant 0 : index
    %6 = vector.load %arg4[%c0_5, %c0_6] : memref<64x384xf32, #tpu.memory_space<vmem>>, vector<64x384xf32>
    tpu.vector_store %arg4[%c0_5, %c0_6], %5 {strides = array<i32>} : memref<64x384xf32, #tpu.memory_space<vmem>>, vector<64x384xf32>,
    return
  }
  func.func @transform_0(%arg0: i32) -> (i32, i32) {
    %c0_i32 = arith.constant 0 : i32
    %c0_i32_0 = arith.constant 0 : i32
    return %arg0, %c0_i32 : i32, i32
  }
  func.func @transform_1(%arg0: i32) -> (i32, i32) {
    %c0_i32 = arith.constant 0 : i32
    %c0_i32_0 = arith.constant 0 : i32
    %c0_i32_1 = arith.constant 0 : i32
    return %c0_i32, %c0_i32_0 : i32, i32
  }
  func.func @transform_2(%arg0: i32) -> (i32, i32) {
    %c0_i32 = arith.constant 0 : i32
    %c0_i32_0 = arith.constant 0 : i32
    %c0_i32_1 = arith.constant 0 : i32
    return %c0_i32, %c0_i32_0 : i32, i32
  }
  func.func @transform_3(%arg0: i32) -> (i32, i32) {
    %c0_i32 = arith.constant 0 : i32
    %c0_i32_0 = arith.constant 0 : i32
    return %arg0, %c0_i32 : i32, i32
  }
}

module attributes {stable_mosaic.version = 11 : i64} {
  func.func @_matmul_bias_kernel(%arg0: i32, %arg1: memref<32x288xbf16, #tpu.memory_space<vmem>>, %arg2: memref<288x64xbf16, #tpu.memory_space<vmem>>, %arg3: memref<1x64xf32, #tpu.memory_space<vmem>>, %arg4: memref<32x64xf32, #tpu.memory_space<vmem>>) attributes {dimension_semantics = [#tpu.dimension_semantics<parallel>], iteration_bounds = array<i64: 1>, scalar_prefetch = 0 : i64, scratch_operands = 0 : i64, tpu.core_type = #tpu.core_type<tc>, window_params = [{transform_indices = @transform_0, window_bounds = array<i64: 32, 288>}, {pipeline_mode = #tpu.pipeline_mode<synchronous>, transform_indices = @transform_1, window_bounds = array<i64: 288, 64>}, {pipeline_mode = #tpu.pipeline_mode<synchronous>, transform_indices = @transform_2, window_bounds = array<i64: 1, 64>}, {transform_indices = @transform_3, window_bounds = array<i64: 32, 64>}]} {
    %c0 = arith.constant 0 : index
    %c0_0 = arith.constant 0 : index
    %0 = vector.load %arg1[%c0, %c0_0] : memref<32x288xbf16, #tpu.memory_space<vmem>>, vector<32x288xbf16>
    %c0_1 = arith.constant 0 : index
    %c0_2 = arith.constant 0 : index
    %1 = vector.load %arg2[%c0_1, %c0_2] : memref<288x64xbf16, #tpu.memory_space<vmem>>, vector<288x64xbf16>
    %cst = arith.constant dense<0.000000e+00> : vector<32x64xf32>
    %2 = tpu.matmul %0, %1, %cst {dimension_numbers = #tpu.dot_dimension_numbers<[1], [0], [0], [1], [0, 0, 1, 1], [], []>} : vector<32x288xbf16>, vector<288x64xbf16>, vector<32x64xf32> -> vector<32x64xf32>
    %c0_3 = arith.constant 0 : index
    %c0_4 = arith.constant 0 : index
    %3 = vector.load %arg3[%c0_3, %c0_4] : memref<1x64xf32, #tpu.memory_space<vmem>>, vector<1x64xf32>
    %4 = vector.broadcast %3 : vector<1x64xf32> to vector<32x64xf32>
    %5 = arith.addf %2, %4 : vector<32x64xf32>
    %cst_5 = arith.constant 0.000000e+00 : f32
    %6 = vector.broadcast %cst_5 : f32 to vector<32x64xf32>
    %7 = arith.maximumf %5, %6 : vector<32x64xf32>
    %c0_6 = arith.constant 0 : index
    %c0_7 = arith.constant 0 : index
    %8 = vector.load %arg4[%c0_6, %c0_7] : memref<32x64xf32, #tpu.memory_space<vmem>>, vector<32x64xf32>
    tpu.vector_store %arg4[%c0_6, %c0_7], %7 {strides = array<i32>} : memref<32x64xf32, #tpu.memory_space<vmem>>, vector<32x64xf32>,
    return
  }
  func.func @transform_0(%arg0: i32) -> (i32, i32) {
    %c0_i32 = arith.constant 0 : i32
    %c0_i32_0 = arith.constant 0 : i32
    return %arg0, %c0_i32 : i32, i32
  }
  func.func @transform_1(%arg0: i32) -> (i32, i32) {
    %c0_i32 = arith.constant 0 : i32
    %c0_i32_0 = arith.constant 0 : i32
    %c0_i32_1 = arith.constant 0 : i32
    return %c0_i32, %c0_i32_0 : i32, i32
  }
  func.func @transform_2(%arg0: i32) -> (i32, i32) {
    %c0_i32 = arith.constant 0 : i32
    %c0_i32_0 = arith.constant 0 : i32
    %c0_i32_1 = arith.constant 0 : i32
    return %c0_i32, %c0_i32_0 : i32, i32
  }
  func.func @transform_3(%arg0: i32) -> (i32, i32) {
    %c0_i32 = arith.constant 0 : i32
    %c0_i32_0 = arith.constant 0 : i32
    return %arg0, %c0_i32 : i32, i32
  }
}

module attributes {stable_mosaic.version = 11 : i64} {
  func.func @_matmul_bias_kernel(%arg0: i32, %arg1: memref<32x576xbf16, #tpu.memory_space<vmem>>, %arg2: memref<576x640xbf16, #tpu.memory_space<vmem>>, %arg3: memref<1x640xf32, #tpu.memory_space<vmem>>, %arg4: memref<32x640xf32, #tpu.memory_space<vmem>>) attributes {dimension_semantics = [#tpu.dimension_semantics<parallel>], iteration_bounds = array<i64: 1>, scalar_prefetch = 0 : i64, scratch_operands = 0 : i64, tpu.core_type = #tpu.core_type<tc>, window_params = [{transform_indices = @transform_0, window_bounds = array<i64: 32, 576>}, {pipeline_mode = #tpu.pipeline_mode<synchronous>, transform_indices = @transform_1, window_bounds = array<i64: 576, 640>}, {pipeline_mode = #tpu.pipeline_mode<synchronous>, transform_indices = @transform_2, window_bounds = array<i64: 1, 640>}, {transform_indices = @transform_3, window_bounds = array<i64: 32, 640>}]} {
    %c0 = arith.constant 0 : index
    %c0_0 = arith.constant 0 : index
    %0 = vector.load %arg1[%c0, %c0_0] : memref<32x576xbf16, #tpu.memory_space<vmem>>, vector<32x576xbf16>
    %c0_1 = arith.constant 0 : index
    %c0_2 = arith.constant 0 : index
    %1 = vector.load %arg2[%c0_1, %c0_2] : memref<576x640xbf16, #tpu.memory_space<vmem>>, vector<576x640xbf16>
    %cst = arith.constant dense<0.000000e+00> : vector<32x640xf32>
    %2 = tpu.matmul %0, %1, %cst {dimension_numbers = #tpu.dot_dimension_numbers<[1], [0], [0], [1], [0, 0, 1, 1], [], []>} : vector<32x576xbf16>, vector<576x640xbf16>, vector<32x640xf32> -> vector<32x640xf32>
    %c0_3 = arith.constant 0 : index
    %c0_4 = arith.constant 0 : index
    %3 = vector.load %arg3[%c0_3, %c0_4] : memref<1x640xf32, #tpu.memory_space<vmem>>, vector<1x640xf32>
    %4 = vector.broadcast %3 : vector<1x640xf32> to vector<32x640xf32>
    %5 = arith.addf %2, %4 : vector<32x640xf32>
    %c0_5 = arith.constant 0 : index
    %c0_6 = arith.constant 0 : index
    %6 = vector.load %arg4[%c0_5, %c0_6] : memref<32x640xf32, #tpu.memory_space<vmem>>, vector<32x640xf32>
    tpu.vector_store %arg4[%c0_5, %c0_6], %5 {strides = array<i32>} : memref<32x640xf32, #tpu.memory_space<vmem>>, vector<32x640xf32>,
    return
  }
  func.func @transform_0(%arg0: i32) -> (i32, i32) {
    %c0_i32 = arith.constant 0 : i32
    %c0_i32_0 = arith.constant 0 : i32
    return %arg0, %c0_i32 : i32, i32
  }
  func.func @transform_1(%arg0: i32) -> (i32, i32) {
    %c0_i32 = arith.constant 0 : i32
    %c0_i32_0 = arith.constant 0 : i32
    %c0_i32_1 = arith.constant 0 : i32
    return %c0_i32, %c0_i32_0 : i32, i32
  }
  func.func @transform_2(%arg0: i32) -> (i32, i32) {
    %c0_i32 = arith.constant 0 : i32
    %c0_i32_0 = arith.constant 0 : i32
    %c0_i32_1 = arith.constant 0 : i32
    return %c0_i32, %c0_i32_0 : i32, i32
  }
  func.func @transform_3(%arg0: i32) -> (i32, i32) {
    %c0_i32 = arith.constant 0 : i32
    %c0_i32_0 = arith.constant 0 : i32
    return %arg0, %c0_i32 : i32, i32
  }
}

module attributes {stable_mosaic.version = 11 : i64} {
  func.func @_matmul_bias_kernel(%arg0: i32, %arg1: memref<32x64xbf16, #tpu.memory_space<vmem>>, %arg2: memref<64x32xbf16, #tpu.memory_space<vmem>>, %arg3: memref<1x32xf32, #tpu.memory_space<vmem>>, %arg4: memref<32x32xf32, #tpu.memory_space<vmem>>) attributes {dimension_semantics = [#tpu.dimension_semantics<parallel>], iteration_bounds = array<i64: 1>, scalar_prefetch = 0 : i64, scratch_operands = 0 : i64, tpu.core_type = #tpu.core_type<tc>, window_params = [{transform_indices = @transform_0, window_bounds = array<i64: 32, 64>}, {pipeline_mode = #tpu.pipeline_mode<synchronous>, transform_indices = @transform_1, window_bounds = array<i64: 64, 32>}, {pipeline_mode = #tpu.pipeline_mode<synchronous>, transform_indices = @transform_2, window_bounds = array<i64: 1, 32>}, {transform_indices = @transform_3, window_bounds = array<i64: 32, 32>}]} {
    %c0 = arith.constant 0 : index
    %c0_0 = arith.constant 0 : index
    %0 = vector.load %arg1[%c0, %c0_0] : memref<32x64xbf16, #tpu.memory_space<vmem>>, vector<32x64xbf16>
    %c0_1 = arith.constant 0 : index
    %c0_2 = arith.constant 0 : index
    %1 = vector.load %arg2[%c0_1, %c0_2] : memref<64x32xbf16, #tpu.memory_space<vmem>>, vector<64x32xbf16>
    %cst = arith.constant dense<0.000000e+00> : vector<32x32xf32>
    %2 = tpu.matmul %0, %1, %cst {dimension_numbers = #tpu.dot_dimension_numbers<[1], [0], [0], [1], [0, 0, 1, 1], [], []>} : vector<32x64xbf16>, vector<64x32xbf16>, vector<32x32xf32> -> vector<32x32xf32>
    %c0_3 = arith.constant 0 : index
    %c0_4 = arith.constant 0 : index
    %3 = vector.load %arg3[%c0_3, %c0_4] : memref<1x32xf32, #tpu.memory_space<vmem>>, vector<1x32xf32>
    %4 = vector.broadcast %3 : vector<1x32xf32> to vector<32x32xf32>
    %5 = arith.addf %2, %4 : vector<32x32xf32>
    %cst_5 = arith.constant 0.000000e+00 : f32
    %6 = vector.broadcast %cst_5 : f32 to vector<32x32xf32>
    %7 = arith.maximumf %5, %6 : vector<32x32xf32>
    %c0_6 = arith.constant 0 : index
    %c0_7 = arith.constant 0 : index
    %8 = vector.load %arg4[%c0_6, %c0_7] : memref<32x32xf32, #tpu.memory_space<vmem>>, vector<32x32xf32>
    tpu.vector_store %arg4[%c0_6, %c0_7], %7 {strides = array<i32>} : memref<32x32xf32, #tpu.memory_space<vmem>>, vector<32x32xf32>,
    return
  }
  func.func @transform_0(%arg0: i32) -> (i32, i32) {
    %c0_i32 = arith.constant 0 : i32
    %c0_i32_0 = arith.constant 0 : i32
    return %arg0, %c0_i32 : i32, i32
  }
  func.func @transform_1(%arg0: i32) -> (i32, i32) {
    %c0_i32 = arith.constant 0 : i32
    %c0_i32_0 = arith.constant 0 : i32
    %c0_i32_1 = arith.constant 0 : i32
    return %c0_i32, %c0_i32_0 : i32, i32
  }
  func.func @transform_2(%arg0: i32) -> (i32, i32) {
    %c0_i32 = arith.constant 0 : i32
    %c0_i32_0 = arith.constant 0 : i32
    %c0_i32_1 = arith.constant 0 : i32
    return %c0_i32, %c0_i32_0 : i32, i32
  }
  func.func @transform_3(%arg0: i32) -> (i32, i32) {
    %c0_i32 = arith.constant 0 : i32
    %c0_i32_0 = arith.constant 0 : i32
    return %arg0, %c0_i32 : i32, i32
  }
}

module attributes {stable_mosaic.version = 11 : i64} {
  func.func @_matmul_bias_kernel(%arg0: i32, %arg1: memref<8x288xbf16, #tpu.memory_space<vmem>>, %arg2: memref<288x64xbf16, #tpu.memory_space<vmem>>, %arg3: memref<1x64xf32, #tpu.memory_space<vmem>>, %arg4: memref<8x64xf32, #tpu.memory_space<vmem>>) attributes {dimension_semantics = [#tpu.dimension_semantics<parallel>], iteration_bounds = array<i64: 1>, scalar_prefetch = 0 : i64, scratch_operands = 0 : i64, tpu.core_type = #tpu.core_type<tc>, window_params = [{transform_indices = @transform_0, window_bounds = array<i64: 8, 288>}, {pipeline_mode = #tpu.pipeline_mode<synchronous>, transform_indices = @transform_1, window_bounds = array<i64: 288, 64>}, {pipeline_mode = #tpu.pipeline_mode<synchronous>, transform_indices = @transform_2, window_bounds = array<i64: 1, 64>}, {transform_indices = @transform_3, window_bounds = array<i64: 8, 64>}]} {
    %c0 = arith.constant 0 : index
    %c0_0 = arith.constant 0 : index
    %0 = vector.load %arg1[%c0, %c0_0] : memref<8x288xbf16, #tpu.memory_space<vmem>>, vector<8x288xbf16>
    %c0_1 = arith.constant 0 : index
    %c0_2 = arith.constant 0 : index
    %1 = vector.load %arg2[%c0_1, %c0_2] : memref<288x64xbf16, #tpu.memory_space<vmem>>, vector<288x64xbf16>
    %cst = arith.constant dense<0.000000e+00> : vector<8x64xf32>
    %2 = tpu.matmul %0, %1, %cst {dimension_numbers = #tpu.dot_dimension_numbers<[1], [0], [0], [1], [0, 0, 1, 1], [], []>} : vector<8x288xbf16>, vector<288x64xbf16>, vector<8x64xf32> -> vector<8x64xf32>
    %c0_3 = arith.constant 0 : index
    %c0_4 = arith.constant 0 : index
    %3 = vector.load %arg3[%c0_3, %c0_4] : memref<1x64xf32, #tpu.memory_space<vmem>>, vector<1x64xf32>
    %4 = vector.broadcast %3 : vector<1x64xf32> to vector<8x64xf32>
    %5 = arith.addf %2, %4 : vector<8x64xf32>
    %cst_5 = arith.constant 0.000000e+00 : f32
    %6 = vector.broadcast %cst_5 : f32 to vector<8x64xf32>
    %7 = arith.maximumf %5, %6 : vector<8x64xf32>
    %c0_6 = arith.constant 0 : index
    %c0_7 = arith.constant 0 : index
    %8 = vector.load %arg4[%c0_6, %c0_7] : memref<8x64xf32, #tpu.memory_space<vmem>>, vector<8x64xf32>
    tpu.vector_store %arg4[%c0_6, %c0_7], %7 {strides = array<i32>} : memref<8x64xf32, #tpu.memory_space<vmem>>, vector<8x64xf32>,
    return
  }
  func.func @transform_0(%arg0: i32) -> (i32, i32) {
    %c0_i32 = arith.constant 0 : i32
    %c0_i32_0 = arith.constant 0 : i32
    return %arg0, %c0_i32 : i32, i32
  }
  func.func @transform_1(%arg0: i32) -> (i32, i32) {
    %c0_i32 = arith.constant 0 : i32
    %c0_i32_0 = arith.constant 0 : i32
    %c0_i32_1 = arith.constant 0 : i32
    return %c0_i32, %c0_i32_0 : i32, i32
  }
  func.func @transform_2(%arg0: i32) -> (i32, i32) {
    %c0_i32 = arith.constant 0 : i32
    %c0_i32_0 = arith.constant 0 : i32
    %c0_i32_1 = arith.constant 0 : i32
    return %c0_i32, %c0_i32_0 : i32, i32
  }
  func.func @transform_3(%arg0: i32) -> (i32, i32) {
    %c0_i32 = arith.constant 0 : i32
    %c0_i32_0 = arith.constant 0 : i32
    return %arg0, %c0_i32 : i32, i32
  }
}

module attributes {stable_mosaic.version = 11 : i64} {
  func.func @_matmul_bias_kernel(%arg0: i32, %arg1: memref<8x576xbf16, #tpu.memory_space<vmem>>, %arg2: memref<576x384xbf16, #tpu.memory_space<vmem>>, %arg3: memref<1x384xf32, #tpu.memory_space<vmem>>, %arg4: memref<8x384xf32, #tpu.memory_space<vmem>>) attributes {dimension_semantics = [#tpu.dimension_semantics<parallel>], iteration_bounds = array<i64: 1>, scalar_prefetch = 0 : i64, scratch_operands = 0 : i64, tpu.core_type = #tpu.core_type<tc>, window_params = [{transform_indices = @transform_0, window_bounds = array<i64: 8, 576>}, {pipeline_mode = #tpu.pipeline_mode<synchronous>, transform_indices = @transform_1, window_bounds = array<i64: 576, 384>}, {pipeline_mode = #tpu.pipeline_mode<synchronous>, transform_indices = @transform_2, window_bounds = array<i64: 1, 384>}, {transform_indices = @transform_3, window_bounds = array<i64: 8, 384>}]} {
    %c0 = arith.constant 0 : index
    %c0_0 = arith.constant 0 : index
    %0 = vector.load %arg1[%c0, %c0_0] : memref<8x576xbf16, #tpu.memory_space<vmem>>, vector<8x576xbf16>
    %c0_1 = arith.constant 0 : index
    %c0_2 = arith.constant 0 : index
    %1 = vector.load %arg2[%c0_1, %c0_2] : memref<576x384xbf16, #tpu.memory_space<vmem>>, vector<576x384xbf16>
    %cst = arith.constant dense<0.000000e+00> : vector<8x384xf32>
    %2 = tpu.matmul %0, %1, %cst {dimension_numbers = #tpu.dot_dimension_numbers<[1], [0], [0], [1], [0, 0, 1, 1], [], []>} : vector<8x576xbf16>, vector<576x384xbf16>, vector<8x384xf32> -> vector<8x384xf32>
    %c0_3 = arith.constant 0 : index
    %c0_4 = arith.constant 0 : index
    %3 = vector.load %arg3[%c0_3, %c0_4] : memref<1x384xf32, #tpu.memory_space<vmem>>, vector<1x384xf32>
    %4 = vector.broadcast %3 : vector<1x384xf32> to vector<8x384xf32>
    %5 = arith.addf %2, %4 : vector<8x384xf32>
    %c0_5 = arith.constant 0 : index
    %c0_6 = arith.constant 0 : index
    %6 = vector.load %arg4[%c0_5, %c0_6] : memref<8x384xf32, #tpu.memory_space<vmem>>, vector<8x384xf32>
    tpu.vector_store %arg4[%c0_5, %c0_6], %5 {strides = array<i32>} : memref<8x384xf32, #tpu.memory_space<vmem>>, vector<8x384xf32>,
    return
  }
  func.func @transform_0(%arg0: i32) -> (i32, i32) {
    %c0_i32 = arith.constant 0 : i32
    %c0_i32_0 = arith.constant 0 : i32
    return %arg0, %c0_i32 : i32, i32
  }
  func.func @transform_1(%arg0: i32) -> (i32, i32) {
    %c0_i32 = arith.constant 0 : i32
    %c0_i32_0 = arith.constant 0 : i32
    %c0_i32_1 = arith.constant 0 : i32
    return %c0_i32, %c0_i32_0 : i32, i32
  }
  func.func @transform_2(%arg0: i32) -> (i32, i32) {
    %c0_i32 = arith.constant 0 : i32
    %c0_i32_0 = arith.constant 0 : i32
    %c0_i32_1 = arith.constant 0 : i32
    return %c0_i32, %c0_i32_0 : i32, i32
  }
  func.func @transform_3(%arg0: i32) -> (i32, i32) {
    %c0_i32 = arith.constant 0 : i32
    %c0_i32_0 = arith.constant 0 : i32
    return %arg0, %c0_i32 : i32, i32
  }
}

</mosaic_0001>

<llo_original>
// kernel: ssd_gmm_forward.9
$region0: #{ssd_gmm_forward.9}
  #allocation0 [shape = 'u32[]', space=smem, size = 0x4, offset = 0x4, fixed_abs, tag = 'smem constant byte address 0x4 - core index']
  #allocation1 [shape = 'u32[144,128]{1,0:T(1,128)}', space=vmem, size = 0x12000, scoped, tag = 'internal scratch']
  %s0 = inlined_call_operand.vmem [shape: bf16[2048,27], index: 0, kind: input, shape index: {}]
  %s1 = inlined_call_operand.vmem [shape: bf16[27,16], index: 1, kind: input, shape index: {}]
  %s2 = inlined_call_operand.vmem [shape: f32[1,16], index: 2, kind: input, shape index: {}]
  %s3 = inlined_call_operand.vmem [shape: f32[2048,16], index: 3, kind: output, shape index: {}]
  %s4 = sld [smem:[#allocation0]]
  $region45: #{ssd_gmm_forward.9} parent=0
    _
  %s6 = ssub.s32 1, %s4
  %s7 = scalar_select 0, %s6, %s4
  loop: start=0, step=1, limit=6
  $region2: #{ssd_gmm_forward.9} parent=0 // loop_pre_header
    _
  $region3: #{ssd_gmm_forward.9} parent=0 // loop_header
    %s9 = sphi 0, %s13
    %p10 = scmp.ge.s32.totalorder %s9, 6
    %s19 = sphi 0, %s21
    %s22 = sphi 0, %s19
    %s23 = sphi 0, %s22
    %s39 = sphi 0, %s23
    %s43 = sphi 0, %s43
    %s45 = sphi 0, %s43
    %s46 = sphi 0, %s45
    %s60 = sphi 0, %s46
    %s64 = sphi 0, %s64
    %s66 = sphi 0, %s64
    %s67 = sphi 0, %s66
    %s81 = sphi 0, %s67
    %s87 = sphi 0, %s89
    %s90 = sphi 0, %s87
    %s91 = sphi 0, %s90
    %s107 = sphi 0, %s91
  $region4: #{ssd_gmm_forward.9} parent=0 // loop_header_branch
    %12 = sbr.rel (%p10) target = $region8
  $region5: #{ssd_gmm_forward.9} parent=0 // loop_body
    %s14 = ssub.s32 %s9, 1
    %s15 = ssub.s32 %s9, 2
    %s16 = sadd.s32 %s9, 1
    %s17 = ssub.s32 %s9, %s16
    %p18 = scmp.eq.s32.totalorder %s17, 0
    %s20 = sadd.s32 %s19, 1
    %s21 = scalar_select %p18, %s19, %s20
    %p24 = pneg %p18
    %p25 = scmp.eq.s32.totalorder %s9, 3
    %p26 = por %p24, %p25
    %p27 = scmp.ne.s32.totalorder %s19, %s22
    %p28 = scmp.eq.s32.totalorder %s9, 0
    %p29 = por %p27, %p28
    %p30 = scmp.ne.s32.totalorder %s19, %s22
    %p31 = scmp.eq.s32.totalorder %s14, 3
    %p32 = por %p30, %p31
    %p33 = scmp.ne.s32.totalorder %s22, %s23
    %p34 = scmp.eq.s32.totalorder %s14, 0
    %p35 = por %p33, %p34
    %p36 = scmp.ne.s32.totalorder %s22, %s23
    %p37 = scmp.eq.s32.totalorder %s15, 3
    %p38 = por %p36, %p37
    %p40 = scmp.ne.s32.totalorder %s23, %s39
    %p41 = scmp.eq.s32.totalorder %s15, 0
    %p42 = por %p40, %p41
    %s44 = sadd.s32 %s43, 1
    %p47 = scmp.eq.s32.totalorder %s9, 3
    %p48 = scmp.ne.s32.totalorder %s43, %s45
    %p49 = scmp.eq.s32.totalorder %s9, 0
    %p50 = por %p48, %p49
    %p51 = scmp.ne.s32.totalorder %s43, %s45
    %p52 = scmp.eq.s32.totalorder %s14, 3
    %p53 = por %p51, %p52
    %p54 = scmp.ne.s32.totalorder %s45, %s46
    %p55 = scmp.eq.s32.totalorder %s14, 0
    %p56 = por %p54, %p55
    %p57 = scmp.ne.s32.totalorder %s45, %s46
    %p58 = scmp.eq.s32.totalorder %s15, 3
    %p59 = por %p57, %p58
    %p61 = scmp.ne.s32.totalorder %s46, %s60
    %p62 = scmp.eq.s32.totalorder %s15, 0
    %p63 = por %p61, %p62
    %s65 = sadd.s32 %s64, 1
    %p68 = scmp.eq.s32.totalorder %s9, 3
    %p69 = scmp.ne.s32.totalorder %s64, %s66
    %p70 = scmp.eq.s32.totalorder %s9, 0
    %p71 = por %p69, %p70
    %p72 = scmp.ne.s32.totalorder %s64, %s66
    %p73 = scmp.eq.s32.totalorder %s14, 3
    %p74 = por %p72, %p73
    %p75 = scmp.ne.s32.totalorder %s66, %s67
    %p76 = scmp.eq.s32.totalorder %s14, 0
    %p77 = por %p75, %p76
    %p78 = scmp.ne.s32.totalorder %s66, %s67
    %p79 = scmp.eq.s32.totalorder %s15, 3
    %p80 = por %p78, %p79
    %p82 = scmp.ne.s32.totalorder %s67, %s81
    %p83 = scmp.eq.s32.totalorder %s15, 0
    %p84 = por %p82, %p83
    %s85 = ssub.s32 %s9, %s16
    %p86 = scmp.eq.s32.totalorder %s85, 0
    %s88 = sadd.s32 %s87, 1
    %s89 = scalar_select %p86, %s87, %s88
    %p92 = pneg %p86
    %p93 = scmp.eq.s32.totalorder %s9, 3
    %p94 = por %p92, %p93
    %p95 = scmp.ne.s32.totalorder %s87, %s90
    %p96 = scmp.eq.s32.totalorder %s9, 0
    %p97 = por %p95, %p96
    %p98 = scmp.ne.s32.totalorder %s87, %s90
    %p99 = scmp.eq.s32.totalorder %s14, 3
    %p100 = por %p98, %p99
    %p101 = scmp.ne.s32.totalorder %s90, %s91
    %p102 = scmp.eq.s32.totalorder %s14, 0
    %p103 = por %p101, %p102
    %p104 = scmp.ne.s32.totalorder %s90, %s91
    %p105 = scmp.eq.s32.totalorder %s15, 3
    %p106 = por %p104, %p105
    %p108 = scmp.ne.s32.totalorder %s91, %s107
    %p109 = scmp.eq.s32.totalorder %s15, 0
    %p110 = por %p108, %p109
    %p111 = scmp.le.s32.totalorder 1, %s9
    %p112 = scmp.lt.s32.totalorder %s9, 5
    %p113 = pnand %p111, %p112
    %p114 = pneg %p113
    // Predicated region
    $region9: #{ssd_gmm_forward.9} parent=5 // pred_check
      _
    $region10: #{ssd_gmm_forward.9} parent=5 // pred_check_branch
      %116 = sbr.rel (%p113) target = $region12
    $region11: #{ssd_gmm_forward.9} parent=5 // pred_region
      %s117 = ssub.s32 %s9, 1
      // Predicated region
      $region13: #{ssd_gmm_forward.9} parent=11 // pred_check
        %p118 = pneg %p56
      $region14: #{ssd_gmm_forward.9} parent=11 // pred_check_branch
        %120 = sbr.rel (%p118) target = $region16
      $region15: #{ssd_gmm_forward.9} parent=11 // pred_region
        _
      $region16: #{ssd_gmm_forward.9} parent=11 // pred_fallthru
        _
      // Predicated region
      $region17: #{ssd_gmm_forward.9} parent=11 // pred_check
        %p121 = pneg %p77
      $region18: #{ssd_gmm_forward.9} parent=11 // pred_check_branch
        %123 = sbr.rel (%p121) target = $region20
      $region19: #{ssd_gmm_forward.9} parent=11 // pred_region
        _
      $region20: #{ssd_gmm_forward.9} parent=11 // pred_fallthru
        _
    $region12: #{ssd_gmm_forward.9} parent=5 // pred_fallthru
      _
    %p124 = scmp.lt.s32.totalorder %s9, 4
    // Predicated region
    $region21: #{ssd_gmm_forward.9} parent=5 // pred_check
      %p125 = pneg %p124
    $region22: #{ssd_gmm_forward.9} parent=5 // pred_check_branch
      %127 = sbr.rel (%p125) target = $region24
    $region23: #{ssd_gmm_forward.9} parent=5 // pred_region
      // Predicated region
      $region25: #{ssd_gmm_forward.9} parent=23 // pred_check
        %p128 = pneg %p29
      $region26: #{ssd_gmm_forward.9} parent=23 // pred_check_branch
        %130 = sbr.rel (%p128) target = $region28
      $region27: #{ssd_gmm_forward.9} parent=23 // pred_region
        %s131 = smul.u32 64, %s9
        %p132 = scmp.lt.s32.totalorder %s131, 255
        %s133 = scalar_select %p132, %s131, 255
        %s134 = smul.addr %s133, 4
        %s135 = scalar_lea.vmem %s0, %s134
        %s136 = smul.u32 64, %s9
      $region28: #{ssd_gmm_forward.9} parent=23 // pred_fallthru
        _
    $region24: #{ssd_gmm_forward.9} parent=5 // pred_fallthru
      _
    %p137 = scmp.le.s32.totalorder 1, %s9
    %p138 = scmp.lt.s32.totalorder %s9, 5
    %p139 = pnand %p137, %p138
    %p140 = pneg %p139
    // Predicated region
    $region29: #{ssd_gmm_forward.9} parent=5 // pred_check
      _
    $region30: #{ssd_gmm_forward.9} parent=5 // pred_check_branch
      %142 = sbr.rel (%p139) target = $region32
    $region31: #{ssd_gmm_forward.9} parent=5 // pred_region
      %s143 = ssub.s32 %s9, 1
      %s144 = smul.u32 64, %s14
      %p145 = scmp.lt.s32.totalorder %s144, 255
      %s146 = scalar_select %p145, %s144, 255
      %s147 = smul.addr %s146, 4
      %s148 = scalar_lea.vmem %s0, %s147
      %p149 = pneg %p35
      %p150 = pneg %p32
      %p151 = pneg %p56
      %p152 = pneg %p53
      %p153 = pneg %p77
      %p154 = pneg %p74
      %p155 = pneg %p103
      %p156 = pneg %p100
      %s157 = smul.u32 64, %s14
      %p158 = scmp.lt.s32.totalorder %s157, 255
      %s159 = scalar_select %p158, %s157, 255
      %s160 = smul.addr %s159, 8
      %s161 = scalar_lea.vmem %s3, %s160
      %s162 = smul.u32 64, %s14
      %p163 = scmp.lt.s32.totalorder %s162, 255
      %s164 = scalar_select %p163, %s162, 255
      %s165 = smul.addr %s164, 4
      %s166 = scalar_lea.vmem %s0, %s165
      %s167 = smul.u32 64, %s14
      %s168 = smul.u32 64, %s14
      %p169 = scmp.lt.s32.totalorder %s168, 255
      %s170 = scalar_select %p169, %s168, 255
      %s171 = smul.addr %s170, 8
      %s172 = scalar_lea.vmem %s3, %s171
      %s173 = smul.u32 64, %s14
      %v175 = vld [vmem:[%s166] sm:$0xf]
      %v176 = vld [vmem:[%s166 + $0x4] sm:$0xf]
      %v177 = vld [vmem:[%s166 + $0x8] sm:$0xf]
      %v178 = vld [vmem:[%s166 + $0xc] sm:$0xf]
      %v179 = vld [vmem:[%s166 + $0x10] sm:$0xf]
      %v180 = vld [vmem:[%s166 + $0x14] sm:$0xf]
      %v181 = vld [vmem:[%s166 + $0x18] sm:$0xf]
      %v182 = vld [vmem:[%s166 + $0x1c] sm:$0xf]
      %v183 = vld [vmem:[%s166 + $0x20] sm:$0xf]
      %v184 = vld [vmem:[%s166 + $0x24] sm:$0xf]
      %v185 = vld [vmem:[%s166 + $0x28] sm:$0xf]
      %v186 = vld [vmem:[%s166 + $0x2c] sm:$0xf]
      %v187 = vld [vmem:[%s166 + $0x30] sm:$0xf]
      %v188 = vld [vmem:[%s166 + $0x34] sm:$0xf]
      %v189 = vld [vmem:[%s166 + $0x38] sm:$0xf]
      %v190 = vld [vmem:[%s166 + $0x3c] sm:$0xf]
      %v191 = vld [vmem:[%s166 + $0x40] sm:$0xf]
      %v192 = vld [vmem:[%s166 + $0x44] sm:$0xf]
      %v193 = vld [vmem:[%s166 + $0x48] sm:$0xf]
      %v194 = vld [vmem:[%s166 + $0x4c] sm:$0xf]
      %v195 = vld [vmem:[%s166 + $0x50] sm:$0xf]
      %v196 = vld [vmem:[%s166 + $0x54] sm:$0xf]
      %v197 = vld [vmem:[%s166 + $0x58] sm:$0xf]
      %v198 = vld [vmem:[%s166 + $0x5c] sm:$0xf]
      %v199 = vld [vmem:[%s166 + $0x60] sm:$0xf]
      %v200 = vld [vmem:[%s166 + $0x64] sm:$0xf]
      %v201 = vld [vmem:[%s166 + $0x68] sm:$0xf]
      %v202 = vld [vmem:[%s166 + $0x6c] sm:$0xf]
      %v203 = vld [vmem:[%s166 + $0x70] sm:$0xf]
      %v204 = vld [vmem:[%s166 + $0x74] sm:$0xf]
      %v205 = vld [vmem:[%s166 + $0x78] sm:$0xf]
      %v206 = vld [vmem:[%s166 + $0x7c] sm:$0xf]
      %v207 = vld [vmem:[%s166 + $0x80] sm:$0xf]
      %v208 = vld [vmem:[%s166 + $0x84] sm:$0xf]
      %v209 = vld [vmem:[%s166 + $0x88] sm:$0xf]
      %v210 = vld [vmem:[%s166 + $0x8c] sm:$0xf]
      %v211 = vld [vmem:[%s166 + $0x90] sm:$0xf]
      %v212 = vld [vmem:[%s166 + $0x94] sm:$0xf]
      %v213 = vld [vmem:[%s166 + $0x98] sm:$0xf]
      %v214 = vld [vmem:[%s166 + $0x9c] sm:$0xf]
      %v215 = vld [vmem:[%s166 + $0xa0] sm:$0xf]
      %v216 = vld [vmem:[%s166 + $0xa4] sm:$0xf]
      %v217 = vld [vmem:[%s166 + $0xa8] sm:$0xf]
      %v218 = vld [vmem:[%s166 + $0xac] sm:$0xf]
      %v219 = vld [vmem:[%s166 + $0xb0] sm:$0xf]
      %v220 = vld [vmem:[%s166 + $0xb4] sm:$0xf]
      %v221 = vld [vmem:[%s166 + $0xb8] sm:$0xf]
      %v222 = vld [vmem:[%s166 + $0xbc] sm:$0xf]
      %v223 = vld [vmem:[%s166 + $0xc0] sm:$0xf]
      %v224 = vld [vmem:[%s166 + $0xc4] sm:$0xf]
      %v225 = vld [vmem:[%s166 + $0xc8] sm:$0xf]
      %v226 = vld [vmem:[%s166 + $0xcc] sm:$0xf]
      %v227 = vld [vmem:[%s166 + $0xd0] sm:$0xf]
      %v228 = vld [vmem:[%s166 + $0xd4] sm:$0xf]
      %v229 = vld [vmem:[%s166 + $0xd8] sm:$0xf]
      %v230 = vld [vmem:[%s166 + $0xdc] sm:$0xf]
      %v231 = vld [vmem:[%s166 + $0xe0] sm:$0xf]
      %v232 = vld [vmem:[%s166 + $0xe4] sm:$0xf]
      %v233 = vld [vmem:[%s166 + $0xe8] sm:$0xf]
      %v234 = vld [vmem:[%s166 + $0xec] sm:$0xf]
      %v235 = vld [vmem:[%s166 + $0xf0] sm:$0xf]
      %v236 = vld [vmem:[%s166 + $0xf4] sm:$0xf]
      %v237 = vld [vmem:[%s166 + $0xf8] sm:$0xf]
      %v238 = vld [vmem:[%s166 + $0xfc] sm:$0xf]
      %v239 = vld [vmem:[%s1] sm:$0xf]
      %v240 = vld [vmem:[%s1 + $0x4] sm:$0xf]
      %v241 = vld [vmem:[%s1 + $0x8] sm:$0xf]
      %v242 = vld [vmem:[%s1 + $0xc] sm:$0x3]
      %v243 = vld [vmem:[%s2] sm:$0x1]
      %v245 = vlaneseq
      %v246 = vshrl.u32 %v245, 7
      %v247 = vsub.s32 0, %v246
      %v248 = vrot.slane %v243, %v247
      %v314 = vunpack.c.l.b16 %v175
      %v315 = vunpack.c.l.b16 %v176
      %v316 = vunpack.c.l.b16 %v177
      %v317 = vunpack.c.l.b16 %v178
      %v318 = vunpack.c.l.b16 %v179
      %v319 = vunpack.c.l.b16 %v180
      %v320 = vunpack.c.l.b16 %v181
      %v321 = vunpack.c.l.b16 %v182
      %v322 = vunpack.c.l.b16 %v183
      %v323 = vunpack.c.l.b16 %v184
      %v324 = vunpack.c.l.b16 %v185
      %v325 = vunpack.c.l.b16 %v186
      %v326 = vunpack.c.l.b16 %v187
      %v327 = vunpack.c.l.b16 %v188
      %v328 = vunpack.c.l.b16 %v189
      %v329 = vunpack.c.l.b16 %v190
      %v330 = vunpack.c.l.b16 %v191
      %v331 = vunpack.c.l.b16 %v192
      %v332 = vunpack.c.l.b16 %v193
      %v333 = vunpack.c.l.b16 %v194
      %v334 = vunpack.c.l.b16 %v195
      %v335 = vunpack.c.l.b16 %v196
      %v336 = vunpack.c.l.b16 %v197
      %v337 = vunpack.c.l.b16 %v198
      %v338 = vunpack.c.l.b16 %v199
      %v339 = vunpack.c.l.b16 %v200
      %v340 = vunpack.c.l.b16 %v201
      %v341 = vunpack.c.l.b16 %v202
      %v342 = vunpack.c.l.b16 %v203
      %v343 = vunpack.c.l.b16 %v204
      %v344 = vunpack.c.l.b16 %v205
      %v345 = vunpack.c.l.b16 %v206
      %v346 = vunpack.c.l.b16 %v207
      %v347 = vunpack.c.l.b16 %v208
      %v348 = vunpack.c.l.b16 %v209
      %v349 = vunpack.c.l.b16 %v210
      %v350 = vunpack.c.l.b16 %v211
      %v351 = vunpack.c.l.b16 %v212
      %v352 = vunpack.c.l.b16 %v213
      %v353 = vunpack.c.l.b16 %v214
      %v354 = vunpack.c.l.b16 %v215
      %v355 = vunpack.c.l.b16 %v216
      %v356 = vunpack.c.l.b16 %v217
      %v357 = vunpack.c.l.b16 %v218
      %v358 = vunpack.c.l.b16 %v219
      %v359 = vunpack.c.l.b16 %v220
      %v360 = vunpack.c.l.b16 %v221
      %v361 = vunpack.c.l.b16 %v222
      %v362 = vunpack.c.l.b16 %v223
      %v363 = vunpack.c.l.b16 %v224
      %v364 = vunpack.c.l.b16 %v225
      %v365 = vunpack.c.l.b16 %v226
      %v366 = vunpack.c.l.b16 %v227
      %v367 = vunpack.c.l.b16 %v228
      %v368 = vunpack.c.l.b16 %v229
      %v369 = vunpack.c.l.b16 %v230
      %v370 = vunpack.c.l.b16 %v231
      %v371 = vunpack.c.l.b16 %v232
      %v372 = vunpack.c.l.b16 %v233
      %v373 = vunpack.c.l.b16 %v234
      %v374 = vunpack.c.l.b16 %v235
      %v375 = vunpack.c.l.b16 %v236
      %v376 = vunpack.c.l.b16 %v237
      %v377 = vunpack.c.l.b16 %v238
      %v378 = vpack.c.b16 %v315, %v314
      %v379 = vpack.c.b16 %v317, %v316
      %v380 = vpack.c.b16 %v319, %v318
      %v381 = vpack.c.b16 %v321, %v320
      %v382 = vpack.c.b16 %v323, %v322
      %v383 = vpack.c.b16 %v325, %v324
      %v384 = vpack.c.b16 %v327, %v326
      %v385 = vpack.c.b16 %v329, %v328
      %v386 = vpack.c.b16 %v331, %v330
      %v387 = vpack.c.b16 %v333, %v332
      %v388 = vpack.c.b16 %v335, %v334
      %v389 = vpack.c.b16 %v337, %v336
      %v390 = vpack.c.b16 %v339, %v338
      %v391 = vpack.c.b16 %v341, %v340
      %v392 = vpack.c.b16 %v343, %v342
      %v393 = vpack.c.b16 %v345, %v344
      %v394 = vpack.c.b16 %v347, %v346
      %v395 = vpack.c.b16 %v349, %v348
      %v396 = vpack.c.b16 %v351, %v350
      %v397 = vpack.c.b16 %v353, %v352
      %v398 = vpack.c.b16 %v355, %v354
      %v399 = vpack.c.b16 %v357, %v356
      %v400 = vpack.c.b16 %v359, %v358
      %v401 = vpack.c.b16 %v361, %v360
      %v402 = vpack.c.b16 %v363, %v362
      %v403 = vpack.c.b16 %v365, %v364
      %v404 = vpack.c.b16 %v367, %v366
      %v405 = vpack.c.b16 %v369, %v368
      %v406 = vpack.c.b16 %v371, %v370
      %v407 = vpack.c.b16 %v373, %v372
      %v408 = vpack.c.b16 %v375, %v374
      %v409 = vpack.c.b16 %v377, %v376
      %v414 = vunpack.c.l.b16 %v239
      %v415 = vunpack.c.l.b16 %v240
      %v416 = vunpack.c.l.b16 %v241
      %v417 = vunpack.c.l.b16 %v242
      %v418 = vpack.c.b16 %v415, %v414
      %v419 = vpack.c.b16 %v417, %v416
      %vm421 = vcmask 220160
      %v423 = vsel %vm421, %v378, 0
      %v426 = vsel %vm421, %v379, 0
      %v429 = vsel %vm421, %v380, 0
      %v432 = vsel %vm421, %v381, 0
      %v435 = vsel %vm421, %v382, 0
      %v438 = vsel %vm421, %v383, 0
      %v441 = vsel %vm421, %v384, 0
      %v444 = vsel %vm421, %v385, 0
      %v447 = vsel %vm421, %v386, 0
      %v450 = vsel %vm421, %v387, 0
      %v453 = vsel %vm421, %v388, 0
      %v456 = vsel %vm421, %v389, 0
      %v459 = vsel %vm421, %v390, 0
      %v462 = vsel %vm421, %v391, 0
      %v465 = vsel %vm421, %v392, 0
      %v468 = vsel %vm421, %v393, 0
      %v471 = vsel %vm421, %v394, 0
      %v474 = vsel %vm421, %v395, 0
      %v477 = vsel %vm421, %v396, 0
      %v480 = vsel %vm421, %v397, 0
      %v483 = vsel %vm421, %v398, 0
      %v486 = vsel %vm421, %v399, 0
      %v489 = vsel %vm421, %v400, 0
      %v492 = vsel %vm421, %v401, 0
      %v495 = vsel %vm421, %v402, 0
      %v498 = vsel %vm421, %v403, 0
      %v501 = vsel %vm421, %v404, 0
      %v504 = vsel %vm421, %v405, 0
      %v507 = vsel %vm421, %v406, 0
      %v510 = vsel %vm421, %v407, 0
      %v513 = vsel %vm421, %v408, 0
      %v516 = vsel %vm421, %v409, 0
      %vm518 = vcmask 1044480
      %vm519 = vcmask 1045504
      %v520 = vsel %vm518, 4294967295, 65535
      %v521 = vsel %vm519, %v520, 0
      %v523 = vand.u32 %v419, %v521
      %525 = vmatprep.subr.bf16.mxu0 0
      %526 = vmatpush1.bf16.msra.mxu0 %v418
      %527 = vmatprep.subr.bf16.mxu0 0
      %528 = vmatpush1.bf16.msra.mxu0 %v523
      %529 = vmatprep.subr.bf16.mxu0 0
      %530 = vmatpush1.bf16.msra.mxu0 0
      %531 = vmatprep.subr.bf16.mxu0 0
      %532 = vmatpush1.bf16.msra.mxu0 0
      %533 = vmatprep.subr.bf16.mxu0 0
      %534 = vmatpush1.bf16.msra.mxu0 0
      %535 = vmatprep.subr.bf16.mxu0 0
      %536 = vmatpush1.bf16.msra.mxu0 0
      %537 = vmatprep.subr.bf16.mxu0 0
      %538 = vmatpush1.bf16.msra.mxu0 0
      %539 = vmatprep.subr.bf16.mxu0 0
      %540 = vmatpush1.bf16.msra.mxu0 0
      %541 = vmatprep.subr.bf16.mxu0 0
      %542 = vmatpush1.bf16.msra.mxu0 0
      %543 = vmatprep.subr.bf16.mxu0 0
      %544 = vmatpush1.bf16.msra.mxu0 0
      %545 = vmatprep.subr.bf16.mxu0 0
      %546 = vmatpush1.bf16.msra.mxu0 0
      %547 = vmatprep.subr.bf16.mxu0 0
      %548 = vmatpush1.bf16.msra.mxu0 0
      %549 = vmatprep.subr.bf16.mxu0 0
      %550 = vmatpush1.bf16.msra.mxu0 0
      %551 = vmatprep.subr.bf16.mxu0 0
      %552 = vmatpush1.bf16.msra.mxu0 0
      %553 = vmatprep.subr.bf16.mxu0 0
      %554 = vmatpush1.bf16.msra.mxu0 0
      %555 = vmatprep.subr.bf16.mxu0 0
      %556 = vmatpush1.bf16.msra.mxu0 0
      %557 = vmatprep.mubr.bf16.mxu0 0
      %558 = vmatmul.mubr.bf16.gmra.mrb[0].mxu0 %v423
      %v559 = vpop.f32.mrb[0].mxu0
      %v560 = vadd.f32 %v248, %v559
      %v561 = vpop.f32.mrb[0].mxu0
      %v562 = vpop.f32.mrb[0].mxu0
      %v563 = vadd.f32 %v248, %v562
      %v564 = vpop.f32.mrb[0].mxu0
      %565 = vmatprep.mubr.bf16.mxu0 0
      %566 = vmatmul.mubr.bf16.gmra.mrb[0].mxu0 %v426
      %v567 = vpop.f32.mrb[0].mxu0
      %v568 = vadd.f32 %v248, %v567
      %v569 = vpop.f32.mrb[0].mxu0
      %v570 = vpop.f32.mrb[0].mxu0
      %v571 = vadd.f32 %v248, %v570
      %v572 = vpop.f32.mrb[0].mxu0
      %573 = vmatprep.mubr.bf16.mxu0 0
      %574 = vmatmul.mubr.bf16.gmra.mrb[0].mxu0 %v429
      %v575 = vpop.f32.mrb[0].mxu0
      %v576 = vadd.f32 %v248, %v575
      %v577 = vpop.f32.mrb[0].mxu0
      %v578 = vpop.f32.mrb[0].mxu0
      %v579 = vadd.f32 %v248, %v578
      %v580 = vpop.f32.mrb[0].mxu0
      %581 = vmatprep.mubr.bf16.mxu0 0
      %582 = vmatmul.mubr.bf16.gmra.mrb[0].mxu0 %v432
      %v583 = vpop.f32.mrb[0].mxu0
      %v584 = vadd.f32 %v248, %v583
      %v585 = vpop.f32.mrb[0].mxu0
      %v586 = vpop.f32.mrb[0].mxu0
      %v587 = vadd.f32 %v248, %v586
      %v588 = vpop.f32.mrb[0].mxu0
      %589 = vmatprep.mubr.bf16.mxu0 0
      %590 = vmatmul.mubr.bf16.gmra.mrb[0].mxu0 %v435
      %v591 = vpop.f32.mrb[0].mxu0
      %v592 = vadd.f32 %v248, %v591
      %v593 = vpop.f32.mrb[0].mxu0
      %v594 = vpop.f32.mrb[0].mxu0
      %v595 = vadd.f32 %v248, %v594
      %v596 = vpop.f32.mrb[0].mxu0
      %597 = vmatprep.mubr.bf16.mxu0 0
      %598 = vmatmul.mubr.bf16.gmra.mrb[0].mxu0 %v438
      %v599 = vpop.f32.mrb[0].mxu0
      %v600 = vadd.f32 %v248, %v599
      %v601 = vpop.f32.mrb[0].mxu0
      %v602 = vpop.f32.mrb[0].mxu0
      %v603 = vadd.f32 %v248, %v602
      %v604 = vpop.f32.mrb[0].mxu0
      %605 = vmatprep.mubr.bf16.mxu0 0
      %606 = vmatmul.mubr.bf16.gmra.mrb[0].mxu0 %v441
      %v607 = vpop.f32.mrb[0].mxu0
      %v608 = vadd.f32 %v248, %v607
      %v609 = vpop.f32.mrb[0].mxu0
      %v610 = vpop.f32.mrb[0].mxu0
      %v611 = vadd.f32 %v248, %v610
      %v612 = vpop.f32.mrb[0].mxu0
      %613 = vmatprep.mubr.bf16.mxu0 0
      %614 = vmatmul.mubr.bf16.gmra.mrb[0].mxu0 %v444
      %v615 = vpop.f32.mrb[0].mxu0
      %v616 = vadd.f32 %v248, %v615
      %v617 = vpop.f32.mrb[0].mxu0
      %v618 = vpop.f32.mrb[0].mxu0
      %v619 = vadd.f32 %v248, %v618
      %v620 = vpop.f32.mrb[0].mxu0
      %621 = vmatprep.mubr.bf16.mxu0 0
      %622 = vmatmul.mubr.bf16.gmra.mrb[0].mxu0 %v447
      %v623 = vpop.f32.mrb[0].mxu0
      %v624 = vadd.f32 %v248, %v623
      %v625 = vpop.f32.mrb[0].mxu0
      %v626 = vpop.f32.mrb[0].mxu0
      %v627 = vadd.f32 %v248, %v626
      %v628 = vpop.f32.mrb[0].mxu0
      %629 = vmatprep.mubr.bf16.mxu0 0
      %630 = vmatmul.mubr.bf16.gmra.mrb[0].mxu0 %v450
      %v631 = vpop.f32.mrb[0].mxu0
      %v632 = vadd.f32 %v248, %v631
      %v633 = vpop.f32.mrb[0].mxu0
      %v634 = vpop.f32.mrb[0].mxu0
      %v635 = vadd.f32 %v248, %v634
      %v636 = vpop.f32.mrb[0].mxu0
      %637 = vmatprep.mubr.bf16.mxu0 0
      %638 = vmatmul.mubr.bf16.gmra.mrb[0].mxu0 %v453
      %v639 = vpop.f32.mrb[0].mxu0
      %v640 = vadd.f32 %v248, %v639
      %v641 = vpop.f32.mrb[0].mxu0
      %v642 = vpop.f32.mrb[0].mxu0
      %v643 = vadd.f32 %v248, %v642
      %v644 = vpop.f32.mrb[0].mxu0
      %645 = vmatprep.mubr.bf16.mxu0 0
      %646 = vmatmul.mubr.bf16.gmra.mrb[0].mxu0 %v456
      %v647 = vpop.f32.mrb[0].mxu0
      %v648 = vadd.f32 %v248, %v647
      %v649 = vpop.f32.mrb[0].mxu0
      %v650 = vpop.f32.mrb[0].mxu0
      %v651 = vadd.f32 %v248, %v650
      %v652 = vpop.f32.mrb[0].mxu0
      %653 = vmatprep.mubr.bf16.mxu0 0
      %654 = vmatmul.mubr.bf16.gmra.mrb[0].mxu0 %v459
      %v655 = vpop.f32.mrb[0].mxu0
      %v656 = vadd.f32 %v248, %v655
      %v657 = vpop.f32.mrb[0].mxu0
      %v658 = vpop.f32.mrb[0].mxu0
      %v659 = vadd.f32 %v248, %v658
      %v660 = vpop.f32.mrb[0].mxu0
      %661 = vmatprep.mubr.bf16.mxu0 0
      %662 = vmatmul.mubr.bf16.gmra.mrb[0].mxu0 %v462
      %v663 = vpop.f32.mrb[0].mxu0
      %v664 = vadd.f32 %v248, %v663
      %v665 = vpop.f32.mrb[0].mxu0
      %v666 = vpop.f32.mrb[0].mxu0
      %v667 = vadd.f32 %v248, %v666
      %v668 = vpop.f32.mrb[0].mxu0
      %669 = vmatprep.mubr.bf16.mxu0 0
      %670 = vmatmul.mubr.bf16.gmra.mrb[0].mxu0 %v465
      %v671 = vpop.f32.mrb[0].mxu0
      %v672 = vadd.f32 %v248, %v671
      %v673 = vpop.f32.mrb[0].mxu0
      %v674 = vpop.f32.mrb[0].mxu0
      %v675 = vadd.f32 %v248, %v674
      %v676 = vpop.f32.mrb[0].mxu0
      %677 = vmatprep.mubr.bf16.mxu0 0
      %678 = vmatmul.mubr.bf16.gmra.mrb[0].mxu0 %v468
      %v679 = vpop.f32.mrb[0].mxu0
      %v680 = vadd.f32 %v248, %v679
      %v681 = vpop.f32.mrb[0].mxu0
      %v682 = vpop.f32.mrb[0].mxu0
      %v683 = vadd.f32 %v248, %v682
      %v684 = vpop.f32.mrb[0].mxu0
      %685 = vmatprep.mubr.bf16.mxu0 0
      %686 = vmatmul.mubr.bf16.gmra.mrb[0].mxu0 %v471
      %v687 = vpop.f32.mrb[0].mxu0
      %v688 = vadd.f32 %v248, %v687
      %v689 = vpop.f32.mrb[0].mxu0
      %v690 = vpop.f32.mrb[0].mxu0
      %v691 = vadd.f32 %v248, %v690
      %v692 = vpop.f32.mrb[0].mxu0
      %693 = vmatprep.mubr.bf16.mxu0 0
      %694 = vmatmul.mubr.bf16.gmra.mrb[0].mxu0 %v474
      %v695 = vpop.f32.mrb[0].mxu0
      %v696 = vadd.f32 %v248, %v695
      %v697 = vpop.f32.mrb[0].mxu0
      %v698 = vpop.f32.mrb[0].mxu0
      %v699 = vadd.f32 %v248, %v698
      %v700 = vpop.f32.mrb[0].mxu0
      %701 = vmatprep.mubr.bf16.mxu0 0
      %702 = vmatmul.mubr.bf16.gmra.mrb[0].mxu0 %v477
      %v703 = vpop.f32.mrb[0].mxu0
      %v704 = vadd.f32 %v248, %v703
      %v705 = vpop.f32.mrb[0].mxu0
      %v706 = vpop.f32.mrb[0].mxu0
      %v707 = vadd.f32 %v248, %v706
      %v708 = vpop.f32.mrb[0].mxu0
      %709 = vmatprep.mubr.bf16.mxu0 0
      %710 = vmatmul.mubr.bf16.gmra.mrb[0].mxu0 %v480
      %v711 = vpop.f32.mrb[0].mxu0
      %v712 = vadd.f32 %v248, %v711
      %v713 = vpop.f32.mrb[0].mxu0
      %v714 = vpop.f32.mrb[0].mxu0
      %v715 = vadd.f32 %v248, %v714
      %v716 = vpop.f32.mrb[0].mxu0
      %717 = vmatprep.mubr.bf16.mxu0 0
      %718 = vmatmul.mubr.bf16.gmra.mrb[0].mxu0 %v483
      %v719 = vpop.f32.mrb[0].mxu0
      %v720 = vadd.f32 %v248, %v719
      %v721 = vpop.f32.mrb[0].mxu0
      %v722 = vpop.f32.mrb[0].mxu0
      %v723 = vadd.f32 %v248, %v722
      %v724 = vpop.f32.mrb[0].mxu0
      %725 = vmatprep.mubr.bf16.mxu0 0
      %726 = vmatmul.mubr.bf16.gmra.mrb[0].mxu0 %v486
      %v727 = vpop.f32.mrb[0].mxu0
      %v728 = vadd.f32 %v248, %v727
      %v729 = vpop.f32.mrb[0].mxu0
      %v730 = vpop.f32.mrb[0].mxu0
      %v731 = vadd.f32 %v248, %v730
      %v732 = vpop.f32.mrb[0].mxu0
      %733 = vmatprep.mubr.bf16.mxu0 0
      %734 = vmatmul.mubr.bf16.gmra.mrb[0].mxu0 %v489
      %v735 = vpop.f32.mrb[0].mxu0
      %v736 = vadd.f32 %v248, %v735
      %v737 = vpop.f32.mrb[0].mxu0
      %v738 = vpop.f32.mrb[0].mxu0
      %v739 = vadd.f32 %v248, %v738
      %v740 = vpop.f32.mrb[0].mxu0
      %741 = vmatprep.mubr.bf16.mxu0 0
      %742 = vmatmul.mubr.bf16.gmra.mrb[0].mxu0 %v492
      %v743 = vpop.f32.mrb[0].mxu0
      %v744 = vadd.f32 %v248, %v743
      %v745 = vpop.f32.mrb[0].mxu0
      %v746 = vpop.f32.mrb[0].mxu0
      %v747 = vadd.f32 %v248, %v746
      %v748 = vpop.f32.mrb[0].mxu0
      %749 = vmatprep.mubr.bf16.mxu0 0
      %750 = vmatmul.mubr.bf16.gmra.mrb[0].mxu0 %v495
      %v751 = vpop.f32.mrb[0].mxu0
      %v752 = vadd.f32 %v248, %v751
      %v753 = vpop.f32.mrb[0].mxu0
      %v754 = vpop.f32.mrb[0].mxu0
      %v755 = vadd.f32 %v248, %v754
      %v756 = vpop.f32.mrb[0].mxu0
      %757 = vmatprep.mubr.bf16.mxu0 0
      %758 = vmatmul.mubr.bf16.gmra.mrb[0].mxu0 %v498
      %v759 = vpop.f32.mrb[0].mxu0
      %v760 = vadd.f32 %v248, %v759
      %v761 = vpop.f32.mrb[0].mxu0
      %v762 = vpop.f32.mrb[0].mxu0
      %v763 = vadd.f32 %v248, %v762
      %v764 = vpop.f32.mrb[0].mxu0
      %765 = vmatprep.mubr.bf16.mxu0 0
      %766 = vmatmul.mubr.bf16.gmra.mrb[0].mxu0 %v501
      %v767 = vpop.f32.mrb[0].mxu0
      %v768 = vadd.f32 %v248, %v767
      %v769 = vpop.f32.mrb[0].mxu0
      %v770 = vpop.f32.mrb[0].mxu0
      %v771 = vadd.f32 %v248, %v770
      %v772 = vpop.f32.mrb[0].mxu0
      %773 = vmatprep.mubr.bf16.mxu0 0
      %774 = vmatmul.mubr.bf16.gmra.mrb[0].mxu0 %v504
      %v775 = vpop.f32.mrb[0].mxu0
      %v776 = vadd.f32 %v248, %v775
      %v777 = vpop.f32.mrb[0].mxu0
      %v778 = vpop.f32.mrb[0].mxu0
      %v779 = vadd.f32 %v248, %v778
      %v780 = vpop.f32.mrb[0].mxu0
      %781 = vmatprep.mubr.bf16.mxu0 0
      %782 = vmatmul.mubr.bf16.gmra.mrb[0].mxu0 %v507
      %v783 = vpop.f32.mrb[0].mxu0
      %v784 = vadd.f32 %v248, %v783
      %v785 = vpop.f32.mrb[0].mxu0
      %v786 = vpop.f32.mrb[0].mxu0
      %v787 = vadd.f32 %v248, %v786
      %v788 = vpop.f32.mrb[0].mxu0
      %789 = vmatprep.mubr.bf16.mxu0 0
      %790 = vmatmul.mubr.bf16.gmra.mrb[0].mxu0 %v510
      %v791 = vpop.f32.mrb[0].mxu0
      %v792 = vadd.f32 %v248, %v791
      %v793 = vpop.f32.mrb[0].mxu0
      %v794 = vpop.f32.mrb[0].mxu0
      %v795 = vadd.f32 %v248, %v794
      %v796 = vpop.f32.mrb[0].mxu0
      %797 = vmatprep.mubr.bf16.mxu0 0
      %798 = vmatmul.mubr.bf16.gmra.mrb[0].mxu0 %v513
      %v799 = vpop.f32.mrb[0].mxu0
      %v800 = vadd.f32 %v248, %v799
      %v801 = vpop.f32.mrb[0].mxu0
      %v802 = vpop.f32.mrb[0].mxu0
      %v803 = vadd.f32 %v248, %v802
      %v804 = vpop.f32.mrb[0].mxu0
      %805 = vmatprep.mubr.bf16.mxu0 0
      %806 = vmatmul.mubr.bf16.gmra.mrb[0].mxu0 %v516
      %v807 = vpop.f32.mrb[0].mxu0
      %v808 = vadd.f32 %v248, %v807
      %v809 = vpop.f32.mrb[0].mxu0
      %v810 = vpop.f32.mrb[0].mxu0
      %v811 = vadd.f32 %v248, %v810
      %v812 = vpop.f32.mrb[0].mxu0
      %813 = vdwg.mxu0
      %v814 = vmax.f32 %v560, 0.0
      %v815 = vmax.f32 %v563, 0.0
      %v816 = vmax.f32 %v568, 0.0
      %v817 = vmax.f32 %v571, 0.0
      %v818 = vmax.f32 %v576, 0.0
      %v819 = vmax.f32 %v579, 0.0
      %v820 = vmax.f32 %v584, 0.0
      %v821 = vmax.f32 %v587, 0.0
      %v822 = vmax.f32 %v592, 0.0
      %v823 = vmax.f32 %v595, 0.0
      %v824 = vmax.f32 %v600, 0.0
      %v825 = vmax.f32 %v603, 0.0
      %v826 = vmax.f32 %v608, 0.0
      %v827 = vmax.f32 %v611, 0.0
      %v828 = vmax.f32 %v616, 0.0
      %v829 = vmax.f32 %v619, 0.0
      %v830 = vmax.f32 %v624, 0.0
      %v831 = vmax.f32 %v627, 0.0
      %v832 = vmax.f32 %v632, 0.0
      %v833 = vmax.f32 %v635, 0.0
      %v834 = vmax.f32 %v640, 0.0
      %v835 = vmax.f32 %v643, 0.0
      %v836 = vmax.f32 %v648, 0.0
      %v837 = vmax.f32 %v651, 0.0
      %v838 = vmax.f32 %v656, 0.0
      %v839 = vmax.f32 %v659, 0.0
      %v840 = vmax.f32 %v664, 0.0
      %v841 = vmax.f32 %v667, 0.0
      %v842 = vmax.f32 %v672, 0.0
      %v843 = vmax.f32 %v675, 0.0
      %v844 = vmax.f32 %v680, 0.0
      %v845 = vmax.f32 %v683, 0.0
      %v846 = vmax.f32 %v688, 0.0
      %v847 = vmax.f32 %v691, 0.0
      %v848 = vmax.f32 %v696, 0.0
      %v849 = vmax.f32 %v699, 0.0
      %v850 = vmax.f32 %v704, 0.0
      %v851 = vmax.f32 %v707, 0.0
      %v852 = vmax.f32 %v712, 0.0
      %v853 = vmax.f32 %v715, 0.0
      %v854 = vmax.f32 %v720, 0.0
      %v855 = vmax.f32 %v723, 0.0
      %v856 = vmax.f32 %v728, 0.0
      %v857 = vmax.f32 %v731, 0.0
      %v858 = vmax.f32 %v736, 0.0
      %v859 = vmax.f32 %v739, 0.0
      %v860 = vmax.f32 %v744, 0.0
      %v861 = vmax.f32 %v747, 0.0
      %v862 = vmax.f32 %v752, 0.0
      %v863 = vmax.f32 %v755, 0.0
      %v864 = vmax.f32 %v760, 0.0
      %v865 = vmax.f32 %v763, 0.0
      %v866 = vmax.f32 %v768, 0.0
      %v867 = vmax.f32 %v771, 0.0
      %v868 = vmax.f32 %v776, 0.0
      %v869 = vmax.f32 %v779, 0.0
      %v870 = vmax.f32 %v784, 0.0
      %v871 = vmax.f32 %v787, 0.0
      %v872 = vmax.f32 %v792, 0.0
      %v873 = vmax.f32 %v795, 0.0
      %v874 = vmax.f32 %v800, 0.0
      %v875 = vmax.f32 %v803, 0.0
      %v876 = vmax.f32 %v808, 0.0
      %v877 = vmax.f32 %v811, 0.0
      %vm878 = vcmask 130048
      %879 = vst.msk [vmem:[%s172] sm:$0xff] %vm878, %v814
      %880 = vst.msk [vmem:[%s172 + $0x8] sm:$0xff] %vm878, %v815
      %881 = vst.msk [vmem:[%s172 + $0x10] sm:$0xff] %vm878, %v816
      %882 = vst.msk [vmem:[%s172 + $0x18] sm:$0xff] %vm878, %v817
      %883 = vst.msk [vmem:[%s172 + $0x20] sm:$0xff] %vm878, %v818
      %884 = vst.msk [vmem:[%s172 + $0x28] sm:$0xff] %vm878, %v819
      %885 = vst.msk [vmem:[%s172 + $0x30] sm:$0xff] %vm878, %v820
      %886 = vst.msk [vmem:[%s172 + $0x38] sm:$0xff] %vm878, %v821
      %887 = vst.msk [vmem:[%s172 + $0x40] sm:$0xff] %vm878, %v822
      %888 = vst.msk [vmem:[%s172 + $0x48] sm:$0xff] %vm878, %v823
      %889 = vst.msk [vmem:[%s172 + $0x50] sm:$0xff] %vm878, %v824
      %890 = vst.msk [vmem:[%s172 + $0x58] sm:$0xff] %vm878, %v825
      %891 = vst.msk [vmem:[%s172 + $0x60] sm:$0xff] %vm878, %v826
      %892 = vst.msk [vmem:[%s172 + $0x68] sm:$0xff] %vm878, %v827
      %893 = vst.msk [vmem:[%s172 + $0x70] sm:$0xff] %vm878, %v828
      %894 = vst.msk [vmem:[%s172 + $0x78] sm:$0xff] %vm878, %v829
      %895 = vst.msk [vmem:[%s172 + $0x80] sm:$0xff] %vm878, %v830
      %896 = vst.msk [vmem:[%s172 + $0x88] sm:$0xff] %vm878, %v831
      %897 = vst.msk [vmem:[%s172 + $0x90] sm:$0xff] %vm878, %v832
      %898 = vst.msk [vmem:[%s172 + $0x98] sm:$0xff] %vm878, %v833
      %899 = vst.msk [vmem:[%s172 + $0xa0] sm:$0xff] %vm878, %v834
      %900 = vst.msk [vmem:[%s172 + $0xa8] sm:$0xff] %vm878, %v835
      %901 = vst.msk [vmem:[%s172 + $0xb0] sm:$0xff] %vm878, %v836
      %902 = vst.msk [vmem:[%s172 + $0xb8] sm:$0xff] %vm878, %v837
      %903 = vst.msk [vmem:[%s172 + $0xc0] sm:$0xff] %vm878, %v838
      %904 = vst.msk [vmem:[%s172 + $0xc8] sm:$0xff] %vm878, %v839
      %905 = vst.msk [vmem:[%s172 + $0xd0] sm:$0xff] %vm878, %v840
      %906 = vst.msk [vmem:[%s172 + $0xd8] sm:$0xff] %vm878, %v841
      %907 = vst.msk [vmem:[%s172 + $0xe0] sm:$0xff] %vm878, %v842
      %908 = vst.msk [vmem:[%s172 + $0xe8] sm:$0xff] %vm878, %v843
      %909 = vst.msk [vmem:[%s172 + $0xf0] sm:$0xff] %vm878, %v844
      %910 = vst.msk [vmem:[%s172 + $0xf8] sm:$0xff] %vm878, %v845
      %911 = vst.msk [vmem:[%s172 + $0x100] sm:$0xff] %vm878, %v846
      %912 = vst.msk [vmem:[%s172 + $0x108] sm:$0xff] %vm878, %v847
      %913 = vst.msk [vmem:[%s172 + $0x110] sm:$0xff] %vm878, %v848
      %914 = vst.msk [vmem:[%s172 + $0x118] sm:$0xff] %vm878, %v849
      %915 = vst.msk [vmem:[%s172 + $0x120] sm:$0xff] %vm878, %v850
      %916 = vst.msk [vmem:[%s172 + $0x128] sm:$0xff] %vm878, %v851
      %917 = vst.msk [vmem:[%s172 + $0x130] sm:$0xff] %vm878, %v852
      %918 = vst.msk [vmem:[%s172 + $0x138] sm:$0xff] %vm878, %v853
      %919 = vst.msk [vmem:[%s172 + $0x140] sm:$0xff] %vm878, %v854
      %920 = vst.msk [vmem:[%s172 + $0x148] sm:$0xff] %vm878, %v855
      %921 = vst.msk [vmem:[%s172 + $0x150] sm:$0xff] %vm878, %v856
      %922 = vst.msk [vmem:[%s172 + $0x158] sm:$0xff] %vm878, %v857
      %923 = vst.msk [vmem:[%s172 + $0x160] sm:$0xff] %vm878, %v858
      %924 = vst.msk [vmem:[%s172 + $0x168] sm:$0xff] %vm878, %v859
      %925 = vst.msk [vmem:[%s172 + $0x170] sm:$0xff] %vm878, %v860
      %926 = vst.msk [vmem:[%s172 + $0x178] sm:$0xff] %vm878, %v861
      %927 = vst.msk [vmem:[%s172 + $0x180] sm:$0xff] %vm878, %v862
      %928 = vst.msk [vmem:[%s172 + $0x188] sm:$0xff] %vm878, %v863
      %929 = vst.msk [vmem:[%s172 + $0x190] sm:$0xff] %vm878, %v864
      %930 = vst.msk [vmem:[%s172 + $0x198] sm:$0xff] %vm878, %v865
      %931 = vst.msk [vmem:[%s172 + $0x1a0] sm:$0xff] %vm878, %v866
      %932 = vst.msk [vmem:[%s172 + $0x1a8] sm:$0xff] %vm878, %v867
      %933 = vst.msk [vmem:[%s172 + $0x1b0] sm:$0xff] %vm878, %v868
      %934 = vst.msk [vmem:[%s172 + $0x1b8] sm:$0xff] %vm878, %v869
      %935 = vst.msk [vmem:[%s172 + $0x1c0] sm:$0xff] %vm878, %v870
      %936 = vst.msk [vmem:[%s172 + $0x1c8] sm:$0xff] %vm878, %v871
      %937 = vst.msk [vmem:[%s172 + $0x1d0] sm:$0xff] %vm878, %v872
      %938 = vst.msk [vmem:[%s172 + $0x1d8] sm:$0xff] %vm878, %v873
      %939 = vst.msk [vmem:[%s172 + $0x1e0] sm:$0xff] %vm878, %v874
      %940 = vst.msk [vmem:[%s172 + $0x1e8] sm:$0xff] %vm878, %v875
      %941 = vst.msk [vmem:[%s172 + $0x1f0] sm:$0xff] %vm878, %v876
      %942 = vst.msk [vmem:[%s172 + $0x1f8] sm:$0xff] %vm878, %v877
      %s943 = smul.u32 64, %s14
      %p944 = scmp.lt.s32.totalorder %s943, 255
      %s945 = scalar_select %p944, %s943, 255
      %s946 = smul.addr %s945, 8
      %s947 = scalar_lea.vmem %s3, %s946
      // Predicated region
      $region33: #{ssd_gmm_forward.9} parent=31 // pred_check
        %p948 = pneg %p100
      $region34: #{ssd_gmm_forward.9} parent=31 // pred_check_branch
        %950 = sbr.rel (%p948) target = $region36
      $region35: #{ssd_gmm_forward.9} parent=31 // pred_region
        %s951 = smul.u32 64, %s14
      $region36: #{ssd_gmm_forward.9} parent=31 // pred_fallthru
        _
    $region32: #{ssd_gmm_forward.9} parent=5 // pred_fallthru
      _
    %p952 = scmp.le.s32.totalorder 2, %s9
    // Predicated region
    $region37: #{ssd_gmm_forward.9} parent=5 // pred_check
      %p953 = pneg %p952
    $region38: #{ssd_gmm_forward.9} parent=5 // pred_check_branch
      %955 = sbr.rel (%p953) target = $region40
    $region39: #{ssd_gmm_forward.9} parent=5 // pred_region
      %s956 = ssub.s32 %s9, 2
      // Predicated region
      $region41: #{ssd_gmm_forward.9} parent=39 // pred_check
        %p957 = pneg %p106
      $region42: #{ssd_gmm_forward.9} parent=39 // pred_check_branch
        %959 = sbr.rel (%p957) target = $region44
      $region43: #{ssd_gmm_forward.9} parent=39 // pred_region
        %s960 = smul.u32 64, %s15
        %p961 = scmp.lt.s32.totalorder %s960, 255
        %s962 = scalar_select %p961, %s960, 255
        %s963 = smul.addr %s962, 8
        %s964 = scalar_lea.vmem %s3, %s963
      $region44: #{ssd_gmm_forward.9} parent=39 // pred_fallthru
        _
    $region40: #{ssd_gmm_forward.9} parent=5 // pred_fallthru
      _
  $region6: #{ssd_gmm_forward.9} parent=0 // loop_footer
    %s13 = sadd.s32 1, %s9
  $region7: #{ssd_gmm_forward.9} parent=0 // loop_footer_branch
    %8 = sbr.rel target = $region3
  $region8: #{ssd_gmm_forward.9} parent=0 // loop_exit
    _

// kernel: ssd_gmm_forward.10
$region0: #{ssd_gmm_forward.10}
  #allocation0 [shape = 'u32[]', space=smem, size = 0x4, offset = 0x4, fixed_abs, tag = 'smem constant byte address 0x4 - core index']
  #allocation1 [shape = 'u32[144,128]{1,0:T(1,128)}', space=vmem, size = 0x12000, scoped, tag = 'internal scratch']
  %s0 = inlined_call_operand.vmem [shape: bf16[512,144], index: 0, kind: input, shape index: {}]
  %s1 = inlined_call_operand.vmem [shape: bf16[144,32], index: 1, kind: input, shape index: {}]
  %s2 = inlined_call_operand.vmem [shape: f32[1,32], index: 2, kind: input, shape index: {}]
  %s3 = inlined_call_operand.vmem [shape: f32[512,32], index: 3, kind: output, shape index: {}]
  %s4 = sld [smem:[#allocation0]]
  $region22: #{ssd_gmm_forward.10} parent=0
    _
  %s6 = ssub.s32 1, %s4
  %s7 = scalar_select 0, %s6, %s4
  // Predicated region
  $region2: #{ssd_gmm_forward.10} parent=0 // pred_check
    _
  $region3: #{ssd_gmm_forward.10} parent=0 // pred_check_branch
    %9 = sbr.rel (0) target = $region5
  $region4: #{ssd_gmm_forward.10} parent=0 // pred_region
    _
  $region5: #{ssd_gmm_forward.10} parent=0 // pred_fallthru
    _
  // Predicated region
  $region6: #{ssd_gmm_forward.10} parent=0 // pred_check
    _
  $region7: #{ssd_gmm_forward.10} parent=0 // pred_check_branch
    %11 = sbr.rel (0) target = $region9
  $region8: #{ssd_gmm_forward.10} parent=0 // pred_region
    _
  $region9: #{ssd_gmm_forward.10} parent=0 // pred_fallthru
    _
  // Predicated region
  $region10: #{ssd_gmm_forward.10} parent=0 // pred_check
    _
  $region11: #{ssd_gmm_forward.10} parent=0 // pred_check_branch
    %13 = sbr.rel (0) target = $region13
  $region12: #{ssd_gmm_forward.10} parent=0 // pred_region
    _
  $region13: #{ssd_gmm_forward.10} parent=0 // pred_fallthru
    _
  %v15 = vld [vmem:[%s0] sm:$0xff]
  %v16 = vld [vmem:[%s0 + $0x8] sm:$0xff]
  %v17 = vld [vmem:[%s0 + $0x10] sm:$0xff]
  %v18 = vld [vmem:[%s0 + $0x18] sm:$0xff]
  %v19 = vld [vmem:[%s0 + $0x20] sm:$0xff]
  %v20 = vld [vmem:[%s0 + $0x28] sm:$0xff]
  %v21 = vld [vmem:[%s0 + $0x30] sm:$0xff]
  %v22 = vld [vmem:[%s0 + $0x38] sm:$0xff]
  %v23 = vld [vmem:[%s0 + $0x40] sm:$0xff]
  %v24 = vld [vmem:[%s0 + $0x48] sm:$0xff]
  %v25 = vld [vmem:[%s0 + $0x50] sm:$0xff]
  %v26 = vld [vmem:[%s0 + $0x58] sm:$0xff]
  %v27 = vld [vmem:[%s0 + $0x60] sm:$0xff]
  %v28 = vld [vmem:[%s0 + $0x68] sm:$0xff]
  %v29 = vld [vmem:[%s0 + $0x70] sm:$0xff]
  %v30 = vld [vmem:[%s0 + $0x78] sm:$0xff]
  %v31 = vld [vmem:[%s0 + $0x80] sm:$0xff]
  %v32 = vld [vmem:[%s0 + $0x88] sm:$0xff]
  %v33 = vld [vmem:[%s0 + $0x90] sm:$0xff]
  %v34 = vld [vmem:[%s0 + $0x98] sm:$0xff]
  %v35 = vld [vmem:[%s0 + $0xa0] sm:$0xff]
  %v36 = vld [vmem:[%s0 + $0xa8] sm:$0xff]
  %v37 = vld [vmem:[%s0 + $0xb0] sm:$0xff]
  %v38 = vld [vmem:[%s0 + $0xb8] sm:$0xff]
  %v39 = vld [vmem:[%s0 + $0xc0] sm:$0xff]
  %v40 = vld [vmem:[%s0 + $0xc8] sm:$0xff]
  %v41 = vld [vmem:[%s0 + $0xd0] sm:$0xff]
  %v42 = vld [vmem:[%s0 + $0xd8] sm:$0xff]
  %v43 = vld [vmem:[%s0 + $0xe0] sm:$0xff]
  %v44 = vld [vmem:[%s0 + $0xe8] sm:$0xff]
  %v45 = vld [vmem:[%s0 + $0xf0] sm:$0xff]
  %v46 = vld [vmem:[%s0 + $0xf8] sm:$0xff]
  %v47 = vld [vmem:[%s0 + $0x100] sm:$0xff]
  %v48 = vld [vmem:[%s0 + $0x108] sm:$0xff]
  %v49 = vld [vmem:[%s0 + $0x110] sm:$0xff]
  %v50 = vld [vmem:[%s0 + $0x118] sm:$0xff]
  %v51 = vld [vmem:[%s0 + $0x120] sm:$0xff]
  %v52 = vld [vmem:[%s0 + $0x128] sm:$0xff]
  %v53 = vld [vmem:[%s0 + $0x130] sm:$0xff]
  %v54 = vld [vmem:[%s0 + $0x138] sm:$0xff]
  %v55 = vld [vmem:[%s0 + $0x140] sm:$0xff]
  %v56 = vld [vmem:[%s0 + $0x148] sm:$0xff]
  %v57 = vld [vmem:[%s0 + $0x150] sm:$0xff]
  %v58 = vld [vmem:[%s0 + $0x158] sm:$0xff]
  %v59 = vld [vmem:[%s0 + $0x160] sm:$0xff]
  %v60 = vld [vmem:[%s0 + $0x168] sm:$0xff]
  %v61 = vld [vmem:[%s0 + $0x170] sm:$0xff]
  %v62 = vld [vmem:[%s0 + $0x178] sm:$0xff]
  %v63 = vld [vmem:[%s0 + $0x180] sm:$0xff]
  %v64 = vld [vmem:[%s0 + $0x188] sm:$0xff]
  %v65 = vld [vmem:[%s0 + $0x190] sm:$0xff]
  %v66 = vld [vmem:[%s0 + $0x198] sm:$0xff]
  %v67 = vld [vmem:[%s0 + $0x1a0] sm:$0xff]
  %v68 = vld [vmem:[%s0 + $0x1a8] sm:$0xff]
  %v69 = vld [vmem:[%s0 + $0x1b0] sm:$0xff]
  %v70 = vld [vmem:[%s0 + $0x1b8] sm:$0xff]
  %v71 = vld [vmem:[%s0 + $0x1c0] sm:$0xff]
  %v72 = vld [vmem:[%s0 + $0x1c8] sm:$0xff]
  %v73 = vld [vmem:[%s0 + $0x1d0] sm:$0xff]
  %v74 = vld [vmem:[%s0 + $0x1d8] sm:$0xff]
  %v75 = vld [vmem:[%s0 + $0x1e0] sm:$0xff]
  %v76 = vld [vmem:[%s0 + $0x1e8] sm:$0xff]
  %v77 = vld [vmem:[%s0 + $0x1f0] sm:$0xff]
  %v78 = vld [vmem:[%s0 + $0x1f8] sm:$0xff]
  %v79 = vld [vmem:[%s1] sm:$0xf]
  %v80 = vld [vmem:[%s1 + $0x4] sm:$0xf]
  %v81 = vld [vmem:[%s1 + $0x8] sm:$0xf]
  %v82 = vld [vmem:[%s1 + $0xc] sm:$0xf]
  %v83 = vld [vmem:[%s1 + $0x10] sm:$0xf]
  %v84 = vld [vmem:[%s1 + $0x14] sm:$0xf]
  %v85 = vld [vmem:[%s1 + $0x18] sm:$0xf]
  %v86 = vld [vmem:[%s1 + $0x1c] sm:$0xf]
  %v87 = vld [vmem:[%s1 + $0x20] sm:$0xf]
  %v88 = vld [vmem:[%s1 + $0x24] sm:$0xf]
  %v89 = vld [vmem:[%s1 + $0x28] sm:$0xf]
  %v90 = vld [vmem:[%s1 + $0x2c] sm:$0xf]
  %v91 = vld [vmem:[%s1 + $0x30] sm:$0xf]
  %v92 = vld [vmem:[%s1 + $0x34] sm:$0xf]
  %v93 = vld [vmem:[%s1 + $0x38] sm:$0xf]
  %v94 = vld [vmem:[%s1 + $0x3c] sm:$0xf]
  %v95 = vld [vmem:[%s1 + $0x40] sm:$0xf]
  %v96 = vld [vmem:[%s1 + $0x44] sm:$0xf]
  %v97 = vld [vmem:[%s2] sm:$0x1]
  %v99 = vlaneseq
  %v100 = vshrl.u32 %v99, 7
  %v101 = vsub.s32 0, %v100
  %v102 = vrot.slane %v97, %v101
  %v168 = vunpack.c.l.b16 %v15
  %v169 = vunpack.c.h.b16 %v15
  %v170 = vunpack.c.l.b16 %v16
  %v171 = vunpack.c.h.b16 %v16
  %v172 = vunpack.c.l.b16 %v17
  %v173 = vunpack.c.h.b16 %v17
  %v174 = vunpack.c.l.b16 %v18
  %v175 = vunpack.c.h.b16 %v18
  %v176 = vunpack.c.l.b16 %v19
  %v177 = vunpack.c.h.b16 %v19
  %v178 = vunpack.c.l.b16 %v20
  %v179 = vunpack.c.h.b16 %v20
  %v180 = vunpack.c.l.b16 %v21
  %v181 = vunpack.c.h.b16 %v21
  %v182 = vunpack.c.l.b16 %v22
  %v183 = vunpack.c.h.b16 %v22
  %v184 = vunpack.c.l.b16 %v23
  %v185 = vunpack.c.h.b16 %v23
  %v186 = vunpack.c.l.b16 %v24
  %v187 = vunpack.c.h.b16 %v24
  %v188 = vunpack.c.l.b16 %v25
  %v189 = vunpack.c.h.b16 %v25
  %v190 = vunpack.c.l.b16 %v26
  %v191 = vunpack.c.h.b16 %v26
  %v192 = vunpack.c.l.b16 %v27
  %v193 = vunpack.c.h.b16 %v27
  %v194 = vunpack.c.l.b16 %v28
  %v195 = vunpack.c.h.b16 %v28
  %v196 = vunpack.c.l.b16 %v29
  %v197 = vunpack.c.h.b16 %v29
  %v198 = vunpack.c.l.b16 %v30
  %v199 = vunpack.c.h.b16 %v30
  %v200 = vunpack.c.l.b16 %v31
  %v201 = vunpack.c.h.b16 %v31
  %v202 = vunpack.c.l.b16 %v32
  %v203 = vunpack.c.h.b16 %v32
  %v204 = vunpack.c.l.b16 %v33
  %v205 = vunpack.c.h.b16 %v33
  %v206 = vunpack.c.l.b16 %v34
  %v207 = vunpack.c.h.b16 %v34
  %v208 = vunpack.c.l.b16 %v35
  %v209 = vunpack.c.h.b16 %v35
  %v210 = vunpack.c.l.b16 %v36
  %v211 = vunpack.c.h.b16 %v36
  %v212 = vunpack.c.l.b16 %v37
  %v213 = vunpack.c.h.b16 %v37
  %v214 = vunpack.c.l.b16 %v38
  %v215 = vunpack.c.h.b16 %v38
  %v216 = vunpack.c.l.b16 %v39
  %v217 = vunpack.c.h.b16 %v39
  %v218 = vunpack.c.l.b16 %v40
  %v219 = vunpack.c.h.b16 %v40
  %v220 = vunpack.c.l.b16 %v41
  %v221 = vunpack.c.h.b16 %v41
  %v222 = vunpack.c.l.b16 %v42
  %v223 = vunpack.c.h.b16 %v42
  %v224 = vunpack.c.l.b16 %v43
  %v225 = vunpack.c.h.b16 %v43
  %v226 = vunpack.c.l.b16 %v44
  %v227 = vunpack.c.h.b16 %v44
  %v228 = vunpack.c.l.b16 %v45
  %v229 = vunpack.c.h.b16 %v45
  %v230 = vunpack.c.l.b16 %v46
  %v231 = vunpack.c.h.b16 %v46
  %v232 = vunpack.c.l.b16 %v47
  %v233 = vunpack.c.h.b16 %v47
  %v234 = vunpack.c.l.b16 %v48
  %v235 = vunpack.c.h.b16 %v48
  %v236 = vunpack.c.l.b16 %v49
  %v237 = vunpack.c.h.b16 %v49
  %v238 = vunpack.c.l.b16 %v50
  %v239 = vunpack.c.h.b16 %v50
  %v240 = vunpack.c.l.b16 %v51
  %v241 = vunpack.c.h.b16 %v51
  %v242 = vunpack.c.l.b16 %v52
  %v243 = vunpack.c.h.b16 %v52
  %v244 = vunpack.c.l.b16 %v53
  %v245 = vunpack.c.h.b16 %v53
  %v246 = vunpack.c.l.b16 %v54
  %v247 = vunpack.c.h.b16 %v54
  %v248 = vunpack.c.l.b16 %v55
  %v249 = vunpack.c.h.b16 %v55
  %v250 = vunpack.c.l.b16 %v56
  %v251 = vunpack.c.h.b16 %v56
  %v252 = vunpack.c.l.b16 %v57
  %v253 = vunpack.c.h.b16 %v57
  %v254 = vunpack.c.l.b16 %v58
  %v255 = vunpack.c.h.b16 %v58
  %v256 = vunpack.c.l.b16 %v59
  %v257 = vunpack.c.h.b16 %v59
  %v258 = vunpack.c.l.b16 %v60
  %v259 = vunpack.c.h.b16 %v60
  %v260 = vunpack.c.l.b16 %v61
  %v261 = vunpack.c.h.b16 %v61
  %v262 = vunpack.c.l.b16 %v62
  %v263 = vunpack.c.h.b16 %v62
  %v264 = vunpack.c.l.b16 %v63
  %v265 = vunpack.c.h.b16 %v63
  %v266 = vunpack.c.l.b16 %v64
  %v267 = vunpack.c.h.b16 %v64
  %v268 = vunpack.c.l.b16 %v65
  %v269 = vunpack.c.h.b16 %v65
  %v270 = vunpack.c.l.b16 %v66
  %v271 = vunpack.c.h.b16 %v66
  %v272 = vunpack.c.l.b16 %v67
  %v273 = vunpack.c.h.b16 %v67
  %v274 = vunpack.c.l.b16 %v68
  %v275 = vunpack.c.h.b16 %v68
  %v276 = vunpack.c.l.b16 %v69
  %v277 = vunpack.c.h.b16 %v69
  %v278 = vunpack.c.l.b16 %v70
  %v279 = vunpack.c.h.b16 %v70
  %v280 = vunpack.c.l.b16 %v71
  %v281 = vunpack.c.h.b16 %v71
  %v282 = vunpack.c.l.b16 %v72
  %v283 = vunpack.c.h.b16 %v72
  %v284 = vunpack.c.l.b16 %v73
  %v285 = vunpack.c.h.b16 %v73
  %v286 = vunpack.c.l.b16 %v74
  %v287 = vunpack.c.h.b16 %v74
  %v288 = vunpack.c.l.b16 %v75
  %v289 = vunpack.c.h.b16 %v75
  %v290 = vunpack.c.l.b16 %v76
  %v291 = vunpack.c.h.b16 %v76
  %v292 = vunpack.c.l.b16 %v77
  %v293 = vunpack.c.h.b16 %v77
  %v294 = vunpack.c.l.b16 %v78
  %v295 = vunpack.c.h.b16 %v78
  %v296 = vpack.c.b16 %v170, %v168
  %v297 = vpack.c.b16 %v171, %v169
  %v298 = vpack.c.b16 %v174, %v172
  %v299 = vpack.c.b16 %v175, %v173
  %v300 = vpack.c.b16 %v178, %v176
  %v301 = vpack.c.b16 %v179, %v177
  %v302 = vpack.c.b16 %v182, %v180
  %v303 = vpack.c.b16 %v183, %v181
  %v304 = vpack.c.b16 %v186, %v184
  %v305 = vpack.c.b16 %v187, %v185
  %v306 = vpack.c.b16 %v190, %v188
  %v307 = vpack.c.b16 %v191, %v189
  %v308 = vpack.c.b16 %v194, %v192
  %v309 = vpack.c.b16 %v195, %v193
  %v310 = vpack.c.b16 %v198, %v196
  %v311 = vpack.c.b16 %v199, %v197
  %v312 = vpack.c.b16 %v202, %v200
  %v313 = vpack.c.b16 %v203, %v201
  %v314 = vpack.c.b16 %v206, %v204
  %v315 = vpack.c.b16 %v207, %v205
  %v316 = vpack.c.b16 %v210, %v208
  %v317 = vpack.c.b16 %v211, %v209
  %v318 = vpack.c.b16 %v214, %v212
  %v319 = vpack.c.b16 %v215, %v213
  %v320 = vpack.c.b16 %v218, %v216
  %v321 = vpack.c.b16 %v219, %v217
  %v322 = vpack.c.b16 %v222, %v220
  %v323 = vpack.c.b16 %v223, %v221
  %v324 = vpack.c.b16 %v226, %v224
  %v325 = vpack.c.b16 %v227, %v225
  %v326 = vpack.c.b16 %v230, %v228
  %v327 = vpack.c.b16 %v231, %v229
  %v328 = vpack.c.b16 %v234, %v232
  %v329 = vpack.c.b16 %v235, %v233
  %v330 = vpack.c.b16 %v238, %v236
  %v331 = vpack.c.b16 %v239, %v237
  %v332 = vpack.c.b16 %v242, %v240
  %v333 = vpack.c.b16 %v243, %v241
  %v334 = vpack.c.b16 %v246, %v244
  %v335 = vpack.c.b16 %v247, %v245
  %v336 = vpack.c.b16 %v250, %v248
  %v337 = vpack.c.b16 %v251, %v249
  %v338 = vpack.c.b16 %v254, %v252
  %v339 = vpack.c.b16 %v255, %v253
  %v340 = vpack.c.b16 %v258, %v256
  %v341 = vpack.c.b16 %v259, %v257
  %v342 = vpack.c.b16 %v262, %v260
  %v343 = vpack.c.b16 %v263, %v261
  %v344 = vpack.c.b16 %v266, %v264
  %v345 = vpack.c.b16 %v267, %v265
  %v346 = vpack.c.b16 %v270, %v268
  %v347 = vpack.c.b16 %v271, %v269
  %v348 = vpack.c.b16 %v274, %v272
  %v349 = vpack.c.b16 %v275, %v273
  %v350 = vpack.c.b16 %v278, %v276
  %v351 = vpack.c.b16 %v279, %v277
  %v352 = vpack.c.b16 %v282, %v280
  %v353 = vpack.c.b16 %v283, %v281
  %v354 = vpack.c.b16 %v286, %v284
  %v355 = vpack.c.b16 %v287, %v285
  %v356 = vpack.c.b16 %v290, %v288
  %v357 = vpack.c.b16 %v291, %v289
  %v358 = vpack.c.b16 %v294, %v292
  %v359 = vpack.c.b16 %v295, %v293
  %v410 = vunpack.c.l.b16 %v79
  %v411 = vunpack.c.l.b16 %v80
  %v412 = vunpack.c.l.b16 %v81
  %v413 = vunpack.c.l.b16 %v82
  %v414 = vunpack.c.l.b16 %v83
  %v415 = vunpack.c.l.b16 %v84
  %v416 = vunpack.c.l.b16 %v85
  %v417 = vunpack.c.l.b16 %v86
  %v418 = vunpack.c.l.b16 %v87
  %v419 = vunpack.c.l.b16 %v88
  %v420 = vunpack.c.l.b16 %v89
  %v421 = vunpack.c.l.b16 %v90
  %v422 = vunpack.c.l.b16 %v91
  %v423 = vunpack.c.l.b16 %v92
  %v424 = vunpack.c.l.b16 %v93
  %v425 = vunpack.c.l.b16 %v94
  %v426 = vunpack.c.l.b16 %v95
  %v427 = vunpack.c.l.b16 %v96
  %v428 = vpack.c.b16 %v411, %v410
  %v429 = vpack.c.b16 %v413, %v412
  %v430 = vpack.c.b16 %v415, %v414
  %v431 = vpack.c.b16 %v417, %v416
  %v432 = vpack.c.b16 %v419, %v418
  %v433 = vpack.c.b16 %v421, %v420
  %v434 = vpack.c.b16 %v423, %v422
  %v435 = vpack.c.b16 %v425, %v424
  %v436 = vpack.c.b16 %v427, %v426
  %vm446 = vcmask 130048
  %v448 = vsel %vm446, %v297, 0
  %v451 = vsel %vm446, %v299, 0
  %v454 = vsel %vm446, %v301, 0
  %v457 = vsel %vm446, %v303, 0
  %v460 = vsel %vm446, %v305, 0
  %v463 = vsel %vm446, %v307, 0
  %v466 = vsel %vm446, %v309, 0
  %v469 = vsel %vm446, %v311, 0
  %v472 = vsel %vm446, %v313, 0
  %v475 = vsel %vm446, %v315, 0
  %v478 = vsel %vm446, %v317, 0
  %v481 = vsel %vm446, %v319, 0
  %v484 = vsel %vm446, %v321, 0
  %v487 = vsel %vm446, %v323, 0
  %v490 = vsel %vm446, %v325, 0
  %v493 = vsel %vm446, %v327, 0
  %v496 = vsel %vm446, %v329, 0
  %v499 = vsel %vm446, %v331, 0
  %v502 = vsel %vm446, %v333, 0
  %v505 = vsel %vm446, %v335, 0
  %v508 = vsel %vm446, %v337, 0
  %v511 = vsel %vm446, %v339, 0
  %v514 = vsel %vm446, %v341, 0
  %v517 = vsel %vm446, %v343, 0
  %v520 = vsel %vm446, %v345, 0
  %v523 = vsel %vm446, %v347, 0
  %v526 = vsel %vm446, %v349, 0
  %v529 = vsel %vm446, %v351, 0
  %v532 = vsel %vm446, %v353, 0
  %v535 = vsel %vm446, %v355, 0
  %v538 = vsel %vm446, %v357, 0
  %v541 = vsel %vm446, %v359, 0
  %543 = vmatprep.subr.bf16.mxu0 0
  %544 = vmatpush1.bf16.msra.mxu0 %v428
  %545 = vmatprep.subr.bf16.mxu0 0
  %546 = vmatpush1.bf16.msra.mxu0 %v429
  %547 = vmatprep.subr.bf16.mxu0 0
  %548 = vmatpush1.bf16.msra.mxu0 %v430
  %549 = vmatprep.subr.bf16.mxu0 0
  %550 = vmatpush1.bf16.msra.mxu0 %v431
  %551 = vmatprep.subr.bf16.mxu0 0
  %552 = vmatpush1.bf16.msra.mxu0 %v432
  %553 = vmatprep.subr.bf16.mxu0 0
  %554 = vmatpush1.bf16.msra.mxu0 %v433
  %555 = vmatprep.subr.bf16.mxu0 0
  %556 = vmatpush1.bf16.msra.mxu0 %v434
  %557 = vmatprep.subr.bf16.mxu0 0
  %558 = vmatpush1.bf16.msra.mxu0 %v435
  %559 = vmatprep.subr.bf16.mxu0 0
  %560 = vmatpush1.bf16.msra.mxu0 %v436
  %561 = vmatprep.subr.bf16.mxu0 0
  %562 = vmatpush1.bf16.msra.mxu0 0
  %563 = vmatprep.subr.bf16.mxu0 0
  %564 = vmatpush1.bf16.msra.mxu0 0
  %565 = vmatprep.subr.bf16.mxu0 0
  %566 = vmatpush1.bf16.msra.mxu0 0
  %567 = vmatprep.subr.bf16.mxu0 0
  %568 = vmatpush1.bf16.msra.mxu0 0
  %569 = vmatprep.subr.bf16.mxu0 0
  %570 = vmatpush1.bf16.msra.mxu0 0
  %571 = vmatprep.subr.bf16.mxu0 0
  %572 = vmatpush1.bf16.msra.mxu0 0
  %573 = vmatprep.subr.bf16.mxu0 0
  %574 = vmatpush1.bf16.msra.mxu0 0
  %575 = vmatprep.mubr.bf16.mxu0 %v448
  %576 = vmatmul.mubr.bf16.gmra.mrb[0].mxu0 %v296
  %v577 = vpop.f32.mrb[0].mxu0
  %v578 = vadd.f32 %v102, %v577
  %v579 = vpop.f32.mrb[0].mxu0
  %v580 = vpop.f32.mrb[0].mxu0
  %v581 = vadd.f32 %v102, %v580
  %v582 = vpop.f32.mrb[0].mxu0
  %583 = vmatprep.mubr.bf16.mxu0 %v451
  %584 = vmatmul.mubr.bf16.gmra.mrb[0].mxu0 %v298
  %v585 = vpop.f32.mrb[0].mxu0
  %v586 = vadd.f32 %v102, %v585
  %v587 = vpop.f32.mrb[0].mxu0
  %v588 = vpop.f32.mrb[0].mxu0
  %v589 = vadd.f32 %v102, %v588
  %v590 = vpop.f32.mrb[0].mxu0
  %591 = vmatprep.mubr.bf16.mxu0 %v454
  %592 = vmatmul.mubr.bf16.gmra.mrb[0].mxu0 %v300
  %v593 = vpop.f32.mrb[0].mxu0
  %v594 = vadd.f32 %v102, %v593
  %v595 = vpop.f32.mrb[0].mxu0
  %v596 = vpop.f32.mrb[0].mxu0
  %v597 = vadd.f32 %v102, %v596
  %v598 = vpop.f32.mrb[0].mxu0
  %599 = vmatprep.mubr.bf16.mxu0 %v457
  %600 = vmatmul.mubr.bf16.gmra.mrb[0].mxu0 %v302
  %v601 = vpop.f32.mrb[0].mxu0
  %v602 = vadd.f32 %v102, %v601
  %v603 = vpop.f32.mrb[0].mxu0
  %v604 = vpop.f32.mrb[0].mxu0
  %v605 = vadd.f32 %v102, %v604
  %v606 = vpop.f32.mrb[0].mxu0
  %607 = vmatprep.mubr.bf16.mxu0 %v460
  %608 = vmatmul.mubr.bf16.gmra.mrb[0].mxu0 %v304
  %v609 = vpop.f32.mrb[0].mxu0
  %v610 = vadd.f32 %v102, %v609
  %v611 = vpop.f32.mrb[0].mxu0
  %v612 = vpop.f32.mrb[0].mxu0
  %v613 = vadd.f32 %v102, %v612
  %v614 = vpop.f32.mrb[0].mxu0
  %615 = vmatprep.mubr.bf16.mxu0 %v463
  %616 = vmatmul.mubr.bf16.gmra.mrb[0].mxu0 %v306
  %v617 = vpop.f32.mrb[0].mxu0
  %v618 = vadd.f32 %v102, %v617
  %v619 = vpop.f32.mrb[0].mxu0
  %v620 = vpop.f32.mrb[0].mxu0
  %v621 = vadd.f32 %v102, %v620
  %v622 = vpop.f32.mrb[0].mxu0
  %623 = vmatprep.mubr.bf16.mxu0 %v466
  %624 = vmatmul.mubr.bf16.gmra.mrb[0].mxu0 %v308
  %v625 = vpop.f32.mrb[0].mxu0
  %v626 = vadd.f32 %v102, %v625
  %v627 = vpop.f32.mrb[0].mxu0
  %v628 = vpop.f32.mrb[0].mxu0
  %v629 = vadd.f32 %v102, %v628
  %v630 = vpop.f32.mrb[0].mxu0
  %631 = vmatprep.mubr.bf16.mxu0 %v469
  %632 = vmatmul.mubr.bf16.gmra.mrb[0].mxu0 %v310
  %v633 = vpop.f32.mrb[0].mxu0
  %v634 = vadd.f32 %v102, %v633
  %v635 = vpop.f32.mrb[0].mxu0
  %v636 = vpop.f32.mrb[0].mxu0
  %v637 = vadd.f32 %v102, %v636
  %v638 = vpop.f32.mrb[0].mxu0
  %639 = vmatprep.mubr.bf16.mxu0 %v472
  %640 = vmatmul.mubr.bf16.gmra.mrb[0].mxu0 %v312
  %v641 = vpop.f32.mrb[0].mxu0
  %v642 = vadd.f32 %v102, %v641
  %v643 = vpop.f32.mrb[0].mxu0
  %v644 = vpop.f32.mrb[0].mxu0
  %v645 = vadd.f32 %v102, %v644
  %v646 = vpop.f32.mrb[0].mxu0
  %647 = vmatprep.mubr.bf16.mxu0 %v475
  %648 = vmatmul.mubr.bf16.gmra.mrb[0].mxu0 %v314
  %v649 = vpop.f32.mrb[0].mxu0
  %v650 = vadd.f32 %v102, %v649
  %v651 = vpop.f32.mrb[0].mxu0
  %v652 = vpop.f32.mrb[0].mxu0
  %v653 = vadd.f32 %v102, %v652
  %v654 = vpop.f32.mrb[0].mxu0
  %655 = vmatprep.mubr.bf16.mxu0 %v478
  %656 = vmatmul.mubr.bf16.gmra.mrb[0].mxu0 %v316
  %v657 = vpop.f32.mrb[0].mxu0
  %v658 = vadd.f32 %v102, %v657
  %v659 = vpop.f32.mrb[0].mxu0
  %v660 = vpop.f32.mrb[0].mxu0
  %v661 = vadd.f32 %v102, %v660
  %v662 = vpop.f32.mrb[0].mxu0
  %663 = vmatprep.mubr.bf16.mxu0 %v481
  %664 = vmatmul.mubr.bf16.gmra.mrb[0].mxu0 %v318
  %v665 = vpop.f32.mrb[0].mxu0
  %v666 = vadd.f32 %v102, %v665
  %v667 = vpop.f32.mrb[0].mxu0
  %v668 = vpop.f32.mrb[0].mxu0
  %v669 = vadd.f32 %v102, %v668
  %v670 = vpop.f32.mrb[0].mxu0
  %671 = vmatprep.mubr.bf16.mxu0 %v484
  %672 = vmatmul.mubr.bf16.gmra.mrb[0].mxu0 %v320
  %v673 = vpop.f32.mrb[0].mxu0
  %v674 = vadd.f32 %v102, %v673
  %v675 = vpop.f32.mrb[0].mxu0
  %v676 = vpop.f32.mrb[0].mxu0
  %v677 = vadd.f32 %v102, %v676
  %v678 = vpop.f32.mrb[0].mxu0
  %679 = vmatprep.mubr.bf16.mxu0 %v487
  %680 = vmatmul.mubr.bf16.gmra.mrb[0].mxu0 %v322
  %v681 = vpop.f32.mrb[0].mxu0
  %v682 = vadd.f32 %v102, %v681
  %v683 = vpop.f32.mrb[0].mxu0
  %v684 = vpop.f32.mrb[0].mxu0
  %v685 = vadd.f32 %v102, %v684
  %v686 = vpop.f32.mrb[0].mxu0
  %687 = vmatprep.mubr.bf16.mxu0 %v490
  %688 = vmatmul.mubr.bf16.gmra.mrb[0].mxu0 %v324
  %v689 = vpop.f32.mrb[0].mxu0
  %v690 = vadd.f32 %v102, %v689
  %v691 = vpop.f32.mrb[0].mxu0
  %v692 = vpop.f32.mrb[0].mxu0
  %v693 = vadd.f32 %v102, %v692
  %v694 = vpop.f32.mrb[0].mxu0
  %695 = vmatprep.mubr.bf16.mxu0 %v493
  %696 = vmatmul.mubr.bf16.gmra.mrb[0].mxu0 %v326
  %v697 = vpop.f32.mrb[0].mxu0
  %v698 = vadd.f32 %v102, %v697
  %v699 = vpop.f32.mrb[0].mxu0
  %v700 = vpop.f32.mrb[0].mxu0
  %v701 = vadd.f32 %v102, %v700
  %v702 = vpop.f32.mrb[0].mxu0
  %703 = vmatprep.mubr.bf16.mxu0 %v496
  %704 = vmatmul.mubr.bf16.gmra.mrb[0].mxu0 %v328
  %v705 = vpop.f32.mrb[0].mxu0
  %v706 = vadd.f32 %v102, %v705
  %v707 = vpop.f32.mrb[0].mxu0
  %v708 = vpop.f32.mrb[0].mxu0
  %v709 = vadd.f32 %v102, %v708
  %v710 = vpop.f32.mrb[0].mxu0
  %711 = vmatprep.mubr.bf16.mxu0 %v499
  %712 = vmatmul.mubr.bf16.gmra.mrb[0].mxu0 %v330
  %v713 = vpop.f32.mrb[0].mxu0
  %v714 = vadd.f32 %v102, %v713
  %v715 = vpop.f32.mrb[0].mxu0
  %v716 = vpop.f32.mrb[0].mxu0
  %v717 = vadd.f32 %v102, %v716
  %v718 = vpop.f32.mrb[0].mxu0
  %719 = vmatprep.mubr.bf16.mxu0 %v502
  %720 = vmatmul.mubr.bf16.gmra.mrb[0].mxu0 %v332
  %v721 = vpop.f32.mrb[0].mxu0
  %v722 = vadd.f32 %v102, %v721
  %v723 = vpop.f32.mrb[0].mxu0
  %v724 = vpop.f32.mrb[0].mxu0
  %v725 = vadd.f32 %v102, %v724
  %v726 = vpop.f32.mrb[0].mxu0
  %727 = vmatprep.mubr.bf16.mxu0 %v505
  %728 = vmatmul.mubr.bf16.gmra.mrb[0].mxu0 %v334
  %v729 = vpop.f32.mrb[0].mxu0
  %v730 = vadd.f32 %v102, %v729
  %v731 = vpop.f32.mrb[0].mxu0
  %v732 = vpop.f32.mrb[0].mxu0
  %v733 = vadd.f32 %v102, %v732
  %v734 = vpop.f32.mrb[0].mxu0
  %735 = vmatprep.mubr.bf16.mxu0 %v508
  %736 = vmatmul.mubr.bf16.gmra.mrb[0].mxu0 %v336
  %v737 = vpop.f32.mrb[0].mxu0
  %v738 = vadd.f32 %v102, %v737
  %v739 = vpop.f32.mrb[0].mxu0
  %v740 = vpop.f32.mrb[0].mxu0
  %v741 = vadd.f32 %v102, %v740
  %v742 = vpop.f32.mrb[0].mxu0
  %743 = vmatprep.mubr.bf16.mxu0 %v511
  %744 = vmatmul.mubr.bf16.gmra.mrb[0].mxu0 %v338
  %v745 = vpop.f32.mrb[0].mxu0
  %v746 = vadd.f32 %v102, %v745
  %v747 = vpop.f32.mrb[0].mxu0
  %v748 = vpop.f32.mrb[0].mxu0
  %v749 = vadd.f32 %v102, %v748
  %v750 = vpop.f32.mrb[0].mxu0
  %751 = vmatprep.mubr.bf16.mxu0 %v514
  %752 = vmatmul.mubr.bf16.gmra.mrb[0].mxu0 %v340
  %v753 = vpop.f32.mrb[0].mxu0
  %v754 = vadd.f32 %v102, %v753
  %v755 = vpop.f32.mrb[0].mxu0
  %v756 = vpop.f32.mrb[0].mxu0
  %v757 = vadd.f32 %v102, %v756
  %v758 = vpop.f32.mrb[0].mxu0
  %759 = vmatprep.mubr.bf16.mxu0 %v517
  %760 = vmatmul.mubr.bf16.gmra.mrb[0].mxu0 %v342
  %v761 = vpop.f32.mrb[0].mxu0
  %v762 = vadd.f32 %v102, %v761
  %v763 = vpop.f32.mrb[0].mxu0
  %v764 = vpop.f32.mrb[0].mxu0
  %v765 = vadd.f32 %v102, %v764
  %v766 = vpop.f32.mrb[0].mxu0
  %767 = vmatprep.mubr.bf16.mxu0 %v520
  %768 = vmatmul.mubr.bf16.gmra.mrb[0].mxu0 %v344
  %v769 = vpop.f32.mrb[0].mxu0
  %v770 = vadd.f32 %v102, %v769
  %v771 = vpop.f32.mrb[0].mxu0
  %v772 = vpop.f32.mrb[0].mxu0
  %v773 = vadd.f32 %v102, %v772
  %v774 = vpop.f32.mrb[0].mxu0
  %775 = vmatprep.mubr.bf16.mxu0 %v523
  %776 = vmatmul.mubr.bf16.gmra.mrb[0].mxu0 %v346
  %v777 = vpop.f32.mrb[0].mxu0
  %v778 = vadd.f32 %v102, %v777
  %v779 = vpop.f32.mrb[0].mxu0
  %v780 = vpop.f32.mrb[0].mxu0
  %v781 = vadd.f32 %v102, %v780
  %v782 = vpop.f32.mrb[0].mxu0
  %783 = vmatprep.mubr.bf16.mxu0 %v526
  %784 = vmatmul.mubr.bf16.gmra.mrb[0].mxu0 %v348
  %v785 = vpop.f32.mrb[0].mxu0
  %v786 = vadd.f32 %v102, %v785
  %v787 = vpop.f32.mrb[0].mxu0
  %v788 = vpop.f32.mrb[0].mxu0
  %v789 = vadd.f32 %v102, %v788
  %v790 = vpop.f32.mrb[0].mxu0
  %791 = vmatprep.mubr.bf16.mxu0 %v529
  %792 = vmatmul.mubr.bf16.gmra.mrb[0].mxu0 %v350
  %v793 = vpop.f32.mrb[0].mxu0
  %v794 = vadd.f32 %v102, %v793
  %v795 = vpop.f32.mrb[0].mxu0
  %v796 = vpop.f32.mrb[0].mxu0
  %v797 = vadd.f32 %v102, %v796
  %v798 = vpop.f32.mrb[0].mxu0
  %799 = vmatprep.mubr.bf16.mxu0 %v532
  %800 = vmatmul.mubr.bf16.gmra.mrb[0].mxu0 %v352
  %v801 = vpop.f32.mrb[0].mxu0
  %v802 = vadd.f32 %v102, %v801
  %v803 = vpop.f32.mrb[0].mxu0
  %v804 = vpop.f32.mrb[0].mxu0
  %v805 = vadd.f32 %v102, %v804
  %v806 = vpop.f32.mrb[0].mxu0
  %807 = vmatprep.mubr.bf16.mxu0 %v535
  %808 = vmatmul.mubr.bf16.gmra.mrb[0].mxu0 %v354
  %v809 = vpop.f32.mrb[0].mxu0
  %v810 = vadd.f32 %v102, %v809
  %v811 = vpop.f32.mrb[0].mxu0
  %v812 = vpop.f32.mrb[0].mxu0
  %v813 = vadd.f32 %v102, %v812
  %v814 = vpop.f32.mrb[0].mxu0
  %815 = vmatprep.mubr.bf16.mxu0 %v538
  %816 = vmatmul.mubr.bf16.gmra.mrb[0].mxu0 %v356
  %v817 = vpop.f32.mrb[0].mxu0
  %v818 = vadd.f32 %v102, %v817
  %v819 = vpop.f32.mrb[0].mxu0
  %v820 = vpop.f32.mrb[0].mxu0
  %v821 = vadd.f32 %v102, %v820
  %v822 = vpop.f32.mrb[0].mxu0
  %823 = vmatprep.mubr.bf16.mxu0 %v541
  %824 = vmatmul.mubr.bf16.gmra.mrb[0].mxu0 %v358
  %v825 = vpop.f32.mrb[0].mxu0
  %v826 = vadd.f32 %v102, %v825
  %v827 = vpop.f32.mrb[0].mxu0
  %v828 = vpop.f32.mrb[0].mxu0
  %v829 = vadd.f32 %v102, %v828
  %v830 = vpop.f32.mrb[0].mxu0
  %831 = vdwg.mxu0
  %v832 = vmax.f32 %v578, 0.0
  %v833 = vmax.f32 %v581, 0.0
  %v834 = vmax.f32 %v586, 0.0
  %v835 = vmax.f32 %v589, 0.0
  %v836 = vmax.f32 %v594, 0.0
  %v837 = vmax.f32 %v597, 0.0
  %v838 = vmax.f32 %v602, 0.0
  %v839 = vmax.f32 %v605, 0.0
  %v840 = vmax.f32 %v610, 0.0
  %v841 = vmax.f32 %v613, 0.0
  %v842 = vmax.f32 %v618, 0.0
  %v843 = vmax.f32 %v621, 0.0
  %v844 = vmax.f32 %v626, 0.0
  %v845 = vmax.f32 %v629, 0.0
  %v846 = vmax.f32 %v634, 0.0
  %v847 = vmax.f32 %v637, 0.0
  %v848 = vmax.f32 %v642, 0.0
  %v849 = vmax.f32 %v645, 0.0
  %v850 = vmax.f32 %v650, 0.0
  %v851 = vmax.f32 %v653, 0.0
  %v852 = vmax.f32 %v658, 0.0
  %v853 = vmax.f32 %v661, 0.0
  %v854 = vmax.f32 %v666, 0.0
  %v855 = vmax.f32 %v669, 0.0
  %v856 = vmax.f32 %v674, 0.0
  %v857 = vmax.f32 %v677, 0.0
  %v858 = vmax.f32 %v682, 0.0
  %v859 = vmax.f32 %v685, 0.0
  %v860 = vmax.f32 %v690, 0.0
  %v861 = vmax.f32 %v693, 0.0
  %v862 = vmax.f32 %v698, 0.0
  %v863 = vmax.f32 %v701, 0.0
  %v864 = vmax.f32 %v706, 0.0
  %v865 = vmax.f32 %v709, 0.0
  %v866 = vmax.f32 %v714, 0.0
  %v867 = vmax.f32 %v717, 0.0
  %v868 = vmax.f32 %v722, 0.0
  %v869 = vmax.f32 %v725, 0.0
  %v870 = vmax.f32 %v730, 0.0
  %v871 = vmax.f32 %v733, 0.0
  %v872 = vmax.f32 %v738, 0.0
  %v873 = vmax.f32 %v741, 0.0
  %v874 = vmax.f32 %v746, 0.0
  %v875 = vmax.f32 %v749, 0.0
  %v876 = vmax.f32 %v754, 0.0
  %v877 = vmax.f32 %v757, 0.0
  %v878 = vmax.f32 %v762, 0.0
  %v879 = vmax.f32 %v765, 0.0
  %v880 = vmax.f32 %v770, 0.0
  %v881 = vmax.f32 %v773, 0.0
  %v882 = vmax.f32 %v778, 0.0
  %v883 = vmax.f32 %v781, 0.0
  %v884 = vmax.f32 %v786, 0.0
  %v885 = vmax.f32 %v789, 0.0
  %v886 = vmax.f32 %v794, 0.0
  %v887 = vmax.f32 %v797, 0.0
  %v888 = vmax.f32 %v802, 0.0
  %v889 = vmax.f32 %v805, 0.0
  %v890 = vmax.f32 %v810, 0.0
  %v891 = vmax.f32 %v813, 0.0
  %v892 = vmax.f32 %v818, 0.0
  %v893 = vmax.f32 %v821, 0.0
  %v894 = vmax.f32 %v826, 0.0
  %v895 = vmax.f32 %v829, 0.0
  %vm896 = vcmask 261120
  %897 = vst.msk [vmem:[%s3] sm:$0xff] %vm896, %v832
  %898 = vst.msk [vmem:[%s3 + $0x8] sm:$0xff] %vm896, %v833
  %899 = vst.msk [vmem:[%s3 + $0x10] sm:$0xff] %vm896, %v834
  %900 = vst.msk [vmem:[%s3 + $0x18] sm:$0xff] %vm896, %v835
  %901 = vst.msk [vmem:[%s3 + $0x20] sm:$0xff] %vm896, %v836
  %902 = vst.msk [vmem:[%s3 + $0x28] sm:$0xff] %vm896, %v837
  %903 = vst.msk [vmem:[%s3 + $0x30] sm:$0xff] %vm896, %v838
  %904 = vst.msk [vmem:[%s3 + $0x38] sm:$0xff] %vm896, %v839
  %905 = vst.msk [vmem:[%s3 + $0x40] sm:$0xff] %vm896, %v840
  %906 = vst.msk [vmem:[%s3 + $0x48] sm:$0xff] %vm896, %v841
  %907 = vst.msk [vmem:[%s3 + $0x50] sm:$0xff] %vm896, %v842
  %908 = vst.msk [vmem:[%s3 + $0x58] sm:$0xff] %vm896, %v843
  %909 = vst.msk [vmem:[%s3 + $0x60] sm:$0xff] %vm896, %v844
  %910 = vst.msk [vmem:[%s3 + $0x68] sm:$0xff] %vm896, %v845
  %911 = vst.msk [vmem:[%s3 + $0x70] sm:$0xff] %vm896, %v846
  %912 = vst.msk [vmem:[%s3 + $0x78] sm:$0xff] %vm896, %v847
  %913 = vst.msk [vmem:[%s3 + $0x80] sm:$0xff] %vm896, %v848
  %914 = vst.msk [vmem:[%s3 + $0x88] sm:$0xff] %vm896, %v849
  %915 = vst.msk [vmem:[%s3 + $0x90] sm:$0xff] %vm896, %v850
  %916 = vst.msk [vmem:[%s3 + $0x98] sm:$0xff] %vm896, %v851
  %917 = vst.msk [vmem:[%s3 + $0xa0] sm:$0xff] %vm896, %v852
  %918 = vst.msk [vmem:[%s3 + $0xa8] sm:$0xff] %vm896, %v853
  %919 = vst.msk [vmem:[%s3 + $0xb0] sm:$0xff] %vm896, %v854
  %920 = vst.msk [vmem:[%s3 + $0xb8] sm:$0xff] %vm896, %v855
  %921 = vst.msk [vmem:[%s3 + $0xc0] sm:$0xff] %vm896, %v856
  %922 = vst.msk [vmem:[%s3 + $0xc8] sm:$0xff] %vm896, %v857
  %923 = vst.msk [vmem:[%s3 + $0xd0] sm:$0xff] %vm896, %v858
  %924 = vst.msk [vmem:[%s3 + $0xd8] sm:$0xff] %vm896, %v859
  %925 = vst.msk [vmem:[%s3 + $0xe0] sm:$0xff] %vm896, %v860
  %926 = vst.msk [vmem:[%s3 + $0xe8] sm:$0xff] %vm896, %v861
  %927 = vst.msk [vmem:[%s3 + $0xf0] sm:$0xff] %vm896, %v862
  %928 = vst.msk [vmem:[%s3 + $0xf8] sm:$0xff] %vm896, %v863
  %929 = vst.msk [vmem:[%s3 + $0x100] sm:$0xff] %vm896, %v864
  %930 = vst.msk [vmem:[%s3 + $0x108] sm:$0xff] %vm896, %v865
  %931 = vst.msk [vmem:[%s3 + $0x110] sm:$0xff] %vm896, %v866
  %932 = vst.msk [vmem:[%s3 + $0x118] sm:$0xff] %vm896, %v867
  %933 = vst.msk [vmem:[%s3 + $0x120] sm:$0xff] %vm896, %v868
  %934 = vst.msk [vmem:[%s3 + $0x128] sm:$0xff] %vm896, %v869
  %935 = vst.msk [vmem:[%s3 + $0x130] sm:$0xff] %vm896, %v870
  %936 = vst.msk [vmem:[%s3 + $0x138] sm:$0xff] %vm896, %v871
  %937 = vst.msk [vmem:[%s3 + $0x140] sm:$0xff] %vm896, %v872
  %938 = vst.msk [vmem:[%s3 + $0x148] sm:$0xff] %vm896, %v873
  %939 = vst.msk [vmem:[%s3 + $0x150] sm:$0xff] %vm896, %v874
  %940 = vst.msk [vmem:[%s3 + $0x158] sm:$0xff] %vm896, %v875
  %941 = vst.msk [vmem:[%s3 + $0x160] sm:$0xff] %vm896, %v876
  %942 = vst.msk [vmem:[%s3 + $0x168] sm:$0xff] %vm896, %v877
  %943 = vst.msk [vmem:[%s3 + $0x170] sm:$0xff] %vm896, %v878
  %944 = vst.msk [vmem:[%s3 + $0x178] sm:$0xff] %vm896, %v879
  %945 = vst.msk [vmem:[%s3 + $0x180] sm:$0xff] %vm896, %v880
  %946 = vst.msk [vmem:[%s3 + $0x188] sm:$0xff] %vm896, %v881
  %947 = vst.msk [vmem:[%s3 + $0x190] sm:$0xff] %vm896, %v882
  %948 = vst.msk [vmem:[%s3 + $0x198] sm:$0xff] %vm896, %v883
  %949 = vst.msk [vmem:[%s3 + $0x1a0] sm:$0xff] %vm896, %v884
  %950 = vst.msk [vmem:[%s3 + $0x1a8] sm:$0xff] %vm896, %v885
  %951 = vst.msk [vmem:[%s3 + $0x1b0] sm:$0xff] %vm896, %v886
  %952 = vst.msk [vmem:[%s3 + $0x1b8] sm:$0xff] %vm896, %v887
  %953 = vst.msk [vmem:[%s3 + $0x1c0] sm:$0xff] %vm896, %v888
  %954 = vst.msk [vmem:[%s3 + $0x1c8] sm:$0xff] %vm896, %v889
  %955 = vst.msk [vmem:[%s3 + $0x1d0] sm:$0xff] %vm896, %v890
  %956 = vst.msk [vmem:[%s3 + $0x1d8] sm:$0xff] %vm896, %v891
  %957 = vst.msk [vmem:[%s3 + $0x1e0] sm:$0xff] %vm896, %v892
  %958 = vst.msk [vmem:[%s3 + $0x1e8] sm:$0xff] %vm896, %v893
  %959 = vst.msk [vmem:[%s3 + $0x1f0] sm:$0xff] %vm896, %v894
  %960 = vst.msk [vmem:[%s3 + $0x1f8] sm:$0xff] %vm896, %v895
  // Predicated region
  $region14: #{ssd_gmm_forward.10} parent=0 // pred_check
    _
  $region15: #{ssd_gmm_forward.10} parent=0 // pred_check_branch
    %962 = sbr.rel (0) target = $region17
  $region16: #{ssd_gmm_forward.10} parent=0 // pred_region
    _
  $region17: #{ssd_gmm_forward.10} parent=0 // pred_fallthru
    _
  // Predicated region
  $region18: #{ssd_gmm_forward.10} parent=0 // pred_check
    _
  $region19: #{ssd_gmm_forward.10} parent=0 // pred_check_branch
    %964 = sbr.rel (0) target = $region21
  $region20: #{ssd_gmm_forward.10} parent=0 // pred_region
    _
  $region21: #{ssd_gmm_forward.10} parent=0 // pred_fallthru
    _

// kernel: ssd_gmm_forward.11
$region0: #{ssd_gmm_forward.11}
  #allocation0 [shape = 'u32[]', space=smem, size = 0x4, offset = 0x4, fixed_abs, tag = 'smem constant byte address 0x4 - core index']
  #allocation1 [shape = 'u32[144,128]{1,0:T(1,128)}', space=vmem, size = 0x12000, scoped, tag = 'internal scratch']
  %s0 = inlined_call_operand.vmem [shape: bf16[128,288], index: 0, kind: input, shape index: {}]
  %s1 = inlined_call_operand.vmem [shape: bf16[288,32], index: 1, kind: input, shape index: {}]
  %s2 = inlined_call_operand.vmem [shape: f32[1,32], index: 2, kind: input, shape index: {}]
  %s3 = inlined_call_operand.vmem [shape: f32[1,32], index: 3, kind: input, shape index: {}]
  %s4 = inlined_call_operand.vmem [shape: f32[128,32], index: 4, kind: output, shape index: {0}]
  %s5 = inlined_call_operand.vmem [shape: f32[128,32], index: 5, kind: output, shape index: {1}]
  %6 = xla_tuple %s4, %s5
  %s7 = sld [smem:[#allocation0]]
  $region34: #{ssd_gmm_forward.11} parent=0
    _
  %s9 = ssub.s32 1, %s7
  %s10 = scalar_select 0, %s9, %s7
  // Predicated region
  $region2: #{ssd_gmm_forward.11} parent=0 // pred_check
    _
  $region3: #{ssd_gmm_forward.11} parent=0 // pred_check_branch
    %12 = sbr.rel (0) target = $region5
  $region4: #{ssd_gmm_forward.11} parent=0 // pred_region
    _
  $region5: #{ssd_gmm_forward.11} parent=0 // pred_fallthru
    _
  // Predicated region
  $region6: #{ssd_gmm_forward.11} parent=0 // pred_check
    _
  $region7: #{ssd_gmm_forward.11} parent=0 // pred_check_branch
    %14 = sbr.rel (0) target = $region9
  $region8: #{ssd_gmm_forward.11} parent=0 // pred_region
    _
  $region9: #{ssd_gmm_forward.11} parent=0 // pred_fallthru
    _
  // Predicated region
  $region10: #{ssd_gmm_forward.11} parent=0 // pred_check
    _
  $region11: #{ssd_gmm_forward.11} parent=0 // pred_check_branch
    %16 = sbr.rel (0) target = $region13
  $region12: #{ssd_gmm_forward.11} parent=0 // pred_region
    _
  $region13: #{ssd_gmm_forward.11} parent=0 // pred_fallthru
    _
  // Predicated region
  $region14: #{ssd_gmm_forward.11} parent=0 // pred_check
    _
  $region15: #{ssd_gmm_forward.11} parent=0 // pred_check_branch
    %18 = sbr.rel (0) target = $region17
  $region16: #{ssd_gmm_forward.11} parent=0 // pred_region
    _
  $region17: #{ssd_gmm_forward.11} parent=0 // pred_fallthru
    _
  %v20 = vld [vmem:[%s0] sm:$0xff]
  %v21 = vld [vmem:[%s0 + $0x8] sm:$0xf]
  %v22 = vld [vmem:[%s0 + $0xc] sm:$0xff]
  %v23 = vld [vmem:[%s0 + $0x14] sm:$0xf]
  %v24 = vld [vmem:[%s0 + $0x18] sm:$0xff]
  %v25 = vld [vmem:[%s0 + $0x20] sm:$0xf]
  %v26 = vld [vmem:[%s0 + $0x24] sm:$0xff]
  %v27 = vld [vmem:[%s0 + $0x2c] sm:$0xf]
  %v28 = vld [vmem:[%s0 + $0x30] sm:$0xff]
  %v29 = vld [vmem:[%s0 + $0x38] sm:$0xf]
  %v30 = vld [vmem:[%s0 + $0x3c] sm:$0xff]
  %v31 = vld [vmem:[%s0 + $0x44] sm:$0xf]
  %v32 = vld [vmem:[%s0 + $0x48] sm:$0xff]
  %v33 = vld [vmem:[%s0 + $0x50] sm:$0xf]
  %v34 = vld [vmem:[%s0 + $0x54] sm:$0xff]
  %v35 = vld [vmem:[%s0 + $0x5c] sm:$0xf]
  %v36 = vld [vmem:[%s0 + $0x60] sm:$0xff]
  %v37 = vld [vmem:[%s0 + $0x68] sm:$0xf]
  %v38 = vld [vmem:[%s0 + $0x6c] sm:$0xff]
  %v39 = vld [vmem:[%s0 + $0x74] sm:$0xf]
  %v40 = vld [vmem:[%s0 + $0x78] sm:$0xff]
  %v41 = vld [vmem:[%s0 + $0x80] sm:$0xf]
  %v42 = vld [vmem:[%s0 + $0x84] sm:$0xff]
  %v43 = vld [vmem:[%s0 + $0x8c] sm:$0xf]
  %v44 = vld [vmem:[%s0 + $0x90] sm:$0xff]
  %v45 = vld [vmem:[%s0 + $0x98] sm:$0xf]
  %v46 = vld [vmem:[%s0 + $0x9c] sm:$0xff]
  %v47 = vld [vmem:[%s0 + $0xa4] sm:$0xf]
  %v48 = vld [vmem:[%s0 + $0xa8] sm:$0xff]
  %v49 = vld [vmem:[%s0 + $0xb0] sm:$0xf]
  %v50 = vld [vmem:[%s0 + $0xb4] sm:$0xff]
  %v51 = vld [vmem:[%s0 + $0xbc] sm:$0xf]
  %v52 = vld [vmem:[%s1] sm:$0xf]
  %v53 = vld [vmem:[%s1 + $0x4] sm:$0xf]
  %v54 = vld [vmem:[%s1 + $0x8] sm:$0xf]
  %v55 = vld [vmem:[%s1 + $0xc] sm:$0xf]
  %v56 = vld [vmem:[%s1 + $0x10] sm:$0xf]
  %v57 = vld [vmem:[%s1 + $0x14] sm:$0xf]
  %v58 = vld [vmem:[%s1 + $0x18] sm:$0xf]
  %v59 = vld [vmem:[%s1 + $0x1c] sm:$0xf]
  %v60 = vld [vmem:[%s1 + $0x20] sm:$0xf]
  %v61 = vld [vmem:[%s1 + $0x24] sm:$0xf]
  %v62 = vld [vmem:[%s1 + $0x28] sm:$0xf]
  %v63 = vld [vmem:[%s1 + $0x2c] sm:$0xf]
  %v64 = vld [vmem:[%s1 + $0x30] sm:$0xf]
  %v65 = vld [vmem:[%s1 + $0x34] sm:$0xf]
  %v66 = vld [vmem:[%s1 + $0x38] sm:$0xf]
  %v67 = vld [vmem:[%s1 + $0x3c] sm:$0xf]
  %v68 = vld [vmem:[%s1 + $0x40] sm:$0xf]
  %v69 = vld [vmem:[%s1 + $0x44] sm:$0xf]
  %v70 = vld [vmem:[%s1 + $0x48] sm:$0xf]
  %v71 = vld [vmem:[%s1 + $0x4c] sm:$0xf]
  %v72 = vld [vmem:[%s1 + $0x50] sm:$0xf]
  %v73 = vld [vmem:[%s1 + $0x54] sm:$0xf]
  %v74 = vld [vmem:[%s1 + $0x58] sm:$0xf]
  %v75 = vld [vmem:[%s1 + $0x5c] sm:$0xf]
  %v76 = vld [vmem:[%s1 + $0x60] sm:$0xf]
  %v77 = vld [vmem:[%s1 + $0x64] sm:$0xf]
  %v78 = vld [vmem:[%s1 + $0x68] sm:$0xf]
  %v79 = vld [vmem:[%s1 + $0x6c] sm:$0xf]
  %v80 = vld [vmem:[%s1 + $0x70] sm:$0xf]
  %v81 = vld [vmem:[%s1 + $0x74] sm:$0xf]
  %v82 = vld [vmem:[%s1 + $0x78] sm:$0xf]
  %v83 = vld [vmem:[%s1 + $0x7c] sm:$0xf]
  %v84 = vld [vmem:[%s1 + $0x80] sm:$0xf]
  %v85 = vld [vmem:[%s1 + $0x84] sm:$0xf]
  %v86 = vld [vmem:[%s1 + $0x88] sm:$0xf]
  %v87 = vld [vmem:[%s1 + $0x8c] sm:$0xf]
  %v88 = vld [vmem:[%s2] sm:$0x1]
  %v90 = vlaneseq
  %v91 = vshrl.u32 %v90, 7
  %v92 = vsub.s32 0, %v91
  %v93 = vrot.slane %v88, %v92
  %v127 = vunpack.c.l.b16 %v20
  %v128 = vunpack.c.h.b16 %v20
  %v129 = vunpack.c.l.b16 %v21
  %v130 = vunpack.c.l.b16 %v22
  %v131 = vunpack.c.h.b16 %v22
  %v132 = vunpack.c.l.b16 %v23
  %v133 = vunpack.c.l.b16 %v24
  %v134 = vunpack.c.h.b16 %v24
  %v135 = vunpack.c.l.b16 %v25
  %v136 = vunpack.c.l.b16 %v26
  %v137 = vunpack.c.h.b16 %v26
  %v138 = vunpack.c.l.b16 %v27
  %v139 = vunpack.c.l.b16 %v28
  %v140 = vunpack.c.h.b16 %v28
  %v141 = vunpack.c.l.b16 %v29
  %v142 = vunpack.c.l.b16 %v30
  %v143 = vunpack.c.h.b16 %v30
  %v144 = vunpack.c.l.b16 %v31
  %v145 = vunpack.c.l.b16 %v32
  %v146 = vunpack.c.h.b16 %v32
  %v147 = vunpack.c.l.b16 %v33
  %v148 = vunpack.c.l.b16 %v34
  %v149 = vunpack.c.h.b16 %v34
  %v150 = vunpack.c.l.b16 %v35
  %v151 = vunpack.c.l.b16 %v36
  %v152 = vunpack.c.h.b16 %v36
  %v153 = vunpack.c.l.b16 %v37
  %v154 = vunpack.c.l.b16 %v38
  %v155 = vunpack.c.h.b16 %v38
  %v156 = vunpack.c.l.b16 %v39
  %v157 = vunpack.c.l.b16 %v40
  %v158 = vunpack.c.h.b16 %v40
  %v159 = vunpack.c.l.b16 %v41
  %v160 = vunpack.c.l.b16 %v42
  %v161 = vunpack.c.h.b16 %v42
  %v162 = vunpack.c.l.b16 %v43
  %v163 = vunpack.c.l.b16 %v44
  %v164 = vunpack.c.h.b16 %v44
  %v165 = vunpack.c.l.b16 %v45
  %v166 = vunpack.c.l.b16 %v46
  %v167 = vunpack.c.h.b16 %v46
  %v168 = vunpack.c.l.b16 %v47
  %v169 = vunpack.c.l.b16 %v48
  %v170 = vunpack.c.h.b16 %v48
  %v171 = vunpack.c.l.b16 %v49
  %v172 = vunpack.c.l.b16 %v50
  %v173 = vunpack.c.h.b16 %v50
  %v174 = vunpack.c.l.b16 %v51
  %v175 = vpack.c.b16 %v130, %v127
  %v176 = vpack.c.b16 %v131, %v128
  %v177 = vpack.c.b16 %v132, %v129
  %v178 = vpack.c.b16 %v136, %v133
  %v179 = vpack.c.b16 %v137, %v134
  %v180 = vpack.c.b16 %v138, %v135
  %v181 = vpack.c.b16 %v142, %v139
  %v182 = vpack.c.b16 %v143, %v140
  %v183 = vpack.c.b16 %v144, %v141
  %v184 = vpack.c.b16 %v148, %v145
  %v185 = vpack.c.b16 %v149, %v146
  %v186 = vpack.c.b16 %v150, %v147
  %v187 = vpack.c.b16 %v154, %v151
  %v188 = vpack.c.b16 %v155, %v152
  %v189 = vpack.c.b16 %v156, %v153
  %v190 = vpack.c.b16 %v160, %v157
  %v191 = vpack.c.b16 %v161, %v158
  %v192 = vpack.c.b16 %v162, %v159
  %v193 = vpack.c.b16 %v166, %v163
  %v194 = vpack.c.b16 %v167, %v164
  %v195 = vpack.c.b16 %v168, %v165
  %v196 = vpack.c.b16 %v172, %v169
  %v197 = vpack.c.b16 %v173, %v170
  %v198 = vpack.c.b16 %v174, %v171
  %v251 = vunpack.c.l.b16 %v52
  %v252 = vunpack.c.l.b16 %v53
  %v253 = vunpack.c.l.b16 %v54
  %v254 = vunpack.c.l.b16 %v55
  %v255 = vunpack.c.l.b16 %v56
  %v256 = vunpack.c.l.b16 %v57
  %v257 = vunpack.c.l.b16 %v58
  %v258 = vunpack.c.l.b16 %v59
  %v259 = vunpack.c.l.b16 %v60
  %v260 = vunpack.c.l.b16 %v61
  %v261 = vunpack.c.l.b16 %v62
  %v262 = vunpack.c.l.b16 %v63
  %v263 = vunpack.c.l.b16 %v64
  %v264 = vunpack.c.l.b16 %v65
  %v265 = vunpack.c.l.b16 %v66
  %v266 = vunpack.c.l.b16 %v67
  %v267 = vunpack.c.l.b16 %v68
  %v268 = vunpack.c.l.b16 %v69
  %v269 = vunpack.c.l.b16 %v70
  %v270 = vunpack.c.l.b16 %v71
  %v271 = vunpack.c.l.b16 %v72
  %v272 = vunpack.c.l.b16 %v73
  %v273 = vunpack.c.l.b16 %v74
  %v274 = vunpack.c.l.b16 %v75
  %v275 = vunpack.c.l.b16 %v76
  %v276 = vunpack.c.l.b16 %v77
  %v277 = vunpack.c.l.b16 %v78
  %v278 = vunpack.c.l.b16 %v79
  %v279 = vunpack.c.l.b16 %v80
  %v280 = vunpack.c.l.b16 %v81
  %v281 = vunpack.c.l.b16 %v82
  %v282 = vunpack.c.l.b16 %v83
  %v283 = vunpack.c.l.b16 %v84
  %v284 = vunpack.c.l.b16 %v85
  %v285 = vunpack.c.l.b16 %v86
  %v286 = vunpack.c.l.b16 %v87
  %v287 = vpack.c.b16 %v252, %v251
  %v288 = vpack.c.b16 %v254, %v253
  %v289 = vpack.c.b16 %v256, %v255
  %v290 = vpack.c.b16 %v258, %v257
  %v291 = vpack.c.b16 %v260, %v259
  %v292 = vpack.c.b16 %v262, %v261
  %v293 = vpack.c.b16 %v264, %v263
  %v294 = vpack.c.b16 %v266, %v265
  %v295 = vpack.c.b16 %v268, %v267
  %v296 = vpack.c.b16 %v270, %v269
  %v297 = vpack.c.b16 %v272, %v271
  %v298 = vpack.c.b16 %v274, %v273
  %v299 = vpack.c.b16 %v276, %v275
  %v300 = vpack.c.b16 %v278, %v277
  %v301 = vpack.c.b16 %v280, %v279
  %v302 = vpack.c.b16 %v282, %v281
  %v303 = vpack.c.b16 %v284, %v283
  %v304 = vpack.c.b16 %v286, %v285
  %vm323 = vcmask 261120
  %v325 = vsel %vm323, %v177, 0
  %v328 = vsel %vm323, %v180, 0
  %v331 = vsel %vm323, %v183, 0
  %v334 = vsel %vm323, %v186, 0
  %v337 = vsel %vm323, %v189, 0
  %v340 = vsel %vm323, %v192, 0
  %v343 = vsel %vm323, %v195, 0
  %v346 = vsel %vm323, %v198, 0
  %348 = vmatprep.subr.bf16.mxu0 0
  %349 = vmatpush1.bf16.msra.mxu0 %v287
  %350 = vmatprep.subr.bf16.mxu0 0
  %351 = vmatpush1.bf16.msra.mxu0 %v288
  %352 = vmatprep.subr.bf16.mxu0 0
  %353 = vmatpush1.bf16.msra.mxu0 %v289
  %354 = vmatprep.subr.bf16.mxu0 0
  %355 = vmatpush1.bf16.msra.mxu0 %v290
  %356 = vmatprep.subr.bf16.mxu0 0
  %357 = vmatpush1.bf16.msra.mxu0 %v291
  %358 = vmatprep.subr.bf16.mxu0 0
  %359 = vmatpush1.bf16.msra.mxu0 %v292
  %360 = vmatprep.subr.bf16.mxu0 0
  %361 = vmatpush1.bf16.msra.mxu0 %v293
  %362 = vmatprep.subr.bf16.mxu0 0
  %363 = vmatpush1.bf16.msra.mxu0 %v294
  %364 = vmatprep.subr.bf16.mxu0 0
  %365 = vmatpush1.bf16.msra.mxu0 %v295
  %366 = vmatprep.subr.bf16.mxu0 0
  %367 = vmatpush1.bf16.msra.mxu0 %v296
  %368 = vmatprep.subr.bf16.mxu0 0
  %369 = vmatpush1.bf16.msra.mxu0 %v297
  %370 = vmatprep.subr.bf16.mxu0 0
  %371 = vmatpush1.bf16.msra.mxu0 %v298
  %372 = vmatprep.subr.bf16.mxu0 0
  %373 = vmatpush1.bf16.msra.mxu0 %v299
  %374 = vmatprep.subr.bf16.mxu0 0
  %375 = vmatpush1.bf16.msra.mxu0 %v300
  %376 = vmatprep.subr.bf16.mxu0 0
  %377 = vmatpush1.bf16.msra.mxu0 %v301
  %378 = vmatprep.subr.bf16.mxu0 0
  %379 = vmatpush1.bf16.msra.mxu0 %v302
  %380 = vmatprep.mubr.bf16.mxu0 %v176
  %381 = vmatmul.mubr.bf16.gmra.mrb[0].mxu0 %v175
  %v382 = vpop.f32.mrb[0].mxu0
  %v383 = vadd.f32 %v93, %v382
  %v384 = vpop.f32.mrb[0].mxu0
  %v385 = vpop.f32.mrb[0].mxu0
  %v386 = vadd.f32 %v93, %v385
  %v387 = vpop.f32.mrb[0].mxu0
  %388 = vmatprep.mubr.bf16.mxu0 %v179
  %389 = vmatmul.mubr.bf16.gmra.mrb[0].mxu0 %v178
  %v390 = vpop.f32.mrb[0].mxu0
  %v391 = vadd.f32 %v93, %v390
  %v392 = vpop.f32.mrb[0].mxu0
  %v393 = vpop.f32.mrb[0].mxu0
  %v394 = vadd.f32 %v93, %v393
  %v395 = vpop.f32.mrb[0].mxu0
  %396 = vmatprep.mubr.bf16.mxu0 %v182
  %397 = vmatmul.mubr.bf16.gmra.mrb[0].mxu0 %v181
  %v398 = vpop.f32.mrb[0].mxu0
  %v399 = vadd.f32 %v93, %v398
  %v400 = vpop.f32.mrb[0].mxu0
  %v401 = vpop.f32.mrb[0].mxu0
  %v402 = vadd.f32 %v93, %v401
  %v403 = vpop.f32.mrb[0].mxu0
  %404 = vmatprep.mubr.bf16.mxu0 %v185
  %405 = vmatmul.mubr.bf16.gmra.mrb[0].mxu0 %v184
  %v406 = vpop.f32.mrb[0].mxu0
  %v407 = vadd.f32 %v93, %v406
  %v408 = vpop.f32.mrb[0].mxu0
  %v409 = vpop.f32.mrb[0].mxu0
  %v410 = vadd.f32 %v93, %v409
  %v411 = vpop.f32.mrb[0].mxu0
  %412 = vmatprep.mubr.bf16.mxu0 %v188
  %413 = vmatmul.mubr.bf16.gmra.mrb[0].mxu0 %v187
  %v414 = vpop.f32.mrb[0].mxu0
  %v415 = vadd.f32 %v93, %v414
  %v416 = vpop.f32.mrb[0].mxu0
  %v417 = vpop.f32.mrb[0].mxu0
  %v418 = vadd.f32 %v93, %v417
  %v419 = vpop.f32.mrb[0].mxu0
  %420 = vmatprep.mubr.bf16.mxu0 %v191
  %421 = vmatmul.mubr.bf16.gmra.mrb[0].mxu0 %v190
  %v422 = vpop.f32.mrb[0].mxu0
  %v423 = vadd.f32 %v93, %v422
  %v424 = vpop.f32.mrb[0].mxu0
  %v425 = vpop.f32.mrb[0].mxu0
  %v426 = vadd.f32 %v93, %v425
  %v427 = vpop.f32.mrb[0].mxu0
  %428 = vmatprep.mubr.bf16.mxu0 %v194
  %429 = vmatmul.mubr.bf16.gmra.mrb[0].mxu0 %v193
  %v430 = vpop.f32.mrb[0].mxu0
  %v431 = vadd.f32 %v93, %v430
  %v432 = vpop.f32.mrb[0].mxu0
  %v433 = vpop.f32.mrb[0].mxu0
  %v434 = vadd.f32 %v93, %v433
  %v435 = vpop.f32.mrb[0].mxu0
  %436 = vmatprep.mubr.bf16.mxu0 %v197
  %437 = vmatmul.mubr.bf16.gmra.mrb[0].mxu0 %v196
  %v438 = vpop.f32.mrb[0].mxu0
  %v439 = vadd.f32 %v93, %v438
  %v440 = vpop.f32.mrb[0].mxu0
  %v441 = vpop.f32.mrb[0].mxu0
  %v442 = vadd.f32 %v93, %v441
  %v443 = vpop.f32.mrb[0].mxu0
  %444 = vdwg.mxu0
  %445 = vmatprep.subr.bf16.mxu0 0
  %446 = vmatpush1.bf16.msra.mxu0 %v303
  %447 = vmatprep.subr.bf16.mxu0 0
  %448 = vmatpush1.bf16.msra.mxu0 %v304
  %449 = vmatprep.subr.bf16.mxu0 0
  %450 = vmatpush1.bf16.msra.mxu0 0
  %451 = vmatprep.subr.bf16.mxu0 0
  %452 = vmatpush1.bf16.msra.mxu0 0
  %453 = vmatprep.subr.bf16.mxu0 0
  %454 = vmatpush1.bf16.msra.mxu0 0
  %455 = vmatprep.subr.bf16.mxu0 0
  %456 = vmatpush1.bf16.msra.mxu0 0
  %457 = vmatprep.subr.bf16.mxu0 0
  %458 = vmatpush1.bf16.msra.mxu0 0
  %459 = vmatprep.subr.bf16.mxu0 0
  %460 = vmatpush1.bf16.msra.mxu0 0
  %461 = vmatprep.subr.bf16.mxu0 0
  %462 = vmatpush1.bf16.msra.mxu0 0
  %463 = vmatprep.subr.bf16.mxu0 0
  %464 = vmatpush1.bf16.msra.mxu0 0
  %465 = vmatprep.subr.bf16.mxu0 0
  %466 = vmatpush1.bf16.msra.mxu0 0
  %467 = vmatprep.subr.bf16.mxu0 0
  %468 = vmatpush1.bf16.msra.mxu0 0
  %469 = vmatprep.subr.bf16.mxu0 0
  %470 = vmatpush1.bf16.msra.mxu0 0
  %471 = vmatprep.subr.bf16.mxu0 0
  %472 = vmatpush1.bf16.msra.mxu0 0
  %473 = vmatprep.subr.bf16.mxu0 0
  %474 = vmatpush1.bf16.msra.mxu0 0
  %475 = vmatprep.subr.bf16.mxu0 0
  %476 = vmatpush1.bf16.msra.mxu0 0
  %477 = vmatprep.mubr.bf16.mxu0 0
  %478 = vmatmul.mubr.bf16.gmra.mrb[0].mxu0 %v325
  %v479 = vpop.f32.mrb[0].mxu0
  %v480 = vadd.f32 %v383, %v479
  %v481 = vpop.f32.mrb[0].mxu0
  %v482 = vpop.f32.mrb[0].mxu0
  %v483 = vadd.f32 %v386, %v482
  %v484 = vpop.f32.mrb[0].mxu0
  %485 = vmatprep.mubr.bf16.mxu0 0
  %486 = vmatmul.mubr.bf16.gmra.mrb[0].mxu0 %v328
  %v487 = vpop.f32.mrb[0].mxu0
  %v488 = vadd.f32 %v391, %v487
  %v489 = vpop.f32.mrb[0].mxu0
  %v490 = vpop.f32.mrb[0].mxu0
  %v491 = vadd.f32 %v394, %v490
  %v492 = vpop.f32.mrb[0].mxu0
  %493 = vmatprep.mubr.bf16.mxu0 0
  %494 = vmatmul.mubr.bf16.gmra.mrb[0].mxu0 %v331
  %v495 = vpop.f32.mrb[0].mxu0
  %v496 = vadd.f32 %v399, %v495
  %v497 = vpop.f32.mrb[0].mxu0
  %v498 = vpop.f32.mrb[0].mxu0
  %v499 = vadd.f32 %v402, %v498
  %v500 = vpop.f32.mrb[0].mxu0
  %501 = vmatprep.mubr.bf16.mxu0 0
  %502 = vmatmul.mubr.bf16.gmra.mrb[0].mxu0 %v334
  %v503 = vpop.f32.mrb[0].mxu0
  %v504 = vadd.f32 %v407, %v503
  %v505 = vpop.f32.mrb[0].mxu0
  %v506 = vpop.f32.mrb[0].mxu0
  %v507 = vadd.f32 %v410, %v506
  %v508 = vpop.f32.mrb[0].mxu0
  %509 = vmatprep.mubr.bf16.mxu0 0
  %510 = vmatmul.mubr.bf16.gmra.mrb[0].mxu0 %v337
  %v511 = vpop.f32.mrb[0].mxu0
  %v512 = vadd.f32 %v415, %v511
  %v513 = vpop.f32.mrb[0].mxu0
  %v514 = vpop.f32.mrb[0].mxu0
  %v515 = vadd.f32 %v418, %v514
  %v516 = vpop.f32.mrb[0].mxu0
  %517 = vmatprep.mubr.bf16.mxu0 0
  %518 = vmatmul.mubr.bf16.gmra.mrb[0].mxu0 %v340
  %v519 = vpop.f32.mrb[0].mxu0
  %v520 = vadd.f32 %v423, %v519
  %v521 = vpop.f32.mrb[0].mxu0
  %v522 = vpop.f32.mrb[0].mxu0
  %v523 = vadd.f32 %v426, %v522
  %v524 = vpop.f32.mrb[0].mxu0
  %525 = vmatprep.mubr.bf16.mxu0 0
  %526 = vmatmul.mubr.bf16.gmra.mrb[0].mxu0 %v343
  %v527 = vpop.f32.mrb[0].mxu0
  %v528 = vadd.f32 %v431, %v527
  %v529 = vpop.f32.mrb[0].mxu0
  %v530 = vpop.f32.mrb[0].mxu0
  %v531 = vadd.f32 %v434, %v530
  %v532 = vpop.f32.mrb[0].mxu0
  %533 = vmatprep.mubr.bf16.mxu0 0
  %534 = vmatmul.mubr.bf16.gmra.mrb[0].mxu0 %v346
  %v535 = vpop.f32.mrb[0].mxu0
  %v536 = vadd.f32 %v439, %v535
  %v537 = vpop.f32.mrb[0].mxu0
  %v538 = vpop.f32.mrb[0].mxu0
  %v539 = vadd.f32 %v442, %v538
  %v540 = vpop.f32.mrb[0].mxu0
  %541 = vdwg.mxu0
  %v542 = vmax.f32 %v480, 0.0
  %v543 = vmax.f32 %v483, 0.0
  %v544 = vmax.f32 %v488, 0.0
  %v545 = vmax.f32 %v491, 0.0
  %v546 = vmax.f32 %v496, 0.0
  %v547 = vmax.f32 %v499, 0.0
  %v548 = vmax.f32 %v504, 0.0
  %v549 = vmax.f32 %v507, 0.0
  %v550 = vmax.f32 %v512, 0.0
  %v551 = vmax.f32 %v515, 0.0
  %v552 = vmax.f32 %v520, 0.0
  %v553 = vmax.f32 %v523, 0.0
  %v554 = vmax.f32 %v528, 0.0
  %v555 = vmax.f32 %v531, 0.0
  %v556 = vmax.f32 %v536, 0.0
  %v557 = vmax.f32 %v539, 0.0
  %558 = vst.msk [vmem:[%s4] sm:$0xff] %vm323, %v542
  %559 = vst.msk [vmem:[%s4 + $0x8] sm:$0xff] %vm323, %v543
  %560 = vst.msk [vmem:[%s4 + $0x10] sm:$0xff] %vm323, %v544
  %561 = vst.msk [vmem:[%s4 + $0x18] sm:$0xff] %vm323, %v545
  %562 = vst.msk [vmem:[%s4 + $0x20] sm:$0xff] %vm323, %v546
  %563 = vst.msk [vmem:[%s4 + $0x28] sm:$0xff] %vm323, %v547
  %564 = vst.msk [vmem:[%s4 + $0x30] sm:$0xff] %vm323, %v548
  %565 = vst.msk [vmem:[%s4 + $0x38] sm:$0xff] %vm323, %v549
  %566 = vst.msk [vmem:[%s4 + $0x40] sm:$0xff] %vm323, %v550
  %567 = vst.msk [vmem:[%s4 + $0x48] sm:$0xff] %vm323, %v551
  %568 = vst.msk [vmem:[%s4 + $0x50] sm:$0xff] %vm323, %v552
  %569 = vst.msk [vmem:[%s4 + $0x58] sm:$0xff] %vm323, %v553
  %570 = vst.msk [vmem:[%s4 + $0x60] sm:$0xff] %vm323, %v554
  %571 = vst.msk [vmem:[%s4 + $0x68] sm:$0xff] %vm323, %v555
  %572 = vst.msk [vmem:[%s4 + $0x70] sm:$0xff] %vm323, %v556
  %573 = vst.msk [vmem:[%s4 + $0x78] sm:$0xff] %vm323, %v557
  %v574 = vmul.f32 %v542, %v542
  %v575 = vmul.f32 %v543, %v543
  %v576 = vmul.f32 %v544, %v544
  %v577 = vmul.f32 %v545, %v545
  %v578 = vmul.f32 %v546, %v546
  %v579 = vmul.f32 %v547, %v547
  %v580 = vmul.f32 %v548, %v548
  %v581 = vmul.f32 %v549, %v549
  %v582 = vmul.f32 %v550, %v550
  %v583 = vmul.f32 %v551, %v551
  %v584 = vmul.f32 %v552, %v552
  %v585 = vmul.f32 %v553, %v553
  %v586 = vmul.f32 %v554, %v554
  %v587 = vmul.f32 %v555, %v555
  %v588 = vmul.f32 %v556, %v556
  %v589 = vmul.f32 %v557, %v557
  %v590 = vsel %vm323, %v574, 0.0
  %591 = vadd.xlane.f32.xlu0 %v590
  %v592 = vpop.xlane.xlu0 %591
  %v593 = vsel %vm323, %v575, 0.0
  %594 = vadd.xlane.f32.xlu0 %v593
  %v595 = vpop.xlane.xlu0 %594
  %v596 = vsel %vm323, %v576, 0.0
  %597 = vadd.xlane.f32.xlu0 %v596
  %v598 = vpop.xlane.xlu0 %597
  %v599 = vsel %vm323, %v577, 0.0
  %600 = vadd.xlane.f32.xlu0 %v599
  %v601 = vpop.xlane.xlu0 %600
  %v602 = vsel %vm323, %v578, 0.0
  %603 = vadd.xlane.f32.xlu0 %v602
  %v604 = vpop.xlane.xlu0 %603
  %v605 = vsel %vm323, %v579, 0.0
  %606 = vadd.xlane.f32.xlu0 %v605
  %v607 = vpop.xlane.xlu0 %606
  %v608 = vsel %vm323, %v580, 0.0
  %609 = vadd.xlane.f32.xlu0 %v608
  %v610 = vpop.xlane.xlu0 %609
  %v611 = vsel %vm323, %v581, 0.0
  %612 = vadd.xlane.f32.xlu0 %v611
  %v613 = vpop.xlane.xlu0 %612
  %v614 = vsel %vm323, %v582, 0.0
  %615 = vadd.xlane.f32.xlu0 %v614
  %v616 = vpop.xlane.xlu0 %615
  %v617 = vsel %vm323, %v583, 0.0
  %618 = vadd.xlane.f32.xlu0 %v617
  %v619 = vpop.xlane.xlu0 %618
  %v620 = vsel %vm323, %v584, 0.0
  %621 = vadd.xlane.f32.xlu0 %v620
  %v622 = vpop.xlane.xlu0 %621
  %v623 = vsel %vm323, %v585, 0.0
  %624 = vadd.xlane.f32.xlu0 %v623
  %v625 = vpop.xlane.xlu0 %624
  %v626 = vsel %vm323, %v586, 0.0
  %627 = vadd.xlane.f32.xlu0 %v626
  %v628 = vpop.xlane.xlu0 %627
  %v629 = vsel %vm323, %v587, 0.0
  %630 = vadd.xlane.f32.xlu0 %v629
  %v631 = vpop.xlane.xlu0 %630
  %v632 = vsel %vm323, %v588, 0.0
  %633 = vadd.xlane.f32.xlu0 %v632
  %v634 = vpop.xlane.xlu0 %633
  %v635 = vsel %vm323, %v589, 0.0
  %636 = vadd.xlane.f32.xlu0 %v635
  %v637 = vpop.xlane.xlu0 %636
  %v638 = vrsqrt.pop %v592
  %v639 = vmul.f32 %v592, %v638
  %vm640 = vcmp.eq.f32.partialorder %v592, inf
  %v641 = vsel %vm640, %v592, %v639
  %vm642 = vcmp.eq.f32.partialorder %v592, 0.0
  %v643 = vand.u32 %v592, 2147483648
  %v644 = vsel %vm642, %v643, %v641
  %v645 = vrsqrt.pop %v595
  %v646 = vmul.f32 %v595, %v645
  %vm647 = vcmp.eq.f32.partialorder %v595, inf
  %v648 = vsel %vm647, %v595, %v646
  %vm649 = vcmp.eq.f32.partialorder %v595, 0.0
  %v650 = vand.u32 %v595, 2147483648
  %v651 = vsel %vm649, %v650, %v648
  %v652 = vrsqrt.pop %v598
  %v653 = vmul.f32 %v598, %v652
  %vm654 = vcmp.eq.f32.partialorder %v598, inf
  %v655 = vsel %vm654, %v598, %v653
  %vm656 = vcmp.eq.f32.partialorder %v598, 0.0
  %v657 = vand.u32 %v598, 2147483648
  %v658 = vsel %vm656, %v657, %v655
  %v659 = vrsqrt.pop %v601
  %v660 = vmul.f32 %v601, %v659
  %vm661 = vcmp.eq.f32.partialorder %v601, inf
  %v662 = vsel %vm661, %v601, %v660
  %vm663 = vcmp.eq.f32.partialorder %v601, 0.0
  %v664 = vand.u32 %v601, 2147483648
  %v665 = vsel %vm663, %v664, %v662
  %v666 = vrsqrt.pop %v604
  %v667 = vmul.f32 %v604, %v666
  %vm668 = vcmp.eq.f32.partialorder %v604, inf
  %v669 = vsel %vm668, %v604, %v667
  %vm670 = vcmp.eq.f32.partialorder %v604, 0.0
  %v671 = vand.u32 %v604, 2147483648
  %v672 = vsel %vm670, %v671, %v669
  %v673 = vrsqrt.pop %v607
  %v674 = vmul.f32 %v607, %v673
  %vm675 = vcmp.eq.f32.partialorder %v607, inf
  %v676 = vsel %vm675, %v607, %v674
  %vm677 = vcmp.eq.f32.partialorder %v607, 0.0
  %v678 = vand.u32 %v607, 2147483648
  %v679 = vsel %vm677, %v678, %v676
  %v680 = vrsqrt.pop %v610
  %v681 = vmul.f32 %v610, %v680
  %vm682 = vcmp.eq.f32.partialorder %v610, inf
  %v683 = vsel %vm682, %v610, %v681
  %vm684 = vcmp.eq.f32.partialorder %v610, 0.0
  %v685 = vand.u32 %v610, 2147483648
  %v686 = vsel %vm684, %v685, %v683
  %v687 = vrsqrt.pop %v613
  %v688 = vmul.f32 %v613, %v687
  %vm689 = vcmp.eq.f32.partialorder %v613, inf
  %v690 = vsel %vm689, %v613, %v688
  %vm691 = vcmp.eq.f32.partialorder %v613, 0.0
  %v692 = vand.u32 %v613, 2147483648
  %v693 = vsel %vm691, %v692, %v690
  %v694 = vrsqrt.pop %v616
  %v695 = vmul.f32 %v616, %v694
  %vm696 = vcmp.eq.f32.partialorder %v616, inf
  %v697 = vsel %vm696, %v616, %v695
  %vm698 = vcmp.eq.f32.partialorder %v616, 0.0
  %v699 = vand.u32 %v616, 2147483648
  %v700 = vsel %vm698, %v699, %v697
  %v701 = vrsqrt.pop %v619
  %v702 = vmul.f32 %v619, %v701
  %vm703 = vcmp.eq.f32.partialorder %v619, inf
  %v704 = vsel %vm703, %v619, %v702
  %vm705 = vcmp.eq.f32.partialorder %v619, 0.0
  %v706 = vand.u32 %v619, 2147483648
  %v707 = vsel %vm705, %v706, %v704
  %v708 = vrsqrt.pop %v622
  %v709 = vmul.f32 %v622, %v708
  %vm710 = vcmp.eq.f32.partialorder %v622, inf
  %v711 = vsel %vm710, %v622, %v709
  %vm712 = vcmp.eq.f32.partialorder %v622, 0.0
  %v713 = vand.u32 %v622, 2147483648
  %v714 = vsel %vm712, %v713, %v711
  %v715 = vrsqrt.pop %v625
  %v716 = vmul.f32 %v625, %v715
  %vm717 = vcmp.eq.f32.partialorder %v625, inf
  %v718 = vsel %vm717, %v625, %v716
  %vm719 = vcmp.eq.f32.partialorder %v625, 0.0
  %v720 = vand.u32 %v625, 2147483648
  %v721 = vsel %vm719, %v720, %v718
  %v722 = vrsqrt.pop %v628
  %v723 = vmul.f32 %v628, %v722
  %vm724 = vcmp.eq.f32.partialorder %v628, inf
  %v725 = vsel %vm724, %v628, %v723
  %vm726 = vcmp.eq.f32.partialorder %v628, 0.0
  %v727 = vand.u32 %v628, 2147483648
  %v728 = vsel %vm726, %v727, %v725
  %v729 = vrsqrt.pop %v631
  %v730 = vmul.f32 %v631, %v729
  %vm731 = vcmp.eq.f32.partialorder %v631, inf
  %v732 = vsel %vm731, %v631, %v730
  %vm733 = vcmp.eq.f32.partialorder %v631, 0.0
  %v734 = vand.u32 %v631, 2147483648
  %v735 = vsel %vm733, %v734, %v732
  %v736 = vrsqrt.pop %v634
  %v737 = vmul.f32 %v634, %v736
  %vm738 = vcmp.eq.f32.partialorder %v634, inf
  %v739 = vsel %vm738, %v634, %v737
  %vm740 = vcmp.eq.f32.partialorder %v634, 0.0
  %v741 = vand.u32 %v634, 2147483648
  %v742 = vsel %vm740, %v741, %v739
  %v743 = vrsqrt.pop %v637
  %v744 = vmul.f32 %v637, %v743
  %vm745 = vcmp.eq.f32.partialorder %v637, inf
  %v746 = vsel %vm745, %v637, %v744
  %vm747 = vcmp.eq.f32.partialorder %v637, 0.0
  %v748 = vand.u32 %v637, 2147483648
  %v749 = vsel %vm747, %v748, %v746
  %v750 = vadd.f32 %v644, 1e-10
  %v751 = vadd.f32 %v651, 1e-10
  %v752 = vadd.f32 %v658, 1e-10
  %v753 = vadd.f32 %v665, 1e-10
  %v754 = vadd.f32 %v672, 1e-10
  %v755 = vadd.f32 %v679, 1e-10
  %v756 = vadd.f32 %v686, 1e-10
  %v757 = vadd.f32 %v693, 1e-10
  %v758 = vadd.f32 %v700, 1e-10
  %v759 = vadd.f32 %v707, 1e-10
  %v760 = vadd.f32 %v714, 1e-10
  %v761 = vadd.f32 %v721, 1e-10
  %v762 = vadd.f32 %v728, 1e-10
  %v763 = vadd.f32 %v735, 1e-10
  %v764 = vadd.f32 %v742, 1e-10
  %v765 = vadd.f32 %v749, 1e-10
  %v766 = vld [vmem:[%s3] sm:$0x1]
  %v767 = vrcp.pop %v750
  %v768 = vrcp.pop %v751
  %v769 = vrcp.pop %v752
  %v770 = vrcp.pop %v753
  %v771 = vrcp.pop %v754
  %v772 = vrcp.pop %v755
  %v773 = vrcp.pop %v756
  %v774 = vrcp.pop %v757
  %v775 = vrcp.pop %v758
  %v776 = vrcp.pop %v759
  %v777 = vrcp.pop %v760
  %v778 = vrcp.pop %v761
  %v779 = vrcp.pop %v762
  %v780 = vrcp.pop %v763
  %v781 = vrcp.pop %v764
  %v782 = vrcp.pop %v765
  %v783 = vmul.f32 %v542, %v767
  %v784 = vmul.f32 %v543, %v768
  %v785 = vmul.f32 %v544, %v769
  %v786 = vmul.f32 %v545, %v770
  %v787 = vmul.f32 %v546, %v771
  %v788 = vmul.f32 %v547, %v772
  %v789 = vmul.f32 %v548, %v773
  %v790 = vmul.f32 %v549, %v774
  %v791 = vmul.f32 %v550, %v775
  %v792 = vmul.f32 %v551, %v776
  %v793 = vmul.f32 %v552, %v777
  %v794 = vmul.f32 %v553, %v778
  %v795 = vmul.f32 %v554, %v779
  %v796 = vmul.f32 %v555, %v780
  %v797 = vmul.f32 %v556, %v781
  %v798 = vmul.f32 %v557, %v782
  %v800 = vlaneseq
  %v801 = vshrl.u32 %v800, 7
  %v802 = vsub.s32 0, %v801
  %v803 = vrot.slane %v766, %v802
  %v805 = vmul.f32 %v803, %v783
  %v806 = vmul.f32 %v803, %v784
  %v807 = vmul.f32 %v803, %v785
  %v808 = vmul.f32 %v803, %v786
  %v809 = vmul.f32 %v803, %v787
  %v810 = vmul.f32 %v803, %v788
  %v811 = vmul.f32 %v803, %v789
  %v812 = vmul.f32 %v803, %v790
  %v813 = vmul.f32 %v803, %v791
  %v814 = vmul.f32 %v803, %v792
  %v815 = vmul.f32 %v803, %v793
  %v816 = vmul.f32 %v803, %v794
  %v817 = vmul.f32 %v803, %v795
  %v818 = vmul.f32 %v803, %v796
  %v819 = vmul.f32 %v803, %v797
  %v820 = vmul.f32 %v803, %v798
  %821 = vst.msk [vmem:[%s5] sm:$0xff] %vm323, %v805
  %822 = vst.msk [vmem:[%s5 + $0x8] sm:$0xff] %vm323, %v806
  %823 = vst.msk [vmem:[%s5 + $0x10] sm:$0xff] %vm323, %v807
  %824 = vst.msk [vmem:[%s5 + $0x18] sm:$0xff] %vm323, %v808
  %825 = vst.msk [vmem:[%s5 + $0x20] sm:$0xff] %vm323, %v809
  %826 = vst.msk [vmem:[%s5 + $0x28] sm:$0xff] %vm323, %v810
  %827 = vst.msk [vmem:[%s5 + $0x30] sm:$0xff] %vm323, %v811
  %828 = vst.msk [vmem:[%s5 + $0x38] sm:$0xff] %vm323, %v812
  %829 = vst.msk [vmem:[%s5 + $0x40] sm:$0xff] %vm323, %v813
  %830 = vst.msk [vmem:[%s5 + $0x48] sm:$0xff] %vm323, %v814
  %831 = vst.msk [vmem:[%s5 + $0x50] sm:$0xff] %vm323, %v815
  %832 = vst.msk [vmem:[%s5 + $0x58] sm:$0xff] %vm323, %v816
  %833 = vst.msk [vmem:[%s5 + $0x60] sm:$0xff] %vm323, %v817
  %834 = vst.msk [vmem:[%s5 + $0x68] sm:$0xff] %vm323, %v818
  %835 = vst.msk [vmem:[%s5 + $0x70] sm:$0xff] %vm323, %v819
  %836 = vst.msk [vmem:[%s5 + $0x78] sm:$0xff] %vm323, %v820
  // Predicated region
  $region18: #{ssd_gmm_forward.11} parent=0 // pred_check
    _
  $region19: #{ssd_gmm_forward.11} parent=0 // pred_check_branch
    %838 = sbr.rel (0) target = $region21
  $region20: #{ssd_gmm_forward.11} parent=0 // pred_region
    _
  $region21: #{ssd_gmm_forward.11} parent=0 // pred_fallthru
    _
  // Predicated region
  $region22: #{ssd_gmm_forward.11} parent=0 // pred_check
    _
  $region23: #{ssd_gmm_forward.11} parent=0 // pred_check_branch
    %840 = sbr.rel (0) target = $region25
  $region24: #{ssd_gmm_forward.11} parent=0 // pred_region
    _
  $region25: #{ssd_gmm_forward.11} parent=0 // pred_fallthru
    _
  // Predicated region
  $region26: #{ssd_gmm_forward.11} parent=0 // pred_check
    _
  $region27: #{ssd_gmm_forward.11} parent=0 // pred_check_branch
    %842 = sbr.rel (0) target = $region29
  $region28: #{ssd_gmm_forward.11} parent=0 // pred_region
    _
  $region29: #{ssd_gmm_forward.11} parent=0 // pred_fallthru
    _
  // Predicated region
  $region30: #{ssd_gmm_forward.11} parent=0 // pred_check
    _
  $region31: #{ssd_gmm_forward.11} parent=0 // pred_check_branch
    %844 = sbr.rel (0) target = $region33
  $region32: #{ssd_gmm_forward.11} parent=0 // pred_region
    _
  $region33: #{ssd_gmm_forward.11} parent=0 // pred_fallthru
    _

// kernel: ssd_gmm_forward.15
$region0: #{ssd_gmm_forward.15}
  #allocation0 [shape = 'u32[]', space=smem, size = 0x4, offset = 0x4, fixed_abs, tag = 'smem constant byte address 0x4 - core index']
  #allocation1 [shape = 'u32[144,128]{1,0:T(1,128)}', space=vmem, size = 0x12000, scoped, tag = 'internal scratch']
  %s0 = inlined_call_operand.vmem [shape: bf16[128,288], index: 0, kind: input, shape index: {}]
  %s1 = inlined_call_operand.vmem [shape: bf16[288,384], index: 1, kind: input, shape index: {}]
  %s2 = inlined_call_operand.vmem [shape: f32[1,384], index: 2, kind: input, shape index: {}]
  %s3 = inlined_call_operand.vmem [shape: f32[128,384], index: 3, kind: output, shape index: {}]
  %s4 = sld [smem:[#allocation0]]
  $region45: #{ssd_gmm_forward.15} parent=0
    _
  %s6 = ssub.s32 1, %s4
  %s7 = scalar_select 0, %s6, %s4
  loop: start=0, step=1, limit=4
  $region2: #{ssd_gmm_forward.15} parent=0 // loop_pre_header
    _
  $region3: #{ssd_gmm_forward.15} parent=0 // loop_header
    %s9 = sphi 0, %s13
    %p10 = scmp.ge.s32.totalorder %s9, 4
    %s19 = sphi 0, %s21
    %s22 = sphi 0, %s19
    %s23 = sphi 0, %s22
    %s39 = sphi 0, %s23
    %s43 = sphi 0, %s43
    %s45 = sphi 0, %s43
    %s46 = sphi 0, %s45
    %s60 = sphi 0, %s46
    %s64 = sphi 0, %s64
    %s66 = sphi 0, %s64
    %s67 = sphi 0, %s66
    %s81 = sphi 0, %s67
    %s87 = sphi 0, %s89
    %s90 = sphi 0, %s87
    %s91 = sphi 0, %s90
    %s107 = sphi 0, %s91
  $region4: #{ssd_gmm_forward.15} parent=0 // loop_header_branch
    %12 = sbr.rel (%p10) target = $region8
  $region5: #{ssd_gmm_forward.15} parent=0 // loop_body
    %s14 = ssub.s32 %s9, 1
    %s15 = ssub.s32 %s9, 2
    %s16 = sadd.s32 %s9, 1
    %s17 = ssub.s32 %s9, %s16
    %p18 = scmp.eq.s32.totalorder %s17, 0
    %s20 = sadd.s32 %s19, 1
    %s21 = scalar_select %p18, %s19, %s20
    %p24 = pneg %p18
    %p25 = scmp.eq.s32.totalorder %s9, 1
    %p26 = por %p24, %p25
    %p27 = scmp.ne.s32.totalorder %s19, %s22
    %p28 = scmp.eq.s32.totalorder %s9, 0
    %p29 = por %p27, %p28
    %p30 = scmp.ne.s32.totalorder %s19, %s22
    %p31 = scmp.eq.s32.totalorder %s14, 1
    %p32 = por %p30, %p31
    %p33 = scmp.ne.s32.totalorder %s22, %s23
    %p34 = scmp.eq.s32.totalorder %s14, 0
    %p35 = por %p33, %p34
    %p36 = scmp.ne.s32.totalorder %s22, %s23
    %p37 = scmp.eq.s32.totalorder %s15, 1
    %p38 = por %p36, %p37
    %p40 = scmp.ne.s32.totalorder %s23, %s39
    %p41 = scmp.eq.s32.totalorder %s15, 0
    %p42 = por %p40, %p41
    %s44 = sadd.s32 %s43, 1
    %p47 = scmp.eq.s32.totalorder %s9, 1
    %p48 = scmp.ne.s32.totalorder %s43, %s45
    %p49 = scmp.eq.s32.totalorder %s9, 0
    %p50 = por %p48, %p49
    %p51 = scmp.ne.s32.totalorder %s43, %s45
    %p52 = scmp.eq.s32.totalorder %s14, 1
    %p53 = por %p51, %p52
    %p54 = scmp.ne.s32.totalorder %s45, %s46
    %p55 = scmp.eq.s32.totalorder %s14, 0
    %p56 = por %p54, %p55
    %p57 = scmp.ne.s32.totalorder %s45, %s46
    %p58 = scmp.eq.s32.totalorder %s15, 1
    %p59 = por %p57, %p58
    %p61 = scmp.ne.s32.totalorder %s46, %s60
    %p62 = scmp.eq.s32.totalorder %s15, 0
    %p63 = por %p61, %p62
    %s65 = sadd.s32 %s64, 1
    %p68 = scmp.eq.s32.totalorder %s9, 1
    %p69 = scmp.ne.s32.totalorder %s64, %s66
    %p70 = scmp.eq.s32.totalorder %s9, 0
    %p71 = por %p69, %p70
    %p72 = scmp.ne.s32.totalorder %s64, %s66
    %p73 = scmp.eq.s32.totalorder %s14, 1
    %p74 = por %p72, %p73
    %p75 = scmp.ne.s32.totalorder %s66, %s67
    %p76 = scmp.eq.s32.totalorder %s14, 0
    %p77 = por %p75, %p76
    %p78 = scmp.ne.s32.totalorder %s66, %s67
    %p79 = scmp.eq.s32.totalorder %s15, 1
    %p80 = por %p78, %p79
    %p82 = scmp.ne.s32.totalorder %s67, %s81
    %p83 = scmp.eq.s32.totalorder %s15, 0
    %p84 = por %p82, %p83
    %s85 = ssub.s32 %s9, %s16
    %p86 = scmp.eq.s32.totalorder %s85, 0
    %s88 = sadd.s32 %s87, 1
    %s89 = scalar_select %p86, %s87, %s88
    %p92 = pneg %p86
    %p93 = scmp.eq.s32.totalorder %s9, 1
    %p94 = por %p92, %p93
    %p95 = scmp.ne.s32.totalorder %s87, %s90
    %p96 = scmp.eq.s32.totalorder %s9, 0
    %p97 = por %p95, %p96
    %p98 = scmp.ne.s32.totalorder %s87, %s90
    %p99 = scmp.eq.s32.totalorder %s14, 1
    %p100 = por %p98, %p99
    %p101 = scmp.ne.s32.totalorder %s90, %s91
    %p102 = scmp.eq.s32.totalorder %s14, 0
    %p103 = por %p101, %p102
    %p104 = scmp.ne.s32.totalorder %s90, %s91
    %p105 = scmp.eq.s32.totalorder %s15, 1
    %p106 = por %p104, %p105
    %p108 = scmp.ne.s32.totalorder %s91, %s107
    %p109 = scmp.eq.s32.totalorder %s15, 0
    %p110 = por %p108, %p109
    %p111 = scmp.le.s32.totalorder 1, %s9
    %p112 = scmp.lt.s32.totalorder %s9, 3
    %p113 = pnand %p111, %p112
    %p114 = pneg %p113
    // Predicated region
    $region9: #{ssd_gmm_forward.15} parent=5 // pred_check
      _
    $region10: #{ssd_gmm_forward.15} parent=5 // pred_check_branch
      %116 = sbr.rel (%p113) target = $region12
    $region11: #{ssd_gmm_forward.15} parent=5 // pred_region
      %s117 = ssub.s32 %s9, 1
      // Predicated region
      $region13: #{ssd_gmm_forward.15} parent=11 // pred_check
        %p118 = pneg %p56
      $region14: #{ssd_gmm_forward.15} parent=11 // pred_check_branch
        %120 = sbr.rel (%p118) target = $region16
      $region15: #{ssd_gmm_forward.15} parent=11 // pred_region
        _
      $region16: #{ssd_gmm_forward.15} parent=11 // pred_fallthru
        _
      // Predicated region
      $region17: #{ssd_gmm_forward.15} parent=11 // pred_check
        %p121 = pneg %p77
      $region18: #{ssd_gmm_forward.15} parent=11 // pred_check_branch
        %123 = sbr.rel (%p121) target = $region20
      $region19: #{ssd_gmm_forward.15} parent=11 // pred_region
        _
      $region20: #{ssd_gmm_forward.15} parent=11 // pred_fallthru
        _
    $region12: #{ssd_gmm_forward.15} parent=5 // pred_fallthru
      _
    %p124 = scmp.lt.s32.totalorder %s9, 2
    // Predicated region
    $region21: #{ssd_gmm_forward.15} parent=5 // pred_check
      %p125 = pneg %p124
    $region22: #{ssd_gmm_forward.15} parent=5 // pred_check_branch
      %127 = sbr.rel (%p125) target = $region24
    $region23: #{ssd_gmm_forward.15} parent=5 // pred_region
      // Predicated region
      $region25: #{ssd_gmm_forward.15} parent=23 // pred_check
        %p128 = pneg %p29
      $region26: #{ssd_gmm_forward.15} parent=23 // pred_check_branch
        %130 = sbr.rel (%p128) target = $region28
      $region27: #{ssd_gmm_forward.15} parent=23 // pred_region
        %s131 = smul.u32 8, %s9
        %p132 = scmp.lt.s32.totalorder %s131, 15
        %s133 = scalar_select %p132, %s131, 15
        %s134 = smul.addr %s133, 3
        %s135 = smul.addr %s134, 4
        %s136 = scalar_lea.vmem %s0, %s135
        %s137 = smul.u32 8, %s9
      $region28: #{ssd_gmm_forward.15} parent=23 // pred_fallthru
        _
    $region24: #{ssd_gmm_forward.15} parent=5 // pred_fallthru
      _
    %p138 = scmp.le.s32.totalorder 1, %s9
    %p139 = scmp.lt.s32.totalorder %s9, 3
    %p140 = pnand %p138, %p139
    %p141 = pneg %p140
    // Predicated region
    $region29: #{ssd_gmm_forward.15} parent=5 // pred_check
      _
    $region30: #{ssd_gmm_forward.15} parent=5 // pred_check_branch
      %143 = sbr.rel (%p140) target = $region32
    $region31: #{ssd_gmm_forward.15} parent=5 // pred_region
      %s144 = ssub.s32 %s9, 1
      %s145 = smul.u32 8, %s14
      %p146 = scmp.lt.s32.totalorder %s145, 15
      %s147 = scalar_select %p146, %s145, 15
      %s148 = smul.addr %s147, 3
      %s149 = smul.addr %s148, 4
      %s150 = scalar_lea.vmem %s0, %s149
      %p151 = pneg %p35
      %p152 = pneg %p32
      %p153 = pneg %p56
      %p154 = pneg %p53
      %p155 = pneg %p77
      %p156 = pneg %p74
      %p157 = pneg %p103
      %p158 = pneg %p100
      %s159 = smul.u32 8, %s14
      %p160 = scmp.lt.s32.totalorder %s159, 15
      %s161 = scalar_select %p160, %s159, 15
      %s162 = smul.addr %s161, 3
      %s163 = smul.addr %s162, 8
      %s164 = scalar_lea.vmem %s3, %s163
      %s165 = smul.u32 8, %s14
      %p166 = scmp.lt.s32.totalorder %s165, 15
      %s167 = scalar_select %p166, %s165, 15
      %s168 = smul.addr %s167, 3
      %s169 = smul.addr %s168, 4
      %s170 = scalar_lea.vmem %s0, %s169
      %s171 = smul.u32 8, %s14
      %s172 = smul.u32 8, %s14
      %p173 = scmp.lt.s32.totalorder %s172, 15
      %s174 = scalar_select %p173, %s172, 15
      %s175 = smul.addr %s174, 3
      %s176 = smul.addr %s175, 8
      %s177 = scalar_lea.vmem %s3, %s176
      %s178 = smul.u32 8, %s14
      %v180 = vld [vmem:[%s170] sm:$0xff]
      %v181 = vld [vmem:[%s170 + $0x8] sm:$0xf]
      %v182 = vld [vmem:[%s170 + $0xc] sm:$0xff]
      %v183 = vld [vmem:[%s170 + $0x14] sm:$0xf]
      %v184 = vld [vmem:[%s170 + $0x18] sm:$0xff]
      %v185 = vld [vmem:[%s170 + $0x20] sm:$0xf]
      %v186 = vld [vmem:[%s170 + $0x24] sm:$0xff]
      %v187 = vld [vmem:[%s170 + $0x2c] sm:$0xf]
      %v188 = vld [vmem:[%s170 + $0x30] sm:$0xff]
      %v189 = vld [vmem:[%s170 + $0x38] sm:$0xf]
      %v190 = vld [vmem:[%s170 + $0x3c] sm:$0xff]
      %v191 = vld [vmem:[%s170 + $0x44] sm:$0xf]
      %v192 = vld [vmem:[%s170 + $0x48] sm:$0xff]
      %v193 = vld [vmem:[%s170 + $0x50] sm:$0xf]
      %v194 = vld [vmem:[%s170 + $0x54] sm:$0xff]
      %v195 = vld [vmem:[%s170 + $0x5c] sm:$0xf]
      %v196 = vld [vmem:[%s1] sm:$0xff]
      %v197 = vld [vmem:[%s1 + $0x8] sm:$0xf]
      %v198 = vld [vmem:[%s1 + $0xc] sm:$0xff]
      %v199 = vld [vmem:[%s1 + $0x14] sm:$0xf]
      %v200 = vld [vmem:[%s1 + $0x18] sm:$0xff]
      %v201 = vld [vmem:[%s1 + $0x20] sm:$0xf]
      %v202 = vld [vmem:[%s1 + $0x24] sm:$0xff]
      %v203 = vld [vmem:[%s1 + $0x2c] sm:$0xf]
      %v204 = vld [vmem:[%s1 + $0x30] sm:$0xff]
      %v205 = vld [vmem:[%s1 + $0x38] sm:$0xf]
      %v206 = vld [vmem:[%s1 + $0x3c] sm:$0xff]
      %v207 = vld [vmem:[%s1 + $0x44] sm:$0xf]
      %v208 = vld [vmem:[%s1 + $0x48] sm:$0xff]
      %v209 = vld [vmem:[%s1 + $0x50] sm:$0xf]
      %v210 = vld [vmem:[%s1 + $0x54] sm:$0xff]
      %v211 = vld [vmem:[%s1 + $0x5c] sm:$0xf]
      %v212 = vld [vmem:[%s1 + $0x60] sm:$0xff]
      %v213 = vld [vmem:[%s1 + $0x68] sm:$0xf]
      %v214 = vld [vmem:[%s1 + $0x6c] sm:$0xff]
      %v215 = vld [vmem:[%s1 + $0x74] sm:$0xf]
      %v216 = vld [vmem:[%s1 + $0x78] sm:$0xff]
      %v217 = vld [vmem:[%s1 + $0x80] sm:$0xf]
      %v218 = vld [vmem:[%s1 + $0x84] sm:$0xff]
      %v219 = vld [vmem:[%s1 + $0x8c] sm:$0xf]
      %v220 = vld [vmem:[%s1 + $0x90] sm:$0xff]
      %v221 = vld [vmem:[%s1 + $0x98] sm:$0xf]
      %v222 = vld [vmem:[%s1 + $0x9c] sm:$0xff]
      %v223 = vld [vmem:[%s1 + $0xa4] sm:$0xf]
      %v224 = vld [vmem:[%s1 + $0xa8] sm:$0xff]
      %v225 = vld [vmem:[%s1 + $0xb0] sm:$0xf]
      %v226 = vld [vmem:[%s1 + $0xb4] sm:$0xff]
      %v227 = vld [vmem:[%s1 + $0xbc] sm:$0xf]
      %v228 = vld [vmem:[%s1 + $0xc0] sm:$0xff]
      %v229 = vld [vmem:[%s1 + $0xc8] sm:$0xf]
      %v230 = vld [vmem:[%s1 + $0xcc] sm:$0xff]
      %v231 = vld [vmem:[%s1 + $0xd4] sm:$0xf]
      %v232 = vld [vmem:[%s1 + $0xd8] sm:$0xff]
      %v233 = vld [vmem:[%s1 + $0xe0] sm:$0xf]
      %v234 = vld [vmem:[%s1 + $0xe4] sm:$0xff]
      %v235 = vld [vmem:[%s1 + $0xec] sm:$0xf]
      %v236 = vld [vmem:[%s1 + $0xf0] sm:$0xff]
      %v237 = vld [vmem:[%s1 + $0xf8] sm:$0xf]
      %v238 = vld [vmem:[%s1 + $0xfc] sm:$0xff]
      %v239 = vld [vmem:[%s1 + $0x104] sm:$0xf]
      %v240 = vld [vmem:[%s1 + $0x108] sm:$0xff]
      %v241 = vld [vmem:[%s1 + $0x110] sm:$0xf]
      %v242 = vld [vmem:[%s1 + $0x114] sm:$0xff]
      %v243 = vld [vmem:[%s1 + $0x11c] sm:$0xf]
      %v244 = vld [vmem:[%s1 + $0x120] sm:$0xff]
      %v245 = vld [vmem:[%s1 + $0x128] sm:$0xf]
      %v246 = vld [vmem:[%s1 + $0x12c] sm:$0xff]
      %v247 = vld [vmem:[%s1 + $0x134] sm:$0xf]
      %v248 = vld [vmem:[%s1 + $0x138] sm:$0xff]
      %v249 = vld [vmem:[%s1 + $0x140] sm:$0xf]
      %v250 = vld [vmem:[%s1 + $0x144] sm:$0xff]
      %v251 = vld [vmem:[%s1 + $0x14c] sm:$0xf]
      %v252 = vld [vmem:[%s1 + $0x150] sm:$0xff]
      %v253 = vld [vmem:[%s1 + $0x158] sm:$0xf]
      %v254 = vld [vmem:[%s1 + $0x15c] sm:$0xff]
      %v255 = vld [vmem:[%s1 + $0x164] sm:$0xf]
      %v256 = vld [vmem:[%s1 + $0x168] sm:$0xff]
      %v257 = vld [vmem:[%s1 + $0x170] sm:$0xf]
      %v258 = vld [vmem:[%s1 + $0x174] sm:$0xff]
      %v259 = vld [vmem:[%s1 + $0x17c] sm:$0xf]
      %v260 = vld [vmem:[%s1 + $0x180] sm:$0xff]
      %v261 = vld [vmem:[%s1 + $0x188] sm:$0xf]
      %v262 = vld [vmem:[%s1 + $0x18c] sm:$0xff]
      %v263 = vld [vmem:[%s1 + $0x194] sm:$0xf]
      %v264 = vld [vmem:[%s1 + $0x198] sm:$0xff]
      %v265 = vld [vmem:[%s1 + $0x1a0] sm:$0xf]
      %v266 = vld [vmem:[%s1 + $0x1a4] sm:$0xff]
      %v267 = vld [vmem:[%s1 + $0x1ac] sm:$0xf]
      %v268 = vld [vmem:[%s2] sm:$0x7]
      %v270 = vlaneseq
      %v271 = vshrl.u32 %v270, 7
      %v272 = vsub.s32 0, %v271
      %v273 = vrot.slane %v268, %v272
      %v274 = vlaneseq
      %v275 = vshrl.u32 %v274, 7
      %v276 = vsub.s32 1, %v275
      %v277 = vrot.slane %v268, %v276
      %v278 = vlaneseq
      %v279 = vshrl.u32 %v278, 7
      %v280 = vsub.s32 2, %v279
      %v281 = vrot.slane %v268, %v280
      %v301 = vunpack.c.l.b16 %v180
      %v302 = vunpack.c.h.b16 %v180
      %v303 = vunpack.c.l.b16 %v181
      %v304 = vunpack.c.l.b16 %v182
      %v305 = vunpack.c.h.b16 %v182
      %v306 = vunpack.c.l.b16 %v183
      %v307 = vunpack.c.l.b16 %v184
      %v308 = vunpack.c.h.b16 %v184
      %v309 = vunpack.c.l.b16 %v185
      %v310 = vunpack.c.l.b16 %v186
      %v311 = vunpack.c.h.b16 %v186
      %v312 = vunpack.c.l.b16 %v187
      %v313 = vunpack.c.l.b16 %v188
      %v314 = vunpack.c.h.b16 %v188
      %v315 = vunpack.c.l.b16 %v189
      %v316 = vunpack.c.l.b16 %v190
      %v317 = vunpack.c.h.b16 %v190
      %v318 = vunpack.c.l.b16 %v191
      %v319 = vunpack.c.l.b16 %v192
      %v320 = vunpack.c.h.b16 %v192
      %v321 = vunpack.c.l.b16 %v193
      %v322 = vunpack.c.l.b16 %v194
      %v323 = vunpack.c.h.b16 %v194
      %v324 = vunpack.c.l.b16 %v195
      %v325 = vpack.c.b16 %v304, %v301
      %v326 = vpack.c.b16 %v305, %v302
      %v327 = vpack.c.b16 %v306, %v303
      %v328 = vpack.c.b16 %v310, %v307
      %v329 = vpack.c.b16 %v311, %v308
      %v330 = vpack.c.b16 %v312, %v309
      %v331 = vpack.c.b16 %v316, %v313
      %v332 = vpack.c.b16 %v317, %v314
      %v333 = vpack.c.b16 %v318, %v315
      %v334 = vpack.c.b16 %v322, %v319
      %v335 = vpack.c.b16 %v323, %v320
      %v336 = vpack.c.b16 %v324, %v321
      %v417 = vunpack.c.l.b16 %v196
      %v418 = vunpack.c.h.b16 %v196
      %v419 = vunpack.c.l.b16 %v197
      %v420 = vunpack.c.l.b16 %v198
      %v421 = vunpack.c.h.b16 %v198
      %v422 = vunpack.c.l.b16 %v199
      %v423 = vunpack.c.l.b16 %v200
      %v424 = vunpack.c.h.b16 %v200
      %v425 = vunpack.c.l.b16 %v201
      %v426 = vunpack.c.l.b16 %v202
      %v427 = vunpack.c.h.b16 %v202
      %v428 = vunpack.c.l.b16 %v203
      %v429 = vunpack.c.l.b16 %v204
      %v430 = vunpack.c.h.b16 %v204
      %v431 = vunpack.c.l.b16 %v205
      %v432 = vunpack.c.l.b16 %v206
      %v433 = vunpack.c.h.b16 %v206
      %v434 = vunpack.c.l.b16 %v207
      %v435 = vunpack.c.l.b16 %v208
      %v436 = vunpack.c.h.b16 %v208
      %v437 = vunpack.c.l.b16 %v209
      %v438 = vunpack.c.l.b16 %v210
      %v439 = vunpack.c.h.b16 %v210
      %v440 = vunpack.c.l.b16 %v211
      %v441 = vunpack.c.l.b16 %v212
      %v442 = vunpack.c.h.b16 %v212
      %v443 = vunpack.c.l.b16 %v213
      %v444 = vunpack.c.l.b16 %v214
      %v445 = vunpack.c.h.b16 %v214
      %v446 = vunpack.c.l.b16 %v215
      %v447 = vunpack.c.l.b16 %v216
      %v448 = vunpack.c.h.b16 %v216
      %v449 = vunpack.c.l.b16 %v217
      %v450 = vunpack.c.l.b16 %v218
      %v451 = vunpack.c.h.b16 %v218
      %v452 = vunpack.c.l.b16 %v219
      %v453 = vunpack.c.l.b16 %v220
      %v454 = vunpack.c.h.b16 %v220
      %v455 = vunpack.c.l.b16 %v221
      %v456 = vunpack.c.l.b16 %v222
      %v457 = vunpack.c.h.b16 %v222
      %v458 = vunpack.c.l.b16 %v223
      %v459 = vunpack.c.l.b16 %v224
      %v460 = vunpack.c.h.b16 %v224
      %v461 = vunpack.c.l.b16 %v225
      %v462 = vunpack.c.l.b16 %v226
      %v463 = vunpack.c.h.b16 %v226
      %v464 = vunpack.c.l.b16 %v227
      %v465 = vunpack.c.l.b16 %v228
      %v466 = vunpack.c.h.b16 %v228
      %v467 = vunpack.c.l.b16 %v229
      %v468 = vunpack.c.l.b16 %v230
      %v469 = vunpack.c.h.b16 %v230
      %v470 = vunpack.c.l.b16 %v231
      %v471 = vunpack.c.l.b16 %v232
      %v472 = vunpack.c.h.b16 %v232
      %v473 = vunpack.c.l.b16 %v233
      %v474 = vunpack.c.l.b16 %v234
      %v475 = vunpack.c.h.b16 %v234
      %v476 = vunpack.c.l.b16 %v235
      %v477 = vunpack.c.l.b16 %v236
      %v478 = vunpack.c.h.b16 %v236
      %v479 = vunpack.c.l.b16 %v237
      %v480 = vunpack.c.l.b16 %v238
      %v481 = vunpack.c.h.b16 %v238
      %v482 = vunpack.c.l.b16 %v239
      %v483 = vunpack.c.l.b16 %v240
      %v484 = vunpack.c.h.b16 %v240
      %v485 = vunpack.c.l.b16 %v241
      %v486 = vunpack.c.l.b16 %v242
      %v487 = vunpack.c.h.b16 %v242
      %v488 = vunpack.c.l.b16 %v243
      %v489 = vunpack.c.l.b16 %v244
      %v490 = vunpack.c.h.b16 %v244
      %v491 = vunpack.c.l.b16 %v245
      %v492 = vunpack.c.l.b16 %v246
      %v493 = vunpack.c.h.b16 %v246
      %v494 = vunpack.c.l.b16 %v247
      %v495 = vunpack.c.l.b16 %v248
      %v496 = vunpack.c.h.b16 %v248
      %v497 = vunpack.c.l.b16 %v249
      %v498 = vunpack.c.l.b16 %v250
      %v499 = vunpack.c.h.b16 %v250
      %v500 = vunpack.c.l.b16 %v251
      %v501 = vunpack.c.l.b16 %v252
      %v502 = vunpack.c.h.b16 %v252
      %v503 = vunpack.c.l.b16 %v253
      %v504 = vunpack.c.l.b16 %v254
      %v505 = vunpack.c.h.b16 %v254
      %v506 = vunpack.c.l.b16 %v255
      %v507 = vunpack.c.l.b16 %v256
      %v508 = vunpack.c.h.b16 %v256
      %v509 = vunpack.c.l.b16 %v257
      %v510 = vunpack.c.l.b16 %v258
      %v511 = vunpack.c.h.b16 %v258
      %v512 = vunpack.c.l.b16 %v259
      %v513 = vunpack.c.l.b16 %v260
      %v514 = vunpack.c.h.b16 %v260
      %v515 = vunpack.c.l.b16 %v261
      %v516 = vunpack.c.l.b16 %v262
      %v517 = vunpack.c.h.b16 %v262
      %v518 = vunpack.c.l.b16 %v263
      %v519 = vunpack.c.l.b16 %v264
      %v520 = vunpack.c.h.b16 %v264
      %v521 = vunpack.c.l.b16 %v265
      %v522 = vunpack.c.l.b16 %v266
      %v523 = vunpack.c.h.b16 %v266
      %v524 = vunpack.c.l.b16 %v267
      %v525 = vpack.c.b16 %v420, %v417
      %v526 = vpack.c.b16 %v421, %v418
      %v527 = vpack.c.b16 %v422, %v419
      %v528 = vpack.c.b16 %v426, %v423
      %v529 = vpack.c.b16 %v427, %v424
      %v530 = vpack.c.b16 %v428, %v425
      %v531 = vpack.c.b16 %v432, %v429
      %v532 = vpack.c.b16 %v433, %v430
      %v533 = vpack.c.b16 %v434, %v431
      %v534 = vpack.c.b16 %v438, %v435
      %v535 = vpack.c.b16 %v439, %v436
      %v536 = vpack.c.b16 %v440, %v437
      %v537 = vpack.c.b16 %v444, %v441
      %v538 = vpack.c.b16 %v445, %v442
      %v539 = vpack.c.b16 %v446, %v443
      %v540 = vpack.c.b16 %v450, %v447
      %v541 = vpack.c.b16 %v451, %v448
      %v542 = vpack.c.b16 %v452, %v449
      %v543 = vpack.c.b16 %v456, %v453
      %v544 = vpack.c.b16 %v457, %v454
      %v545 = vpack.c.b16 %v458, %v455
      %v546 = vpack.c.b16 %v462, %v459
      %v547 = vpack.c.b16 %v463, %v460
      %v548 = vpack.c.b16 %v464, %v461
      %v549 = vpack.c.b16 %v468, %v465
      %v550 = vpack.c.b16 %v469, %v466
      %v551 = vpack.c.b16 %v470, %v467
      %v552 = vpack.c.b16 %v474, %v471
      %v553 = vpack.c.b16 %v475, %v472
      %v554 = vpack.c.b16 %v476, %v473
      %v555 = vpack.c.b16 %v480, %v477
      %v556 = vpack.c.b16 %v481, %v478
      %v557 = vpack.c.b16 %v482, %v479
      %v558 = vpack.c.b16 %v486, %v483
      %v559 = vpack.c.b16 %v487, %v484
      %v560 = vpack.c.b16 %v488, %v485
      %v561 = vpack.c.b16 %v492, %v489
      %v562 = vpack.c.b16 %v493, %v490
      %v563 = vpack.c.b16 %v494, %v491
      %v564 = vpack.c.b16 %v498, %v495
      %v565 = vpack.c.b16 %v499, %v496
      %v566 = vpack.c.b16 %v500, %v497
      %v567 = vpack.c.b16 %v504, %v501
      %v568 = vpack.c.b16 %v505, %v502
      %v569 = vpack.c.b16 %v506, %v503
      %v570 = vpack.c.b16 %v510, %v507
      %v571 = vpack.c.b16 %v511, %v508
      %v572 = vpack.c.b16 %v512, %v509
      %v573 = vpack.c.b16 %v516, %v513
      %v574 = vpack.c.b16 %v517, %v514
      %v575 = vpack.c.b16 %v518, %v515
      %v576 = vpack.c.b16 %v522, %v519
      %v577 = vpack.c.b16 %v523, %v520
      %v578 = vpack.c.b16 %v524, %v521
      %vm633 = vcmask 261120
      %v635 = vsel %vm633, %v327, 0
      %v638 = vsel %vm633, %v330, 0
      %v641 = vsel %vm633, %v333, 0
      %v644 = vsel %vm633, %v336, 0
      %646 = vmatprep.subr.bf16.mxu0 %v526
      %647 = vmatpush1.bf16.msra.mxu0 %v525
      %648 = vmatprep.subr.bf16.mxu0 %v529
      %649 = vmatpush1.bf16.msra.mxu0 %v528
      %650 = vmatprep.subr.bf16.mxu0 %v532
      %651 = vmatpush1.bf16.msra.mxu0 %v531
      %652 = vmatprep.subr.bf16.mxu0 %v535
      %653 = vmatpush1.bf16.msra.mxu0 %v534
      %654 = vmatprep.subr.bf16.mxu0 %v538
      %655 = vmatpush1.bf16.msra.mxu0 %v537
      %656 = vmatprep.subr.bf16.mxu0 %v541
      %657 = vmatpush1.bf16.msra.mxu0 %v540
      %658 = vmatprep.subr.bf16.mxu0 %v544
      %659 = vmatpush1.bf16.msra.mxu0 %v543
      %660 = vmatprep.subr.bf16.mxu0 %v547
      %661 = vmatpush1.bf16.msra.mxu0 %v546
      %662 = vmatprep.subr.bf16.mxu0 %v550
      %663 = vmatpush1.bf16.msra.mxu0 %v549
      %664 = vmatprep.subr.bf16.mxu0 %v553
      %665 = vmatpush1.bf16.msra.mxu0 %v552
      %666 = vmatprep.subr.bf16.mxu0 %v556
      %667 = vmatpush1.bf16.msra.mxu0 %v555
      %668 = vmatprep.subr.bf16.mxu0 %v559
      %669 = vmatpush1.bf16.msra.mxu0 %v558
      %670 = vmatprep.subr.bf16.mxu0 %v562
      %671 = vmatpush1.bf16.msra.mxu0 %v561
      %672 = vmatprep.subr.bf16.mxu0 %v565
      %673 = vmatpush1.bf16.msra.mxu0 %v564
      %674 = vmatprep.subr.bf16.mxu0 %v568
      %675 = vmatpush1.bf16.msra.mxu0 %v567
      %676 = vmatprep.subr.bf16.mxu0 %v571
      %677 = vmatpush1.bf16.msra.mxu0 %v570
      %678 = vmatprep.mubr.bf16.mxu0 %v326
      %679 = vmatmul.mubr.bf16.gmra.mrb[0].mxu0 %v325
      %v680 = vpop.f32.mrb[0].mxu0
      %v681 = vadd.f32 %v273, %v680
      %v682 = vpop.f32.mrb[0].mxu0
      %v683 = vadd.f32 %v277, %v682
      %v684 = vpop.f32.mrb[0].mxu0
      %v685 = vadd.f32 %v273, %v684
      %v686 = vpop.f32.mrb[0].mxu0
      %v687 = vadd.f32 %v277, %v686
      %688 = vmatprep.mubr.bf16.mxu0 %v329
      %689 = vmatmul.mubr.bf16.gmra.mrb[0].mxu0 %v328
      %v690 = vpop.f32.mrb[0].mxu0
      %v691 = vadd.f32 %v273, %v690
      %v692 = vpop.f32.mrb[0].mxu0
      %v693 = vadd.f32 %v277, %v692
      %v694 = vpop.f32.mrb[0].mxu0
      %v695 = vadd.f32 %v273, %v694
      %v696 = vpop.f32.mrb[0].mxu0
      %v697 = vadd.f32 %v277, %v696
      %698 = vmatprep.mubr.bf16.mxu0 %v332
      %699 = vmatmul.mubr.bf16.gmra.mrb[0].mxu0 %v331
      %v700 = vpop.f32.mrb[0].mxu0
      %v701 = vadd.f32 %v273, %v700
      %v702 = vpop.f32.mrb[0].mxu0
      %v703 = vadd.f32 %v277, %v702
      %v704 = vpop.f32.mrb[0].mxu0
      %v705 = vadd.f32 %v273, %v704
      %v706 = vpop.f32.mrb[0].mxu0
      %v707 = vadd.f32 %v277, %v706
      %708 = vmatprep.mubr.bf16.mxu0 %v335
      %709 = vmatmul.mubr.bf16.gmra.mrb[0].mxu0 %v334
      %v710 = vpop.f32.mrb[0].mxu0
      %v711 = vadd.f32 %v273, %v710
      %v712 = vpop.f32.mrb[0].mxu0
      %v713 = vadd.f32 %v277, %v712
      %v714 = vpop.f32.mrb[0].mxu0
      %v715 = vadd.f32 %v273, %v714
      %v716 = vpop.f32.mrb[0].mxu0
      %v717 = vadd.f32 %v277, %v716
      %718 = vdwg.mxu0
      %719 = vmatprep.subr.bf16.mxu0 %v574
      %720 = vmatpush1.bf16.msra.mxu0 %v573
      %721 = vmatprep.subr.bf16.mxu0 %v577
      %722 = vmatpush1.bf16.msra.mxu0 %v576
      %723 = vmatprep.subr.bf16.mxu0 0
      %724 = vmatpush1.bf16.msra.mxu0 0
      %725 = vmatprep.subr.bf16.mxu0 0
      %726 = vmatpush1.bf16.msra.mxu0 0
      %727 = vmatprep.subr.bf16.mxu0 0
      %728 = vmatpush1.bf16.msra.mxu0 0
      %729 = vmatprep.subr.bf16.mxu0 0
      %730 = vmatpush1.bf16.msra.mxu0 0
      %731 = vmatprep.subr.bf16.mxu0 0
      %732 = vmatpush1.bf16.msra.mxu0 0
      %733 = vmatprep.subr.bf16.mxu0 0
      %734 = vmatpush1.bf16.msra.mxu0 0
      %735 = vmatprep.subr.bf16.mxu0 0
      %736 = vmatpush1.bf16.msra.mxu0 0
      %737 = vmatprep.subr.bf16.mxu0 0
      %738 = vmatpush1.bf16.msra.mxu0 0
      %739 = vmatprep.subr.bf16.mxu0 0
      %740 = vmatpush1.bf16.msra.mxu0 0
      %741 = vmatprep.subr.bf16.mxu0 0
      %742 = vmatpush1.bf16.msra.mxu0 0
      %743 = vmatprep.subr.bf16.mxu0 0
      %744 = vmatpush1.bf16.msra.mxu0 0
      %745 = vmatprep.subr.bf16.mxu0 0
      %746 = vmatpush1.bf16.msra.mxu0 0
      %747 = vmatprep.subr.bf16.mxu0 0
      %748 = vmatpush1.bf16.msra.mxu0 0
      %749 = vmatprep.subr.bf16.mxu0 0
      %750 = vmatpush1.bf16.msra.mxu0 0
      %751 = vmatprep.mubr.bf16.mxu0 0
      %752 = vmatmul.mubr.bf16.gmra.mrb[0].mxu0 %v635
      %v753 = vpop.f32.mrb[0].mxu0
      %v754 = vadd.f32 %v681, %v753
      %v755 = vpop.f32.mrb[0].mxu0
      %v756 = vadd.f32 %v683, %v755
      %v757 = vpop.f32.mrb[0].mxu0
      %v758 = vadd.f32 %v685, %v757
      %v759 = vpop.f32.mrb[0].mxu0
      %v760 = vadd.f32 %v687, %v759
      %761 = vmatprep.mubr.bf16.mxu0 0
      %762 = vmatmul.mubr.bf16.gmra.mrb[0].mxu0 %v638
      %v763 = vpop.f32.mrb[0].mxu0
      %v764 = vadd.f32 %v691, %v763
      %v765 = vpop.f32.mrb[0].mxu0
      %v766 = vadd.f32 %v693, %v765
      %v767 = vpop.f32.mrb[0].mxu0
      %v768 = vadd.f32 %v695, %v767
      %v769 = vpop.f32.mrb[0].mxu0
      %v770 = vadd.f32 %v697, %v769
      %771 = vmatprep.mubr.bf16.mxu0 0
      %772 = vmatmul.mubr.bf16.gmra.mrb[0].mxu0 %v641
      %v773 = vpop.f32.mrb[0].mxu0
      %v774 = vadd.f32 %v701, %v773
      %v775 = vpop.f32.mrb[0].mxu0
      %v776 = vadd.f32 %v703, %v775
      %v777 = vpop.f32.mrb[0].mxu0
      %v778 = vadd.f32 %v705, %v777
      %v779 = vpop.f32.mrb[0].mxu0
      %v780 = vadd.f32 %v707, %v779
      %781 = vmatprep.mubr.bf16.mxu0 0
      %782 = vmatmul.mubr.bf16.gmra.mrb[0].mxu0 %v644
      %v783 = vpop.f32.mrb[0].mxu0
      %v784 = vadd.f32 %v711, %v783
      %v785 = vpop.f32.mrb[0].mxu0
      %v786 = vadd.f32 %v713, %v785
      %v787 = vpop.f32.mrb[0].mxu0
      %v788 = vadd.f32 %v715, %v787
      %v789 = vpop.f32.mrb[0].mxu0
      %v790 = vadd.f32 %v717, %v789
      %791 = vdwg.mxu0
      %792 = vmatprep.subr.bf16.mxu0 0
      %793 = vmatpush1.bf16.msra.mxu0 %v527
      %794 = vmatprep.subr.bf16.mxu0 0
      %795 = vmatpush1.bf16.msra.mxu0 %v530
      %796 = vmatprep.subr.bf16.mxu0 0
      %797 = vmatpush1.bf16.msra.mxu0 %v533
      %798 = vmatprep.subr.bf16.mxu0 0
      %799 = vmatpush1.bf16.msra.mxu0 %v536
      %800 = vmatprep.subr.bf16.mxu0 0
      %801 = vmatpush1.bf16.msra.mxu0 %v539
      %802 = vmatprep.subr.bf16.mxu0 0
      %803 = vmatpush1.bf16.msra.mxu0 %v542
      %804 = vmatprep.subr.bf16.mxu0 0
      %805 = vmatpush1.bf16.msra.mxu0 %v545
      %806 = vmatprep.subr.bf16.mxu0 0
      %807 = vmatpush1.bf16.msra.mxu0 %v548
      %808 = vmatprep.subr.bf16.mxu0 0
      %809 = vmatpush1.bf16.msra.mxu0 %v551
      %810 = vmatprep.subr.bf16.mxu0 0
      %811 = vmatpush1.bf16.msra.mxu0 %v554
      %812 = vmatprep.subr.bf16.mxu0 0
      %813 = vmatpush1.bf16.msra.mxu0 %v557
      %814 = vmatprep.subr.bf16.mxu0 0
      %815 = vmatpush1.bf16.msra.mxu0 %v560
      %816 = vmatprep.subr.bf16.mxu0 0
      %817 = vmatpush1.bf16.msra.mxu0 %v563
      %818 = vmatprep.subr.bf16.mxu0 0
      %819 = vmatpush1.bf16.msra.mxu0 %v566
      %820 = vmatprep.subr.bf16.mxu0 0
      %821 = vmatpush1.bf16.msra.mxu0 %v569
      %822 = vmatprep.subr.bf16.mxu0 0
      %823 = vmatpush1.bf16.msra.mxu0 %v572
      %824 = vmatprep.mubr.bf16.mxu0 %v326
      %825 = vmatmul.mubr.bf16.gmra.mrb[0].mxu0 %v325
      %v826 = vpop.f32.mrb[0].mxu0
      %v827 = vadd.f32 %v281, %v826
      %v828 = vpop.f32.mrb[0].mxu0
      %v829 = vpop.f32.mrb[0].mxu0
      %v830 = vadd.f32 %v281, %v829
      %v831 = vpop.f32.mrb[0].mxu0
      %832 = vmatprep.mubr.bf16.mxu0 %v329
      %833 = vmatmul.mubr.bf16.gmra.mrb[0].mxu0 %v328
      %v834 = vpop.f32.mrb[0].mxu0
      %v835 = vadd.f32 %v281, %v834
      %v836 = vpop.f32.mrb[0].mxu0
      %v837 = vpop.f32.mrb[0].mxu0
      %v838 = vadd.f32 %v281, %v837
      %v839 = vpop.f32.mrb[0].mxu0
      %840 = vmatprep.mubr.bf16.mxu0 %v332
      %841 = vmatmul.mubr.bf16.gmra.mrb[0].mxu0 %v331
      %v842 = vpop.f32.mrb[0].mxu0
      %v843 = vadd.f32 %v281, %v842
      %v844 = vpop.f32.mrb[0].mxu0
      %v845 = vpop.f32.mrb[0].mxu0
      %v846 = vadd.f32 %v281, %v845
      %v847 = vpop.f32.mrb[0].mxu0
      %848 = vmatprep.mubr.bf16.mxu0 %v335
      %849 = vmatmul.mubr.bf16.gmra.mrb[0].mxu0 %v334
      %v850 = vpop.f32.mrb[0].mxu0
      %v851 = vadd.f32 %v281, %v850
      %v852 = vpop.f32.mrb[0].mxu0
      %v853 = vpop.f32.mrb[0].mxu0
      %v854 = vadd.f32 %v281, %v853
      %v855 = vpop.f32.mrb[0].mxu0
      %856 = vdwg.mxu0
      %857 = vmatprep.subr.bf16.mxu0 0
      %858 = vmatpush1.bf16.msra.mxu0 %v575
      %859 = vmatprep.subr.bf16.mxu0 0
      %860 = vmatpush1.bf16.msra.mxu0 %v578
      %861 = vmatprep.subr.bf16.mxu0 0
      %862 = vmatpush1.bf16.msra.mxu0 0
      %863 = vmatprep.subr.bf16.mxu0 0
      %864 = vmatpush1.bf16.msra.mxu0 0
      %865 = vmatprep.subr.bf16.mxu0 0
      %866 = vmatpush1.bf16.msra.mxu0 0
      %867 = vmatprep.subr.bf16.mxu0 0
      %868 = vmatpush1.bf16.msra.mxu0 0
      %869 = vmatprep.subr.bf16.mxu0 0
      %870 = vmatpush1.bf16.msra.mxu0 0
      %871 = vmatprep.subr.bf16.mxu0 0
      %872 = vmatpush1.bf16.msra.mxu0 0
      %873 = vmatprep.subr.bf16.mxu0 0
      %874 = vmatpush1.bf16.msra.mxu0 0
      %875 = vmatprep.subr.bf16.mxu0 0
      %876 = vmatpush1.bf16.msra.mxu0 0
      %877 = vmatprep.subr.bf16.mxu0 0
      %878 = vmatpush1.bf16.msra.mxu0 0
      %879 = vmatprep.subr.bf16.mxu0 0
      %880 = vmatpush1.bf16.msra.mxu0 0
      %881 = vmatprep.subr.bf16.mxu0 0
      %882 = vmatpush1.bf16.msra.mxu0 0
      %883 = vmatprep.subr.bf16.mxu0 0
      %884 = vmatpush1.bf16.msra.mxu0 0
      %885 = vmatprep.subr.bf16.mxu0 0
      %886 = vmatpush1.bf16.msra.mxu0 0
      %887 = vmatprep.subr.bf16.mxu0 0
      %888 = vmatpush1.bf16.msra.mxu0 0
      %889 = vmatprep.mubr.bf16.mxu0 0
      %890 = vmatmul.mubr.bf16.gmra.mrb[0].mxu0 %v635
      %v891 = vpop.f32.mrb[0].mxu0
      %v892 = vadd.f32 %v827, %v891
      %v893 = vpop.f32.mrb[0].mxu0
      %v894 = vpop.f32.mrb[0].mxu0
      %v895 = vadd.f32 %v830, %v894
      %v896 = vpop.f32.mrb[0].mxu0
      %897 = vmatprep.mubr.bf16.mxu0 0
      %898 = vmatmul.mubr.bf16.gmra.mrb[0].mxu0 %v638
      %v899 = vpop.f32.mrb[0].mxu0
      %v900 = vadd.f32 %v835, %v899
      %v901 = vpop.f32.mrb[0].mxu0
      %v902 = vpop.f32.mrb[0].mxu0
      %v903 = vadd.f32 %v838, %v902
      %v904 = vpop.f32.mrb[0].mxu0
      %905 = vmatprep.mubr.bf16.mxu0 0
      %906 = vmatmul.mubr.bf16.gmra.mrb[0].mxu0 %v641
      %v907 = vpop.f32.mrb[0].mxu0
      %v908 = vadd.f32 %v843, %v907
      %v909 = vpop.f32.mrb[0].mxu0
      %v910 = vpop.f32.mrb[0].mxu0
      %v911 = vadd.f32 %v846, %v910
      %v912 = vpop.f32.mrb[0].mxu0
      %913 = vmatprep.mubr.bf16.mxu0 0
      %914 = vmatmul.mubr.bf16.gmra.mrb[0].mxu0 %v644
      %v915 = vpop.f32.mrb[0].mxu0
      %v916 = vadd.f32 %v851, %v915
      %v917 = vpop.f32.mrb[0].mxu0
      %v918 = vpop.f32.mrb[0].mxu0
      %v919 = vadd.f32 %v854, %v918
      %v920 = vpop.f32.mrb[0].mxu0
      %921 = vdwg.mxu0
      %922 = vst [vmem:[%s177] sm:$0xff] %v754
      %923 = vst [vmem:[%s177 + $0x8] sm:$0xff] %v756
      %924 = vst [vmem:[%s177 + $0x10] sm:$0xff] %v892
      %925 = vst [vmem:[%s177 + $0x18] sm:$0xff] %v758
      %926 = vst [vmem:[%s177 + $0x20] sm:$0xff] %v760
      %927 = vst [vmem:[%s177 + $0x28] sm:$0xff] %v895
      %928 = vst [vmem:[%s177 + $0x30] sm:$0xff] %v764
      %929 = vst [vmem:[%s177 + $0x38] sm:$0xff] %v766
      %930 = vst [vmem:[%s177 + $0x40] sm:$0xff] %v900
      %931 = vst [vmem:[%s177 + $0x48] sm:$0xff] %v768
      %932 = vst [vmem:[%s177 + $0x50] sm:$0xff] %v770
      %933 = vst [vmem:[%s177 + $0x58] sm:$0xff] %v903
      %934 = vst [vmem:[%s177 + $0x60] sm:$0xff] %v774
      %935 = vst [vmem:[%s177 + $0x68] sm:$0xff] %v776
      %936 = vst [vmem:[%s177 + $0x70] sm:$0xff] %v908
      %937 = vst [vmem:[%s177 + $0x78] sm:$0xff] %v778
      %938 = vst [vmem:[%s177 + $0x80] sm:$0xff] %v780
      %939 = vst [vmem:[%s177 + $0x88] sm:$0xff] %v911
      %940 = vst [vmem:[%s177 + $0x90] sm:$0xff] %v784
      %941 = vst [vmem:[%s177 + $0x98] sm:$0xff] %v786
      %942 = vst [vmem:[%s177 + $0xa0] sm:$0xff] %v916
      %943 = vst [vmem:[%s177 + $0xa8] sm:$0xff] %v788
      %944 = vst [vmem:[%s177 + $0xb0] sm:$0xff] %v790
      %945 = vst [vmem:[%s177 + $0xb8] sm:$0xff] %v919
      %s946 = smul.u32 8, %s14
      %p947 = scmp.lt.s32.totalorder %s946, 15
      %s948 = scalar_select %p947, %s946, 15
      %s949 = smul.addr %s948, 3
      %s950 = smul.addr %s949, 8
      %s951 = scalar_lea.vmem %s3, %s950
      // Predicated region
      $region33: #{ssd_gmm_forward.15} parent=31 // pred_check
        %p952 = pneg %p100
      $region34: #{ssd_gmm_forward.15} parent=31 // pred_check_branch
        %954 = sbr.rel (%p952) target = $region36
      $region35: #{ssd_gmm_forward.15} parent=31 // pred_region
        %s955 = smul.u32 8, %s14
      $region36: #{ssd_gmm_forward.15} parent=31 // pred_fallthru
        _
    $region32: #{ssd_gmm_forward.15} parent=5 // pred_fallthru
      _
    %p956 = scmp.le.s32.totalorder 2, %s9
    // Predicated region
    $region37: #{ssd_gmm_forward.15} parent=5 // pred_check
      %p957 = pneg %p956
    $region38: #{ssd_gmm_forward.15} parent=5 // pred_check_branch
      %959 = sbr.rel (%p957) target = $region40
    $region39: #{ssd_gmm_forward.15} parent=5 // pred_region
      %s960 = ssub.s32 %s9, 2
      // Predicated region
      $region41: #{ssd_gmm_forward.15} parent=39 // pred_check
        %p961 = pneg %p106
      $region42: #{ssd_gmm_forward.15} parent=39 // pred_check_branch
        %963 = sbr.rel (%p961) target = $region44
      $region43: #{ssd_gmm_forward.15} parent=39 // pred_region
        %s964 = smul.u32 8, %s15
        %p965 = scmp.lt.s32.totalorder %s964, 15
        %s966 = scalar_select %p965, %s964, 15
        %s967 = smul.addr %s966, 3
        %s968 = smul.addr %s967, 8
        %s969 = scalar_lea.vmem %s3, %s968
      $region44: #{ssd_gmm_forward.15} parent=39 // pred_fallthru
        _
    $region40: #{ssd_gmm_forward.15} parent=5 // pred_fallthru
      _
  $region6: #{ssd_gmm_forward.15} parent=0 // loop_footer
    %s13 = sadd.s32 1, %s9
  $region7: #{ssd_gmm_forward.15} parent=0 // loop_footer_branch
    %8 = sbr.rel target = $region3
  $region8: #{ssd_gmm_forward.15} parent=0 // loop_exit
    _

// kernel: ssd_gmm_forward.12
$region0: #{ssd_gmm_forward.12}
  #allocation0 [shape = 'u32[]', space=smem, size = 0x4, offset = 0x4, fixed_abs, tag = 'smem constant byte address 0x4 - core index']
  #allocation1 [shape = 'u32[144,128]{1,0:T(1,128)}', space=vmem, size = 0x12000, scoped, tag = 'internal scratch']
  %s0 = inlined_call_operand.vmem [shape: bf16[32,288], index: 0, kind: input, shape index: {}]
  %s1 = inlined_call_operand.vmem [shape: bf16[288,64], index: 1, kind: input, shape index: {}]
  %s2 = inlined_call_operand.vmem [shape: f32[1,64], index: 2, kind: input, shape index: {}]
  %s3 = inlined_call_operand.vmem [shape: f32[32,64], index: 3, kind: output, shape index: {}]
  %s4 = sld [smem:[#allocation0]]
  $region22: #{ssd_gmm_forward.12} parent=0
    _
  %s6 = ssub.s32 1, %s4
  %s7 = scalar_select 0, %s6, %s4
  // Predicated region
  $region2: #{ssd_gmm_forward.12} parent=0 // pred_check
    _
  $region3: #{ssd_gmm_forward.12} parent=0 // pred_check_branch
    %9 = sbr.rel (0) target = $region5
  $region4: #{ssd_gmm_forward.12} parent=0 // pred_region
    _
  $region5: #{ssd_gmm_forward.12} parent=0 // pred_fallthru
    _
  // Predicated region
  $region6: #{ssd_gmm_forward.12} parent=0 // pred_check
    _
  $region7: #{ssd_gmm_forward.12} parent=0 // pred_check_branch
    %11 = sbr.rel (0) target = $region9
  $region8: #{ssd_gmm_forward.12} parent=0 // pred_region
    _
  $region9: #{ssd_gmm_forward.12} parent=0 // pred_fallthru
    _
  // Predicated region
  $region10: #{ssd_gmm_forward.12} parent=0 // pred_check
    _
  $region11: #{ssd_gmm_forward.12} parent=0 // pred_check_branch
    %13 = sbr.rel (0) target = $region13
  $region12: #{ssd_gmm_forward.12} parent=0 // pred_region
    _
  $region13: #{ssd_gmm_forward.12} parent=0 // pred_fallthru
    _
  %v15 = vld [vmem:[%s0] sm:$0xff]
  %v16 = vld [vmem:[%s0 + $0x8] sm:$0xf]
  %v17 = vld [vmem:[%s0 + $0xc] sm:$0xff]
  %v18 = vld [vmem:[%s0 + $0x14] sm:$0xf]
  %v19 = vld [vmem:[%s0 + $0x18] sm:$0xff]
  %v20 = vld [vmem:[%s0 + $0x20] sm:$0xf]
  %v21 = vld [vmem:[%s0 + $0x24] sm:$0xff]
  %v22 = vld [vmem:[%s0 + $0x2c] sm:$0xf]
  %v23 = vld [vmem:[%s1] sm:$0xf]
  %v24 = vld [vmem:[%s1 + $0x4] sm:$0xf]
  %v25 = vld [vmem:[%s1 + $0x8] sm:$0xf]
  %v26 = vld [vmem:[%s1 + $0xc] sm:$0xf]
  %v27 = vld [vmem:[%s1 + $0x10] sm:$0xf]
  %v28 = vld [vmem:[%s1 + $0x14] sm:$0xf]
  %v29 = vld [vmem:[%s1 + $0x18] sm:$0xf]
  %v30 = vld [vmem:[%s1 + $0x1c] sm:$0xf]
  %v31 = vld [vmem:[%s1 + $0x20] sm:$0xf]
  %v32 = vld [vmem:[%s1 + $0x24] sm:$0xf]
  %v33 = vld [vmem:[%s1 + $0x28] sm:$0xf]
  %v34 = vld [vmem:[%s1 + $0x2c] sm:$0xf]
  %v35 = vld [vmem:[%s1 + $0x30] sm:$0xf]
  %v36 = vld [vmem:[%s1 + $0x34] sm:$0xf]
  %v37 = vld [vmem:[%s1 + $0x38] sm:$0xf]
  %v38 = vld [vmem:[%s1 + $0x3c] sm:$0xf]
  %v39 = vld [vmem:[%s1 + $0x40] sm:$0xf]
  %v40 = vld [vmem:[%s1 + $0x44] sm:$0xf]
  %v41 = vld [vmem:[%s1 + $0x48] sm:$0xf]
  %v42 = vld [vmem:[%s1 + $0x4c] sm:$0xf]
  %v43 = vld [vmem:[%s1 + $0x50] sm:$0xf]
  %v44 = vld [vmem:[%s1 + $0x54] sm:$0xf]
  %v45 = vld [vmem:[%s1 + $0x58] sm:$0xf]
  %v46 = vld [vmem:[%s1 + $0x5c] sm:$0xf]
  %v47 = vld [vmem:[%s1 + $0x60] sm:$0xf]
  %v48 = vld [vmem:[%s1 + $0x64] sm:$0xf]
  %v49 = vld [vmem:[%s1 + $0x68] sm:$0xf]
  %v50 = vld [vmem:[%s1 + $0x6c] sm:$0xf]
  %v51 = vld [vmem:[%s1 + $0x70] sm:$0xf]
  %v52 = vld [vmem:[%s1 + $0x74] sm:$0xf]
  %v53 = vld [vmem:[%s1 + $0x78] sm:$0xf]
  %v54 = vld [vmem:[%s1 + $0x7c] sm:$0xf]
  %v55 = vld [vmem:[%s1 + $0x80] sm:$0xf]
  %v56 = vld [vmem:[%s1 + $0x84] sm:$0xf]
  %v57 = vld [vmem:[%s1 + $0x88] sm:$0xf]
  %v58 = vld [vmem:[%s1 + $0x8c] sm:$0xf]
  %v59 = vld [vmem:[%s2] sm:$0x1]
  %v61 = vlaneseq
  %v62 = vshrl.u32 %v61, 7
  %v63 = vsub.s32 0, %v62
  %v64 = vrot.slane %v59, %v63
  %v74 = vunpack.c.l.b16 %v15
  %v75 = vunpack.c.h.b16 %v15
  %v76 = vunpack.c.l.b16 %v16
  %v77 = vunpack.c.l.b16 %v17
  %v78 = vunpack.c.h.b16 %v17
  %v79 = vunpack.c.l.b16 %v18
  %v80 = vunpack.c.l.b16 %v19
  %v81 = vunpack.c.h.b16 %v19
  %v82 = vunpack.c.l.b16 %v20
  %v83 = vunpack.c.l.b16 %v21
  %v84 = vunpack.c.h.b16 %v21
  %v85 = vunpack.c.l.b16 %v22
  %v86 = vpack.c.b16 %v77, %v74
  %v87 = vpack.c.b16 %v78, %v75
  %v88 = vpack.c.b16 %v79, %v76
  %v89 = vpack.c.b16 %v83, %v80
  %v90 = vpack.c.b16 %v84, %v81
  %v91 = vpack.c.b16 %v85, %v82
  %v132 = vunpack.c.l.b16 %v23
  %v133 = vunpack.c.l.b16 %v24
  %v134 = vunpack.c.l.b16 %v25
  %v135 = vunpack.c.l.b16 %v26
  %v136 = vunpack.c.l.b16 %v27
  %v137 = vunpack.c.l.b16 %v28
  %v138 = vunpack.c.l.b16 %v29
  %v139 = vunpack.c.l.b16 %v30
  %v140 = vunpack.c.l.b16 %v31
  %v141 = vunpack.c.l.b16 %v32
  %v142 = vunpack.c.l.b16 %v33
  %v143 = vunpack.c.l.b16 %v34
  %v144 = vunpack.c.l.b16 %v35
  %v145 = vunpack.c.l.b16 %v36
  %v146 = vunpack.c.l.b16 %v37
  %v147 = vunpack.c.l.b16 %v38
  %v148 = vunpack.c.l.b16 %v39
  %v149 = vunpack.c.l.b16 %v40
  %v150 = vunpack.c.l.b16 %v41
  %v151 = vunpack.c.l.b16 %v42
  %v152 = vunpack.c.l.b16 %v43
  %v153 = vunpack.c.l.b16 %v44
  %v154 = vunpack.c.l.b16 %v45
  %v155 = vunpack.c.l.b16 %v46
  %v156 = vunpack.c.l.b16 %v47
  %v157 = vunpack.c.l.b16 %v48
  %v158 = vunpack.c.l.b16 %v49
  %v159 = vunpack.c.l.b16 %v50
  %v160 = vunpack.c.l.b16 %v51
  %v161 = vunpack.c.l.b16 %v52
  %v162 = vunpack.c.l.b16 %v53
  %v163 = vunpack.c.l.b16 %v54
  %v164 = vunpack.c.l.b16 %v55
  %v165 = vunpack.c.l.b16 %v56
  %v166 = vunpack.c.l.b16 %v57
  %v167 = vunpack.c.l.b16 %v58
  %v168 = vpack.c.b16 %v133, %v132
  %v169 = vpack.c.b16 %v135, %v134
  %v170 = vpack.c.b16 %v137, %v136
  %v171 = vpack.c.b16 %v139, %v138
  %v172 = vpack.c.b16 %v141, %v140
  %v173 = vpack.c.b16 %v143, %v142
  %v174 = vpack.c.b16 %v145, %v144
  %v175 = vpack.c.b16 %v147, %v146
  %v176 = vpack.c.b16 %v149, %v148
  %v177 = vpack.c.b16 %v151, %v150
  %v178 = vpack.c.b16 %v153, %v152
  %v179 = vpack.c.b16 %v155, %v154
  %v180 = vpack.c.b16 %v157, %v156
  %v181 = vpack.c.b16 %v159, %v158
  %v182 = vpack.c.b16 %v161, %v160
  %v183 = vpack.c.b16 %v163, %v162
  %v184 = vpack.c.b16 %v165, %v164
  %v185 = vpack.c.b16 %v167, %v166
  %vm204 = vcmask 261120
  %v206 = vsel %vm204, %v88, 0
  %v209 = vsel %vm204, %v91, 0
  %211 = vmatprep.subr.bf16.mxu0 0
  %212 = vmatpush1.bf16.msra.mxu0 %v168
  %213 = vmatprep.subr.bf16.mxu0 0
  %214 = vmatpush1.bf16.msra.mxu0 %v169
  %215 = vmatprep.subr.bf16.mxu0 0
  %216 = vmatpush1.bf16.msra.mxu0 %v170
  %217 = vmatprep.subr.bf16.mxu0 0
  %218 = vmatpush1.bf16.msra.mxu0 %v171
  %219 = vmatprep.subr.bf16.mxu0 0
  %220 = vmatpush1.bf16.msra.mxu0 %v172
  %221 = vmatprep.subr.bf16.mxu0 0
  %222 = vmatpush1.bf16.msra.mxu0 %v173
  %223 = vmatprep.subr.bf16.mxu0 0
  %224 = vmatpush1.bf16.msra.mxu0 %v174
  %225 = vmatprep.subr.bf16.mxu0 0
  %226 = vmatpush1.bf16.msra.mxu0 %v175
  %227 = vmatprep.subr.bf16.mxu0 0
  %228 = vmatpush1.bf16.msra.mxu0 %v176
  %229 = vmatprep.subr.bf16.mxu0 0
  %230 = vmatpush1.bf16.msra.mxu0 %v177
  %231 = vmatprep.subr.bf16.mxu0 0
  %232 = vmatpush1.bf16.msra.mxu0 %v178
  %233 = vmatprep.subr.bf16.mxu0 0
  %234 = vmatpush1.bf16.msra.mxu0 %v179
  %235 = vmatprep.subr.bf16.mxu0 0
  %236 = vmatpush1.bf16.msra.mxu0 %v180
  %237 = vmatprep.subr.bf16.mxu0 0
  %238 = vmatpush1.bf16.msra.mxu0 %v181
  %239 = vmatprep.subr.bf16.mxu0 0
  %240 = vmatpush1.bf16.msra.mxu0 %v182
  %241 = vmatprep.subr.bf16.mxu0 0
  %242 = vmatpush1.bf16.msra.mxu0 %v183
  %243 = vmatprep.mubr.bf16.mxu0 %v87
  %244 = vmatmul.mubr.bf16.gmra.mrb[0].mxu0 %v86
  %v245 = vpop.f32.mrb[0].mxu0
  %v246 = vadd.f32 %v64, %v245
  %v247 = vpop.f32.mrb[0].mxu0
  %v248 = vpop.f32.mrb[0].mxu0
  %v249 = vadd.f32 %v64, %v248
  %v250 = vpop.f32.mrb[0].mxu0
  %251 = vmatprep.mubr.bf16.mxu0 %v90
  %252 = vmatmul.mubr.bf16.gmra.mrb[0].mxu0 %v89
  %v253 = vpop.f32.mrb[0].mxu0
  %v254 = vadd.f32 %v64, %v253
  %v255 = vpop.f32.mrb[0].mxu0
  %v256 = vpop.f32.mrb[0].mxu0
  %v257 = vadd.f32 %v64, %v256
  %v258 = vpop.f32.mrb[0].mxu0
  %259 = vdwg.mxu0
  %260 = vmatprep.subr.bf16.mxu0 0
  %261 = vmatpush1.bf16.msra.mxu0 %v184
  %262 = vmatprep.subr.bf16.mxu0 0
  %263 = vmatpush1.bf16.msra.mxu0 %v185
  %264 = vmatprep.subr.bf16.mxu0 0
  %265 = vmatpush1.bf16.msra.mxu0 0
  %266 = vmatprep.subr.bf16.mxu0 0
  %267 = vmatpush1.bf16.msra.mxu0 0
  %268 = vmatprep.subr.bf16.mxu0 0
  %269 = vmatpush1.bf16.msra.mxu0 0
  %270 = vmatprep.subr.bf16.mxu0 0
  %271 = vmatpush1.bf16.msra.mxu0 0
  %272 = vmatprep.subr.bf16.mxu0 0
  %273 = vmatpush1.bf16.msra.mxu0 0
  %274 = vmatprep.subr.bf16.mxu0 0
  %275 = vmatpush1.bf16.msra.mxu0 0
  %276 = vmatprep.subr.bf16.mxu0 0
  %277 = vmatpush1.bf16.msra.mxu0 0
  %278 = vmatprep.subr.bf16.mxu0 0
  %279 = vmatpush1.bf16.msra.mxu0 0
  %280 = vmatprep.subr.bf16.mxu0 0
  %281 = vmatpush1.bf16.msra.mxu0 0
  %282 = vmatprep.subr.bf16.mxu0 0
  %283 = vmatpush1.bf16.msra.mxu0 0
  %284 = vmatprep.subr.bf16.mxu0 0
  %285 = vmatpush1.bf16.msra.mxu0 0
  %286 = vmatprep.subr.bf16.mxu0 0
  %287 = vmatpush1.bf16.msra.mxu0 0
  %288 = vmatprep.subr.bf16.mxu0 0
  %289 = vmatpush1.bf16.msra.mxu0 0
  %290 = vmatprep.subr.bf16.mxu0 0
  %291 = vmatpush1.bf16.msra.mxu0 0
  %292 = vmatprep.mubr.bf16.mxu0 0
  %293 = vmatmul.mubr.bf16.gmra.mrb[0].mxu0 %v206
  %v294 = vpop.f32.mrb[0].mxu0
  %v295 = vadd.f32 %v246, %v294
  %v296 = vpop.f32.mrb[0].mxu0
  %v297 = vpop.f32.mrb[0].mxu0
  %v298 = vadd.f32 %v249, %v297
  %v299 = vpop.f32.mrb[0].mxu0
  %300 = vmatprep.mubr.bf16.mxu0 0
  %301 = vmatmul.mubr.bf16.gmra.mrb[0].mxu0 %v209
  %v302 = vpop.f32.mrb[0].mxu0
  %v303 = vadd.f32 %v254, %v302
  %v304 = vpop.f32.mrb[0].mxu0
  %v305 = vpop.f32.mrb[0].mxu0
  %v306 = vadd.f32 %v257, %v305
  %v307 = vpop.f32.mrb[0].mxu0
  %308 = vdwg.mxu0
  %v309 = vmax.f32 %v295, 0.0
  %v310 = vmax.f32 %v298, 0.0
  %v311 = vmax.f32 %v303, 0.0
  %v312 = vmax.f32 %v306, 0.0
  %vm313 = vcmask 523264
  %314 = vst.msk [vmem:[%s3] sm:$0xff] %vm313, %v309
  %315 = vst.msk [vmem:[%s3 + $0x8] sm:$0xff] %vm313, %v310
  %316 = vst.msk [vmem:[%s3 + $0x10] sm:$0xff] %vm313, %v311
  %317 = vst.msk [vmem:[%s3 + $0x18] sm:$0xff] %vm313, %v312
  // Predicated region
  $region14: #{ssd_gmm_forward.12} parent=0 // pred_check
    _
  $region15: #{ssd_gmm_forward.12} parent=0 // pred_check_branch
    %319 = sbr.rel (0) target = $region17
  $region16: #{ssd_gmm_forward.12} parent=0 // pred_region
    _
  $region17: #{ssd_gmm_forward.12} parent=0 // pred_fallthru
    _
  // Predicated region
  $region18: #{ssd_gmm_forward.12} parent=0 // pred_check
    _
  $region19: #{ssd_gmm_forward.12} parent=0 // pred_check_branch
    %321 = sbr.rel (0) target = $region21
  $region20: #{ssd_gmm_forward.12} parent=0 // pred_region
    _
  $region21: #{ssd_gmm_forward.12} parent=0 // pred_fallthru
    _

// kernel: ssd_gmm_forward.13
$region0: #{ssd_gmm_forward.13}
  #allocation0 [shape = 'u32[]', space=smem, size = 0x4, offset = 0x4, fixed_abs, tag = 'smem constant byte address 0x4 - core index']
  #allocation1 [shape = 'u32[144,128]{1,0:T(1,128)}', space=vmem, size = 0x12000, scoped, tag = 'internal scratch']
  %s0 = inlined_call_operand.vmem [shape: bf16[32,64], index: 0, kind: input, shape index: {}]
  %s1 = inlined_call_operand.vmem [shape: bf16[64,32], index: 1, kind: input, shape index: {}]
  %s2 = inlined_call_operand.vmem [shape: f32[1,32], index: 2, kind: input, shape index: {}]
  %s3 = inlined_call_operand.vmem [shape: f32[32,32], index: 3, kind: output, shape index: {}]
  %s4 = sld [smem:[#allocation0]]
  $region22: #{ssd_gmm_forward.13} parent=0
    _
  %s6 = ssub.s32 1, %s4
  %s7 = scalar_select 0, %s6, %s4
  // Predicated region
  $region2: #{ssd_gmm_forward.13} parent=0 // pred_check
    _
  $region3: #{ssd_gmm_forward.13} parent=0 // pred_check_branch
    %9 = sbr.rel (0) target = $region5
  $region4: #{ssd_gmm_forward.13} parent=0 // pred_region
    _
  $region5: #{ssd_gmm_forward.13} parent=0 // pred_fallthru
    _
  // Predicated region
  $region6: #{ssd_gmm_forward.13} parent=0 // pred_check
    _
  $region7: #{ssd_gmm_forward.13} parent=0 // pred_check_branch
    %11 = sbr.rel (0) target = $region9
  $region8: #{ssd_gmm_forward.13} parent=0 // pred_region
    _
  $region9: #{ssd_gmm_forward.13} parent=0 // pred_fallthru
    _
  // Predicated region
  $region10: #{ssd_gmm_forward.13} parent=0 // pred_check
    _
  $region11: #{ssd_gmm_forward.13} parent=0 // pred_check_branch
    %13 = sbr.rel (0) target = $region13
  $region12: #{ssd_gmm_forward.13} parent=0 // pred_region
    _
  $region13: #{ssd_gmm_forward.13} parent=0 // pred_fallthru
    _
  %v15 = vld [vmem:[%s0] sm:$0xf]
  %v16 = vld [vmem:[%s0 + $0x4] sm:$0xf]
  %v17 = vld [vmem:[%s0 + $0x8] sm:$0xf]
  %v18 = vld [vmem:[%s0 + $0xc] sm:$0xf]
  %v19 = vld [vmem:[%s1] sm:$0xf]
  %v20 = vld [vmem:[%s1 + $0x4] sm:$0xf]
  %v21 = vld [vmem:[%s1 + $0x8] sm:$0xf]
  %v22 = vld [vmem:[%s1 + $0xc] sm:$0xf]
  %v23 = vld [vmem:[%s1 + $0x10] sm:$0xf]
  %v24 = vld [vmem:[%s1 + $0x14] sm:$0xf]
  %v25 = vld [vmem:[%s1 + $0x18] sm:$0xf]
  %v26 = vld [vmem:[%s1 + $0x1c] sm:$0xf]
  %v27 = vld [vmem:[%s2] sm:$0x1]
  %v29 = vlaneseq
  %v30 = vshrl.u32 %v29, 7
  %v31 = vsub.s32 0, %v30
  %v32 = vrot.slane %v27, %v31
  %v38 = vunpack.c.l.b16 %v15
  %v39 = vunpack.c.l.b16 %v16
  %v40 = vunpack.c.l.b16 %v17
  %v41 = vunpack.c.l.b16 %v18
  %v42 = vpack.c.b16 %v39, %v38
  %v43 = vpack.c.b16 %v41, %v40
  %v52 = vunpack.c.l.b16 %v19
  %v53 = vunpack.c.l.b16 %v20
  %v54 = vunpack.c.l.b16 %v21
  %v55 = vunpack.c.l.b16 %v22
  %v56 = vunpack.c.l.b16 %v23
  %v57 = vunpack.c.l.b16 %v24
  %v58 = vunpack.c.l.b16 %v25
  %v59 = vunpack.c.l.b16 %v26
  %v60 = vpack.c.b16 %v53, %v52
  %v61 = vpack.c.b16 %v55, %v54
  %v62 = vpack.c.b16 %v57, %v56
  %v63 = vpack.c.b16 %v59, %v58
  %vm68 = vcmask 523264
  %v70 = vsel %vm68, %v42, 0
  %v73 = vsel %vm68, %v43, 0
  %75 = vmatprep.subr.bf16.mxu0 0
  %76 = vmatpush1.bf16.msra.mxu0 %v60
  %77 = vmatprep.subr.bf16.mxu0 0
  %78 = vmatpush1.bf16.msra.mxu0 %v61
  %79 = vmatprep.subr.bf16.mxu0 0
  %80 = vmatpush1.bf16.msra.mxu0 %v62
  %81 = vmatprep.subr.bf16.mxu0 0
  %82 = vmatpush1.bf16.msra.mxu0 %v63
  %83 = vmatprep.subr.bf16.mxu0 0
  %84 = vmatpush1.bf16.msra.mxu0 0
  %85 = vmatprep.subr.bf16.mxu0 0
  %86 = vmatpush1.bf16.msra.mxu0 0
  %87 = vmatprep.subr.bf16.mxu0 0
  %88 = vmatpush1.bf16.msra.mxu0 0
  %89 = vmatprep.subr.bf16.mxu0 0
  %90 = vmatpush1.bf16.msra.mxu0 0
  %91 = vmatprep.subr.bf16.mxu0 0
  %92 = vmatpush1.bf16.msra.mxu0 0
  %93 = vmatprep.subr.bf16.mxu0 0
  %94 = vmatpush1.bf16.msra.mxu0 0
  %95 = vmatprep.subr.bf16.mxu0 0
  %96 = vmatpush1.bf16.msra.mxu0 0
  %97 = vmatprep.subr.bf16.mxu0 0
  %98 = vmatpush1.bf16.msra.mxu0 0
  %99 = vmatprep.subr.bf16.mxu0 0
  %100 = vmatpush1.bf16.msra.mxu0 0
  %101 = vmatprep.subr.bf16.mxu0 0
  %102 = vmatpush1.bf16.msra.mxu0 0
  %103 = vmatprep.subr.bf16.mxu0 0
  %104 = vmatpush1.bf16.msra.mxu0 0
  %105 = vmatprep.subr.bf16.mxu0 0
  %106 = vmatpush1.bf16.msra.mxu0 0
  %107 = vmatprep.mubr.bf16.mxu0 0
  %108 = vmatmul.mubr.bf16.gmra.mrb[0].mxu0 %v70
  %v109 = vpop.f32.mrb[0].mxu0
  %v110 = vadd.f32 %v32, %v109
  %v111 = vpop.f32.mrb[0].mxu0
  %v112 = vpop.f32.mrb[0].mxu0
  %v113 = vadd.f32 %v32, %v112
  %v114 = vpop.f32.mrb[0].mxu0
  %115 = vmatprep.mubr.bf16.mxu0 0
  %116 = vmatmul.mubr.bf16.gmra.mrb[0].mxu0 %v73
  %v117 = vpop.f32.mrb[0].mxu0
  %v118 = vadd.f32 %v32, %v117
  %v119 = vpop.f32.mrb[0].mxu0
  %v120 = vpop.f32.mrb[0].mxu0
  %v121 = vadd.f32 %v32, %v120
  %v122 = vpop.f32.mrb[0].mxu0
  %123 = vdwg.mxu0
  %v124 = vmax.f32 %v110, 0.0
  %v125 = vmax.f32 %v113, 0.0
  %v126 = vmax.f32 %v118, 0.0
  %v127 = vmax.f32 %v121, 0.0
  %vm128 = vcmask 261120
  %129 = vst.msk [vmem:[%s3] sm:$0xff] %vm128, %v124
  %130 = vst.msk [vmem:[%s3 + $0x8] sm:$0xff] %vm128, %v125
  %131 = vst.msk [vmem:[%s3 + $0x10] sm:$0xff] %vm128, %v126
  %132 = vst.msk [vmem:[%s3 + $0x18] sm:$0xff] %vm128, %v127
  // Predicated region
  $region14: #{ssd_gmm_forward.13} parent=0 // pred_check
    _
  $region15: #{ssd_gmm_forward.13} parent=0 // pred_check_branch
    %134 = sbr.rel (0) target = $region17
  $region16: #{ssd_gmm_forward.13} parent=0 // pred_region
    _
  $region17: #{ssd_gmm_forward.13} parent=0 // pred_fallthru
    _
  // Predicated region
  $region18: #{ssd_gmm_forward.13} parent=0 // pred_check
    _
  $region19: #{ssd_gmm_forward.13} parent=0 // pred_check_branch
    %136 = sbr.rel (0) target = $region21
  $region20: #{ssd_gmm_forward.13} parent=0 // pred_region
    _
  $region21: #{ssd_gmm_forward.13} parent=0 // pred_fallthru
    _

// kernel: ssd_gmm_forward.16
$region0: #{ssd_gmm_forward.16}
  #allocation0 [shape = 'u32[]', space=smem, size = 0x4, offset = 0x4, fixed_abs, tag = 'smem constant byte address 0x4 - core index']
  #allocation1 [shape = 'u32[144,128]{1,0:T(1,128)}', space=vmem, size = 0x12000, scoped, tag = 'internal scratch']
  %s0 = inlined_call_operand.vmem [shape: bf16[32,576], index: 0, kind: input, shape index: {}]
  %s1 = inlined_call_operand.vmem [shape: bf16[576,640], index: 1, kind: input, shape index: {}]
  %s2 = inlined_call_operand.vmem [shape: f32[1,640], index: 2, kind: input, shape index: {}]
  %s3 = inlined_call_operand.vmem [shape: f32[32,640], index: 3, kind: output, shape index: {}]
  %s4 = sld [smem:[#allocation0]]
  $region22: #{ssd_gmm_forward.16} parent=0
    _
  %s6 = ssub.s32 1, %s4
  %s7 = scalar_select 0, %s6, %s4
  // Predicated region
  $region2: #{ssd_gmm_forward.16} parent=0 // pred_check
    _
  $region3: #{ssd_gmm_forward.16} parent=0 // pred_check_branch
    %9 = sbr.rel (0) target = $region5
  $region4: #{ssd_gmm_forward.16} parent=0 // pred_region
    _
  $region5: #{ssd_gmm_forward.16} parent=0 // pred_fallthru
    _
  // Predicated region
  $region6: #{ssd_gmm_forward.16} parent=0 // pred_check
    _
  $region7: #{ssd_gmm_forward.16} parent=0 // pred_check_branch
    %11 = sbr.rel (0) target = $region9
  $region8: #{ssd_gmm_forward.16} parent=0 // pred_region
    _
  $region9: #{ssd_gmm_forward.16} parent=0 // pred_fallthru
    _
  // Predicated region
  $region10: #{ssd_gmm_forward.16} parent=0 // pred_check
    _
  $region11: #{ssd_gmm_forward.16} parent=0 // pred_check_branch
    %13 = sbr.rel (0) target = $region13
  $region12: #{ssd_gmm_forward.16} parent=0 // pred_region
    _
  $region13: #{ssd_gmm_forward.16} parent=0 // pred_fallthru
    _
  %v15 = vld [vmem:[%s0] sm:$0xff]
  %v16 = vld [vmem:[%s0 + $0x8] sm:$0xff]
  %v17 = vld [vmem:[%s0 + $0x10] sm:$0xf]
  %v18 = vld [vmem:[%s0 + $0x14] sm:$0xff]
  %v19 = vld [vmem:[%s0 + $0x1c] sm:$0xff]
  %v20 = vld [vmem:[%s0 + $0x24] sm:$0xf]
  %v21 = vld [vmem:[%s0 + $0x28] sm:$0xff]
  %v22 = vld [vmem:[%s0 + $0x30] sm:$0xff]
  %v23 = vld [vmem:[%s0 + $0x38] sm:$0xf]
  %v24 = vld [vmem:[%s0 + $0x3c] sm:$0xff]
  %v25 = vld [vmem:[%s0 + $0x44] sm:$0xff]
  %v26 = vld [vmem:[%s0 + $0x4c] sm:$0xf]
  %v27 = vld [vmem:[%s1] sm:$0xff]
  %v28 = vld [vmem:[%s1 + $0x8] sm:$0xff]
  %v29 = vld [vmem:[%s1 + $0x10] sm:$0xf]
  %v30 = vld [vmem:[%s1 + $0x14] sm:$0xff]
  %v31 = vld [vmem:[%s1 + $0x1c] sm:$0xff]
  %v32 = vld [vmem:[%s1 + $0x24] sm:$0xf]
  %v33 = vld [vmem:[%s1 + $0x28] sm:$0xff]
  %v34 = vld [vmem:[%s1 + $0x30] sm:$0xff]
  %v35 = vld [vmem:[%s1 + $0x38] sm:$0xf]
  %v36 = vld [vmem:[%s1 + $0x3c] sm:$0xff]
  %v37 = vld [vmem:[%s1 + $0x44] sm:$0xff]
  %v38 = vld [vmem:[%s1 + $0x4c] sm:$0xf]
  %v39 = vld [vmem:[%s1 + $0x50] sm:$0xff]
  %v40 = vld [vmem:[%s1 + $0x58] sm:$0xff]
  %v41 = vld [vmem:[%s1 + $0x60] sm:$0xf]
  %v42 = vld [vmem:[%s1 + $0x64] sm:$0xff]
  %v43 = vld [vmem:[%s1 + $0x6c] sm:$0xff]
  %v44 = vld [vmem:[%s1 + $0x74] sm:$0xf]
  %v45 = vld [vmem:[%s1 + $0x78] sm:$0xff]
  %v46 = vld [vmem:[%s1 + $0x80] sm:$0xff]
  %v47 = vld [vmem:[%s1 + $0x88] sm:$0xf]
  %v48 = vld [vmem:[%s1 + $0x8c] sm:$0xff]
  %v49 = vld [vmem:[%s1 + $0x94] sm:$0xff]
  %v50 = vld [vmem:[%s1 + $0x9c] sm:$0xf]
  %v51 = vld [vmem:[%s1 + $0xa0] sm:$0xff]
  %v52 = vld [vmem:[%s1 + $0xa8] sm:$0xff]
  %v53 = vld [vmem:[%s1 + $0xb0] sm:$0xf]
  %v54 = vld [vmem:[%s1 + $0xb4] sm:$0xff]
  %v55 = vld [vmem:[%s1 + $0xbc] sm:$0xff]
  %v56 = vld [vmem:[%s1 + $0xc4] sm:$0xf]
  %v57 = vld [vmem:[%s1 + $0xc8] sm:$0xff]
  %v58 = vld [vmem:[%s1 + $0xd0] sm:$0xff]
  %v59 = vld [vmem:[%s1 + $0xd8] sm:$0xf]
  %v60 = vld [vmem:[%s1 + $0xdc] sm:$0xff]
  %v61 = vld [vmem:[%s1 + $0xe4] sm:$0xff]
  %v62 = vld [vmem:[%s1 + $0xec] sm:$0xf]
  %v63 = vld [vmem:[%s1 + $0xf0] sm:$0xff]
  %v64 = vld [vmem:[%s1 + $0xf8] sm:$0xff]
  %v65 = vld [vmem:[%s1 + $0x100] sm:$0xf]
  %v66 = vld [vmem:[%s1 + $0x104] sm:$0xff]
  %v67 = vld [vmem:[%s1 + $0x10c] sm:$0xff]
  %v68 = vld [vmem:[%s1 + $0x114] sm:$0xf]
  %v69 = vld [vmem:[%s1 + $0x118] sm:$0xff]
  %v70 = vld [vmem:[%s1 + $0x120] sm:$0xff]
  %v71 = vld [vmem:[%s1 + $0x128] sm:$0xf]
  %v72 = vld [vmem:[%s1 + $0x12c] sm:$0xff]
  %v73 = vld [vmem:[%s1 + $0x134] sm:$0xff]
  %v74 = vld [vmem:[%s1 + $0x13c] sm:$0xf]
  %v75 = vld [vmem:[%s1 + $0x140] sm:$0xff]
  %v76 = vld [vmem:[%s1 + $0x148] sm:$0xff]
  %v77 = vld [vmem:[%s1 + $0x150] sm:$0xf]
  %v78 = vld [vmem:[%s1 + $0x154] sm:$0xff]
  %v79 = vld [vmem:[%s1 + $0x15c] sm:$0xff]
  %v80 = vld [vmem:[%s1 + $0x164] sm:$0xf]
  %v81 = vld [vmem:[%s1 + $0x168] sm:$0xff]
  %v82 = vld [vmem:[%s1 + $0x170] sm:$0xff]
  %v83 = vld [vmem:[%s1 + $0x178] sm:$0xf]
  %v84 = vld [vmem:[%s1 + $0x17c] sm:$0xff]
  %v85 = vld [vmem:[%s1 + $0x184] sm:$0xff]
  %v86 = vld [vmem:[%s1 + $0x18c] sm:$0xf]
  %v87 = vld [vmem:[%s1 + $0x190] sm:$0xff]
  %v88 = vld [vmem:[%s1 + $0x198] sm:$0xff]
  %v89 = vld [vmem:[%s1 + $0x1a0] sm:$0xf]
  %v90 = vld [vmem:[%s1 + $0x1a4] sm:$0xff]
  %v91 = vld [vmem:[%s1 + $0x1ac] sm:$0xff]
  %v92 = vld [vmem:[%s1 + $0x1b4] sm:$0xf]
  %v93 = vld [vmem:[%s1 + $0x1b8] sm:$0xff]
  %v94 = vld [vmem:[%s1 + $0x1c0] sm:$0xff]
  %v95 = vld [vmem:[%s1 + $0x1c8] sm:$0xf]
  %v96 = vld [vmem:[%s1 + $0x1cc] sm:$0xff]
  %v97 = vld [vmem:[%s1 + $0x1d4] sm:$0xff]
  %v98 = vld [vmem:[%s1 + $0x1dc] sm:$0xf]
  %v99 = vld [vmem:[%s1 + $0x1e0] sm:$0xff]
  %v100 = vld [vmem:[%s1 + $0x1e8] sm:$0xff]
  %v101 = vld [vmem:[%s1 + $0x1f0] sm:$0xf]
  %v102 = vld [vmem:[%s1 + $0x1f4] sm:$0xff]
  %v103 = vld [vmem:[%s1 + $0x1fc] sm:$0xff]
  %v104 = vld [vmem:[%s1 + $0x204] sm:$0xf]
  %v105 = vld [vmem:[%s1 + $0x208] sm:$0xff]
  %v106 = vld [vmem:[%s1 + $0x210] sm:$0xff]
  %v107 = vld [vmem:[%s1 + $0x218] sm:$0xf]
  %v108 = vld [vmem:[%s1 + $0x21c] sm:$0xff]
  %v109 = vld [vmem:[%s1 + $0x224] sm:$0xff]
  %v110 = vld [vmem:[%s1 + $0x22c] sm:$0xf]
  %v111 = vld [vmem:[%s1 + $0x230] sm:$0xff]
  %v112 = vld [vmem:[%s1 + $0x238] sm:$0xff]
  %v113 = vld [vmem:[%s1 + $0x240] sm:$0xf]
  %v114 = vld [vmem:[%s1 + $0x244] sm:$0xff]
  %v115 = vld [vmem:[%s1 + $0x24c] sm:$0xff]
  %v116 = vld [vmem:[%s1 + $0x254] sm:$0xf]
  %v117 = vld [vmem:[%s1 + $0x258] sm:$0xff]
  %v118 = vld [vmem:[%s1 + $0x260] sm:$0xff]
  %v119 = vld [vmem:[%s1 + $0x268] sm:$0xf]
  %v120 = vld [vmem:[%s1 + $0x26c] sm:$0xff]
  %v121 = vld [vmem:[%s1 + $0x274] sm:$0xff]
  %v122 = vld [vmem:[%s1 + $0x27c] sm:$0xf]
  %v123 = vld [vmem:[%s1 + $0x280] sm:$0xff]
  %v124 = vld [vmem:[%s1 + $0x288] sm:$0xff]
  %v125 = vld [vmem:[%s1 + $0x290] sm:$0xf]
  %v126 = vld [vmem:[%s1 + $0x294] sm:$0xff]
  %v127 = vld [vmem:[%s1 + $0x29c] sm:$0xff]
  %v128 = vld [vmem:[%s1 + $0x2a4] sm:$0xf]
  %v129 = vld [vmem:[%s1 + $0x2a8] sm:$0xff]
  %v130 = vld [vmem:[%s1 + $0x2b0] sm:$0xff]
  %v131 = vld [vmem:[%s1 + $0x2b8] sm:$0xf]
  %v132 = vld [vmem:[%s1 + $0x2bc] sm:$0xff]
  %v133 = vld [vmem:[%s1 + $0x2c4] sm:$0xff]
  %v134 = vld [vmem:[%s1 + $0x2cc] sm:$0xf]
  %v135 = vld [vmem:[%s1 + $0x2d0] sm:$0xff]
  %v136 = vld [vmem:[%s1 + $0x2d8] sm:$0xff]
  %v137 = vld [vmem:[%s1 + $0x2e0] sm:$0xf]
  %v138 = vld [vmem:[%s1 + $0x2e4] sm:$0xff]
  %v139 = vld [vmem:[%s1 + $0x2ec] sm:$0xff]
  %v140 = vld [vmem:[%s1 + $0x2f4] sm:$0xf]
  %v141 = vld [vmem:[%s1 + $0x2f8] sm:$0xff]
  %v142 = vld [vmem:[%s1 + $0x300] sm:$0xff]
  %v143 = vld [vmem:[%s1 + $0x308] sm:$0xf]
  %v144 = vld [vmem:[%s1 + $0x30c] sm:$0xff]
  %v145 = vld [vmem:[%s1 + $0x314] sm:$0xff]
  %v146 = vld [vmem:[%s1 + $0x31c] sm:$0xf]
  %v147 = vld [vmem:[%s1 + $0x320] sm:$0xff]
  %v148 = vld [vmem:[%s1 + $0x328] sm:$0xff]
  %v149 = vld [vmem:[%s1 + $0x330] sm:$0xf]
  %v150 = vld [vmem:[%s1 + $0x334] sm:$0xff]
  %v151 = vld [vmem:[%s1 + $0x33c] sm:$0xff]
  %v152 = vld [vmem:[%s1 + $0x344] sm:$0xf]
  %v153 = vld [vmem:[%s1 + $0x348] sm:$0xff]
  %v154 = vld [vmem:[%s1 + $0x350] sm:$0xff]
  %v155 = vld [vmem:[%s1 + $0x358] sm:$0xf]
  %v156 = vld [vmem:[%s1 + $0x35c] sm:$0xff]
  %v157 = vld [vmem:[%s1 + $0x364] sm:$0xff]
  %v158 = vld [vmem:[%s1 + $0x36c] sm:$0xf]
  %v159 = vld [vmem:[%s1 + $0x370] sm:$0xff]
  %v160 = vld [vmem:[%s1 + $0x378] sm:$0xff]
  %v161 = vld [vmem:[%s1 + $0x380] sm:$0xf]
  %v162 = vld [vmem:[%s1 + $0x384] sm:$0xff]
  %v163 = vld [vmem:[%s1 + $0x38c] sm:$0xff]
  %v164 = vld [vmem:[%s1 + $0x394] sm:$0xf]
  %v165 = vld [vmem:[%s1 + $0x398] sm:$0xff]
  %v166 = vld [vmem:[%s1 + $0x3a0] sm:$0xff]
  %v167 = vld [vmem:[%s1 + $0x3a8] sm:$0xf]
  %v168 = vld [vmem:[%s1 + $0x3ac] sm:$0xff]
  %v169 = vld [vmem:[%s1 + $0x3b4] sm:$0xff]
  %v170 = vld [vmem:[%s1 + $0x3bc] sm:$0xf]
  %v171 = vld [vmem:[%s1 + $0x3c0] sm:$0xff]
  %v172 = vld [vmem:[%s1 + $0x3c8] sm:$0xff]
  %v173 = vld [vmem:[%s1 + $0x3d0] sm:$0xf]
  %v174 = vld [vmem:[%s1 + $0x3d4] sm:$0xff]
  %v175 = vld [vmem:[%s1 + $0x3dc] sm:$0xff]
  %v176 = vld [vmem:[%s1 + $0x3e4] sm:$0xf]
  %v177 = vld [vmem:[%s1 + $0x3e8] sm:$0xff]
  %v178 = vld [vmem:[%s1 + $0x3f0] sm:$0xff]
  %v179 = vld [vmem:[%s1 + $0x3f8] sm:$0xf]
  %v180 = vld [vmem:[%s1 + $0x3fc] sm:$0xff]
  %v181 = vld [vmem:[%s1 + $0x404] sm:$0xff]
  %v182 = vld [vmem:[%s1 + $0x40c] sm:$0xf]
  %v183 = vld [vmem:[%s1 + $0x410] sm:$0xff]
  %v184 = vld [vmem:[%s1 + $0x418] sm:$0xff]
  %v185 = vld [vmem:[%s1 + $0x420] sm:$0xf]
  %v186 = vld [vmem:[%s1 + $0x424] sm:$0xff]
  %v187 = vld [vmem:[%s1 + $0x42c] sm:$0xff]
  %v188 = vld [vmem:[%s1 + $0x434] sm:$0xf]
  %v189 = vld [vmem:[%s1 + $0x438] sm:$0xff]
  %v190 = vld [vmem:[%s1 + $0x440] sm:$0xff]
  %v191 = vld [vmem:[%s1 + $0x448] sm:$0xf]
  %v192 = vld [vmem:[%s1 + $0x44c] sm:$0xff]
  %v193 = vld [vmem:[%s1 + $0x454] sm:$0xff]
  %v194 = vld [vmem:[%s1 + $0x45c] sm:$0xf]
  %v195 = vld [vmem:[%s1 + $0x460] sm:$0xff]
  %v196 = vld [vmem:[%s1 + $0x468] sm:$0xff]
  %v197 = vld [vmem:[%s1 + $0x470] sm:$0xf]
  %v198 = vld [vmem:[%s1 + $0x474] sm:$0xff]
  %v199 = vld [vmem:[%s1 + $0x47c] sm:$0xff]
  %v200 = vld [vmem:[%s1 + $0x484] sm:$0xf]
  %v201 = vld [vmem:[%s1 + $0x488] sm:$0xff]
  %v202 = vld [vmem:[%s1 + $0x490] sm:$0xff]
  %v203 = vld [vmem:[%s1 + $0x498] sm:$0xf]
  %v204 = vld [vmem:[%s1 + $0x49c] sm:$0xff]
  %v205 = vld [vmem:[%s1 + $0x4a4] sm:$0xff]
  %v206 = vld [vmem:[%s1 + $0x4ac] sm:$0xf]
  %v207 = vld [vmem:[%s1 + $0x4b0] sm:$0xff]
  %v208 = vld [vmem:[%s1 + $0x4b8] sm:$0xff]
  %v209 = vld [vmem:[%s1 + $0x4c0] sm:$0xf]
  %v210 = vld [vmem:[%s1 + $0x4c4] sm:$0xff]
  %v211 = vld [vmem:[%s1 + $0x4cc] sm:$0xff]
  %v212 = vld [vmem:[%s1 + $0x4d4] sm:$0xf]
  %v213 = vld [vmem:[%s1 + $0x4d8] sm:$0xff]
  %v214 = vld [vmem:[%s1 + $0x4e0] sm:$0xff]
  %v215 = vld [vmem:[%s1 + $0x4e8] sm:$0xf]
  %v216 = vld [vmem:[%s1 + $0x4ec] sm:$0xff]
  %v217 = vld [vmem:[%s1 + $0x4f4] sm:$0xff]
  %v218 = vld [vmem:[%s1 + $0x4fc] sm:$0xf]
  %v219 = vld [vmem:[%s1 + $0x500] sm:$0xff]
  %v220 = vld [vmem:[%s1 + $0x508] sm:$0xff]
  %v221 = vld [vmem:[%s1 + $0x510] sm:$0xf]
  %v222 = vld [vmem:[%s1 + $0x514] sm:$0xff]
  %v223 = vld [vmem:[%s1 + $0x51c] sm:$0xff]
  %v224 = vld [vmem:[%s1 + $0x524] sm:$0xf]
  %v225 = vld [vmem:[%s1 + $0x528] sm:$0xff]
  %v226 = vld [vmem:[%s1 + $0x530] sm:$0xff]
  %v227 = vld [vmem:[%s1 + $0x538] sm:$0xf]
  %v228 = vld [vmem:[%s1 + $0x53c] sm:$0xff]
  %v229 = vld [vmem:[%s1 + $0x544] sm:$0xff]
  %v230 = vld [vmem:[%s1 + $0x54c] sm:$0xf]
  %v231 = vld [vmem:[%s1 + $0x550] sm:$0xff]
  %v232 = vld [vmem:[%s1 + $0x558] sm:$0xff]
  %v233 = vld [vmem:[%s1 + $0x560] sm:$0xf]
  %v234 = vld [vmem:[%s1 + $0x564] sm:$0xff]
  %v235 = vld [vmem:[%s1 + $0x56c] sm:$0xff]
  %v236 = vld [vmem:[%s1 + $0x574] sm:$0xf]
  %v237 = vld [vmem:[%s1 + $0x578] sm:$0xff]
  %v238 = vld [vmem:[%s1 + $0x580] sm:$0xff]
  %v239 = vld [vmem:[%s1 + $0x588] sm:$0xf]
  %v240 = vld [vmem:[%s1 + $0x58c] sm:$0xff]
  %v241 = vld [vmem:[%s1 + $0x594] sm:$0xff]
  %v242 = vld [vmem:[%s1 + $0x59c] sm:$0xf]
  %v243 = vld [vmem:[%s2] sm:$0x1f]
  %v245 = vlaneseq
  %v246 = vshrl.u32 %v245, 7
  %v247 = vsub.s32 0, %v246
  %v248 = vrot.slane %v243, %v247
  %v249 = vlaneseq
  %v250 = vshrl.u32 %v249, 7
  %v251 = vsub.s32 1, %v250
  %v252 = vrot.slane %v243, %v251
  %v253 = vlaneseq
  %v254 = vshrl.u32 %v253, 7
  %v255 = vsub.s32 2, %v254
  %v256 = vrot.slane %v243, %v255
  %v257 = vlaneseq
  %v258 = vshrl.u32 %v257, 7
  %v259 = vsub.s32 3, %v258
  %v260 = vrot.slane %v243, %v259
  %v261 = vlaneseq
  %v262 = vshrl.u32 %v261, 7
  %v263 = vsub.s32 4, %v262
  %v264 = vrot.slane %v243, %v263
  %v282 = vunpack.c.l.b16 %v15
  %v283 = vunpack.c.h.b16 %v15
  %v284 = vunpack.c.l.b16 %v16
  %v285 = vunpack.c.h.b16 %v16
  %v286 = vunpack.c.l.b16 %v17
  %v287 = vunpack.c.l.b16 %v18
  %v288 = vunpack.c.h.b16 %v18
  %v289 = vunpack.c.l.b16 %v19
  %v290 = vunpack.c.h.b16 %v19
  %v291 = vunpack.c.l.b16 %v20
  %v292 = vunpack.c.l.b16 %v21
  %v293 = vunpack.c.h.b16 %v21
  %v294 = vunpack.c.l.b16 %v22
  %v295 = vunpack.c.h.b16 %v22
  %v296 = vunpack.c.l.b16 %v23
  %v297 = vunpack.c.l.b16 %v24
  %v298 = vunpack.c.h.b16 %v24
  %v299 = vunpack.c.l.b16 %v25
  %v300 = vunpack.c.h.b16 %v25
  %v301 = vunpack.c.l.b16 %v26
  %v302 = vpack.c.b16 %v287, %v282
  %v303 = vpack.c.b16 %v288, %v283
  %v304 = vpack.c.b16 %v289, %v284
  %v305 = vpack.c.b16 %v290, %v285
  %v306 = vpack.c.b16 %v291, %v286
  %v307 = vpack.c.b16 %v297, %v292
  %v308 = vpack.c.b16 %v298, %v293
  %v309 = vpack.c.b16 %v299, %v294
  %v310 = vpack.c.b16 %v300, %v295
  %v311 = vpack.c.b16 %v301, %v296
  %v536 = vunpack.c.l.b16 %v27
  %v537 = vunpack.c.h.b16 %v27
  %v538 = vunpack.c.l.b16 %v28
  %v539 = vunpack.c.h.b16 %v28
  %v540 = vunpack.c.l.b16 %v29
  %v541 = vunpack.c.l.b16 %v30
  %v542 = vunpack.c.h.b16 %v30
  %v543 = vunpack.c.l.b16 %v31
  %v544 = vunpack.c.h.b16 %v31
  %v545 = vunpack.c.l.b16 %v32
  %v546 = vunpack.c.l.b16 %v33
  %v547 = vunpack.c.h.b16 %v33
  %v548 = vunpack.c.l.b16 %v34
  %v549 = vunpack.c.h.b16 %v34
  %v550 = vunpack.c.l.b16 %v35
  %v551 = vunpack.c.l.b16 %v36
  %v552 = vunpack.c.h.b16 %v36
  %v553 = vunpack.c.l.b16 %v37
  %v554 = vunpack.c.h.b16 %v37
  %v555 = vunpack.c.l.b16 %v38
  %v556 = vunpack.c.l.b16 %v39
  %v557 = vunpack.c.h.b16 %v39
  %v558 = vunpack.c.l.b16 %v40
  %v559 = vunpack.c.h.b16 %v40
  %v560 = vunpack.c.l.b16 %v41
  %v561 = vunpack.c.l.b16 %v42
  %v562 = vunpack.c.h.b16 %v42
  %v563 = vunpack.c.l.b16 %v43
  %v564 = vunpack.c.h.b16 %v43
  %v565 = vunpack.c.l.b16 %v44
  %v566 = vunpack.c.l.b16 %v45
  %v567 = vunpack.c.h.b16 %v45
  %v568 = vunpack.c.l.b16 %v46
  %v569 = vunpack.c.h.b16 %v46
  %v570 = vunpack.c.l.b16 %v47
  %v571 = vunpack.c.l.b16 %v48
  %v572 = vunpack.c.h.b16 %v48
  %v573 = vunpack.c.l.b16 %v49
  %v574 = vunpack.c.h.b16 %v49
  %v575 = vunpack.c.l.b16 %v50
  %v576 = vunpack.c.l.b16 %v51
  %v577 = vunpack.c.h.b16 %v51
  %v578 = vunpack.c.l.b16 %v52
  %v579 = vunpack.c.h.b16 %v52
  %v580 = vunpack.c.l.b16 %v53
  %v581 = vunpack.c.l.b16 %v54
  %v582 = vunpack.c.h.b16 %v54
  %v583 = vunpack.c.l.b16 %v55
  %v584 = vunpack.c.h.b16 %v55
  %v585 = vunpack.c.l.b16 %v56
  %v586 = vunpack.c.l.b16 %v57
  %v587 = vunpack.c.h.b16 %v57
  %v588 = vunpack.c.l.b16 %v58
  %v589 = vunpack.c.h.b16 %v58
  %v590 = vunpack.c.l.b16 %v59
  %v591 = vunpack.c.l.b16 %v60
  %v592 = vunpack.c.h.b16 %v60
  %v593 = vunpack.c.l.b16 %v61
  %v594 = vunpack.c.h.b16 %v61
  %v595 = vunpack.c.l.b16 %v62
  %v596 = vunpack.c.l.b16 %v63
  %v597 = vunpack.c.h.b16 %v63
  %v598 = vunpack.c.l.b16 %v64
  %v599 = vunpack.c.h.b16 %v64
  %v600 = vunpack.c.l.b16 %v65
  %v601 = vunpack.c.l.b16 %v66
  %v602 = vunpack.c.h.b16 %v66
  %v603 = vunpack.c.l.b16 %v67
  %v604 = vunpack.c.h.b16 %v67
  %v605 = vunpack.c.l.b16 %v68
  %v606 = vunpack.c.l.b16 %v69
  %v607 = vunpack.c.h.b16 %v69
  %v608 = vunpack.c.l.b16 %v70
  %v609 = vunpack.c.h.b16 %v70
  %v610 = vunpack.c.l.b16 %v71
  %v611 = vunpack.c.l.b16 %v72
  %v612 = vunpack.c.h.b16 %v72
  %v613 = vunpack.c.l.b16 %v73
  %v614 = vunpack.c.h.b16 %v73
  %v615 = vunpack.c.l.b16 %v74
  %v616 = vunpack.c.l.b16 %v75
  %v617 = vunpack.c.h.b16 %v75
  %v618 = vunpack.c.l.b16 %v76
  %v619 = vunpack.c.h.b16 %v76
  %v620 = vunpack.c.l.b16 %v77
  %v621 = vunpack.c.l.b16 %v78
  %v622 = vunpack.c.h.b16 %v78
  %v623 = vunpack.c.l.b16 %v79
  %v624 = vunpack.c.h.b16 %v79
  %v625 = vunpack.c.l.b16 %v80
  %v626 = vunpack.c.l.b16 %v81
  %v627 = vunpack.c.h.b16 %v81
  %v628 = vunpack.c.l.b16 %v82
  %v629 = vunpack.c.h.b16 %v82
  %v630 = vunpack.c.l.b16 %v83
  %v631 = vunpack.c.l.b16 %v84
  %v632 = vunpack.c.h.b16 %v84
  %v633 = vunpack.c.l.b16 %v85
  %v634 = vunpack.c.h.b16 %v85
  %v635 = vunpack.c.l.b16 %v86
  %v636 = vunpack.c.l.b16 %v87
  %v637 = vunpack.c.h.b16 %v87
  %v638 = vunpack.c.l.b16 %v88
  %v639 = vunpack.c.h.b16 %v88
  %v640 = vunpack.c.l.b16 %v89
  %v641 = vunpack.c.l.b16 %v90
  %v642 = vunpack.c.h.b16 %v90
  %v643 = vunpack.c.l.b16 %v91
  %v644 = vunpack.c.h.b16 %v91
  %v645 = vunpack.c.l.b16 %v92
  %v646 = vunpack.c.l.b16 %v93
  %v647 = vunpack.c.h.b16 %v93
  %v648 = vunpack.c.l.b16 %v94
  %v649 = vunpack.c.h.b16 %v94
  %v650 = vunpack.c.l.b16 %v95
  %v651 = vunpack.c.l.b16 %v96
  %v652 = vunpack.c.h.b16 %v96
  %v653 = vunpack.c.l.b16 %v97
  %v654 = vunpack.c.h.b16 %v97
  %v655 = vunpack.c.l.b16 %v98
  %v656 = vunpack.c.l.b16 %v99
  %v657 = vunpack.c.h.b16 %v99
  %v658 = vunpack.c.l.b16 %v100
  %v659 = vunpack.c.h.b16 %v100
  %v660 = vunpack.c.l.b16 %v101
  %v661 = vunpack.c.l.b16 %v102
  %v662 = vunpack.c.h.b16 %v102
  %v663 = vunpack.c.l.b16 %v103
  %v664 = vunpack.c.h.b16 %v103
  %v665 = vunpack.c.l.b16 %v104
  %v666 = vunpack.c.l.b16 %v105
  %v667 = vunpack.c.h.b16 %v105
  %v668 = vunpack.c.l.b16 %v106
  %v669 = vunpack.c.h.b16 %v106
  %v670 = vunpack.c.l.b16 %v107
  %v671 = vunpack.c.l.b16 %v108
  %v672 = vunpack.c.h.b16 %v108
  %v673 = vunpack.c.l.b16 %v109
  %v674 = vunpack.c.h.b16 %v109
  %v675 = vunpack.c.l.b16 %v110
  %v676 = vunpack.c.l.b16 %v111
  %v677 = vunpack.c.h.b16 %v111
  %v678 = vunpack.c.l.b16 %v112
  %v679 = vunpack.c.h.b16 %v112
  %v680 = vunpack.c.l.b16 %v113
  %v681 = vunpack.c.l.b16 %v114
  %v682 = vunpack.c.h.b16 %v114
  %v683 = vunpack.c.l.b16 %v115
  %v684 = vunpack.c.h.b16 %v115
  %v685 = vunpack.c.l.b16 %v116
  %v686 = vunpack.c.l.b16 %v117
  %v687 = vunpack.c.h.b16 %v117
  %v688 = vunpack.c.l.b16 %v118
  %v689 = vunpack.c.h.b16 %v118
  %v690 = vunpack.c.l.b16 %v119
  %v691 = vunpack.c.l.b16 %v120
  %v692 = vunpack.c.h.b16 %v120
  %v693 = vunpack.c.l.b16 %v121
  %v694 = vunpack.c.h.b16 %v121
  %v695 = vunpack.c.l.b16 %v122
  %v696 = vunpack.c.l.b16 %v123
  %v697 = vunpack.c.h.b16 %v123
  %v698 = vunpack.c.l.b16 %v124
  %v699 = vunpack.c.h.b16 %v124
  %v700 = vunpack.c.l.b16 %v125
  %v701 = vunpack.c.l.b16 %v126
  %v702 = vunpack.c.h.b16 %v126
  %v703 = vunpack.c.l.b16 %v127
  %v704 = vunpack.c.h.b16 %v127
  %v705 = vunpack.c.l.b16 %v128
  %v706 = vunpack.c.l.b16 %v129
  %v707 = vunpack.c.h.b16 %v129
  %v708 = vunpack.c.l.b16 %v130
  %v709 = vunpack.c.h.b16 %v130
  %v710 = vunpack.c.l.b16 %v131
  %v711 = vunpack.c.l.b16 %v132
  %v712 = vunpack.c.h.b16 %v132
  %v713 = vunpack.c.l.b16 %v133
  %v714 = vunpack.c.h.b16 %v133
  %v715 = vunpack.c.l.b16 %v134
  %v716 = vunpack.c.l.b16 %v135
  %v717 = vunpack.c.h.b16 %v135
  %v718 = vunpack.c.l.b16 %v136
  %v719 = vunpack.c.h.b16 %v136
  %v720 = vunpack.c.l.b16 %v137
  %v721 = vunpack.c.l.b16 %v138
  %v722 = vunpack.c.h.b16 %v138
  %v723 = vunpack.c.l.b16 %v139
  %v724 = vunpack.c.h.b16 %v139
  %v725 = vunpack.c.l.b16 %v140
  %v726 = vunpack.c.l.b16 %v141
  %v727 = vunpack.c.h.b16 %v141
  %v728 = vunpack.c.l.b16 %v142
  %v729 = vunpack.c.h.b16 %v142
  %v730 = vunpack.c.l.b16 %v143
  %v731 = vunpack.c.l.b16 %v144
  %v732 = vunpack.c.h.b16 %v144
  %v733 = vunpack.c.l.b16 %v145
  %v734 = vunpack.c.h.b16 %v145
  %v735 = vunpack.c.l.b16 %v146
  %v736 = vunpack.c.l.b16 %v147
  %v737 = vunpack.c.h.b16 %v147
  %v738 = vunpack.c.l.b16 %v148
  %v739 = vunpack.c.h.b16 %v148
  %v740 = vunpack.c.l.b16 %v149
  %v741 = vunpack.c.l.b16 %v150
  %v742 = vunpack.c.h.b16 %v150
  %v743 = vunpack.c.l.b16 %v151
  %v744 = vunpack.c.h.b16 %v151
  %v745 = vunpack.c.l.b16 %v152
  %v746 = vunpack.c.l.b16 %v153
  %v747 = vunpack.c.h.b16 %v153
  %v748 = vunpack.c.l.b16 %v154
  %v749 = vunpack.c.h.b16 %v154
  %v750 = vunpack.c.l.b16 %v155
  %v751 = vunpack.c.l.b16 %v156
  %v752 = vunpack.c.h.b16 %v156
  %v753 = vunpack.c.l.b16 %v157
  %v754 = vunpack.c.h.b16 %v157
  %v755 = vunpack.c.l.b16 %v158
  %v756 = vunpack.c.l.b16 %v159
  %v757 = vunpack.c.h.b16 %v159
  %v758 = vunpack.c.l.b16 %v160
  %v759 = vunpack.c.h.b16 %v160
  %v760 = vunpack.c.l.b16 %v161
  %v761 = vunpack.c.l.b16 %v162
  %v762 = vunpack.c.h.b16 %v162
  %v763 = vunpack.c.l.b16 %v163
  %v764 = vunpack.c.h.b16 %v163
  %v765 = vunpack.c.l.b16 %v164
  %v766 = vunpack.c.l.b16 %v165
  %v767 = vunpack.c.h.b16 %v165
  %v768 = vunpack.c.l.b16 %v166
  %v769 = vunpack.c.h.b16 %v166
  %v770 = vunpack.c.l.b16 %v167
  %v771 = vunpack.c.l.b16 %v168
  %v772 = vunpack.c.h.b16 %v168
  %v773 = vunpack.c.l.b16 %v169
  %v774 = vunpack.c.h.b16 %v169
  %v775 = vunpack.c.l.b16 %v170
  %v776 = vunpack.c.l.b16 %v171
  %v777 = vunpack.c.h.b16 %v171
  %v778 = vunpack.c.l.b16 %v172
  %v779 = vunpack.c.h.b16 %v172
  %v780 = vunpack.c.l.b16 %v173
  %v781 = vunpack.c.l.b16 %v174
  %v782 = vunpack.c.h.b16 %v174
  %v783 = vunpack.c.l.b16 %v175
  %v784 = vunpack.c.h.b16 %v175
  %v785 = vunpack.c.l.b16 %v176
  %v786 = vunpack.c.l.b16 %v177
  %v787 = vunpack.c.h.b16 %v177
  %v788 = vunpack.c.l.b16 %v178
  %v789 = vunpack.c.h.b16 %v178
  %v790 = vunpack.c.l.b16 %v179
  %v791 = vunpack.c.l.b16 %v180
  %v792 = vunpack.c.h.b16 %v180
  %v793 = vunpack.c.l.b16 %v181
  %v794 = vunpack.c.h.b16 %v181
  %v795 = vunpack.c.l.b16 %v182
  %v796 = vunpack.c.l.b16 %v183
  %v797 = vunpack.c.h.b16 %v183
  %v798 = vunpack.c.l.b16 %v184
  %v799 = vunpack.c.h.b16 %v184
  %v800 = vunpack.c.l.b16 %v185
  %v801 = vunpack.c.l.b16 %v186
  %v802 = vunpack.c.h.b16 %v186
  %v803 = vunpack.c.l.b16 %v187
  %v804 = vunpack.c.h.b16 %v187
  %v805 = vunpack.c.l.b16 %v188
  %v806 = vunpack.c.l.b16 %v189
  %v807 = vunpack.c.h.b16 %v189
  %v808 = vunpack.c.l.b16 %v190
  %v809 = vunpack.c.h.b16 %v190
  %v810 = vunpack.c.l.b16 %v191
  %v811 = vunpack.c.l.b16 %v192
  %v812 = vunpack.c.h.b16 %v192
  %v813 = vunpack.c.l.b16 %v193
  %v814 = vunpack.c.h.b16 %v193
  %v815 = vunpack.c.l.b16 %v194
  %v816 = vunpack.c.l.b16 %v195
  %v817 = vunpack.c.h.b16 %v195
  %v818 = vunpack.c.l.b16 %v196
  %v819 = vunpack.c.h.b16 %v196
  %v820 = vunpack.c.l.b16 %v197
  %v821 = vunpack.c.l.b16 %v198
  %v822 = vunpack.c.h.b16 %v198
  %v823 = vunpack.c.l.b16 %v199
  %v824 = vunpack.c.h.b16 %v199
  %v825 = vunpack.c.l.b16 %v200
  %v826 = vunpack.c.l.b16 %v201
  %v827 = vunpack.c.h.b16 %v201
  %v828 = vunpack.c.l.b16 %v202
  %v829 = vunpack.c.h.b16 %v202
  %v830 = vunpack.c.l.b16 %v203
  %v831 = vunpack.c.l.b16 %v204
  %v832 = vunpack.c.h.b16 %v204
  %v833 = vunpack.c.l.b16 %v205
  %v834 = vunpack.c.h.b16 %v205
  %v835 = vunpack.c.l.b16 %v206
  %v836 = vunpack.c.l.b16 %v207
  %v837 = vunpack.c.h.b16 %v207
  %v838 = vunpack.c.l.b16 %v208
  %v839 = vunpack.c.h.b16 %v208
  %v840 = vunpack.c.l.b16 %v209
  %v841 = vunpack.c.l.b16 %v210
  %v842 = vunpack.c.h.b16 %v210
  %v843 = vunpack.c.l.b16 %v211
  %v844 = vunpack.c.h.b16 %v211
  %v845 = vunpack.c.l.b16 %v212
  %v846 = vunpack.c.l.b16 %v213
  %v847 = vunpack.c.h.b16 %v213
  %v848 = vunpack.c.l.b16 %v214
  %v849 = vunpack.c.h.b16 %v214
  %v850 = vunpack.c.l.b16 %v215
  %v851 = vunpack.c.l.b16 %v216
  %v852 = vunpack.c.h.b16 %v216
  %v853 = vunpack.c.l.b16 %v217
  %v854 = vunpack.c.h.b16 %v217
  %v855 = vunpack.c.l.b16 %v218
  %v856 = vunpack.c.l.b16 %v219
  %v857 = vunpack.c.h.b16 %v219
  %v858 = vunpack.c.l.b16 %v220
  %v859 = vunpack.c.h.b16 %v220
  %v860 = vunpack.c.l.b16 %v221
  %v861 = vunpack.c.l.b16 %v222
  %v862 = vunpack.c.h.b16 %v222
  %v863 = vunpack.c.l.b16 %v223
  %v864 = vunpack.c.h.b16 %v223
  %v865 = vunpack.c.l.b16 %v224
  %v866 = vunpack.c.l.b16 %v225
  %v867 = vunpack.c.h.b16 %v225
  %v868 = vunpack.c.l.b16 %v226
  %v869 = vunpack.c.h.b16 %v226
  %v870 = vunpack.c.l.b16 %v227
  %v871 = vunpack.c.l.b16 %v228
  %v872 = vunpack.c.h.b16 %v228
  %v873 = vunpack.c.l.b16 %v229
  %v874 = vunpack.c.h.b16 %v229
  %v875 = vunpack.c.l.b16 %v230
  %v876 = vunpack.c.l.b16 %v231
  %v877 = vunpack.c.h.b16 %v231
  %v878 = vunpack.c.l.b16 %v232
  %v879 = vunpack.c.h.b16 %v232
  %v880 = vunpack.c.l.b16 %v233
  %v881 = vunpack.c.l.b16 %v234
  %v882 = vunpack.c.h.b16 %v234
  %v883 = vunpack.c.l.b16 %v235
  %v884 = vunpack.c.h.b16 %v235
  %v885 = vunpack.c.l.b16 %v236
  %v886 = vunpack.c.l.b16 %v237
  %v887 = vunpack.c.h.b16 %v237
  %v888 = vunpack.c.l.b16 %v238
  %v889 = vunpack.c.h.b16 %v238
  %v890 = vunpack.c.l.b16 %v239
  %v891 = vunpack.c.l.b16 %v240
  %v892 = vunpack.c.h.b16 %v240
  %v893 = vunpack.c.l.b16 %v241
  %v894 = vunpack.c.h.b16 %v241
  %v895 = vunpack.c.l.b16 %v242
  %v896 = vpack.c.b16 %v541, %v536
  %v897 = vpack.c.b16 %v542, %v537
  %v898 = vpack.c.b16 %v543, %v538
  %v899 = vpack.c.b16 %v544, %v539
  %v900 = vpack.c.b16 %v545, %v540
  %v901 = vpack.c.b16 %v551, %v546
  %v902 = vpack.c.b16 %v552, %v547
  %v903 = vpack.c.b16 %v553, %v548
  %v904 = vpack.c.b16 %v554, %v549
  %v905 = vpack.c.b16 %v555, %v550
  %v906 = vpack.c.b16 %v561, %v556
  %v907 = vpack.c.b16 %v562, %v557
  %v908 = vpack.c.b16 %v563, %v558
  %v909 = vpack.c.b16 %v564, %v559
  %v910 = vpack.c.b16 %v565, %v560
  %v911 = vpack.c.b16 %v571, %v566
  %v912 = vpack.c.b16 %v572, %v567
  %v913 = vpack.c.b16 %v573, %v568
  %v914 = vpack.c.b16 %v574, %v569
  %v915 = vpack.c.b16 %v575, %v570
  %v916 = vpack.c.b16 %v581, %v576
  %v917 = vpack.c.b16 %v582, %v577
  %v918 = vpack.c.b16 %v583, %v578
  %v919 = vpack.c.b16 %v584, %v579
  %v920 = vpack.c.b16 %v585, %v580
  %v921 = vpack.c.b16 %v591, %v586
  %v922 = vpack.c.b16 %v592, %v587
  %v923 = vpack.c.b16 %v593, %v588
  %v924 = vpack.c.b16 %v594, %v589
  %v925 = vpack.c.b16 %v595, %v590
  %v926 = vpack.c.b16 %v601, %v596
  %v927 = vpack.c.b16 %v602, %v597
  %v928 = vpack.c.b16 %v603, %v598
  %v929 = vpack.c.b16 %v604, %v599
  %v930 = vpack.c.b16 %v605, %v600
  %v931 = vpack.c.b16 %v611, %v606
  %v932 = vpack.c.b16 %v612, %v607
  %v933 = vpack.c.b16 %v613, %v608
  %v934 = vpack.c.b16 %v614, %v609
  %v935 = vpack.c.b16 %v615, %v610
  %v936 = vpack.c.b16 %v621, %v616
  %v937 = vpack.c.b16 %v622, %v617
  %v938 = vpack.c.b16 %v623, %v618
  %v939 = vpack.c.b16 %v624, %v619
  %v940 = vpack.c.b16 %v625, %v620
  %v941 = vpack.c.b16 %v631, %v626
  %v942 = vpack.c.b16 %v632, %v627
  %v943 = vpack.c.b16 %v633, %v628
  %v944 = vpack.c.b16 %v634, %v629
  %v945 = vpack.c.b16 %v635, %v630
  %v946 = vpack.c.b16 %v641, %v636
  %v947 = vpack.c.b16 %v642, %v637
  %v948 = vpack.c.b16 %v643, %v638
  %v949 = vpack.c.b16 %v644, %v639
  %v950 = vpack.c.b16 %v645, %v640
  %v951 = vpack.c.b16 %v651, %v646
  %v952 = vpack.c.b16 %v652, %v647
  %v953 = vpack.c.b16 %v653, %v648
  %v954 = vpack.c.b16 %v654, %v649
  %v955 = vpack.c.b16 %v655, %v650
  %v956 = vpack.c.b16 %v661, %v656
  %v957 = vpack.c.b16 %v662, %v657
  %v958 = vpack.c.b16 %v663, %v658
  %v959 = vpack.c.b16 %v664, %v659
  %v960 = vpack.c.b16 %v665, %v660
  %v961 = vpack.c.b16 %v671, %v666
  %v962 = vpack.c.b16 %v672, %v667
  %v963 = vpack.c.b16 %v673, %v668
  %v964 = vpack.c.b16 %v674, %v669
  %v965 = vpack.c.b16 %v675, %v670
  %v966 = vpack.c.b16 %v681, %v676
  %v967 = vpack.c.b16 %v682, %v677
  %v968 = vpack.c.b16 %v683, %v678
  %v969 = vpack.c.b16 %v684, %v679
  %v970 = vpack.c.b16 %v685, %v680
  %v971 = vpack.c.b16 %v691, %v686
  %v972 = vpack.c.b16 %v692, %v687
  %v973 = vpack.c.b16 %v693, %v688
  %v974 = vpack.c.b16 %v694, %v689
  %v975 = vpack.c.b16 %v695, %v690
  %v976 = vpack.c.b16 %v701, %v696
  %v977 = vpack.c.b16 %v702, %v697
  %v978 = vpack.c.b16 %v703, %v698
  %v979 = vpack.c.b16 %v704, %v699
  %v980 = vpack.c.b16 %v705, %v700
  %v981 = vpack.c.b16 %v711, %v706
  %v982 = vpack.c.b16 %v712, %v707
  %v983 = vpack.c.b16 %v713, %v708
  %v984 = vpack.c.b16 %v714, %v709
  %v985 = vpack.c.b16 %v715, %v710
  %v986 = vpack.c.b16 %v721, %v716
  %v987 = vpack.c.b16 %v722, %v717
  %v988 = vpack.c.b16 %v723, %v718
  %v989 = vpack.c.b16 %v724, %v719
  %v990 = vpack.c.b16 %v725, %v720
  %v991 = vpack.c.b16 %v731, %v726
  %v992 = vpack.c.b16 %v732, %v727
  %v993 = vpack.c.b16 %v733, %v728
  %v994 = vpack.c.b16 %v734, %v729
  %v995 = vpack.c.b16 %v735, %v730
  %v996 = vpack.c.b16 %v741, %v736
  %v997 = vpack.c.b16 %v742, %v737
  %v998 = vpack.c.b16 %v743, %v738
  %v999 = vpack.c.b16 %v744, %v739
  %v1000 = vpack.c.b16 %v745, %v740
  %v1001 = vpack.c.b16 %v751, %v746
  %v1002 = vpack.c.b16 %v752, %v747
  %v1003 = vpack.c.b16 %v753, %v748
  %v1004 = vpack.c.b16 %v754, %v749
  %v1005 = vpack.c.b16 %v755, %v750
  %v1006 = vpack.c.b16 %v761, %v756
  %v1007 = vpack.c.b16 %v762, %v757
  %v1008 = vpack.c.b16 %v763, %v758
  %v1009 = vpack.c.b16 %v764, %v759
  %v1010 = vpack.c.b16 %v765, %v760
  %v1011 = vpack.c.b16 %v771, %v766
  %v1012 = vpack.c.b16 %v772, %v767
  %v1013 = vpack.c.b16 %v773, %v768
  %v1014 = vpack.c.b16 %v774, %v769
  %v1015 = vpack.c.b16 %v775, %v770
  %v1016 = vpack.c.b16 %v781, %v776
  %v1017 = vpack.c.b16 %v782, %v777
  %v1018 = vpack.c.b16 %v783, %v778
  %v1019 = vpack.c.b16 %v784, %v779
  %v1020 = vpack.c.b16 %v785, %v780
  %v1021 = vpack.c.b16 %v791, %v786
  %v1022 = vpack.c.b16 %v792, %v787
  %v1023 = vpack.c.b16 %v793, %v788
  %v1024 = vpack.c.b16 %v794, %v789
  %v1025 = vpack.c.b16 %v795, %v790
  %v1026 = vpack.c.b16 %v801, %v796
  %v1027 = vpack.c.b16 %v802, %v797
  %v1028 = vpack.c.b16 %v803, %v798
  %v1029 = vpack.c.b16 %v804, %v799
  %v1030 = vpack.c.b16 %v805, %v800
  %v1031 = vpack.c.b16 %v811, %v806
  %v1032 = vpack.c.b16 %v812, %v807
  %v1033 = vpack.c.b16 %v813, %v808
  %v1034 = vpack.c.b16 %v814, %v809
  %v1035 = vpack.c.b16 %v815, %v810
  %v1036 = vpack.c.b16 %v821, %v816
  %v1037 = vpack.c.b16 %v822, %v817
  %v1038 = vpack.c.b16 %v823, %v818
  %v1039 = vpack.c.b16 %v824, %v819
  %v1040 = vpack.c.b16 %v825, %v820
  %v1041 = vpack.c.b16 %v831, %v826
  %v1042 = vpack.c.b16 %v832, %v827
  %v1043 = vpack.c.b16 %v833, %v828
  %v1044 = vpack.c.b16 %v834, %v829
  %v1045 = vpack.c.b16 %v835, %v830
  %v1046 = vpack.c.b16 %v841, %v836
  %v1047 = vpack.c.b16 %v842, %v837
  %v1048 = vpack.c.b16 %v843, %v838
  %v1049 = vpack.c.b16 %v844, %v839
  %v1050 = vpack.c.b16 %v845, %v840
  %v1051 = vpack.c.b16 %v851, %v846
  %v1052 = vpack.c.b16 %v852, %v847
  %v1053 = vpack.c.b16 %v853, %v848
  %v1054 = vpack.c.b16 %v854, %v849
  %v1055 = vpack.c.b16 %v855, %v850
  %v1056 = vpack.c.b16 %v861, %v856
  %v1057 = vpack.c.b16 %v862, %v857
  %v1058 = vpack.c.b16 %v863, %v858
  %v1059 = vpack.c.b16 %v864, %v859
  %v1060 = vpack.c.b16 %v865, %v860
  %v1061 = vpack.c.b16 %v871, %v866
  %v1062 = vpack.c.b16 %v872, %v867
  %v1063 = vpack.c.b16 %v873, %v868
  %v1064 = vpack.c.b16 %v874, %v869
  %v1065 = vpack.c.b16 %v875, %v870
  %v1066 = vpack.c.b16 %v881, %v876
  %v1067 = vpack.c.b16 %v882, %v877
  %v1068 = vpack.c.b16 %v883, %v878
  %v1069 = vpack.c.b16 %v884, %v879
  %v1070 = vpack.c.b16 %v885, %v880
  %v1071 = vpack.c.b16 %v891, %v886
  %v1072 = vpack.c.b16 %v892, %v887
  %v1073 = vpack.c.b16 %v893, %v888
  %v1074 = vpack.c.b16 %v894, %v889
  %v1075 = vpack.c.b16 %v895, %v890
  %vm1256 = vcmask 523264
  %v1258 = vsel %vm1256, %v306, 0
  %v1261 = vsel %vm1256, %v311, 0
  %1263 = vmatprep.subr.bf16.mxu0 %v897
  %1264 = vmatpush1.bf16.msra.mxu0 %v896
  %1265 = vmatprep.subr.bf16.mxu0 %v902
  %1266 = vmatpush1.bf16.msra.mxu0 %v901
  %1267 = vmatprep.subr.bf16.mxu0 %v907
  %1268 = vmatpush1.bf16.msra.mxu0 %v906
  %1269 = vmatprep.subr.bf16.mxu0 %v912
  %1270 = vmatpush1.bf16.msra.mxu0 %v911
  %1271 = vmatprep.subr.bf16.mxu0 %v917
  %1272 = vmatpush1.bf16.msra.mxu0 %v916
  %1273 = vmatprep.subr.bf16.mxu0 %v922
  %1274 = vmatpush1.bf16.msra.mxu0 %v921
  %1275 = vmatprep.subr.bf16.mxu0 %v927
  %1276 = vmatpush1.bf16.msra.mxu0 %v926
  %1277 = vmatprep.subr.bf16.mxu0 %v932
  %1278 = vmatpush1.bf16.msra.mxu0 %v931
  %1279 = vmatprep.subr.bf16.mxu0 %v937
  %1280 = vmatpush1.bf16.msra.mxu0 %v936
  %1281 = vmatprep.subr.bf16.mxu0 %v942
  %1282 = vmatpush1.bf16.msra.mxu0 %v941
  %1283 = vmatprep.subr.bf16.mxu0 %v947
  %1284 = vmatpush1.bf16.msra.mxu0 %v946
  %1285 = vmatprep.subr.bf16.mxu0 %v952
  %1286 = vmatpush1.bf16.msra.mxu0 %v951
  %1287 = vmatprep.subr.bf16.mxu0 %v957
  %1288 = vmatpush1.bf16.msra.mxu0 %v956
  %1289 = vmatprep.subr.bf16.mxu0 %v962
  %1290 = vmatpush1.bf16.msra.mxu0 %v961
  %1291 = vmatprep.subr.bf16.mxu0 %v967
  %1292 = vmatpush1.bf16.msra.mxu0 %v966
  %1293 = vmatprep.subr.bf16.mxu0 %v972
  %1294 = vmatpush1.bf16.msra.mxu0 %v971
  %1295 = vmatprep.mubr.bf16.mxu0 %v303
  %1296 = vmatmul.mubr.bf16.gmra.mrb[0].mxu0 %v302
  %v1297 = vpop.f32.mrb[0].mxu0
  %v1298 = vadd.f32 %v248, %v1297
  %v1299 = vpop.f32.mrb[0].mxu0
  %v1300 = vadd.f32 %v252, %v1299
  %v1301 = vpop.f32.mrb[0].mxu0
  %v1302 = vadd.f32 %v248, %v1301
  %v1303 = vpop.f32.mrb[0].mxu0
  %v1304 = vadd.f32 %v252, %v1303
  %1305 = vmatprep.mubr.bf16.mxu0 %v308
  %1306 = vmatmul.mubr.bf16.gmra.mrb[0].mxu0 %v307
  %v1307 = vpop.f32.mrb[0].mxu0
  %v1308 = vadd.f32 %v248, %v1307
  %v1309 = vpop.f32.mrb[0].mxu0
  %v1310 = vadd.f32 %v252, %v1309
  %v1311 = vpop.f32.mrb[0].mxu0
  %v1312 = vadd.f32 %v248, %v1311
  %v1313 = vpop.f32.mrb[0].mxu0
  %v1314 = vadd.f32 %v252, %v1313
  %1315 = vdwg.mxu0
  %1316 = vmatprep.subr.bf16.mxu0 %v977
  %1317 = vmatpush1.bf16.msra.mxu0 %v976
  %1318 = vmatprep.subr.bf16.mxu0 %v982
  %1319 = vmatpush1.bf16.msra.mxu0 %v981
  %1320 = vmatprep.subr.bf16.mxu0 %v987
  %1321 = vmatpush1.bf16.msra.mxu0 %v986
  %1322 = vmatprep.subr.bf16.mxu0 %v992
  %1323 = vmatpush1.bf16.msra.mxu0 %v991
  %1324 = vmatprep.subr.bf16.mxu0 %v997
  %1325 = vmatpush1.bf16.msra.mxu0 %v996
  %1326 = vmatprep.subr.bf16.mxu0 %v1002
  %1327 = vmatpush1.bf16.msra.mxu0 %v1001
  %1328 = vmatprep.subr.bf16.mxu0 %v1007
  %1329 = vmatpush1.bf16.msra.mxu0 %v1006
  %1330 = vmatprep.subr.bf16.mxu0 %v1012
  %1331 = vmatpush1.bf16.msra.mxu0 %v1011
  %1332 = vmatprep.subr.bf16.mxu0 %v1017
  %1333 = vmatpush1.bf16.msra.mxu0 %v1016
  %1334 = vmatprep.subr.bf16.mxu0 %v1022
  %1335 = vmatpush1.bf16.msra.mxu0 %v1021
  %1336 = vmatprep.subr.bf16.mxu0 %v1027
  %1337 = vmatpush1.bf16.msra.mxu0 %v1026
  %1338 = vmatprep.subr.bf16.mxu0 %v1032
  %1339 = vmatpush1.bf16.msra.mxu0 %v1031
  %1340 = vmatprep.subr.bf16.mxu0 %v1037
  %1341 = vmatpush1.bf16.msra.mxu0 %v1036
  %1342 = vmatprep.subr.bf16.mxu0 %v1042
  %1343 = vmatpush1.bf16.msra.mxu0 %v1041
  %1344 = vmatprep.subr.bf16.mxu0 %v1047
  %1345 = vmatpush1.bf16.msra.mxu0 %v1046
  %1346 = vmatprep.subr.bf16.mxu0 %v1052
  %1347 = vmatpush1.bf16.msra.mxu0 %v1051
  %1348 = vmatprep.mubr.bf16.mxu0 %v305
  %1349 = vmatmul.mubr.bf16.gmra.mrb[0].mxu0 %v304
  %v1350 = vpop.f32.mrb[0].mxu0
  %v1351 = vadd.f32 %v1298, %v1350
  %v1352 = vpop.f32.mrb[0].mxu0
  %v1353 = vadd.f32 %v1300, %v1352
  %v1354 = vpop.f32.mrb[0].mxu0
  %v1355 = vadd.f32 %v1302, %v1354
  %v1356 = vpop.f32.mrb[0].mxu0
  %v1357 = vadd.f32 %v1304, %v1356
  %1358 = vmatprep.mubr.bf16.mxu0 %v310
  %1359 = vmatmul.mubr.bf16.gmra.mrb[0].mxu0 %v309
  %v1360 = vpop.f32.mrb[0].mxu0
  %v1361 = vadd.f32 %v1308, %v1360
  %v1362 = vpop.f32.mrb[0].mxu0
  %v1363 = vadd.f32 %v1310, %v1362
  %v1364 = vpop.f32.mrb[0].mxu0
  %v1365 = vadd.f32 %v1312, %v1364
  %v1366 = vpop.f32.mrb[0].mxu0
  %v1367 = vadd.f32 %v1314, %v1366
  %1368 = vdwg.mxu0
  %1369 = vmatprep.subr.bf16.mxu0 %v1057
  %1370 = vmatpush1.bf16.msra.mxu0 %v1056
  %1371 = vmatprep.subr.bf16.mxu0 %v1062
  %1372 = vmatpush1.bf16.msra.mxu0 %v1061
  %1373 = vmatprep.subr.bf16.mxu0 %v1067
  %1374 = vmatpush1.bf16.msra.mxu0 %v1066
  %1375 = vmatprep.subr.bf16.mxu0 %v1072
  %1376 = vmatpush1.bf16.msra.mxu0 %v1071
  %1377 = vmatprep.subr.bf16.mxu0 0
  %1378 = vmatpush1.bf16.msra.mxu0 0
  %1379 = vmatprep.subr.bf16.mxu0 0
  %1380 = vmatpush1.bf16.msra.mxu0 0
  %1381 = vmatprep.subr.bf16.mxu0 0
  %1382 = vmatpush1.bf16.msra.mxu0 0
  %1383 = vmatprep.subr.bf16.mxu0 0
  %1384 = vmatpush1.bf16.msra.mxu0 0
  %1385 = vmatprep.subr.bf16.mxu0 0
  %1386 = vmatpush1.bf16.msra.mxu0 0
  %1387 = vmatprep.subr.bf16.mxu0 0
  %1388 = vmatpush1.bf16.msra.mxu0 0
  %1389 = vmatprep.subr.bf16.mxu0 0
  %1390 = vmatpush1.bf16.msra.mxu0 0
  %1391 = vmatprep.subr.bf16.mxu0 0
  %1392 = vmatpush1.bf16.msra.mxu0 0
  %1393 = vmatprep.subr.bf16.mxu0 0
  %1394 = vmatpush1.bf16.msra.mxu0 0
  %1395 = vmatprep.subr.bf16.mxu0 0
  %1396 = vmatpush1.bf16.msra.mxu0 0
  %1397 = vmatprep.subr.bf16.mxu0 0
  %1398 = vmatpush1.bf16.msra.mxu0 0
  %1399 = vmatprep.subr.bf16.mxu0 0
  %1400 = vmatpush1.bf16.msra.mxu0 0
  %1401 = vmatprep.mubr.bf16.mxu0 0
  %1402 = vmatmul.mubr.bf16.gmra.mrb[0].mxu0 %v1258
  %v1403 = vpop.f32.mrb[0].mxu0
  %v1404 = vadd.f32 %v1351, %v1403
  %v1405 = vpop.f32.mrb[0].mxu0
  %v1406 = vadd.f32 %v1353, %v1405
  %v1407 = vpop.f32.mrb[0].mxu0
  %v1408 = vadd.f32 %v1355, %v1407
  %v1409 = vpop.f32.mrb[0].mxu0
  %v1410 = vadd.f32 %v1357, %v1409
  %1411 = vmatprep.mubr.bf16.mxu0 0
  %1412 = vmatmul.mubr.bf16.gmra.mrb[0].mxu0 %v1261
  %v1413 = vpop.f32.mrb[0].mxu0
  %v1414 = vadd.f32 %v1361, %v1413
  %v1415 = vpop.f32.mrb[0].mxu0
  %v1416 = vadd.f32 %v1363, %v1415
  %v1417 = vpop.f32.mrb[0].mxu0
  %v1418 = vadd.f32 %v1365, %v1417
  %v1419 = vpop.f32.mrb[0].mxu0
  %v1420 = vadd.f32 %v1367, %v1419
  %1421 = vdwg.mxu0
  %1422 = vmatprep.subr.bf16.mxu0 %v899
  %1423 = vmatpush1.bf16.msra.mxu0 %v898
  %1424 = vmatprep.subr.bf16.mxu0 %v904
  %1425 = vmatpush1.bf16.msra.mxu0 %v903
  %1426 = vmatprep.subr.bf16.mxu0 %v909
  %1427 = vmatpush1.bf16.msra.mxu0 %v908
  %1428 = vmatprep.subr.bf16.mxu0 %v914
  %1429 = vmatpush1.bf16.msra.mxu0 %v913
  %1430 = vmatprep.subr.bf16.mxu0 %v919
  %1431 = vmatpush1.bf16.msra.mxu0 %v918
  %1432 = vmatprep.subr.bf16.mxu0 %v924
  %1433 = vmatpush1.bf16.msra.mxu0 %v923
  %1434 = vmatprep.subr.bf16.mxu0 %v929
  %1435 = vmatpush1.bf16.msra.mxu0 %v928
  %1436 = vmatprep.subr.bf16.mxu0 %v934
  %1437 = vmatpush1.bf16.msra.mxu0 %v933
  %1438 = vmatprep.subr.bf16.mxu0 %v939
  %1439 = vmatpush1.bf16.msra.mxu0 %v938
  %1440 = vmatprep.subr.bf16.mxu0 %v944
  %1441 = vmatpush1.bf16.msra.mxu0 %v943
  %1442 = vmatprep.subr.bf16.mxu0 %v949
  %1443 = vmatpush1.bf16.msra.mxu0 %v948
  %1444 = vmatprep.subr.bf16.mxu0 %v954
  %1445 = vmatpush1.bf16.msra.mxu0 %v953
  %1446 = vmatprep.subr.bf16.mxu0 %v959
  %1447 = vmatpush1.bf16.msra.mxu0 %v958
  %1448 = vmatprep.subr.bf16.mxu0 %v964
  %1449 = vmatpush1.bf16.msra.mxu0 %v963
  %1450 = vmatprep.subr.bf16.mxu0 %v969
  %1451 = vmatpush1.bf16.msra.mxu0 %v968
  %1452 = vmatprep.subr.bf16.mxu0 %v974
  %1453 = vmatpush1.bf16.msra.mxu0 %v973
  %1454 = vmatprep.mubr.bf16.mxu0 %v303
  %1455 = vmatmul.mubr.bf16.gmra.mrb[0].mxu0 %v302
  %v1456 = vpop.f32.mrb[0].mxu0
  %v1457 = vadd.f32 %v256, %v1456
  %v1458 = vpop.f32.mrb[0].mxu0
  %v1459 = vadd.f32 %v260, %v1458
  %v1460 = vpop.f32.mrb[0].mxu0
  %v1461 = vadd.f32 %v256, %v1460
  %v1462 = vpop.f32.mrb[0].mxu0
  %v1463 = vadd.f32 %v260, %v1462
  %1464 = vmatprep.mubr.bf16.mxu0 %v308
  %1465 = vmatmul.mubr.bf16.gmra.mrb[0].mxu0 %v307
  %v1466 = vpop.f32.mrb[0].mxu0
  %v1467 = vadd.f32 %v256, %v1466
  %v1468 = vpop.f32.mrb[0].mxu0
  %v1469 = vadd.f32 %v260, %v1468
  %v1470 = vpop.f32.mrb[0].mxu0
  %v1471 = vadd.f32 %v256, %v1470
  %v1472 = vpop.f32.mrb[0].mxu0
  %v1473 = vadd.f32 %v260, %v1472
  %1474 = vdwg.mxu0
  %1475 = vmatprep.subr.bf16.mxu0 %v979
  %1476 = vmatpush1.bf16.msra.mxu0 %v978
  %1477 = vmatprep.subr.bf16.mxu0 %v984
  %1478 = vmatpush1.bf16.msra.mxu0 %v983
  %1479 = vmatprep.subr.bf16.mxu0 %v989
  %1480 = vmatpush1.bf16.msra.mxu0 %v988
  %1481 = vmatprep.subr.bf16.mxu0 %v994
  %1482 = vmatpush1.bf16.msra.mxu0 %v993
  %1483 = vmatprep.subr.bf16.mxu0 %v999
  %1484 = vmatpush1.bf16.msra.mxu0 %v998
  %1485 = vmatprep.subr.bf16.mxu0 %v1004
  %1486 = vmatpush1.bf16.msra.mxu0 %v1003
  %1487 = vmatprep.subr.bf16.mxu0 %v1009
  %1488 = vmatpush1.bf16.msra.mxu0 %v1008
  %1489 = vmatprep.subr.bf16.mxu0 %v1014
  %1490 = vmatpush1.bf16.msra.mxu0 %v1013
  %1491 = vmatprep.subr.bf16.mxu0 %v1019
  %1492 = vmatpush1.bf16.msra.mxu0 %v1018
  %1493 = vmatprep.subr.bf16.mxu0 %v1024
  %1494 = vmatpush1.bf16.msra.mxu0 %v1023
  %1495 = vmatprep.subr.bf16.mxu0 %v1029
  %1496 = vmatpush1.bf16.msra.mxu0 %v1028
  %1497 = vmatprep.subr.bf16.mxu0 %v1034
  %1498 = vmatpush1.bf16.msra.mxu0 %v1033
  %1499 = vmatprep.subr.bf16.mxu0 %v1039
  %1500 = vmatpush1.bf16.msra.mxu0 %v1038
  %1501 = vmatprep.subr.bf16.mxu0 %v1044
  %1502 = vmatpush1.bf16.msra.mxu0 %v1043
  %1503 = vmatprep.subr.bf16.mxu0 %v1049
  %1504 = vmatpush1.bf16.msra.mxu0 %v1048
  %1505 = vmatprep.subr.bf16.mxu0 %v1054
  %1506 = vmatpush1.bf16.msra.mxu0 %v1053
  %1507 = vmatprep.mubr.bf16.mxu0 %v305
  %1508 = vmatmul.mubr.bf16.gmra.mrb[0].mxu0 %v304
  %v1509 = vpop.f32.mrb[0].mxu0
  %v1510 = vadd.f32 %v1457, %v1509
  %v1511 = vpop.f32.mrb[0].mxu0
  %v1512 = vadd.f32 %v1459, %v1511
  %v1513 = vpop.f32.mrb[0].mxu0
  %v1514 = vadd.f32 %v1461, %v1513
  %v1515 = vpop.f32.mrb[0].mxu0
  %v1516 = vadd.f32 %v1463, %v1515
  %1517 = vmatprep.mubr.bf16.mxu0 %v310
  %1518 = vmatmul.mubr.bf16.gmra.mrb[0].mxu0 %v309
  %v1519 = vpop.f32.mrb[0].mxu0
  %v1520 = vadd.f32 %v1467, %v1519
  %v1521 = vpop.f32.mrb[0].mxu0
  %v1522 = vadd.f32 %v1469, %v1521
  %v1523 = vpop.f32.mrb[0].mxu0
  %v1524 = vadd.f32 %v1471, %v1523
  %v1525 = vpop.f32.mrb[0].mxu0
  %v1526 = vadd.f32 %v1473, %v1525
  %1527 = vdwg.mxu0
  %1528 = vmatprep.subr.bf16.mxu0 %v1059
  %1529 = vmatpush1.bf16.msra.mxu0 %v1058
  %1530 = vmatprep.subr.bf16.mxu0 %v1064
  %1531 = vmatpush1.bf16.msra.mxu0 %v1063
  %1532 = vmatprep.subr.bf16.mxu0 %v1069
  %1533 = vmatpush1.bf16.msra.mxu0 %v1068
  %1534 = vmatprep.subr.bf16.mxu0 %v1074
  %1535 = vmatpush1.bf16.msra.mxu0 %v1073
  %1536 = vmatprep.subr.bf16.mxu0 0
  %1537 = vmatpush1.bf16.msra.mxu0 0
  %1538 = vmatprep.subr.bf16.mxu0 0
  %1539 = vmatpush1.bf16.msra.mxu0 0
  %1540 = vmatprep.subr.bf16.mxu0 0
  %1541 = vmatpush1.bf16.msra.mxu0 0
  %1542 = vmatprep.subr.bf16.mxu0 0
  %1543 = vmatpush1.bf16.msra.mxu0 0
  %1544 = vmatprep.subr.bf16.mxu0 0
  %1545 = vmatpush1.bf16.msra.mxu0 0
  %1546 = vmatprep.subr.bf16.mxu0 0
  %1547 = vmatpush1.bf16.msra.mxu0 0
  %1548 = vmatprep.subr.bf16.mxu0 0
  %1549 = vmatpush1.bf16.msra.mxu0 0
  %1550 = vmatprep.subr.bf16.mxu0 0
  %1551 = vmatpush1.bf16.msra.mxu0 0
  %1552 = vmatprep.subr.bf16.mxu0 0
  %1553 = vmatpush1.bf16.msra.mxu0 0
  %1554 = vmatprep.subr.bf16.mxu0 0
  %1555 = vmatpush1.bf16.msra.mxu0 0
  %1556 = vmatprep.subr.bf16.mxu0 0
  %1557 = vmatpush1.bf16.msra.mxu0 0
  %1558 = vmatprep.subr.bf16.mxu0 0
  %1559 = vmatpush1.bf16.msra.mxu0 0
  %1560 = vmatprep.mubr.bf16.mxu0 0
  %1561 = vmatmul.mubr.bf16.gmra.mrb[0].mxu0 %v1258
  %v1562 = vpop.f32.mrb[0].mxu0
  %v1563 = vadd.f32 %v1510, %v1562
  %v1564 = vpop.f32.mrb[0].mxu0
  %v1565 = vadd.f32 %v1512, %v1564
  %v1566 = vpop.f32.mrb[0].mxu0
  %v1567 = vadd.f32 %v1514, %v1566
  %v1568 = vpop.f32.mrb[0].mxu0
  %v1569 = vadd.f32 %v1516, %v1568
  %1570 = vmatprep.mubr.bf16.mxu0 0
  %1571 = vmatmul.mubr.bf16.gmra.mrb[0].mxu0 %v1261
  %v1572 = vpop.f32.mrb[0].mxu0
  %v1573 = vadd.f32 %v1520, %v1572
  %v1574 = vpop.f32.mrb[0].mxu0
  %v1575 = vadd.f32 %v1522, %v1574
  %v1576 = vpop.f32.mrb[0].mxu0
  %v1577 = vadd.f32 %v1524, %v1576
  %v1578 = vpop.f32.mrb[0].mxu0
  %v1579 = vadd.f32 %v1526, %v1578
  %1580 = vdwg.mxu0
  %1581 = vmatprep.subr.bf16.mxu0 0
  %1582 = vmatpush1.bf16.msra.mxu0 %v900
  %1583 = vmatprep.subr.bf16.mxu0 0
  %1584 = vmatpush1.bf16.msra.mxu0 %v905
  %1585 = vmatprep.subr.bf16.mxu0 0
  %1586 = vmatpush1.bf16.msra.mxu0 %v910
  %1587 = vmatprep.subr.bf16.mxu0 0
  %1588 = vmatpush1.bf16.msra.mxu0 %v915
  %1589 = vmatprep.subr.bf16.mxu0 0
  %1590 = vmatpush1.bf16.msra.mxu0 %v920
  %1591 = vmatprep.subr.bf16.mxu0 0
  %1592 = vmatpush1.bf16.msra.mxu0 %v925
  %1593 = vmatprep.subr.bf16.mxu0 0
  %1594 = vmatpush1.bf16.msra.mxu0 %v930
  %1595 = vmatprep.subr.bf16.mxu0 0
  %1596 = vmatpush1.bf16.msra.mxu0 %v935
  %1597 = vmatprep.subr.bf16.mxu0 0
  %1598 = vmatpush1.bf16.msra.mxu0 %v940
  %1599 = vmatprep.subr.bf16.mxu0 0
  %1600 = vmatpush1.bf16.msra.mxu0 %v945
  %1601 = vmatprep.subr.bf16.mxu0 0
  %1602 = vmatpush1.bf16.msra.mxu0 %v950
  %1603 = vmatprep.subr.bf16.mxu0 0
  %1604 = vmatpush1.bf16.msra.mxu0 %v955
  %1605 = vmatprep.subr.bf16.mxu0 0
  %1606 = vmatpush1.bf16.msra.mxu0 %v960
  %1607 = vmatprep.subr.bf16.mxu0 0
  %1608 = vmatpush1.bf16.msra.mxu0 %v965
  %1609 = vmatprep.subr.bf16.mxu0 0
  %1610 = vmatpush1.bf16.msra.mxu0 %v970
  %1611 = vmatprep.subr.bf16.mxu0 0
  %1612 = vmatpush1.bf16.msra.mxu0 %v975
  %1613 = vmatprep.mubr.bf16.mxu0 %v303
  %1614 = vmatmul.mubr.bf16.gmra.mrb[0].mxu0 %v302
  %v1615 = vpop.f32.mrb[0].mxu0
  %v1616 = vadd.f32 %v264, %v1615
  %v1617 = vpop.f32.mrb[0].mxu0
  %v1618 = vpop.f32.mrb[0].mxu0
  %v1619 = vadd.f32 %v264, %v1618
  %v1620 = vpop.f32.mrb[0].mxu0
  %1621 = vmatprep.mubr.bf16.mxu0 %v308
  %1622 = vmatmul.mubr.bf16.gmra.mrb[0].mxu0 %v307
  %v1623 = vpop.f32.mrb[0].mxu0
  %v1624 = vadd.f32 %v264, %v1623
  %v1625 = vpop.f32.mrb[0].mxu0
  %v1626 = vpop.f32.mrb[0].mxu0
  %v1627 = vadd.f32 %v264, %v1626
  %v1628 = vpop.f32.mrb[0].mxu0
  %1629 = vdwg.mxu0
  %1630 = vmatprep.subr.bf16.mxu0 0
  %1631 = vmatpush1.bf16.msra.mxu0 %v980
  %1632 = vmatprep.subr.bf16.mxu0 0
  %1633 = vmatpush1.bf16.msra.mxu0 %v985
  %1634 = vmatprep.subr.bf16.mxu0 0
  %1635 = vmatpush1.bf16.msra.mxu0 %v990
  %1636 = vmatprep.subr.bf16.mxu0 0
  %1637 = vmatpush1.bf16.msra.mxu0 %v995
  %1638 = vmatprep.subr.bf16.mxu0 0
  %1639 = vmatpush1.bf16.msra.mxu0 %v1000
  %1640 = vmatprep.subr.bf16.mxu0 0
  %1641 = vmatpush1.bf16.msra.mxu0 %v1005
  %1642 = vmatprep.subr.bf16.mxu0 0
  %1643 = vmatpush1.bf16.msra.mxu0 %v1010
  %1644 = vmatprep.subr.bf16.mxu0 0
  %1645 = vmatpush1.bf16.msra.mxu0 %v1015
  %1646 = vmatprep.subr.bf16.mxu0 0
  %1647 = vmatpush1.bf16.msra.mxu0 %v1020
  %1648 = vmatprep.subr.bf16.mxu0 0
  %1649 = vmatpush1.bf16.msra.mxu0 %v1025
  %1650 = vmatprep.subr.bf16.mxu0 0
  %1651 = vmatpush1.bf16.msra.mxu0 %v1030
  %1652 = vmatprep.subr.bf16.mxu0 0
  %1653 = vmatpush1.bf16.msra.mxu0 %v1035
  %1654 = vmatprep.subr.bf16.mxu0 0
  %1655 = vmatpush1.bf16.msra.mxu0 %v1040
  %1656 = vmatprep.subr.bf16.mxu0 0
  %1657 = vmatpush1.bf16.msra.mxu0 %v1045
  %1658 = vmatprep.subr.bf16.mxu0 0
  %1659 = vmatpush1.bf16.msra.mxu0 %v1050
  %1660 = vmatprep.subr.bf16.mxu0 0
  %1661 = vmatpush1.bf16.msra.mxu0 %v1055
  %1662 = vmatprep.mubr.bf16.mxu0 %v305
  %1663 = vmatmul.mubr.bf16.gmra.mrb[0].mxu0 %v304
  %v1664 = vpop.f32.mrb[0].mxu0
  %v1665 = vadd.f32 %v1616, %v1664
  %v1666 = vpop.f32.mrb[0].mxu0
  %v1667 = vpop.f32.mrb[0].mxu0
  %v1668 = vadd.f32 %v1619, %v1667
  %v1669 = vpop.f32.mrb[0].mxu0
  %1670 = vmatprep.mubr.bf16.mxu0 %v310
  %1671 = vmatmul.mubr.bf16.gmra.mrb[0].mxu0 %v309
  %v1672 = vpop.f32.mrb[0].mxu0
  %v1673 = vadd.f32 %v1624, %v1672
  %v1674 = vpop.f32.mrb[0].mxu0
  %v1675 = vpop.f32.mrb[0].mxu0
  %v1676 = vadd.f32 %v1627, %v1675
  %v1677 = vpop.f32.mrb[0].mxu0
  %1678 = vdwg.mxu0
  %1679 = vmatprep.subr.bf16.mxu0 0
  %1680 = vmatpush1.bf16.msra.mxu0 %v1060
  %1681 = vmatprep.subr.bf16.mxu0 0
  %1682 = vmatpush1.bf16.msra.mxu0 %v1065
  %1683 = vmatprep.subr.bf16.mxu0 0
  %1684 = vmatpush1.bf16.msra.mxu0 %v1070
  %1685 = vmatprep.subr.bf16.mxu0 0
  %1686 = vmatpush1.bf16.msra.mxu0 %v1075
  %1687 = vmatprep.subr.bf16.mxu0 0
  %1688 = vmatpush1.bf16.msra.mxu0 0
  %1689 = vmatprep.subr.bf16.mxu0 0
  %1690 = vmatpush1.bf16.msra.mxu0 0
  %1691 = vmatprep.subr.bf16.mxu0 0
  %1692 = vmatpush1.bf16.msra.mxu0 0
  %1693 = vmatprep.subr.bf16.mxu0 0
  %1694 = vmatpush1.bf16.msra.mxu0 0
  %1695 = vmatprep.subr.bf16.mxu0 0
  %1696 = vmatpush1.bf16.msra.mxu0 0
  %1697 = vmatprep.subr.bf16.mxu0 0
  %1698 = vmatpush1.bf16.msra.mxu0 0
  %1699 = vmatprep.subr.bf16.mxu0 0
  %1700 = vmatpush1.bf16.msra.mxu0 0
  %1701 = vmatprep.subr.bf16.mxu0 0
  %1702 = vmatpush1.bf16.msra.mxu0 0
  %1703 = vmatprep.subr.bf16.mxu0 0
  %1704 = vmatpush1.bf16.msra.mxu0 0
  %1705 = vmatprep.subr.bf16.mxu0 0
  %1706 = vmatpush1.bf16.msra.mxu0 0
  %1707 = vmatprep.subr.bf16.mxu0 0
  %1708 = vmatpush1.bf16.msra.mxu0 0
  %1709 = vmatprep.subr.bf16.mxu0 0
  %1710 = vmatpush1.bf16.msra.mxu0 0
  %1711 = vmatprep.mubr.bf16.mxu0 0
  %1712 = vmatmul.mubr.bf16.gmra.mrb[0].mxu0 %v1258
  %v1713 = vpop.f32.mrb[0].mxu0
  %v1714 = vadd.f32 %v1665, %v1713
  %v1715 = vpop.f32.mrb[0].mxu0
  %v1716 = vpop.f32.mrb[0].mxu0
  %v1717 = vadd.f32 %v1668, %v1716
  %v1718 = vpop.f32.mrb[0].mxu0
  %1719 = vmatprep.mubr.bf16.mxu0 0
  %1720 = vmatmul.mubr.bf16.gmra.mrb[0].mxu0 %v1261
  %v1721 = vpop.f32.mrb[0].mxu0
  %v1722 = vadd.f32 %v1673, %v1721
  %v1723 = vpop.f32.mrb[0].mxu0
  %v1724 = vpop.f32.mrb[0].mxu0
  %v1725 = vadd.f32 %v1676, %v1724
  %v1726 = vpop.f32.mrb[0].mxu0
  %1727 = vdwg.mxu0
  %1728 = vst [vmem:[%s3] sm:$0xff] %v1404
  %1729 = vst [vmem:[%s3 + $0x8] sm:$0xff] %v1406
  %1730 = vst [vmem:[%s3 + $0x10] sm:$0xff] %v1563
  %1731 = vst [vmem:[%s3 + $0x18] sm:$0xff] %v1565
  %1732 = vst [vmem:[%s3 + $0x20] sm:$0xff] %v1714
  %1733 = vst [vmem:[%s3 + $0x28] sm:$0xff] %v1408
  %1734 = vst [vmem:[%s3 + $0x30] sm:$0xff] %v1410
  %1735 = vst [vmem:[%s3 + $0x38] sm:$0xff] %v1567
  %1736 = vst [vmem:[%s3 + $0x40] sm:$0xff] %v1569
  %1737 = vst [vmem:[%s3 + $0x48] sm:$0xff] %v1717
  %1738 = vst [vmem:[%s3 + $0x50] sm:$0xff] %v1414
  %1739 = vst [vmem:[%s3 + $0x58] sm:$0xff] %v1416
  %1740 = vst [vmem:[%s3 + $0x60] sm:$0xff] %v1573
  %1741 = vst [vmem:[%s3 + $0x68] sm:$0xff] %v1575
  %1742 = vst [vmem:[%s3 + $0x70] sm:$0xff] %v1722
  %1743 = vst [vmem:[%s3 + $0x78] sm:$0xff] %v1418
  %1744 = vst [vmem:[%s3 + $0x80] sm:$0xff] %v1420
  %1745 = vst [vmem:[%s3 + $0x88] sm:$0xff] %v1577
  %1746 = vst [vmem:[%s3 + $0x90] sm:$0xff] %v1579
  %1747 = vst [vmem:[%s3 + $0x98] sm:$0xff] %v1725
  // Predicated region
  $region14: #{ssd_gmm_forward.16} parent=0 // pred_check
    _
  $region15: #{ssd_gmm_forward.16} parent=0 // pred_check_branch
    %1749 = sbr.rel (0) target = $region17
  $region16: #{ssd_gmm_forward.16} parent=0 // pred_region
    _
  $region17: #{ssd_gmm_forward.16} parent=0 // pred_fallthru
    _
  // Predicated region
  $region18: #{ssd_gmm_forward.16} parent=0 // pred_check
    _
  $region19: #{ssd_gmm_forward.16} parent=0 // pred_check_branch
    %1751 = sbr.rel (0) target = $region21
  $region20: #{ssd_gmm_forward.16} parent=0 // pred_region
    _
  $region21: #{ssd_gmm_forward.16} parent=0 // pred_fallthru
    _

// kernel: ssd_gmm_forward.14
$region0: #{ssd_gmm_forward.14}
  #allocation0 [shape = 'u32[]', space=smem, size = 0x4, offset = 0x4, fixed_abs, tag = 'smem constant byte address 0x4 - core index']
  #allocation1 [shape = 'u32[144,128]{1,0:T(1,128)}', space=vmem, size = 0x12000, scoped, tag = 'internal scratch']
  %s0 = inlined_call_operand.vmem [shape: bf16[8,288], index: 0, kind: input, shape index: {}]
  %s1 = inlined_call_operand.vmem [shape: bf16[288,64], index: 1, kind: input, shape index: {}]
  %s2 = inlined_call_operand.vmem [shape: f32[1,64], index: 2, kind: input, shape index: {}]
  %s3 = inlined_call_operand.vmem [shape: f32[8,64], index: 3, kind: output, shape index: {}]
  %s4 = sld [smem:[#allocation0]]
  $region22: #{ssd_gmm_forward.14} parent=0
    _
  %s6 = ssub.s32 1, %s4
  %s7 = scalar_select 0, %s6, %s4
  // Predicated region
  $region2: #{ssd_gmm_forward.14} parent=0 // pred_check
    _
  $region3: #{ssd_gmm_forward.14} parent=0 // pred_check_branch
    %9 = sbr.rel (0) target = $region5
  $region4: #{ssd_gmm_forward.14} parent=0 // pred_region
    _
  $region5: #{ssd_gmm_forward.14} parent=0 // pred_fallthru
    _
  // Predicated region
  $region6: #{ssd_gmm_forward.14} parent=0 // pred_check
    _
  $region7: #{ssd_gmm_forward.14} parent=0 // pred_check_branch
    %11 = sbr.rel (0) target = $region9
  $region8: #{ssd_gmm_forward.14} parent=0 // pred_region
    _
  $region9: #{ssd_gmm_forward.14} parent=0 // pred_fallthru
    _
  // Predicated region
  $region10: #{ssd_gmm_forward.14} parent=0 // pred_check
    _
  $region11: #{ssd_gmm_forward.14} parent=0 // pred_check_branch
    %13 = sbr.rel (0) target = $region13
  $region12: #{ssd_gmm_forward.14} parent=0 // pred_region
    _
  $region13: #{ssd_gmm_forward.14} parent=0 // pred_fallthru
    _
  %v15 = vld [vmem:[%s0] sm:$0xff]
  %v16 = vld [vmem:[%s0 + $0x8] sm:$0xf]
  %v17 = vld [vmem:[%s1] sm:$0xf]
  %v18 = vld [vmem:[%s1 + $0x4] sm:$0xf]
  %v19 = vld [vmem:[%s1 + $0x8] sm:$0xf]
  %v20 = vld [vmem:[%s1 + $0xc] sm:$0xf]
  %v21 = vld [vmem:[%s1 + $0x10] sm:$0xf]
  %v22 = vld [vmem:[%s1 + $0x14] sm:$0xf]
  %v23 = vld [vmem:[%s1 + $0x18] sm:$0xf]
  %v24 = vld [vmem:[%s1 + $0x1c] sm:$0xf]
  %v25 = vld [vmem:[%s1 + $0x20] sm:$0xf]
  %v26 = vld [vmem:[%s1 + $0x24] sm:$0xf]
  %v27 = vld [vmem:[%s1 + $0x28] sm:$0xf]
  %v28 = vld [vmem:[%s1 + $0x2c] sm:$0xf]
  %v29 = vld [vmem:[%s1 + $0x30] sm:$0xf]
  %v30 = vld [vmem:[%s1 + $0x34] sm:$0xf]
  %v31 = vld [vmem:[%s1 + $0x38] sm:$0xf]
  %v32 = vld [vmem:[%s1 + $0x3c] sm:$0xf]
  %v33 = vld [vmem:[%s1 + $0x40] sm:$0xf]
  %v34 = vld [vmem:[%s1 + $0x44] sm:$0xf]
  %v35 = vld [vmem:[%s1 + $0x48] sm:$0xf]
  %v36 = vld [vmem:[%s1 + $0x4c] sm:$0xf]
  %v37 = vld [vmem:[%s1 + $0x50] sm:$0xf]
  %v38 = vld [vmem:[%s1 + $0x54] sm:$0xf]
  %v39 = vld [vmem:[%s1 + $0x58] sm:$0xf]
  %v40 = vld [vmem:[%s1 + $0x5c] sm:$0xf]
  %v41 = vld [vmem:[%s1 + $0x60] sm:$0xf]
  %v42 = vld [vmem:[%s1 + $0x64] sm:$0xf]
  %v43 = vld [vmem:[%s1 + $0x68] sm:$0xf]
  %v44 = vld [vmem:[%s1 + $0x6c] sm:$0xf]
  %v45 = vld [vmem:[%s1 + $0x70] sm:$0xf]
  %v46 = vld [vmem:[%s1 + $0x74] sm:$0xf]
  %v47 = vld [vmem:[%s1 + $0x78] sm:$0xf]
  %v48 = vld [vmem:[%s1 + $0x7c] sm:$0xf]
  %v49 = vld [vmem:[%s1 + $0x80] sm:$0xf]
  %v50 = vld [vmem:[%s1 + $0x84] sm:$0xf]
  %v51 = vld [vmem:[%s1 + $0x88] sm:$0xf]
  %v52 = vld [vmem:[%s1 + $0x8c] sm:$0xf]
  %v53 = vld [vmem:[%s2] sm:$0x1]
  %v55 = vlaneseq
  %v56 = vshrl.u32 %v55, 7
  %v57 = vsub.s32 0, %v56
  %v58 = vrot.slane %v53, %v57
  %v62 = vunpack.c.l.b16 %v15
  %v63 = vunpack.c.h.b16 %v15
  %v64 = vunpack.c.l.b16 %v16
  %v65 = vpack.c.b16 %v62, %v62
  %v66 = vpack.c.b16 %v63, %v63
  %v67 = vpack.c.b16 %v64, %v64
  %v106 = vunpack.c.l.b16 %v17
  %v107 = vunpack.c.l.b16 %v18
  %v108 = vunpack.c.l.b16 %v19
  %v109 = vunpack.c.l.b16 %v20
  %v110 = vunpack.c.l.b16 %v21
  %v111 = vunpack.c.l.b16 %v22
  %v112 = vunpack.c.l.b16 %v23
  %v113 = vunpack.c.l.b16 %v24
  %v114 = vunpack.c.l.b16 %v25
  %v115 = vunpack.c.l.b16 %v26
  %v116 = vunpack.c.l.b16 %v27
  %v117 = vunpack.c.l.b16 %v28
  %v118 = vunpack.c.l.b16 %v29
  %v119 = vunpack.c.l.b16 %v30
  %v120 = vunpack.c.l.b16 %v31
  %v121 = vunpack.c.l.b16 %v32
  %v122 = vunpack.c.l.b16 %v33
  %v123 = vunpack.c.l.b16 %v34
  %v124 = vunpack.c.l.b16 %v35
  %v125 = vunpack.c.l.b16 %v36
  %v126 = vunpack.c.l.b16 %v37
  %v127 = vunpack.c.l.b16 %v38
  %v128 = vunpack.c.l.b16 %v39
  %v129 = vunpack.c.l.b16 %v40
  %v130 = vunpack.c.l.b16 %v41
  %v131 = vunpack.c.l.b16 %v42
  %v132 = vunpack.c.l.b16 %v43
  %v133 = vunpack.c.l.b16 %v44
  %v134 = vunpack.c.l.b16 %v45
  %v135 = vunpack.c.l.b16 %v46
  %v136 = vunpack.c.l.b16 %v47
  %v137 = vunpack.c.l.b16 %v48
  %v138 = vunpack.c.l.b16 %v49
  %v139 = vunpack.c.l.b16 %v50
  %v140 = vunpack.c.l.b16 %v51
  %v141 = vunpack.c.l.b16 %v52
  %v142 = vpack.c.b16 %v107, %v106
  %v143 = vpack.c.b16 %v109, %v108
  %v144 = vpack.c.b16 %v111, %v110
  %v145 = vpack.c.b16 %v113, %v112
  %v146 = vpack.c.b16 %v115, %v114
  %v147 = vpack.c.b16 %v117, %v116
  %v148 = vpack.c.b16 %v119, %v118
  %v149 = vpack.c.b16 %v121, %v120
  %v150 = vpack.c.b16 %v123, %v122
  %v151 = vpack.c.b16 %v125, %v124
  %v152 = vpack.c.b16 %v127, %v126
  %v153 = vpack.c.b16 %v129, %v128
  %v154 = vpack.c.b16 %v131, %v130
  %v155 = vpack.c.b16 %v133, %v132
  %v156 = vpack.c.b16 %v135, %v134
  %v157 = vpack.c.b16 %v137, %v136
  %v158 = vpack.c.b16 %v139, %v138
  %v159 = vpack.c.b16 %v141, %v140
  %vm178 = vcmask 261120
  %v180 = vsel %vm178, %v67, 0
  %182 = vmatprep.subr.bf16.mxu0 0
  %183 = vmatpush1.bf16.msra.mxu0 %v142
  %184 = vmatprep.subr.bf16.mxu0 0
  %185 = vmatpush1.bf16.msra.mxu0 %v143
  %186 = vmatprep.subr.bf16.mxu0 0
  %187 = vmatpush1.bf16.msra.mxu0 %v144
  %188 = vmatprep.subr.bf16.mxu0 0
  %189 = vmatpush1.bf16.msra.mxu0 %v145
  %190 = vmatprep.subr.bf16.mxu0 0
  %191 = vmatpush1.bf16.msra.mxu0 %v146
  %192 = vmatprep.subr.bf16.mxu0 0
  %193 = vmatpush1.bf16.msra.mxu0 %v147
  %194 = vmatprep.subr.bf16.mxu0 0
  %195 = vmatpush1.bf16.msra.mxu0 %v148
  %196 = vmatprep.subr.bf16.mxu0 0
  %197 = vmatpush1.bf16.msra.mxu0 %v149
  %198 = vmatprep.subr.bf16.mxu0 0
  %199 = vmatpush1.bf16.msra.mxu0 %v150
  %200 = vmatprep.subr.bf16.mxu0 0
  %201 = vmatpush1.bf16.msra.mxu0 %v151
  %202 = vmatprep.subr.bf16.mxu0 0
  %203 = vmatpush1.bf16.msra.mxu0 %v152
  %204 = vmatprep.subr.bf16.mxu0 0
  %205 = vmatpush1.bf16.msra.mxu0 %v153
  %206 = vmatprep.subr.bf16.mxu0 0
  %207 = vmatpush1.bf16.msra.mxu0 %v154
  %208 = vmatprep.subr.bf16.mxu0 0
  %209 = vmatpush1.bf16.msra.mxu0 %v155
  %210 = vmatprep.subr.bf16.mxu0 0
  %211 = vmatpush1.bf16.msra.mxu0 %v156
  %212 = vmatprep.subr.bf16.mxu0 0
  %213 = vmatpush1.bf16.msra.mxu0 %v157
  %214 = vmatprep.mubr.bf16.mxu0 %v66
  %215 = vmatmul.mubr.bf16.gmra.mrb[0].mxu0 %v65
  %v216 = vpop.f32.mrb[0].mxu0
  %v217 = vadd.f32 %v58, %v216
  %v218 = vpop.f32.mrb[0].mxu0
  %v219 = vpop.f32.mrb[0].mxu0
  %v220 = vpop.f32.mrb[0].mxu0
  %221 = vdwg.mxu0
  %222 = vmatprep.subr.bf16.mxu0 0
  %223 = vmatpush1.bf16.msra.mxu0 %v158
  %224 = vmatprep.subr.bf16.mxu0 0
  %225 = vmatpush1.bf16.msra.mxu0 %v159
  %226 = vmatprep.subr.bf16.mxu0 0
  %227 = vmatpush1.bf16.msra.mxu0 0
  %228 = vmatprep.subr.bf16.mxu0 0
  %229 = vmatpush1.bf16.msra.mxu0 0
  %230 = vmatprep.subr.bf16.mxu0 0
  %231 = vmatpush1.bf16.msra.mxu0 0
  %232 = vmatprep.subr.bf16.mxu0 0
  %233 = vmatpush1.bf16.msra.mxu0 0
  %234 = vmatprep.subr.bf16.mxu0 0
  %235 = vmatpush1.bf16.msra.mxu0 0
  %236 = vmatprep.subr.bf16.mxu0 0
  %237 = vmatpush1.bf16.msra.mxu0 0
  %238 = vmatprep.subr.bf16.mxu0 0
  %239 = vmatpush1.bf16.msra.mxu0 0
  %240 = vmatprep.subr.bf16.mxu0 0
  %241 = vmatpush1.bf16.msra.mxu0 0
  %242 = vmatprep.subr.bf16.mxu0 0
  %243 = vmatpush1.bf16.msra.mxu0 0
  %244 = vmatprep.subr.bf16.mxu0 0
  %245 = vmatpush1.bf16.msra.mxu0 0
  %246 = vmatprep.subr.bf16.mxu0 0
  %247 = vmatpush1.bf16.msra.mxu0 0
  %248 = vmatprep.subr.bf16.mxu0 0
  %249 = vmatpush1.bf16.msra.mxu0 0
  %250 = vmatprep.subr.bf16.mxu0 0
  %251 = vmatpush1.bf16.msra.mxu0 0
  %252 = vmatprep.subr.bf16.mxu0 0
  %253 = vmatpush1.bf16.msra.mxu0 0
  %254 = vmatprep.mubr.bf16.mxu0 0
  %255 = vmatmul.mubr.bf16.gmra.mrb[0].mxu0 %v180
  %v256 = vpop.f32.mrb[0].mxu0
  %v257 = vadd.f32 %v217, %v256
  %v258 = vpop.f32.mrb[0].mxu0
  %v259 = vpop.f32.mrb[0].mxu0
  %v260 = vpop.f32.mrb[0].mxu0
  %261 = vdwg.mxu0
  %v262 = vmax.f32 %v257, 0.0
  %vm263 = vcmask 523264
  %264 = vst.msk [vmem:[%s3] sm:$0xff] %vm263, %v262
  // Predicated region
  $region14: #{ssd_gmm_forward.14} parent=0 // pred_check
    _
  $region15: #{ssd_gmm_forward.14} parent=0 // pred_check_branch
    %266 = sbr.rel (0) target = $region17
  $region16: #{ssd_gmm_forward.14} parent=0 // pred_region
    _
  $region17: #{ssd_gmm_forward.14} parent=0 // pred_fallthru
    _
  // Predicated region
  $region18: #{ssd_gmm_forward.14} parent=0 // pred_check
    _
  $region19: #{ssd_gmm_forward.14} parent=0 // pred_check_branch
    %268 = sbr.rel (0) target = $region21
  $region20: #{ssd_gmm_forward.14} parent=0 // pred_region
    _
  $region21: #{ssd_gmm_forward.14} parent=0 // pred_fallthru
    _

// kernel: ssd_gmm_forward.17
$region0: #{ssd_gmm_forward.17}
  #allocation0 [shape = 'u32[]', space=smem, size = 0x4, offset = 0x4, fixed_abs, tag = 'smem constant byte address 0x4 - core index']
  #allocation1 [shape = 'u32[144,128]{1,0:T(1,128)}', space=vmem, size = 0x12000, scoped, tag = 'internal scratch']
  %s0 = inlined_call_operand.vmem [shape: bf16[8,576], index: 0, kind: input, shape index: {}]
  %s1 = inlined_call_operand.vmem [shape: bf16[576,384], index: 1, kind: input, shape index: {}]
  %s2 = inlined_call_operand.vmem [shape: f32[1,384], index: 2, kind: input, shape index: {}]
  %s3 = inlined_call_operand.vmem [shape: f32[8,384], index: 3, kind: output, shape index: {}]
  %s4 = sld [smem:[#allocation0]]
  $region22: #{ssd_gmm_forward.17} parent=0
    _
  %s6 = ssub.s32 1, %s4
  %s7 = scalar_select 0, %s6, %s4
  // Predicated region
  $region2: #{ssd_gmm_forward.17} parent=0 // pred_check
    _
  $region3: #{ssd_gmm_forward.17} parent=0 // pred_check_branch
    %9 = sbr.rel (0) target = $region5
  $region4: #{ssd_gmm_forward.17} parent=0 // pred_region
    _
  $region5: #{ssd_gmm_forward.17} parent=0 // pred_fallthru
    _
  // Predicated region
  $region6: #{ssd_gmm_forward.17} parent=0 // pred_check
    _
  $region7: #{ssd_gmm_forward.17} parent=0 // pred_check_branch
    %11 = sbr.rel (0) target = $region9
  $region8: #{ssd_gmm_forward.17} parent=0 // pred_region
    _
  $region9: #{ssd_gmm_forward.17} parent=0 // pred_fallthru
    _
  // Predicated region
  $region10: #{ssd_gmm_forward.17} parent=0 // pred_check
    _
  $region11: #{ssd_gmm_forward.17} parent=0 // pred_check_branch
    %13 = sbr.rel (0) target = $region13
  $region12: #{ssd_gmm_forward.17} parent=0 // pred_region
    _
  $region13: #{ssd_gmm_forward.17} parent=0 // pred_fallthru
    _
  %v15 = vld [vmem:[%s0] sm:$0xff]
  %v16 = vld [vmem:[%s0 + $0x8] sm:$0xff]
  %v17 = vld [vmem:[%s0 + $0x10] sm:$0xf]
  %v18 = vld [vmem:[%s1] sm:$0xff]
  %v19 = vld [vmem:[%s1 + $0x8] sm:$0xf]
  %v20 = vld [vmem:[%s1 + $0xc] sm:$0xff]
  %v21 = vld [vmem:[%s1 + $0x14] sm:$0xf]
  %v22 = vld [vmem:[%s1 + $0x18] sm:$0xff]
  %v23 = vld [vmem:[%s1 + $0x20] sm:$0xf]
  %v24 = vld [vmem:[%s1 + $0x24] sm:$0xff]
  %v25 = vld [vmem:[%s1 + $0x2c] sm:$0xf]
  %v26 = vld [vmem:[%s1 + $0x30] sm:$0xff]
  %v27 = vld [vmem:[%s1 + $0x38] sm:$0xf]
  %v28 = vld [vmem:[%s1 + $0x3c] sm:$0xff]
  %v29 = vld [vmem:[%s1 + $0x44] sm:$0xf]
  %v30 = vld [vmem:[%s1 + $0x48] sm:$0xff]
  %v31 = vld [vmem:[%s1 + $0x50] sm:$0xf]
  %v32 = vld [vmem:[%s1 + $0x54] sm:$0xff]
  %v33 = vld [vmem:[%s1 + $0x5c] sm:$0xf]
  %v34 = vld [vmem:[%s1 + $0x60] sm:$0xff]
  %v35 = vld [vmem:[%s1 + $0x68] sm:$0xf]
  %v36 = vld [vmem:[%s1 + $0x6c] sm:$0xff]
  %v37 = vld [vmem:[%s1 + $0x74] sm:$0xf]
  %v38 = vld [vmem:[%s1 + $0x78] sm:$0xff]
  %v39 = vld [vmem:[%s1 + $0x80] sm:$0xf]
  %v40 = vld [vmem:[%s1 + $0x84] sm:$0xff]
  %v41 = vld [vmem:[%s1 + $0x8c] sm:$0xf]
  %v42 = vld [vmem:[%s1 + $0x90] sm:$0xff]
  %v43 = vld [vmem:[%s1 + $0x98] sm:$0xf]
  %v44 = vld [vmem:[%s1 + $0x9c] sm:$0xff]
  %v45 = vld [vmem:[%s1 + $0xa4] sm:$0xf]
  %v46 = vld [vmem:[%s1 + $0xa8] sm:$0xff]
  %v47 = vld [vmem:[%s1 + $0xb0] sm:$0xf]
  %v48 = vld [vmem:[%s1 + $0xb4] sm:$0xff]
  %v49 = vld [vmem:[%s1 + $0xbc] sm:$0xf]
  %v50 = vld [vmem:[%s1 + $0xc0] sm:$0xff]
  %v51 = vld [vmem:[%s1 + $0xc8] sm:$0xf]
  %v52 = vld [vmem:[%s1 + $0xcc] sm:$0xff]
  %v53 = vld [vmem:[%s1 + $0xd4] sm:$0xf]
  %v54 = vld [vmem:[%s1 + $0xd8] sm:$0xff]
  %v55 = vld [vmem:[%s1 + $0xe0] sm:$0xf]
  %v56 = vld [vmem:[%s1 + $0xe4] sm:$0xff]
  %v57 = vld [vmem:[%s1 + $0xec] sm:$0xf]
  %v58 = vld [vmem:[%s1 + $0xf0] sm:$0xff]
  %v59 = vld [vmem:[%s1 + $0xf8] sm:$0xf]
  %v60 = vld [vmem:[%s1 + $0xfc] sm:$0xff]
  %v61 = vld [vmem:[%s1 + $0x104] sm:$0xf]
  %v62 = vld [vmem:[%s1 + $0x108] sm:$0xff]
  %v63 = vld [vmem:[%s1 + $0x110] sm:$0xf]
  %v64 = vld [vmem:[%s1 + $0x114] sm:$0xff]
  %v65 = vld [vmem:[%s1 + $0x11c] sm:$0xf]
  %v66 = vld [vmem:[%s1 + $0x120] sm:$0xff]
  %v67 = vld [vmem:[%s1 + $0x128] sm:$0xf]
  %v68 = vld [vmem:[%s1 + $0x12c] sm:$0xff]
  %v69 = vld [vmem:[%s1 + $0x134] sm:$0xf]
  %v70 = vld [vmem:[%s1 + $0x138] sm:$0xff]
  %v71 = vld [vmem:[%s1 + $0x140] sm:$0xf]
  %v72 = vld [vmem:[%s1 + $0x144] sm:$0xff]
  %v73 = vld [vmem:[%s1 + $0x14c] sm:$0xf]
  %v74 = vld [vmem:[%s1 + $0x150] sm:$0xff]
  %v75 = vld [vmem:[%s1 + $0x158] sm:$0xf]
  %v76 = vld [vmem:[%s1 + $0x15c] sm:$0xff]
  %v77 = vld [vmem:[%s1 + $0x164] sm:$0xf]
  %v78 = vld [vmem:[%s1 + $0x168] sm:$0xff]
  %v79 = vld [vmem:[%s1 + $0x170] sm:$0xf]
  %v80 = vld [vmem:[%s1 + $0x174] sm:$0xff]
  %v81 = vld [vmem:[%s1 + $0x17c] sm:$0xf]
  %v82 = vld [vmem:[%s1 + $0x180] sm:$0xff]
  %v83 = vld [vmem:[%s1 + $0x188] sm:$0xf]
  %v84 = vld [vmem:[%s1 + $0x18c] sm:$0xff]
  %v85 = vld [vmem:[%s1 + $0x194] sm:$0xf]
  %v86 = vld [vmem:[%s1 + $0x198] sm:$0xff]
  %v87 = vld [vmem:[%s1 + $0x1a0] sm:$0xf]
  %v88 = vld [vmem:[%s1 + $0x1a4] sm:$0xff]
  %v89 = vld [vmem:[%s1 + $0x1ac] sm:$0xf]
  %v90 = vld [vmem:[%s1 + $0x1b0] sm:$0xff]
  %v91 = vld [vmem:[%s1 + $0x1b8] sm:$0xf]
  %v92 = vld [vmem:[%s1 + $0x1bc] sm:$0xff]
  %v93 = vld [vmem:[%s1 + $0x1c4] sm:$0xf]
  %v94 = vld [vmem:[%s1 + $0x1c8] sm:$0xff]
  %v95 = vld [vmem:[%s1 + $0x1d0] sm:$0xf]
  %v96 = vld [vmem:[%s1 + $0x1d4] sm:$0xff]
  %v97 = vld [vmem:[%s1 + $0x1dc] sm:$0xf]
  %v98 = vld [vmem:[%s1 + $0x1e0] sm:$0xff]
  %v99 = vld [vmem:[%s1 + $0x1e8] sm:$0xf]
  %v100 = vld [vmem:[%s1 + $0x1ec] sm:$0xff]
  %v101 = vld [vmem:[%s1 + $0x1f4] sm:$0xf]
  %v102 = vld [vmem:[%s1 + $0x1f8] sm:$0xff]
  %v103 = vld [vmem:[%s1 + $0x200] sm:$0xf]
  %v104 = vld [vmem:[%s1 + $0x204] sm:$0xff]
  %v105 = vld [vmem:[%s1 + $0x20c] sm:$0xf]
  %v106 = vld [vmem:[%s1 + $0x210] sm:$0xff]
  %v107 = vld [vmem:[%s1 + $0x218] sm:$0xf]
  %v108 = vld [vmem:[%s1 + $0x21c] sm:$0xff]
  %v109 = vld [vmem:[%s1 + $0x224] sm:$0xf]
  %v110 = vld [vmem:[%s1 + $0x228] sm:$0xff]
  %v111 = vld [vmem:[%s1 + $0x230] sm:$0xf]
  %v112 = vld [vmem:[%s1 + $0x234] sm:$0xff]
  %v113 = vld [vmem:[%s1 + $0x23c] sm:$0xf]
  %v114 = vld [vmem:[%s1 + $0x240] sm:$0xff]
  %v115 = vld [vmem:[%s1 + $0x248] sm:$0xf]
  %v116 = vld [vmem:[%s1 + $0x24c] sm:$0xff]
  %v117 = vld [vmem:[%s1 + $0x254] sm:$0xf]
  %v118 = vld [vmem:[%s1 + $0x258] sm:$0xff]
  %v119 = vld [vmem:[%s1 + $0x260] sm:$0xf]
  %v120 = vld [vmem:[%s1 + $0x264] sm:$0xff]
  %v121 = vld [vmem:[%s1 + $0x26c] sm:$0xf]
  %v122 = vld [vmem:[%s1 + $0x270] sm:$0xff]
  %v123 = vld [vmem:[%s1 + $0x278] sm:$0xf]
  %v124 = vld [vmem:[%s1 + $0x27c] sm:$0xff]
  %v125 = vld [vmem:[%s1 + $0x284] sm:$0xf]
  %v126 = vld [vmem:[%s1 + $0x288] sm:$0xff]
  %v127 = vld [vmem:[%s1 + $0x290] sm:$0xf]
  %v128 = vld [vmem:[%s1 + $0x294] sm:$0xff]
  %v129 = vld [vmem:[%s1 + $0x29c] sm:$0xf]
  %v130 = vld [vmem:[%s1 + $0x2a0] sm:$0xff]
  %v131 = vld [vmem:[%s1 + $0x2a8] sm:$0xf]
  %v132 = vld [vmem:[%s1 + $0x2ac] sm:$0xff]
  %v133 = vld [vmem:[%s1 + $0x2b4] sm:$0xf]
  %v134 = vld [vmem:[%s1 + $0x2b8] sm:$0xff]
  %v135 = vld [vmem:[%s1 + $0x2c0] sm:$0xf]
  %v136 = vld [vmem:[%s1 + $0x2c4] sm:$0xff]
  %v137 = vld [vmem:[%s1 + $0x2cc] sm:$0xf]
  %v138 = vld [vmem:[%s1 + $0x2d0] sm:$0xff]
  %v139 = vld [vmem:[%s1 + $0x2d8] sm:$0xf]
  %v140 = vld [vmem:[%s1 + $0x2dc] sm:$0xff]
  %v141 = vld [vmem:[%s1 + $0x2e4] sm:$0xf]
  %v142 = vld [vmem:[%s1 + $0x2e8] sm:$0xff]
  %v143 = vld [vmem:[%s1 + $0x2f0] sm:$0xf]
  %v144 = vld [vmem:[%s1 + $0x2f4] sm:$0xff]
  %v145 = vld [vmem:[%s1 + $0x2fc] sm:$0xf]
  %v146 = vld [vmem:[%s1 + $0x300] sm:$0xff]
  %v147 = vld [vmem:[%s1 + $0x308] sm:$0xf]
  %v148 = vld [vmem:[%s1 + $0x30c] sm:$0xff]
  %v149 = vld [vmem:[%s1 + $0x314] sm:$0xf]
  %v150 = vld [vmem:[%s1 + $0x318] sm:$0xff]
  %v151 = vld [vmem:[%s1 + $0x320] sm:$0xf]
  %v152 = vld [vmem:[%s1 + $0x324] sm:$0xff]
  %v153 = vld [vmem:[%s1 + $0x32c] sm:$0xf]
  %v154 = vld [vmem:[%s1 + $0x330] sm:$0xff]
  %v155 = vld [vmem:[%s1 + $0x338] sm:$0xf]
  %v156 = vld [vmem:[%s1 + $0x33c] sm:$0xff]
  %v157 = vld [vmem:[%s1 + $0x344] sm:$0xf]
  %v158 = vld [vmem:[%s1 + $0x348] sm:$0xff]
  %v159 = vld [vmem:[%s1 + $0x350] sm:$0xf]
  %v160 = vld [vmem:[%s1 + $0x354] sm:$0xff]
  %v161 = vld [vmem:[%s1 + $0x35c] sm:$0xf]
  %v162 = vld [vmem:[%s2] sm:$0x7]
  %v164 = vlaneseq
  %v165 = vshrl.u32 %v164, 7
  %v166 = vsub.s32 0, %v165
  %v167 = vrot.slane %v162, %v166
  %v168 = vlaneseq
  %v169 = vshrl.u32 %v168, 7
  %v170 = vsub.s32 1, %v169
  %v171 = vrot.slane %v162, %v170
  %v172 = vlaneseq
  %v173 = vshrl.u32 %v172, 7
  %v174 = vsub.s32 2, %v173
  %v175 = vrot.slane %v162, %v174
  %v182 = vunpack.c.l.b16 %v15
  %v183 = vunpack.c.h.b16 %v15
  %v184 = vunpack.c.l.b16 %v16
  %v185 = vunpack.c.h.b16 %v16
  %v186 = vunpack.c.l.b16 %v17
  %v187 = vpack.c.b16 %v182, %v182
  %v188 = vpack.c.b16 %v183, %v183
  %v189 = vpack.c.b16 %v184, %v184
  %v190 = vpack.c.b16 %v185, %v185
  %v191 = vpack.c.b16 %v186, %v186
  %v340 = vunpack.c.l.b16 %v18
  %v341 = vunpack.c.h.b16 %v18
  %v342 = vunpack.c.l.b16 %v19
  %v343 = vunpack.c.l.b16 %v20
  %v344 = vunpack.c.h.b16 %v20
  %v345 = vunpack.c.l.b16 %v21
  %v346 = vunpack.c.l.b16 %v22
  %v347 = vunpack.c.h.b16 %v22
  %v348 = vunpack.c.l.b16 %v23
  %v349 = vunpack.c.l.b16 %v24
  %v350 = vunpack.c.h.b16 %v24
  %v351 = vunpack.c.l.b16 %v25
  %v352 = vunpack.c.l.b16 %v26
  %v353 = vunpack.c.h.b16 %v26
  %v354 = vunpack.c.l.b16 %v27
  %v355 = vunpack.c.l.b16 %v28
  %v356 = vunpack.c.h.b16 %v28
  %v357 = vunpack.c.l.b16 %v29
  %v358 = vunpack.c.l.b16 %v30
  %v359 = vunpack.c.h.b16 %v30
  %v360 = vunpack.c.l.b16 %v31
  %v361 = vunpack.c.l.b16 %v32
  %v362 = vunpack.c.h.b16 %v32
  %v363 = vunpack.c.l.b16 %v33
  %v364 = vunpack.c.l.b16 %v34
  %v365 = vunpack.c.h.b16 %v34
  %v366 = vunpack.c.l.b16 %v35
  %v367 = vunpack.c.l.b16 %v36
  %v368 = vunpack.c.h.b16 %v36
  %v369 = vunpack.c.l.b16 %v37
  %v370 = vunpack.c.l.b16 %v38
  %v371 = vunpack.c.h.b16 %v38
  %v372 = vunpack.c.l.b16 %v39
  %v373 = vunpack.c.l.b16 %v40
  %v374 = vunpack.c.h.b16 %v40
  %v375 = vunpack.c.l.b16 %v41
  %v376 = vunpack.c.l.b16 %v42
  %v377 = vunpack.c.h.b16 %v42
  %v378 = vunpack.c.l.b16 %v43
  %v379 = vunpack.c.l.b16 %v44
  %v380 = vunpack.c.h.b16 %v44
  %v381 = vunpack.c.l.b16 %v45
  %v382 = vunpack.c.l.b16 %v46
  %v383 = vunpack.c.h.b16 %v46
  %v384 = vunpack.c.l.b16 %v47
  %v385 = vunpack.c.l.b16 %v48
  %v386 = vunpack.c.h.b16 %v48
  %v387 = vunpack.c.l.b16 %v49
  %v388 = vunpack.c.l.b16 %v50
  %v389 = vunpack.c.h.b16 %v50
  %v390 = vunpack.c.l.b16 %v51
  %v391 = vunpack.c.l.b16 %v52
  %v392 = vunpack.c.h.b16 %v52
  %v393 = vunpack.c.l.b16 %v53
  %v394 = vunpack.c.l.b16 %v54
  %v395 = vunpack.c.h.b16 %v54
  %v396 = vunpack.c.l.b16 %v55
  %v397 = vunpack.c.l.b16 %v56
  %v398 = vunpack.c.h.b16 %v56
  %v399 = vunpack.c.l.b16 %v57
  %v400 = vunpack.c.l.b16 %v58
  %v401 = vunpack.c.h.b16 %v58
  %v402 = vunpack.c.l.b16 %v59
  %v403 = vunpack.c.l.b16 %v60
  %v404 = vunpack.c.h.b16 %v60
  %v405 = vunpack.c.l.b16 %v61
  %v406 = vunpack.c.l.b16 %v62
  %v407 = vunpack.c.h.b16 %v62
  %v408 = vunpack.c.l.b16 %v63
  %v409 = vunpack.c.l.b16 %v64
  %v410 = vunpack.c.h.b16 %v64
  %v411 = vunpack.c.l.b16 %v65
  %v412 = vunpack.c.l.b16 %v66
  %v413 = vunpack.c.h.b16 %v66
  %v414 = vunpack.c.l.b16 %v67
  %v415 = vunpack.c.l.b16 %v68
  %v416 = vunpack.c.h.b16 %v68
  %v417 = vunpack.c.l.b16 %v69
  %v418 = vunpack.c.l.b16 %v70
  %v419 = vunpack.c.h.b16 %v70
  %v420 = vunpack.c.l.b16 %v71
  %v421 = vunpack.c.l.b16 %v72
  %v422 = vunpack.c.h.b16 %v72
  %v423 = vunpack.c.l.b16 %v73
  %v424 = vunpack.c.l.b16 %v74
  %v425 = vunpack.c.h.b16 %v74
  %v426 = vunpack.c.l.b16 %v75
  %v427 = vunpack.c.l.b16 %v76
  %v428 = vunpack.c.h.b16 %v76
  %v429 = vunpack.c.l.b16 %v77
  %v430 = vunpack.c.l.b16 %v78
  %v431 = vunpack.c.h.b16 %v78
  %v432 = vunpack.c.l.b16 %v79
  %v433 = vunpack.c.l.b16 %v80
  %v434 = vunpack.c.h.b16 %v80
  %v435 = vunpack.c.l.b16 %v81
  %v436 = vunpack.c.l.b16 %v82
  %v437 = vunpack.c.h.b16 %v82
  %v438 = vunpack.c.l.b16 %v83
  %v439 = vunpack.c.l.b16 %v84
  %v440 = vunpack.c.h.b16 %v84
  %v441 = vunpack.c.l.b16 %v85
  %v442 = vunpack.c.l.b16 %v86
  %v443 = vunpack.c.h.b16 %v86
  %v444 = vunpack.c.l.b16 %v87
  %v445 = vunpack.c.l.b16 %v88
  %v446 = vunpack.c.h.b16 %v88
  %v447 = vunpack.c.l.b16 %v89
  %v448 = vunpack.c.l.b16 %v90
  %v449 = vunpack.c.h.b16 %v90
  %v450 = vunpack.c.l.b16 %v91
  %v451 = vunpack.c.l.b16 %v92
  %v452 = vunpack.c.h.b16 %v92
  %v453 = vunpack.c.l.b16 %v93
  %v454 = vunpack.c.l.b16 %v94
  %v455 = vunpack.c.h.b16 %v94
  %v456 = vunpack.c.l.b16 %v95
  %v457 = vunpack.c.l.b16 %v96
  %v458 = vunpack.c.h.b16 %v96
  %v459 = vunpack.c.l.b16 %v97
  %v460 = vunpack.c.l.b16 %v98
  %v461 = vunpack.c.h.b16 %v98
  %v462 = vunpack.c.l.b16 %v99
  %v463 = vunpack.c.l.b16 %v100
  %v464 = vunpack.c.h.b16 %v100
  %v465 = vunpack.c.l.b16 %v101
  %v466 = vunpack.c.l.b16 %v102
  %v467 = vunpack.c.h.b16 %v102
  %v468 = vunpack.c.l.b16 %v103
  %v469 = vunpack.c.l.b16 %v104
  %v470 = vunpack.c.h.b16 %v104
  %v471 = vunpack.c.l.b16 %v105
  %v472 = vunpack.c.l.b16 %v106
  %v473 = vunpack.c.h.b16 %v106
  %v474 = vunpack.c.l.b16 %v107
  %v475 = vunpack.c.l.b16 %v108
  %v476 = vunpack.c.h.b16 %v108
  %v477 = vunpack.c.l.b16 %v109
  %v478 = vunpack.c.l.b16 %v110
  %v479 = vunpack.c.h.b16 %v110
  %v480 = vunpack.c.l.b16 %v111
  %v481 = vunpack.c.l.b16 %v112
  %v482 = vunpack.c.h.b16 %v112
  %v483 = vunpack.c.l.b16 %v113
  %v484 = vunpack.c.l.b16 %v114
  %v485 = vunpack.c.h.b16 %v114
  %v486 = vunpack.c.l.b16 %v115
  %v487 = vunpack.c.l.b16 %v116
  %v488 = vunpack.c.h.b16 %v116
  %v489 = vunpack.c.l.b16 %v117
  %v490 = vunpack.c.l.b16 %v118
  %v491 = vunpack.c.h.b16 %v118
  %v492 = vunpack.c.l.b16 %v119
  %v493 = vunpack.c.l.b16 %v120
  %v494 = vunpack.c.h.b16 %v120
  %v495 = vunpack.c.l.b16 %v121
  %v496 = vunpack.c.l.b16 %v122
  %v497 = vunpack.c.h.b16 %v122
  %v498 = vunpack.c.l.b16 %v123
  %v499 = vunpack.c.l.b16 %v124
  %v500 = vunpack.c.h.b16 %v124
  %v501 = vunpack.c.l.b16 %v125
  %v502 = vunpack.c.l.b16 %v126
  %v503 = vunpack.c.h.b16 %v126
  %v504 = vunpack.c.l.b16 %v127
  %v505 = vunpack.c.l.b16 %v128
  %v506 = vunpack.c.h.b16 %v128
  %v507 = vunpack.c.l.b16 %v129
  %v508 = vunpack.c.l.b16 %v130
  %v509 = vunpack.c.h.b16 %v130
  %v510 = vunpack.c.l.b16 %v131
  %v511 = vunpack.c.l.b16 %v132
  %v512 = vunpack.c.h.b16 %v132
  %v513 = vunpack.c.l.b16 %v133
  %v514 = vunpack.c.l.b16 %v134
  %v515 = vunpack.c.h.b16 %v134
  %v516 = vunpack.c.l.b16 %v135
  %v517 = vunpack.c.l.b16 %v136
  %v518 = vunpack.c.h.b16 %v136
  %v519 = vunpack.c.l.b16 %v137
  %v520 = vunpack.c.l.b16 %v138
  %v521 = vunpack.c.h.b16 %v138
  %v522 = vunpack.c.l.b16 %v139
  %v523 = vunpack.c.l.b16 %v140
  %v524 = vunpack.c.h.b16 %v140
  %v525 = vunpack.c.l.b16 %v141
  %v526 = vunpack.c.l.b16 %v142
  %v527 = vunpack.c.h.b16 %v142
  %v528 = vunpack.c.l.b16 %v143
  %v529 = vunpack.c.l.b16 %v144
  %v530 = vunpack.c.h.b16 %v144
  %v531 = vunpack.c.l.b16 %v145
  %v532 = vunpack.c.l.b16 %v146
  %v533 = vunpack.c.h.b16 %v146
  %v534 = vunpack.c.l.b16 %v147
  %v535 = vunpack.c.l.b16 %v148
  %v536 = vunpack.c.h.b16 %v148
  %v537 = vunpack.c.l.b16 %v149
  %v538 = vunpack.c.l.b16 %v150
  %v539 = vunpack.c.h.b16 %v150
  %v540 = vunpack.c.l.b16 %v151
  %v541 = vunpack.c.l.b16 %v152
  %v542 = vunpack.c.h.b16 %v152
  %v543 = vunpack.c.l.b16 %v153
  %v544 = vunpack.c.l.b16 %v154
  %v545 = vunpack.c.h.b16 %v154
  %v546 = vunpack.c.l.b16 %v155
  %v547 = vunpack.c.l.b16 %v156
  %v548 = vunpack.c.h.b16 %v156
  %v549 = vunpack.c.l.b16 %v157
  %v550 = vunpack.c.l.b16 %v158
  %v551 = vunpack.c.h.b16 %v158
  %v552 = vunpack.c.l.b16 %v159
  %v553 = vunpack.c.l.b16 %v160
  %v554 = vunpack.c.h.b16 %v160
  %v555 = vunpack.c.l.b16 %v161
  %v556 = vpack.c.b16 %v343, %v340
  %v557 = vpack.c.b16 %v344, %v341
  %v558 = vpack.c.b16 %v345, %v342
  %v559 = vpack.c.b16 %v349, %v346
  %v560 = vpack.c.b16 %v350, %v347
  %v561 = vpack.c.b16 %v351, %v348
  %v562 = vpack.c.b16 %v355, %v352
  %v563 = vpack.c.b16 %v356, %v353
  %v564 = vpack.c.b16 %v357, %v354
  %v565 = vpack.c.b16 %v361, %v358
  %v566 = vpack.c.b16 %v362, %v359
  %v567 = vpack.c.b16 %v363, %v360
  %v568 = vpack.c.b16 %v367, %v364
  %v569 = vpack.c.b16 %v368, %v365
  %v570 = vpack.c.b16 %v369, %v366
  %v571 = vpack.c.b16 %v373, %v370
  %v572 = vpack.c.b16 %v374, %v371
  %v573 = vpack.c.b16 %v375, %v372
  %v574 = vpack.c.b16 %v379, %v376
  %v575 = vpack.c.b16 %v380, %v377
  %v576 = vpack.c.b16 %v381, %v378
  %v577 = vpack.c.b16 %v385, %v382
  %v578 = vpack.c.b16 %v386, %v383
  %v579 = vpack.c.b16 %v387, %v384
  %v580 = vpack.c.b16 %v391, %v388
  %v581 = vpack.c.b16 %v392, %v389
  %v582 = vpack.c.b16 %v393, %v390
  %v583 = vpack.c.b16 %v397, %v394
  %v584 = vpack.c.b16 %v398, %v395
  %v585 = vpack.c.b16 %v399, %v396
  %v586 = vpack.c.b16 %v403, %v400
  %v587 = vpack.c.b16 %v404, %v401
  %v588 = vpack.c.b16 %v405, %v402
  %v589 = vpack.c.b16 %v409, %v406
  %v590 = vpack.c.b16 %v410, %v407
  %v591 = vpack.c.b16 %v411, %v408
  %v592 = vpack.c.b16 %v415, %v412
  %v593 = vpack.c.b16 %v416, %v413
  %v594 = vpack.c.b16 %v417, %v414
  %v595 = vpack.c.b16 %v421, %v418
  %v596 = vpack.c.b16 %v422, %v419
  %v597 = vpack.c.b16 %v423, %v420
  %v598 = vpack.c.b16 %v427, %v424
  %v599 = vpack.c.b16 %v428, %v425
  %v600 = vpack.c.b16 %v429, %v426
  %v601 = vpack.c.b16 %v433, %v430
  %v602 = vpack.c.b16 %v434, %v431
  %v603 = vpack.c.b16 %v435, %v432
  %v604 = vpack.c.b16 %v439, %v436
  %v605 = vpack.c.b16 %v440, %v437
  %v606 = vpack.c.b16 %v441, %v438
  %v607 = vpack.c.b16 %v445, %v442
  %v608 = vpack.c.b16 %v446, %v443
  %v609 = vpack.c.b16 %v447, %v444
  %v610 = vpack.c.b16 %v451, %v448
  %v611 = vpack.c.b16 %v452, %v449
  %v612 = vpack.c.b16 %v453, %v450
  %v613 = vpack.c.b16 %v457, %v454
  %v614 = vpack.c.b16 %v458, %v455
  %v615 = vpack.c.b16 %v459, %v456
  %v616 = vpack.c.b16 %v463, %v460
  %v617 = vpack.c.b16 %v464, %v461
  %v618 = vpack.c.b16 %v465, %v462
  %v619 = vpack.c.b16 %v469, %v466
  %v620 = vpack.c.b16 %v470, %v467
  %v621 = vpack.c.b16 %v471, %v468
  %v622 = vpack.c.b16 %v475, %v472
  %v623 = vpack.c.b16 %v476, %v473
  %v624 = vpack.c.b16 %v477, %v474
  %v625 = vpack.c.b16 %v481, %v478
  %v626 = vpack.c.b16 %v482, %v479
  %v627 = vpack.c.b16 %v483, %v480
  %v628 = vpack.c.b16 %v487, %v484
  %v629 = vpack.c.b16 %v488, %v485
  %v630 = vpack.c.b16 %v489, %v486
  %v631 = vpack.c.b16 %v493, %v490
  %v632 = vpack.c.b16 %v494, %v491
  %v633 = vpack.c.b16 %v495, %v492
  %v634 = vpack.c.b16 %v499, %v496
  %v635 = vpack.c.b16 %v500, %v497
  %v636 = vpack.c.b16 %v501, %v498
  %v637 = vpack.c.b16 %v505, %v502
  %v638 = vpack.c.b16 %v506, %v503
  %v639 = vpack.c.b16 %v507, %v504
  %v640 = vpack.c.b16 %v511, %v508
  %v641 = vpack.c.b16 %v512, %v509
  %v642 = vpack.c.b16 %v513, %v510
  %v643 = vpack.c.b16 %v517, %v514
  %v644 = vpack.c.b16 %v518, %v515
  %v645 = vpack.c.b16 %v519, %v516
  %v646 = vpack.c.b16 %v523, %v520
  %v647 = vpack.c.b16 %v524, %v521
  %v648 = vpack.c.b16 %v525, %v522
  %v649 = vpack.c.b16 %v529, %v526
  %v650 = vpack.c.b16 %v530, %v527
  %v651 = vpack.c.b16 %v531, %v528
  %v652 = vpack.c.b16 %v535, %v532
  %v653 = vpack.c.b16 %v536, %v533
  %v654 = vpack.c.b16 %v537, %v534
  %v655 = vpack.c.b16 %v541, %v538
  %v656 = vpack.c.b16 %v542, %v539
  %v657 = vpack.c.b16 %v543, %v540
  %v658 = vpack.c.b16 %v547, %v544
  %v659 = vpack.c.b16 %v548, %v545
  %v660 = vpack.c.b16 %v549, %v546
  %v661 = vpack.c.b16 %v553, %v550
  %v662 = vpack.c.b16 %v554, %v551
  %v663 = vpack.c.b16 %v555, %v552
  %vm772 = vcmask 523264
  %v774 = vsel %vm772, %v191, 0
  %776 = vmatprep.subr.bf16.mxu0 %v557
  %777 = vmatpush1.bf16.msra.mxu0 %v556
  %778 = vmatprep.subr.bf16.mxu0 %v560
  %779 = vmatpush1.bf16.msra.mxu0 %v559
  %780 = vmatprep.subr.bf16.mxu0 %v563
  %781 = vmatpush1.bf16.msra.mxu0 %v562
  %782 = vmatprep.subr.bf16.mxu0 %v566
  %783 = vmatpush1.bf16.msra.mxu0 %v565
  %784 = vmatprep.subr.bf16.mxu0 %v569
  %785 = vmatpush1.bf16.msra.mxu0 %v568
  %786 = vmatprep.subr.bf16.mxu0 %v572
  %787 = vmatpush1.bf16.msra.mxu0 %v571
  %788 = vmatprep.subr.bf16.mxu0 %v575
  %789 = vmatpush1.bf16.msra.mxu0 %v574
  %790 = vmatprep.subr.bf16.mxu0 %v578
  %791 = vmatpush1.bf16.msra.mxu0 %v577
  %792 = vmatprep.subr.bf16.mxu0 %v581
  %793 = vmatpush1.bf16.msra.mxu0 %v580
  %794 = vmatprep.subr.bf16.mxu0 %v584
  %795 = vmatpush1.bf16.msra.mxu0 %v583
  %796 = vmatprep.subr.bf16.mxu0 %v587
  %797 = vmatpush1.bf16.msra.mxu0 %v586
  %798 = vmatprep.subr.bf16.mxu0 %v590
  %799 = vmatpush1.bf16.msra.mxu0 %v589
  %800 = vmatprep.subr.bf16.mxu0 %v593
  %801 = vmatpush1.bf16.msra.mxu0 %v592
  %802 = vmatprep.subr.bf16.mxu0 %v596
  %803 = vmatpush1.bf16.msra.mxu0 %v595
  %804 = vmatprep.subr.bf16.mxu0 %v599
  %805 = vmatpush1.bf16.msra.mxu0 %v598
  %806 = vmatprep.subr.bf16.mxu0 %v602
  %807 = vmatpush1.bf16.msra.mxu0 %v601
  %808 = vmatprep.mubr.bf16.mxu0 %v188
  %809 = vmatmul.mubr.bf16.gmra.mrb[0].mxu0 %v187
  %v810 = vpop.f32.mrb[0].mxu0
  %v811 = vadd.f32 %v167, %v810
  %v812 = vpop.f32.mrb[0].mxu0
  %v813 = vadd.f32 %v171, %v812
  %v814 = vpop.f32.mrb[0].mxu0
  %v815 = vpop.f32.mrb[0].mxu0
  %816 = vdwg.mxu0
  %817 = vmatprep.subr.bf16.mxu0 %v605
  %818 = vmatpush1.bf16.msra.mxu0 %v604
  %819 = vmatprep.subr.bf16.mxu0 %v608
  %820 = vmatpush1.bf16.msra.mxu0 %v607
  %821 = vmatprep.subr.bf16.mxu0 %v611
  %822 = vmatpush1.bf16.msra.mxu0 %v610
  %823 = vmatprep.subr.bf16.mxu0 %v614
  %824 = vmatpush1.bf16.msra.mxu0 %v613
  %825 = vmatprep.subr.bf16.mxu0 %v617
  %826 = vmatpush1.bf16.msra.mxu0 %v616
  %827 = vmatprep.subr.bf16.mxu0 %v620
  %828 = vmatpush1.bf16.msra.mxu0 %v619
  %829 = vmatprep.subr.bf16.mxu0 %v623
  %830 = vmatpush1.bf16.msra.mxu0 %v622
  %831 = vmatprep.subr.bf16.mxu0 %v626
  %832 = vmatpush1.bf16.msra.mxu0 %v625
  %833 = vmatprep.subr.bf16.mxu0 %v629
  %834 = vmatpush1.bf16.msra.mxu0 %v628
  %835 = vmatprep.subr.bf16.mxu0 %v632
  %836 = vmatpush1.bf16.msra.mxu0 %v631
  %837 = vmatprep.subr.bf16.mxu0 %v635
  %838 = vmatpush1.bf16.msra.mxu0 %v634
  %839 = vmatprep.subr.bf16.mxu0 %v638
  %840 = vmatpush1.bf16.msra.mxu0 %v637
  %841 = vmatprep.subr.bf16.mxu0 %v641
  %842 = vmatpush1.bf16.msra.mxu0 %v640
  %843 = vmatprep.subr.bf16.mxu0 %v644
  %844 = vmatpush1.bf16.msra.mxu0 %v643
  %845 = vmatprep.subr.bf16.mxu0 %v647
  %846 = vmatpush1.bf16.msra.mxu0 %v646
  %847 = vmatprep.subr.bf16.mxu0 %v650
  %848 = vmatpush1.bf16.msra.mxu0 %v649
  %849 = vmatprep.mubr.bf16.mxu0 %v190
  %850 = vmatmul.mubr.bf16.gmra.mrb[0].mxu0 %v189
  %v851 = vpop.f32.mrb[0].mxu0
  %v852 = vadd.f32 %v811, %v851
  %v853 = vpop.f32.mrb[0].mxu0
  %v854 = vadd.f32 %v813, %v853
  %v855 = vpop.f32.mrb[0].mxu0
  %v856 = vpop.f32.mrb[0].mxu0
  %857 = vdwg.mxu0
  %858 = vmatprep.subr.bf16.mxu0 %v653
  %859 = vmatpush1.bf16.msra.mxu0 %v652
  %860 = vmatprep.subr.bf16.mxu0 %v656
  %861 = vmatpush1.bf16.msra.mxu0 %v655
  %862 = vmatprep.subr.bf16.mxu0 %v659
  %863 = vmatpush1.bf16.msra.mxu0 %v658
  %864 = vmatprep.subr.bf16.mxu0 %v662
  %865 = vmatpush1.bf16.msra.mxu0 %v661
  %866 = vmatprep.subr.bf16.mxu0 0
  %867 = vmatpush1.bf16.msra.mxu0 0
  %868 = vmatprep.subr.bf16.mxu0 0
  %869 = vmatpush1.bf16.msra.mxu0 0
  %870 = vmatprep.subr.bf16.mxu0 0
  %871 = vmatpush1.bf16.msra.mxu0 0
  %872 = vmatprep.subr.bf16.mxu0 0
  %873 = vmatpush1.bf16.msra.mxu0 0
  %874 = vmatprep.subr.bf16.mxu0 0
  %875 = vmatpush1.bf16.msra.mxu0 0
  %876 = vmatprep.subr.bf16.mxu0 0
  %877 = vmatpush1.bf16.msra.mxu0 0
  %878 = vmatprep.subr.bf16.mxu0 0
  %879 = vmatpush1.bf16.msra.mxu0 0
  %880 = vmatprep.subr.bf16.mxu0 0
  %881 = vmatpush1.bf16.msra.mxu0 0
  %882 = vmatprep.subr.bf16.mxu0 0
  %883 = vmatpush1.bf16.msra.mxu0 0
  %884 = vmatprep.subr.bf16.mxu0 0
  %885 = vmatpush1.bf16.msra.mxu0 0
  %886 = vmatprep.subr.bf16.mxu0 0
  %887 = vmatpush1.bf16.msra.mxu0 0
  %888 = vmatprep.subr.bf16.mxu0 0
  %889 = vmatpush1.bf16.msra.mxu0 0
  %890 = vmatprep.mubr.bf16.mxu0 0
  %891 = vmatmul.mubr.bf16.gmra.mrb[0].mxu0 %v774
  %v892 = vpop.f32.mrb[0].mxu0
  %v893 = vadd.f32 %v852, %v892
  %v894 = vpop.f32.mrb[0].mxu0
  %v895 = vadd.f32 %v854, %v894
  %v896 = vpop.f32.mrb[0].mxu0
  %v897 = vpop.f32.mrb[0].mxu0
  %898 = vdwg.mxu0
  %899 = vmatprep.subr.bf16.mxu0 0
  %900 = vmatpush1.bf16.msra.mxu0 %v558
  %901 = vmatprep.subr.bf16.mxu0 0
  %902 = vmatpush1.bf16.msra.mxu0 %v561
  %903 = vmatprep.subr.bf16.mxu0 0
  %904 = vmatpush1.bf16.msra.mxu0 %v564
  %905 = vmatprep.subr.bf16.mxu0 0
  %906 = vmatpush1.bf16.msra.mxu0 %v567
  %907 = vmatprep.subr.bf16.mxu0 0
  %908 = vmatpush1.bf16.msra.mxu0 %v570
  %909 = vmatprep.subr.bf16.mxu0 0
  %910 = vmatpush1.bf16.msra.mxu0 %v573
  %911 = vmatprep.subr.bf16.mxu0 0
  %912 = vmatpush1.bf16.msra.mxu0 %v576
  %913 = vmatprep.subr.bf16.mxu0 0
  %914 = vmatpush1.bf16.msra.mxu0 %v579
  %915 = vmatprep.subr.bf16.mxu0 0
  %916 = vmatpush1.bf16.msra.mxu0 %v582
  %917 = vmatprep.subr.bf16.mxu0 0
  %918 = vmatpush1.bf16.msra.mxu0 %v585
  %919 = vmatprep.subr.bf16.mxu0 0
  %920 = vmatpush1.bf16.msra.mxu0 %v588
  %921 = vmatprep.subr.bf16.mxu0 0
  %922 = vmatpush1.bf16.msra.mxu0 %v591
  %923 = vmatprep.subr.bf16.mxu0 0
  %924 = vmatpush1.bf16.msra.mxu0 %v594
  %925 = vmatprep.subr.bf16.mxu0 0
  %926 = vmatpush1.bf16.msra.mxu0 %v597
  %927 = vmatprep.subr.bf16.mxu0 0
  %928 = vmatpush1.bf16.msra.mxu0 %v600
  %929 = vmatprep.subr.bf16.mxu0 0
  %930 = vmatpush1.bf16.msra.mxu0 %v603
  %931 = vmatprep.mubr.bf16.mxu0 %v188
  %932 = vmatmul.mubr.bf16.gmra.mrb[0].mxu0 %v187
  %v933 = vpop.f32.mrb[0].mxu0
  %v934 = vadd.f32 %v175, %v933
  %v935 = vpop.f32.mrb[0].mxu0
  %v936 = vpop.f32.mrb[0].mxu0
  %v937 = vpop.f32.mrb[0].mxu0
  %938 = vdwg.mxu0
  %939 = vmatprep.subr.bf16.mxu0 0
  %940 = vmatpush1.bf16.msra.mxu0 %v606
  %941 = vmatprep.subr.bf16.mxu0 0
  %942 = vmatpush1.bf16.msra.mxu0 %v609
  %943 = vmatprep.subr.bf16.mxu0 0
  %944 = vmatpush1.bf16.msra.mxu0 %v612
  %945 = vmatprep.subr.bf16.mxu0 0
  %946 = vmatpush1.bf16.msra.mxu0 %v615
  %947 = vmatprep.subr.bf16.mxu0 0
  %948 = vmatpush1.bf16.msra.mxu0 %v618
  %949 = vmatprep.subr.bf16.mxu0 0
  %950 = vmatpush1.bf16.msra.mxu0 %v621
  %951 = vmatprep.subr.bf16.mxu0 0
  %952 = vmatpush1.bf16.msra.mxu0 %v624
  %953 = vmatprep.subr.bf16.mxu0 0
  %954 = vmatpush1.bf16.msra.mxu0 %v627
  %955 = vmatprep.subr.bf16.mxu0 0
  %956 = vmatpush1.bf16.msra.mxu0 %v630
  %957 = vmatprep.subr.bf16.mxu0 0
  %958 = vmatpush1.bf16.msra.mxu0 %v633
  %959 = vmatprep.subr.bf16.mxu0 0
  %960 = vmatpush1.bf16.msra.mxu0 %v636
  %961 = vmatprep.subr.bf16.mxu0 0
  %962 = vmatpush1.bf16.msra.mxu0 %v639
  %963 = vmatprep.subr.bf16.mxu0 0
  %964 = vmatpush1.bf16.msra.mxu0 %v642
  %965 = vmatprep.subr.bf16.mxu0 0
  %966 = vmatpush1.bf16.msra.mxu0 %v645
  %967 = vmatprep.subr.bf16.mxu0 0
  %968 = vmatpush1.bf16.msra.mxu0 %v648
  %969 = vmatprep.subr.bf16.mxu0 0
  %970 = vmatpush1.bf16.msra.mxu0 %v651
  %971 = vmatprep.mubr.bf16.mxu0 %v190
  %972 = vmatmul.mubr.bf16.gmra.mrb[0].mxu0 %v189
  %v973 = vpop.f32.mrb[0].mxu0
  %v974 = vadd.f32 %v934, %v973
  %v975 = vpop.f32.mrb[0].mxu0
  %v976 = vpop.f32.mrb[0].mxu0
  %v977 = vpop.f32.mrb[0].mxu0
  %978 = vdwg.mxu0
  %979 = vmatprep.subr.bf16.mxu0 0
  %980 = vmatpush1.bf16.msra.mxu0 %v654
  %981 = vmatprep.subr.bf16.mxu0 0
  %982 = vmatpush1.bf16.msra.mxu0 %v657
  %983 = vmatprep.subr.bf16.mxu0 0
  %984 = vmatpush1.bf16.msra.mxu0 %v660
  %985 = vmatprep.subr.bf16.mxu0 0
  %986 = vmatpush1.bf16.msra.mxu0 %v663
  %987 = vmatprep.subr.bf16.mxu0 0
  %988 = vmatpush1.bf16.msra.mxu0 0
  %989 = vmatprep.subr.bf16.mxu0 0
  %990 = vmatpush1.bf16.msra.mxu0 0
  %991 = vmatprep.subr.bf16.mxu0 0
  %992 = vmatpush1.bf16.msra.mxu0 0
  %993 = vmatprep.subr.bf16.mxu0 0
  %994 = vmatpush1.bf16.msra.mxu0 0
  %995 = vmatprep.subr.bf16.mxu0 0
  %996 = vmatpush1.bf16.msra.mxu0 0
  %997 = vmatprep.subr.bf16.mxu0 0
  %998 = vmatpush1.bf16.msra.mxu0 0
  %999 = vmatprep.subr.bf16.mxu0 0
  %1000 = vmatpush1.bf16.msra.mxu0 0
  %1001 = vmatprep.subr.bf16.mxu0 0
  %1002 = vmatpush1.bf16.msra.mxu0 0
  %1003 = vmatprep.subr.bf16.mxu0 0
  %1004 = vmatpush1.bf16.msra.mxu0 0
  %1005 = vmatprep.subr.bf16.mxu0 0
  %1006 = vmatpush1.bf16.msra.mxu0 0
  %1007 = vmatprep.subr.bf16.mxu0 0
  %1008 = vmatpush1.bf16.msra.mxu0 0
  %1009 = vmatprep.subr.bf16.mxu0 0
  %1010 = vmatpush1.bf16.msra.mxu0 0
  %1011 = vmatprep.mubr.bf16.mxu0 0
  %1012 = vmatmul.mubr.bf16.gmra.mrb[0].mxu0 %v774
  %v1013 = vpop.f32.mrb[0].mxu0
  %v1014 = vadd.f32 %v974, %v1013
  %v1015 = vpop.f32.mrb[0].mxu0
  %v1016 = vpop.f32.mrb[0].mxu0
  %v1017 = vpop.f32.mrb[0].mxu0
  %1018 = vdwg.mxu0
  %1019 = vst [vmem:[%s3] sm:$0xff] %v893
  %1020 = vst [vmem:[%s3 + $0x8] sm:$0xff] %v895
  %1021 = vst [vmem:[%s3 + $0x10] sm:$0xff] %v1014
  // Predicated region
  $region14: #{ssd_gmm_forward.17} parent=0 // pred_check
    _
  $region15: #{ssd_gmm_forward.17} parent=0 // pred_check_branch
    %1023 = sbr.rel (0) target = $region17
  $region16: #{ssd_gmm_forward.17} parent=0 // pred_region
    _
  $region17: #{ssd_gmm_forward.17} parent=0 // pred_fallthru
    _
  // Predicated region
  $region18: #{ssd_gmm_forward.17} parent=0 // pred_check
    _
  $region19: #{ssd_gmm_forward.17} parent=0 // pred_check_branch
    %1025 = sbr.rel (0) target = $region21
  $region20: #{ssd_gmm_forward.17} parent=0 // pred_region
    _
  $region21: #{ssd_gmm_forward.17} parent=0 // pred_fallthru
    _

</llo_original>
